<compile_context>
chip_gen: v6e
topology: v6e:2x2x1
jax: 0.10.0
libtpu: 0.0.40
codegen_flags: <defaults>
</compile_context>

<pallas_src>
import functools

import numpy as np
import jax
import jax.numpy as jnp
from jax import lax
from jax.experimental import pallas as pl
from jax.experimental.pallas import tpu as pltpu

EPS = 1e-5
K = 4  # all (transposed) convs use 4x4 kernels

# Per-layer (stride, padding) of the DCGAN generator.
LAYER_CFG = [(1, 0), (2, 1), (2, 1), (2, 1), (2, 1)]


# ----------------------------------------------------------------------------
# Pallas kernel: fused  per-phase (W @ patches^T)  ->  BatchNorm(batch stats) -> act
# ----------------------------------------------------------------------------
def _phase_matmul_bn_act_kernel(p_ref, w_ref, g_ref, b_ref, o_ref, *, use_bn, act):
    # p_ref: (Pp, Kc, R)  bf16   -- Pp == P (per-phase patches) or 1 (shared patches)
    # w_ref: (P, Cout, Kc) bf16
    # g_ref, b_ref: (Cout, 1) f32
    # o_ref: (P, Cout, R)
    n_phase = w_ref.shape[0]
    rows = p_ref.shape[-1]
    shared = p_ref.shape[0] == 1

    rhs_shared = p_ref[0] if shared else None
    ys = []
    for p in range(n_phase):  # static unroll (P is 4 or 16)
        rhs = rhs_shared if shared else p_ref[p]
        # bf16 MXU operands, f32 accumulator.
        ys.append(jnp.dot(w_ref[p], rhs, preferred_element_type=jnp.float32))

    if use_bn:
        # Training-mode BatchNorm2d: per-channel stats over (N, H, W) == all phases x
        # all rows here; biased variance, eps=1e-5. Epilogue math kept in f32 (v5e).
        cnt = float(n_phase * rows)
        ssum = jnp.sum(ys[0], axis=1, keepdims=True)
        for y in ys[1:]:
            ssum = ssum + jnp.sum(y, axis=1, keepdims=True)
        mean = ssum * (1.0 / cnt)
        vsum = jnp.sum(jnp.square(ys[0] - mean), axis=1, keepdims=True)
        for y in ys[1:]:
            vsum = vsum + jnp.sum(jnp.square(y - mean), axis=1, keepdims=True)
        var = vsum * (1.0 / cnt)
        scale = g_ref[...] * lax.rsqrt(var + EPS)
        shift = b_ref[...] - mean * scale
        ys = [y * scale + shift for y in ys]

    if act == "relu":
        ys = [jnp.maximum(y, 0.0) for y in ys]
    elif act == "tanh":
        ys = [jnp.tanh(y) for y in ys]

    for p in range(n_phase):
        o_ref[p] = ys[p].astype(o_ref.dtype)


def phase_matmul_bn_act(patches, w_mat, gamma, beta, *, use_bn, act, out_dtype):
    n_phase, cout, _ = w_mat.shape
    rows = patches.shape[-1]
    kernel = functools.partial(_phase_matmul_bn_act_kernel, use_bn=use_bn, act=act)
    # Everything is tiny at these shapes, so each array is a single whole-resident
    # VMEM block (no grid) -> one launch per layer, matmul/BN/act fully fused.
    # TODO(synk): for large batches, grid over `rows` with a two-pass BN
    # (gridded matmul+stats kernel, then gridded normalize+act) so the call
    # pipelines / megacore-shards on v7x and the VMEM footprint stays bounded.
    return pl.pallas_call(
        kernel,
        out_shape=jax.ShapeDtypeStruct((n_phase, cout, rows), out_dtype),
        in_specs=[pl.BlockSpec(memory_space=pltpu.MemorySpace.VMEM)] * 4,
        out_specs=pl.BlockSpec(memory_space=pltpu.MemorySpace.VMEM),
    )(patches, w_mat, gamma, beta)


# ----------------------------------------------------------------------------
# Glue: sub-pixel (phase) im2col for ConvTranspose2d(k=4, stride=2, pad=1).
# Output phase (dy,dx) is a 2x2 correlation on the un-dilated input:
#   out[2i+dy, 2j+dx] = sum_{a,b in {0,1}} x[i-1+dy+a, j-1+dx+b] . w_t[:, :, 3-dy-2a, 3-dx-2b]
# ----------------------------------------------------------------------------
def _subpixel_im2col(x):
    """x: (Cin, B, H, W) -> per-phase transposed patches (4, 4*Cin, B*H*W)."""
    C, B, H, W = x.shape
    R = B * H * W
    xp = jnp.pad(x, ((0, 0), (0, 0), (1, 1), (1, 1)))
    # 3x3 neighbourhood slices shared by the 4 phases (9 slices instead of 16 taps).
    sl = {(r, c): xp[:, :, r:r + H, c:c + W].reshape(C, R)
          for r in range(3) for c in range(3)}
    phases = []
    for dy in range(2):
        for dx in range(2):
            taps = [sl[(dy + a, dx + b)] for a in range(2) for b in range(2)]
            phases.append(jnp.concatenate(taps, axis=0))       # (4*Cin, R)
    return jnp.stack(phases, axis=0)                           # (4, 4*Cin, R)


def prepare_params(params):
    """One-time conversion of PyTorch-layout weights to bf16 matmul matrices."""
    ws = params["w"]
    wm_list = []

    # Layer 1: ConvT(nz, C1, 4, 1, 0) on a 1x1 input is a plain matmul per output
    # spatial position s = ky*4+kx:  y_s = w_t[:, :, ky, kx]^T @ z^T.
    w0 = ws[0]                                                  # (nz, C1, 4, 4)
    wm0 = jnp.transpose(w0, (2, 3, 1, 0)).reshape(K * K, w0.shape[1], w0.shape[0])
    wm_list.append(wm0.astype(jnp.bfloat16))                    # (16, C1, nz)

    # Layers 2..5: per phase (dy,dx), concat the four 2x2 taps along the Cin axis.
    for w_t in ws[1:]:
        phases = []
        for dy in range(2):
            for dx in range(2):
                taps = []
                for a in range(2):
                    for b in range(2):
                        taps.append(w_t[:, :, 3 - dy - 2 * a, 3 - dx - 2 * b].T)  # (Cout, Cin)
                phases.append(jnp.concatenate(taps, axis=1))    # (Cout, 4*Cin)
        wm_list.append(jnp.stack(phases, axis=0).astype(jnp.bfloat16))  # (4, Cout, 4*Cin)

    gammas = [g.reshape(-1, 1).astype(jnp.float32) for g in params["gamma"]]
    betas = [b.reshape(-1, 1).astype(jnp.float32) for b in params["beta"]]
    return {"wm": wm_list, "gamma": gammas, "beta": betas}


def generator_forward(z_nchw, prepped):
    """z_nchw: (B, nz, 1, 1) float32 (PyTorch convention). Returns (B, nc, 64, 64)."""
    B, nz = z_nchw.shape[0], z_nchw.shape[1]
    n_layers = len(prepped["wm"])

    # ---- Layer 1: 1x1 input -> 4x4 output (shared patches across 16 "phases") ----
    zT = z_nchw.reshape(B, nz).T.astype(jnp.bfloat16)[None]     # (1, nz, B)
    wm = prepped["wm"][0]
    cout = wm.shape[1]
    y = phase_matmul_bn_act(zT, wm, prepped["gamma"][0], prepped["beta"][0],
                            use_bn=True, act="relu", out_dtype=jnp.bfloat16)
    # (16, cout, B) -> (cout, B, 4, 4), activations kept channel-first + bf16.
    x = jnp.transpose(y.reshape(K, K, cout, B), (2, 3, 0, 1))
    H = W = K

    # ---- Layers 2..5: stride-2 transposed convs via 4-phase sub-pixel matmuls ----
    for i in range(1, n_layers):
        patches = _subpixel_im2col(x)                           # (4, 4*Cin, B*H*W)
        wm = prepped["wm"][i]
        cout = wm.shape[1]
        last = i == n_layers - 1
        gamma = prepped["gamma"][i] if not last else jnp.ones((cout, 1), jnp.float32)
        beta = prepped["beta"][i] if not last else jnp.zeros((cout, 1), jnp.float32)
        y = phase_matmul_bn_act(
            patches, wm, gamma, beta,
            use_bn=not last,
            act="tanh" if last else "relu",
            out_dtype=jnp.float32 if last else jnp.bfloat16)
        # Interleave the 4 output phases: (4, cout, B*H*W) -> (cout, B, 2H, 2W).
        y = y.reshape(2, 2, cout, B, H, W)
        x = jnp.transpose(y, (2, 3, 4, 0, 5, 1)).reshape(cout, B, 2 * H, 2 * W)
        H, W = 2 * H, 2 * W

    return jnp.transpose(x, (1, 0, 2, 3))                       # (C,B,H,W) -> NCHW


# ----------------------------------------------------------------------------
# Deterministic parameter init (mirrors Generator.init_weights: conv ~ N(0, .02),
# BN gamma ~ N(1, .02), BN beta = 0). ConvTranspose2d layers have bias=False.
# ----------------------------------------------------------------------------
def init_params(key, nz, fm, nc):
    chans = [nz, fm * 8, fm * 4, fm * 2, fm, nc]
    ws, gs, bs = [], [], []
    for i in range(5):
        key, kw, kg = jax.random.split(key, 3)
        ws.append(0.02 * jax.random.normal(kw, (chans[i], chans[i + 1], K, K), jnp.float32))
        if i < 4:  # last layer has no BatchNorm
            gs.append(1.0 + 0.02 * jax.random.normal(kg, (1, chans[i + 1]), jnp.float32))
            bs.append(jnp.zeros((1, chans[i + 1]), jnp.float32))
    return {"w": ws, "gamma": gs, "beta": bs}


# ----------------------------------------------------------------------------
# Pure-JAX reference (lax.conv_general_dilated, f32 HIGHEST) for a correctness check.
# ----------------------------------------------------------------------------
def reference_forward(z_nchw, params):
    x = jnp.transpose(z_nchw, (0, 2, 3, 1))
    n_layers = len(params["w"])
    for i, (s, p) in enumerate(LAYER_CFG):
        w_t = params["w"][i]
        w_conv = jnp.transpose(w_t[:, :, ::-1, ::-1], (2, 3, 0, 1))  # HWIO (flipped)
        pe = K - 1 - p
        y = lax.conv_general_dilated(
            x, w_conv,
            window_strides=(1, 1),
            padding=[(pe, pe), (pe, pe)],
            lhs_dilation=(s, s),
            dimension_numbers=("NHWC", "HWIO", "NHWC"),
            precision=lax.Precision.HIGHEST,
        )
        if i != n_layers - 1:
            mean = jnp.mean(y, axis=(0, 1, 2), keepdims=True)
            var = jnp.mean(jnp.square(y - mean), axis=(0, 1, 2), keepdims=True)
            g = params["gamma"][i].reshape(1, 1, 1, -1)
            b = params["beta"][i].reshape(1, 1, 1, -1)
            y = (y - mean) * lax.rsqrt(var + EPS) * g + b
            y = jnp.maximum(y, 0.0)
        else:
            y = jnp.tanh(y)
        x = y
    return jnp.transpose(x, (0, 3, 1, 2))


if __name__ == "__main__":
    key = jax.random.PRNGKey(0)
    nz, fm, nc, B = 16, 8, 3, 2  # latent_vector_size, feature_map, num_channels, batch
    pkey, zkey = jax.random.split(key)
    params = init_params(pkey, nz, fm, nc)
    prepped = prepare_params(params)
    z = jax.random.normal(zkey, (B, nz, 1, 1), jnp.float32)  # PyTorch-style NCHW latent

    fwd = jax.jit(generator_forward)
    out = jax.block_until_ready(fwd(z, prepped))

    assert out.shape == (B, nc, 64, 64), out.shape
    assert bool(jnp.all(jnp.isfinite(out)))

    ref = reference_forward(z, params)
    max_diff = float(np.max(np.abs(np.asarray(out) - np.asarray(ref))))
    assert np.allclose(np.asarray(out), np.asarray(ref), atol=3e-2, rtol=3e-2), max_diff

    print("KERNEL_OK")
</pallas_src>

<mosaic_0001>
module attributes {stable_mosaic.version = 11 : i64} {
  func.func @_phase_matmul_bn_act_kernel(%arg0: memref<1x16x2xbf16, #tpu.memory_space<vmem>>, %arg1: memref<16x64x16xbf16, #tpu.memory_space<vmem>>, %arg2: memref<64x1xf32, #tpu.memory_space<vmem>>, %arg3: memref<64x1xf32, #tpu.memory_space<vmem>>, %arg4: memref<16x64x2xbf16, #tpu.memory_space<vmem>>) attributes {dimension_semantics = [], scalar_prefetch = 0 : i64, scratch_operands = 0 : i64, tpu.core_type = #tpu.core_type<tc>} {
    %c0 = arith.constant 0 : index
    %c0_0 = arith.constant 0 : index
    %c0_1 = arith.constant 0 : index
    %0 = vector.load %arg0[%c0, %c0_0, %c0_1] : memref<1x16x2xbf16, #tpu.memory_space<vmem>>, vector<1x16x2xbf16>
    %1 = vector.shape_cast %0 : vector<1x16x2xbf16> to vector<16x2xbf16>
    %c0_2 = arith.constant 0 : index
    %c0_3 = arith.constant 0 : index
    %c0_4 = arith.constant 0 : index
    %2 = vector.load %arg1[%c0_2, %c0_3, %c0_4] : memref<16x64x16xbf16, #tpu.memory_space<vmem>>, vector<1x64x16xbf16>
    %3 = vector.shape_cast %2 : vector<1x64x16xbf16> to vector<64x16xbf16>
    %cst = arith.constant dense<0.000000e+00> : vector<64x2xf32>
    %4 = tpu.matmul %3, %1, %cst {dimension_numbers = #tpu.dot_dimension_numbers<[1], [0], [0], [1], [0, 0, 1, 1], [], []>} : vector<64x16xbf16>, vector<16x2xbf16>, vector<64x2xf32> -> vector<64x2xf32>
    %c1 = arith.constant 1 : index
    %c0_5 = arith.constant 0 : index
    %c0_6 = arith.constant 0 : index
    %5 = vector.load %arg1[%c1, %c0_5, %c0_6] : memref<16x64x16xbf16, #tpu.memory_space<vmem>>, vector<1x64x16xbf16>
    %6 = vector.shape_cast %5 : vector<1x64x16xbf16> to vector<64x16xbf16>
    %cst_7 = arith.constant dense<0.000000e+00> : vector<64x2xf32>
    %7 = tpu.matmul %6, %1, %cst_7 {dimension_numbers = #tpu.dot_dimension_numbers<[1], [0], [0], [1], [0, 0, 1, 1], [], []>} : vector<64x16xbf16>, vector<16x2xbf16>, vector<64x2xf32> -> vector<64x2xf32>
    %c2 = arith.constant 2 : index
    %c0_8 = arith.constant 0 : index
    %c0_9 = arith.constant 0 : index
    %8 = vector.load %arg1[%c2, %c0_8, %c0_9] : memref<16x64x16xbf16, #tpu.memory_space<vmem>>, vector<1x64x16xbf16>
    %9 = vector.shape_cast %8 : vector<1x64x16xbf16> to vector<64x16xbf16>
    %cst_10 = arith.constant dense<0.000000e+00> : vector<64x2xf32>
    %10 = tpu.matmul %9, %1, %cst_10 {dimension_numbers = #tpu.dot_dimension_numbers<[1], [0], [0], [1], [0, 0, 1, 1], [], []>} : vector<64x16xbf16>, vector<16x2xbf16>, vector<64x2xf32> -> vector<64x2xf32>
    %c3 = arith.constant 3 : index
    %c0_11 = arith.constant 0 : index
    %c0_12 = arith.constant 0 : index
    %11 = vector.load %arg1[%c3, %c0_11, %c0_12] : memref<16x64x16xbf16, #tpu.memory_space<vmem>>, vector<1x64x16xbf16>
    %12 = vector.shape_cast %11 : vector<1x64x16xbf16> to vector<64x16xbf16>
    %cst_13 = arith.constant dense<0.000000e+00> : vector<64x2xf32>
    %13 = tpu.matmul %12, %1, %cst_13 {dimension_numbers = #tpu.dot_dimension_numbers<[1], [0], [0], [1], [0, 0, 1, 1], [], []>} : vector<64x16xbf16>, vector<16x2xbf16>, vector<64x2xf32> -> vector<64x2xf32>
    %c4 = arith.constant 4 : index
    %c0_14 = arith.constant 0 : index
    %c0_15 = arith.constant 0 : index
    %14 = vector.load %arg1[%c4, %c0_14, %c0_15] : memref<16x64x16xbf16, #tpu.memory_space<vmem>>, vector<1x64x16xbf16>
    %15 = vector.shape_cast %14 : vector<1x64x16xbf16> to vector<64x16xbf16>
    %cst_16 = arith.constant dense<0.000000e+00> : vector<64x2xf32>
    %16 = tpu.matmul %15, %1, %cst_16 {dimension_numbers = #tpu.dot_dimension_numbers<[1], [0], [0], [1], [0, 0, 1, 1], [], []>} : vector<64x16xbf16>, vector<16x2xbf16>, vector<64x2xf32> -> vector<64x2xf32>
    %c5 = arith.constant 5 : index
    %c0_17 = arith.constant 0 : index
    %c0_18 = arith.constant 0 : index
    %17 = vector.load %arg1[%c5, %c0_17, %c0_18] : memref<16x64x16xbf16, #tpu.memory_space<vmem>>, vector<1x64x16xbf16>
    %18 = vector.shape_cast %17 : vector<1x64x16xbf16> to vector<64x16xbf16>
    %cst_19 = arith.constant dense<0.000000e+00> : vector<64x2xf32>
    %19 = tpu.matmul %18, %1, %cst_19 {dimension_numbers = #tpu.dot_dimension_numbers<[1], [0], [0], [1], [0, 0, 1, 1], [], []>} : vector<64x16xbf16>, vector<16x2xbf16>, vector<64x2xf32> -> vector<64x2xf32>
    %c6 = arith.constant 6 : index
    %c0_20 = arith.constant 0 : index
    %c0_21 = arith.constant 0 : index
    %20 = vector.load %arg1[%c6, %c0_20, %c0_21] : memref<16x64x16xbf16, #tpu.memory_space<vmem>>, vector<1x64x16xbf16>
    %21 = vector.shape_cast %20 : vector<1x64x16xbf16> to vector<64x16xbf16>
    %cst_22 = arith.constant dense<0.000000e+00> : vector<64x2xf32>
    %22 = tpu.matmul %21, %1, %cst_22 {dimension_numbers = #tpu.dot_dimension_numbers<[1], [0], [0], [1], [0, 0, 1, 1], [], []>} : vector<64x16xbf16>, vector<16x2xbf16>, vector<64x2xf32> -> vector<64x2xf32>
    %c7 = arith.constant 7 : index
    %c0_23 = arith.constant 0 : index
    %c0_24 = arith.constant 0 : index
    %23 = vector.load %arg1[%c7, %c0_23, %c0_24] : memref<16x64x16xbf16, #tpu.memory_space<vmem>>, vector<1x64x16xbf16>
    %24 = vector.shape_cast %23 : vector<1x64x16xbf16> to vector<64x16xbf16>
    %cst_25 = arith.constant dense<0.000000e+00> : vector<64x2xf32>
    %25 = tpu.matmul %24, %1, %cst_25 {dimension_numbers = #tpu.dot_dimension_numbers<[1], [0], [0], [1], [0, 0, 1, 1], [], []>} : vector<64x16xbf16>, vector<16x2xbf16>, vector<64x2xf32> -> vector<64x2xf32>
    %c8 = arith.constant 8 : index
    %c0_26 = arith.constant 0 : index
    %c0_27 = arith.constant 0 : index
    %26 = vector.load %arg1[%c8, %c0_26, %c0_27] : memref<16x64x16xbf16, #tpu.memory_space<vmem>>, vector<1x64x16xbf16>
    %27 = vector.shape_cast %26 : vector<1x64x16xbf16> to vector<64x16xbf16>
    %cst_28 = arith.constant dense<0.000000e+00> : vector<64x2xf32>
    %28 = tpu.matmul %27, %1, %cst_28 {dimension_numbers = #tpu.dot_dimension_numbers<[1], [0], [0], [1], [0, 0, 1, 1], [], []>} : vector<64x16xbf16>, vector<16x2xbf16>, vector<64x2xf32> -> vector<64x2xf32>
    %c9 = arith.constant 9 : index
    %c0_29 = arith.constant 0 : index
    %c0_30 = arith.constant 0 : index
    %29 = vector.load %arg1[%c9, %c0_29, %c0_30] : memref<16x64x16xbf16, #tpu.memory_space<vmem>>, vector<1x64x16xbf16>
    %30 = vector.shape_cast %29 : vector<1x64x16xbf16> to vector<64x16xbf16>
    %cst_31 = arith.constant dense<0.000000e+00> : vector<64x2xf32>
    %31 = tpu.matmul %30, %1, %cst_31 {dimension_numbers = #tpu.dot_dimension_numbers<[1], [0], [0], [1], [0, 0, 1, 1], [], []>} : vector<64x16xbf16>, vector<16x2xbf16>, vector<64x2xf32> -> vector<64x2xf32>
    %c10 = arith.constant 10 : index
    %c0_32 = arith.constant 0 : index
    %c0_33 = arith.constant 0 : index
    %32 = vector.load %arg1[%c10, %c0_32, %c0_33] : memref<16x64x16xbf16, #tpu.memory_space<vmem>>, vector<1x64x16xbf16>
    %33 = vector.shape_cast %32 : vector<1x64x16xbf16> to vector<64x16xbf16>
    %cst_34 = arith.constant dense<0.000000e+00> : vector<64x2xf32>
    %34 = tpu.matmul %33, %1, %cst_34 {dimension_numbers = #tpu.dot_dimension_numbers<[1], [0], [0], [1], [0, 0, 1, 1], [], []>} : vector<64x16xbf16>, vector<16x2xbf16>, vector<64x2xf32> -> vector<64x2xf32>
    %c11 = arith.constant 11 : index
    %c0_35 = arith.constant 0 : index
    %c0_36 = arith.constant 0 : index
    %35 = vector.load %arg1[%c11, %c0_35, %c0_36] : memref<16x64x16xbf16, #tpu.memory_space<vmem>>, vector<1x64x16xbf16>
    %36 = vector.shape_cast %35 : vector<1x64x16xbf16> to vector<64x16xbf16>
    %cst_37 = arith.constant dense<0.000000e+00> : vector<64x2xf32>
    %37 = tpu.matmul %36, %1, %cst_37 {dimension_numbers = #tpu.dot_dimension_numbers<[1], [0], [0], [1], [0, 0, 1, 1], [], []>} : vector<64x16xbf16>, vector<16x2xbf16>, vector<64x2xf32> -> vector<64x2xf32>
    %c12 = arith.constant 12 : index
    %c0_38 = arith.constant 0 : index
    %c0_39 = arith.constant 0 : index
    %38 = vector.load %arg1[%c12, %c0_38, %c0_39] : memref<16x64x16xbf16, #tpu.memory_space<vmem>>, vector<1x64x16xbf16>
    %39 = vector.shape_cast %38 : vector<1x64x16xbf16> to vector<64x16xbf16>
    %cst_40 = arith.constant dense<0.000000e+00> : vector<64x2xf32>
    %40 = tpu.matmul %39, %1, %cst_40 {dimension_numbers = #tpu.dot_dimension_numbers<[1], [0], [0], [1], [0, 0, 1, 1], [], []>} : vector<64x16xbf16>, vector<16x2xbf16>, vector<64x2xf32> -> vector<64x2xf32>
    %c13 = arith.constant 13 : index
    %c0_41 = arith.constant 0 : index
    %c0_42 = arith.constant 0 : index
    %41 = vector.load %arg1[%c13, %c0_41, %c0_42] : memref<16x64x16xbf16, #tpu.memory_space<vmem>>, vector<1x64x16xbf16>
    %42 = vector.shape_cast %41 : vector<1x64x16xbf16> to vector<64x16xbf16>
    %cst_43 = arith.constant dense<0.000000e+00> : vector<64x2xf32>
    %43 = tpu.matmul %42, %1, %cst_43 {dimension_numbers = #tpu.dot_dimension_numbers<[1], [0], [0], [1], [0, 0, 1, 1], [], []>} : vector<64x16xbf16>, vector<16x2xbf16>, vector<64x2xf32> -> vector<64x2xf32>
    %c14 = arith.constant 14 : index
    %c0_44 = arith.constant 0 : index
    %c0_45 = arith.constant 0 : index
    %44 = vector.load %arg1[%c14, %c0_44, %c0_45] : memref<16x64x16xbf16, #tpu.memory_space<vmem>>, vector<1x64x16xbf16>
    %45 = vector.shape_cast %44 : vector<1x64x16xbf16> to vector<64x16xbf16>
    %cst_46 = arith.constant dense<0.000000e+00> : vector<64x2xf32>
    %46 = tpu.matmul %45, %1, %cst_46 {dimension_numbers = #tpu.dot_dimension_numbers<[1], [0], [0], [1], [0, 0, 1, 1], [], []>} : vector<64x16xbf16>, vector<16x2xbf16>, vector<64x2xf32> -> vector<64x2xf32>
    %c15 = arith.constant 15 : index
    %c0_47 = arith.constant 0 : index
    %c0_48 = arith.constant 0 : index
    %47 = vector.load %arg1[%c15, %c0_47, %c0_48] : memref<16x64x16xbf16, #tpu.memory_space<vmem>>, vector<1x64x16xbf16>
    %48 = vector.shape_cast %47 : vector<1x64x16xbf16> to vector<64x16xbf16>
    %cst_49 = arith.constant dense<0.000000e+00> : vector<64x2xf32>
    %49 = tpu.matmul %48, %1, %cst_49 {dimension_numbers = #tpu.dot_dimension_numbers<[1], [0], [0], [1], [0, 0, 1, 1], [], []>} : vector<64x16xbf16>, vector<16x2xbf16>, vector<64x2xf32> -> vector<64x2xf32>
    %cst_50 = arith.constant dense<0.000000e+00> : vector<64xf32>
    %50 = vector.multi_reduction <add>, %4, %cst_50 [1] : vector<64x2xf32> to vector<64xf32>
    %51 = vector.shape_cast %50 : vector<64xf32> to vector<64x1xf32>
    %cst_51 = arith.constant dense<0.000000e+00> : vector<64xf32>
    %52 = vector.multi_reduction <add>, %7, %cst_51 [1] : vector<64x2xf32> to vector<64xf32>
    %53 = vector.shape_cast %52 : vector<64xf32> to vector<64x1xf32>
    %54 = arith.addf %51, %53 : vector<64x1xf32>
    %cst_52 = arith.constant dense<0.000000e+00> : vector<64xf32>
    %55 = vector.multi_reduction <add>, %10, %cst_52 [1] : vector<64x2xf32> to vector<64xf32>
    %56 = vector.shape_cast %55 : vector<64xf32> to vector<64x1xf32>
    %57 = arith.addf %54, %56 : vector<64x1xf32>
    %cst_53 = arith.constant dense<0.000000e+00> : vector<64xf32>
    %58 = vector.multi_reduction <add>, %13, %cst_53 [1] : vector<64x2xf32> to vector<64xf32>
    %59 = vector.shape_cast %58 : vector<64xf32> to vector<64x1xf32>
    %60 = arith.addf %57, %59 : vector<64x1xf32>
    %cst_54 = arith.constant dense<0.000000e+00> : vector<64xf32>
    %61 = vector.multi_reduction <add>, %16, %cst_54 [1] : vector<64x2xf32> to vector<64xf32>
    %62 = vector.shape_cast %61 : vector<64xf32> to vector<64x1xf32>
    %63 = arith.addf %60, %62 : vector<64x1xf32>
    %cst_55 = arith.constant dense<0.000000e+00> : vector<64xf32>
    %64 = vector.multi_reduction <add>, %19, %cst_55 [1] : vector<64x2xf32> to vector<64xf32>
    %65 = vector.shape_cast %64 : vector<64xf32> to vector<64x1xf32>
    %66 = arith.addf %63, %65 : vector<64x1xf32>
    %cst_56 = arith.constant dense<0.000000e+00> : vector<64xf32>
    %67 = vector.multi_reduction <add>, %22, %cst_56 [1] : vector<64x2xf32> to vector<64xf32>
    %68 = vector.shape_cast %67 : vector<64xf32> to vector<64x1xf32>
    %69 = arith.addf %66, %68 : vector<64x1xf32>
    %cst_57 = arith.constant dense<0.000000e+00> : vector<64xf32>
    %70 = vector.multi_reduction <add>, %25, %cst_57 [1] : vector<64x2xf32> to vector<64xf32>
    %71 = vector.shape_cast %70 : vector<64xf32> to vector<64x1xf32>
    %72 = arith.addf %69, %71 : vector<64x1xf32>
    %cst_58 = arith.constant dense<0.000000e+00> : vector<64xf32>
    %73 = vector.multi_reduction <add>, %28, %cst_58 [1] : vector<64x2xf32> to vector<64xf32>
    %74 = vector.shape_cast %73 : vector<64xf32> to vector<64x1xf32>
    %75 = arith.addf %72, %74 : vector<64x1xf32>
    %cst_59 = arith.constant dense<0.000000e+00> : vector<64xf32>
    %76 = vector.multi_reduction <add>, %31, %cst_59 [1] : vector<64x2xf32> to vector<64xf32>
    %77 = vector.shape_cast %76 : vector<64xf32> to vector<64x1xf32>
    %78 = arith.addf %75, %77 : vector<64x1xf32>
    %cst_60 = arith.constant dense<0.000000e+00> : vector<64xf32>
    %79 = vector.multi_reduction <add>, %34, %cst_60 [1] : vector<64x2xf32> to vector<64xf32>
    %80 = vector.shape_cast %79 : vector<64xf32> to vector<64x1xf32>
    %81 = arith.addf %78, %80 : vector<64x1xf32>
    %cst_61 = arith.constant dense<0.000000e+00> : vector<64xf32>
    %82 = vector.multi_reduction <add>, %37, %cst_61 [1] : vector<64x2xf32> to vector<64xf32>
    %83 = vector.shape_cast %82 : vector<64xf32> to vector<64x1xf32>
    %84 = arith.addf %81, %83 : vector<64x1xf32>
    %cst_62 = arith.constant dense<0.000000e+00> : vector<64xf32>
    %85 = vector.multi_reduction <add>, %40, %cst_62 [1] : vector<64x2xf32> to vector<64xf32>
    %86 = vector.shape_cast %85 : vector<64xf32> to vector<64x1xf32>
    %87 = arith.addf %84, %86 : vector<64x1xf32>
    %cst_63 = arith.constant dense<0.000000e+00> : vector<64xf32>
    %88 = vector.multi_reduction <add>, %43, %cst_63 [1] : vector<64x2xf32> to vector<64xf32>
    %89 = vector.shape_cast %88 : vector<64xf32> to vector<64x1xf32>
    %90 = arith.addf %87, %89 : vector<64x1xf32>
    %cst_64 = arith.constant dense<0.000000e+00> : vector<64xf32>
    %91 = vector.multi_reduction <add>, %46, %cst_64 [1] : vector<64x2xf32> to vector<64xf32>
    %92 = vector.shape_cast %91 : vector<64xf32> to vector<64x1xf32>
    %93 = arith.addf %90, %92 : vector<64x1xf32>
    %cst_65 = arith.constant dense<0.000000e+00> : vector<64xf32>
    %94 = vector.multi_reduction <add>, %49, %cst_65 [1] : vector<64x2xf32> to vector<64xf32>
    %95 = vector.shape_cast %94 : vector<64xf32> to vector<64x1xf32>
    %96 = arith.addf %93, %95 : vector<64x1xf32>
    %cst_66 = arith.constant 3.125000e-02 : f32
    %97 = vector.broadcast %cst_66 : f32 to vector<64x1xf32>
    %98 = arith.mulf %96, %97 : vector<64x1xf32>
    %99 = vector.broadcast %98 : vector<64x1xf32> to vector<64x2xf32>
    %100 = arith.subf %4, %99 : vector<64x2xf32>
    %101 = arith.mulf %100, %100 : vector<64x2xf32>
    %cst_67 = arith.constant dense<0.000000e+00> : vector<64xf32>
    %102 = vector.multi_reduction <add>, %101, %cst_67 [1] : vector<64x2xf32> to vector<64xf32>
    %103 = vector.shape_cast %102 : vector<64xf32> to vector<64x1xf32>
    %104 = vector.broadcast %98 : vector<64x1xf32> to vector<64x2xf32>
    %105 = arith.subf %7, %104 : vector<64x2xf32>
    %106 = arith.mulf %105, %105 : vector<64x2xf32>
    %cst_68 = arith.constant dense<0.000000e+00> : vector<64xf32>
    %107 = vector.multi_reduction <add>, %106, %cst_68 [1] : vector<64x2xf32> to vector<64xf32>
    %108 = vector.shape_cast %107 : vector<64xf32> to vector<64x1xf32>
    %109 = arith.addf %103, %108 : vector<64x1xf32>
    %110 = vector.broadcast %98 : vector<64x1xf32> to vector<64x2xf32>
    %111 = arith.subf %10, %110 : vector<64x2xf32>
    %112 = arith.mulf %111, %111 : vector<64x2xf32>
    %cst_69 = arith.constant dense<0.000000e+00> : vector<64xf32>
    %113 = vector.multi_reduction <add>, %112, %cst_69 [1] : vector<64x2xf32> to vector<64xf32>
    %114 = vector.shape_cast %113 : vector<64xf32> to vector<64x1xf32>
    %115 = arith.addf %109, %114 : vector<64x1xf32>
    %116 = vector.broadcast %98 : vector<64x1xf32> to vector<64x2xf32>
    %117 = arith.subf %13, %116 : vector<64x2xf32>
    %118 = arith.mulf %117, %117 : vector<64x2xf32>
    %cst_70 = arith.constant dense<0.000000e+00> : vector<64xf32>
    %119 = vector.multi_reduction <add>, %118, %cst_70 [1] : vector<64x2xf32> to vector<64xf32>
    %120 = vector.shape_cast %119 : vector<64xf32> to vector<64x1xf32>
    %121 = arith.addf %115, %120 : vector<64x1xf32>
    %122 = vector.broadcast %98 : vector<64x1xf32> to vector<64x2xf32>
    %123 = arith.subf %16, %122 : vector<64x2xf32>
    %124 = arith.mulf %123, %123 : vector<64x2xf32>
    %cst_71 = arith.constant dense<0.000000e+00> : vector<64xf32>
    %125 = vector.multi_reduction <add>, %124, %cst_71 [1] : vector<64x2xf32> to vector<64xf32>
    %126 = vector.shape_cast %125 : vector<64xf32> to vector<64x1xf32>
    %127 = arith.addf %121, %126 : vector<64x1xf32>
    %128 = vector.broadcast %98 : vector<64x1xf32> to vector<64x2xf32>
    %129 = arith.subf %19, %128 : vector<64x2xf32>
    %130 = arith.mulf %129, %129 : vector<64x2xf32>
    %cst_72 = arith.constant dense<0.000000e+00> : vector<64xf32>
    %131 = vector.multi_reduction <add>, %130, %cst_72 [1] : vector<64x2xf32> to vector<64xf32>
    %132 = vector.shape_cast %131 : vector<64xf32> to vector<64x1xf32>
    %133 = arith.addf %127, %132 : vector<64x1xf32>
    %134 = vector.broadcast %98 : vector<64x1xf32> to vector<64x2xf32>
    %135 = arith.subf %22, %134 : vector<64x2xf32>
    %136 = arith.mulf %135, %135 : vector<64x2xf32>
    %cst_73 = arith.constant dense<0.000000e+00> : vector<64xf32>
    %137 = vector.multi_reduction <add>, %136, %cst_73 [1] : vector<64x2xf32> to vector<64xf32>
    %138 = vector.shape_cast %137 : vector<64xf32> to vector<64x1xf32>
    %139 = arith.addf %133, %138 : vector<64x1xf32>
    %140 = vector.broadcast %98 : vector<64x1xf32> to vector<64x2xf32>
    %141 = arith.subf %25, %140 : vector<64x2xf32>
    %142 = arith.mulf %141, %141 : vector<64x2xf32>
    %cst_74 = arith.constant dense<0.000000e+00> : vector<64xf32>
    %143 = vector.multi_reduction <add>, %142, %cst_74 [1] : vector<64x2xf32> to vector<64xf32>
    %144 = vector.shape_cast %143 : vector<64xf32> to vector<64x1xf32>
    %145 = arith.addf %139, %144 : vector<64x1xf32>
    %146 = vector.broadcast %98 : vector<64x1xf32> to vector<64x2xf32>
    %147 = arith.subf %28, %146 : vector<64x2xf32>
    %148 = arith.mulf %147, %147 : vector<64x2xf32>
    %cst_75 = arith.constant dense<0.000000e+00> : vector<64xf32>
    %149 = vector.multi_reduction <add>, %148, %cst_75 [1] : vector<64x2xf32> to vector<64xf32>
    %150 = vector.shape_cast %149 : vector<64xf32> to vector<64x1xf32>
    %151 = arith.addf %145, %150 : vector<64x1xf32>
    %152 = vector.broadcast %98 : vector<64x1xf32> to vector<64x2xf32>
    %153 = arith.subf %31, %152 : vector<64x2xf32>
    %154 = arith.mulf %153, %153 : vector<64x2xf32>
    %cst_76 = arith.constant dense<0.000000e+00> : vector<64xf32>
    %155 = vector.multi_reduction <add>, %154, %cst_76 [1] : vector<64x2xf32> to vector<64xf32>
    %156 = vector.shape_cast %155 : vector<64xf32> to vector<64x1xf32>
    %157 = arith.addf %151, %156 : vector<64x1xf32>
    %158 = vector.broadcast %98 : vector<64x1xf32> to vector<64x2xf32>
    %159 = arith.subf %34, %158 : vector<64x2xf32>
    %160 = arith.mulf %159, %159 : vector<64x2xf32>
    %cst_77 = arith.constant dense<0.000000e+00> : vector<64xf32>
    %161 = vector.multi_reduction <add>, %160, %cst_77 [1] : vector<64x2xf32> to vector<64xf32>
    %162 = vector.shape_cast %161 : vector<64xf32> to vector<64x1xf32>
    %163 = arith.addf %157, %162 : vector<64x1xf32>
    %164 = vector.broadcast %98 : vector<64x1xf32> to vector<64x2xf32>
    %165 = arith.subf %37, %164 : vector<64x2xf32>
    %166 = arith.mulf %165, %165 : vector<64x2xf32>
    %cst_78 = arith.constant dense<0.000000e+00> : vector<64xf32>
    %167 = vector.multi_reduction <add>, %166, %cst_78 [1] : vector<64x2xf32> to vector<64xf32>
    %168 = vector.shape_cast %167 : vector<64xf32> to vector<64x1xf32>
    %169 = arith.addf %163, %168 : vector<64x1xf32>
    %170 = vector.broadcast %98 : vector<64x1xf32> to vector<64x2xf32>
    %171 = arith.subf %40, %170 : vector<64x2xf32>
    %172 = arith.mulf %171, %171 : vector<64x2xf32>
    %cst_79 = arith.constant dense<0.000000e+00> : vector<64xf32>
    %173 = vector.multi_reduction <add>, %172, %cst_79 [1] : vector<64x2xf32> to vector<64xf32>
    %174 = vector.shape_cast %173 : vector<64xf32> to vector<64x1xf32>
    %175 = arith.addf %169, %174 : vector<64x1xf32>
    %176 = vector.broadcast %98 : vector<64x1xf32> to vector<64x2xf32>
    %177 = arith.subf %43, %176 : vector<64x2xf32>
    %178 = arith.mulf %177, %177 : vector<64x2xf32>
    %cst_80 = arith.constant dense<0.000000e+00> : vector<64xf32>
    %179 = vector.multi_reduction <add>, %178, %cst_80 [1] : vector<64x2xf32> to vector<64xf32>
    %180 = vector.shape_cast %179 : vector<64xf32> to vector<64x1xf32>
    %181 = arith.addf %175, %180 : vector<64x1xf32>
    %182 = vector.broadcast %98 : vector<64x1xf32> to vector<64x2xf32>
    %183 = arith.subf %46, %182 : vector<64x2xf32>
    %184 = arith.mulf %183, %183 : vector<64x2xf32>
    %cst_81 = arith.constant dense<0.000000e+00> : vector<64xf32>
    %185 = vector.multi_reduction <add>, %184, %cst_81 [1] : vector<64x2xf32> to vector<64xf32>
    %186 = vector.shape_cast %185 : vector<64xf32> to vector<64x1xf32>
    %187 = arith.addf %181, %186 : vector<64x1xf32>
    %188 = vector.broadcast %98 : vector<64x1xf32> to vector<64x2xf32>
    %189 = arith.subf %49, %188 : vector<64x2xf32>
    %190 = arith.mulf %189, %189 : vector<64x2xf32>
    %cst_82 = arith.constant dense<0.000000e+00> : vector<64xf32>
    %191 = vector.multi_reduction <add>, %190, %cst_82 [1] : vector<64x2xf32> to vector<64xf32>
    %192 = vector.shape_cast %191 : vector<64xf32> to vector<64x1xf32>
    %193 = arith.addf %187, %192 : vector<64x1xf32>
    %cst_83 = arith.constant 3.125000e-02 : f32
    %194 = vector.broadcast %cst_83 : f32 to vector<64x1xf32>
    %195 = arith.mulf %193, %194 : vector<64x1xf32>
    %c0_84 = arith.constant 0 : index
    %c0_85 = arith.constant 0 : index
    %196 = vector.load %arg2[%c0_84, %c0_85] : memref<64x1xf32, #tpu.memory_space<vmem>>, vector<64x1xf32>
    %cst_86 = arith.constant 9.99999974E-6 : f32
    %197 = vector.broadcast %cst_86 : f32 to vector<64x1xf32>
    %198 = arith.addf %195, %197 : vector<64x1xf32>
    %199 = math.rsqrt %198 : vector<64x1xf32>
    %200 = arith.mulf %196, %199 : vector<64x1xf32>
    %c0_87 = arith.constant 0 : index
    %c0_88 = arith.constant 0 : index
    %201 = vector.load %arg3[%c0_87, %c0_88] : memref<64x1xf32, #tpu.memory_space<vmem>>, vector<64x1xf32>
    %202 = arith.mulf %98, %200 : vector<64x1xf32>
    %203 = arith.subf %201, %202 : vector<64x1xf32>
    %204 = vector.broadcast %200 : vector<64x1xf32> to vector<64x2xf32>
    %205 = arith.mulf %4, %204 : vector<64x2xf32>
    %206 = vector.broadcast %203 : vector<64x1xf32> to vector<64x2xf32>
    %207 = arith.addf %205, %206 : vector<64x2xf32>
    %208 = vector.broadcast %200 : vector<64x1xf32> to vector<64x2xf32>
    %209 = arith.mulf %7, %208 : vector<64x2xf32>
    %210 = vector.broadcast %203 : vector<64x1xf32> to vector<64x2xf32>
    %211 = arith.addf %209, %210 : vector<64x2xf32>
    %212 = vector.broadcast %200 : vector<64x1xf32> to vector<64x2xf32>
    %213 = arith.mulf %10, %212 : vector<64x2xf32>
    %214 = vector.broadcast %203 : vector<64x1xf32> to vector<64x2xf32>
    %215 = arith.addf %213, %214 : vector<64x2xf32>
    %216 = vector.broadcast %200 : vector<64x1xf32> to vector<64x2xf32>
    %217 = arith.mulf %13, %216 : vector<64x2xf32>
    %218 = vector.broadcast %203 : vector<64x1xf32> to vector<64x2xf32>
    %219 = arith.addf %217, %218 : vector<64x2xf32>
    %220 = vector.broadcast %200 : vector<64x1xf32> to vector<64x2xf32>
    %221 = arith.mulf %16, %220 : vector<64x2xf32>
    %222 = vector.broadcast %203 : vector<64x1xf32> to vector<64x2xf32>
    %223 = arith.addf %221, %222 : vector<64x2xf32>
    %224 = vector.broadcast %200 : vector<64x1xf32> to vector<64x2xf32>
    %225 = arith.mulf %19, %224 : vector<64x2xf32>
    %226 = vector.broadcast %203 : vector<64x1xf32> to vector<64x2xf32>
    %227 = arith.addf %225, %226 : vector<64x2xf32>
    %228 = vector.broadcast %200 : vector<64x1xf32> to vector<64x2xf32>
    %229 = arith.mulf %22, %228 : vector<64x2xf32>
    %230 = vector.broadcast %203 : vector<64x1xf32> to vector<64x2xf32>
    %231 = arith.addf %229, %230 : vector<64x2xf32>
    %232 = vector.broadcast %200 : vector<64x1xf32> to vector<64x2xf32>
    %233 = arith.mulf %25, %232 : vector<64x2xf32>
    %234 = vector.broadcast %203 : vector<64x1xf32> to vector<64x2xf32>
    %235 = arith.addf %233, %234 : vector<64x2xf32>
    %236 = vector.broadcast %200 : vector<64x1xf32> to vector<64x2xf32>
    %237 = arith.mulf %28, %236 : vector<64x2xf32>
    %238 = vector.broadcast %203 : vector<64x1xf32> to vector<64x2xf32>
    %239 = arith.addf %237, %238 : vector<64x2xf32>
    %240 = vector.broadcast %200 : vector<64x1xf32> to vector<64x2xf32>
    %241 = arith.mulf %31, %240 : vector<64x2xf32>
    %242 = vector.broadcast %203 : vector<64x1xf32> to vector<64x2xf32>
    %243 = arith.addf %241, %242 : vector<64x2xf32>
    %244 = vector.broadcast %200 : vector<64x1xf32> to vector<64x2xf32>
    %245 = arith.mulf %34, %244 : vector<64x2xf32>
    %246 = vector.broadcast %203 : vector<64x1xf32> to vector<64x2xf32>
    %247 = arith.addf %245, %246 : vector<64x2xf32>
    %248 = vector.broadcast %200 : vector<64x1xf32> to vector<64x2xf32>
    %249 = arith.mulf %37, %248 : vector<64x2xf32>
    %250 = vector.broadcast %203 : vector<64x1xf32> to vector<64x2xf32>
    %251 = arith.addf %249, %250 : vector<64x2xf32>
    %252 = vector.broadcast %200 : vector<64x1xf32> to vector<64x2xf32>
    %253 = arith.mulf %40, %252 : vector<64x2xf32>
    %254 = vector.broadcast %203 : vector<64x1xf32> to vector<64x2xf32>
    %255 = arith.addf %253, %254 : vector<64x2xf32>
    %256 = vector.broadcast %200 : vector<64x1xf32> to vector<64x2xf32>
    %257 = arith.mulf %43, %256 : vector<64x2xf32>
    %258 = vector.broadcast %203 : vector<64x1xf32> to vector<64x2xf32>
    %259 = arith.addf %257, %258 : vector<64x2xf32>
    %260 = vector.broadcast %200 : vector<64x1xf32> to vector<64x2xf32>
    %261 = arith.mulf %46, %260 : vector<64x2xf32>
    %262 = vector.broadcast %203 : vector<64x1xf32> to vector<64x2xf32>
    %263 = arith.addf %261, %262 : vector<64x2xf32>
    %264 = vector.broadcast %200 : vector<64x1xf32> to vector<64x2xf32>
    %265 = arith.mulf %49, %264 : vector<64x2xf32>
    %266 = vector.broadcast %203 : vector<64x1xf32> to vector<64x2xf32>
    %267 = arith.addf %265, %266 : vector<64x2xf32>
    %cst_89 = arith.constant 0.000000e+00 : f32
    %268 = vector.broadcast %cst_89 : f32 to vector<64x2xf32>
    %269 = arith.maximumf %207, %268 : vector<64x2xf32>
    %cst_90 = arith.constant 0.000000e+00 : f32
    %270 = vector.broadcast %cst_90 : f32 to vector<64x2xf32>
    %271 = arith.maximumf %211, %270 : vector<64x2xf32>
    %cst_91 = arith.constant 0.000000e+00 : f32
    %272 = vector.broadcast %cst_91 : f32 to vector<64x2xf32>
    %273 = arith.maximumf %215, %272 : vector<64x2xf32>
    %cst_92 = arith.constant 0.000000e+00 : f32
    %274 = vector.broadcast %cst_92 : f32 to vector<64x2xf32>
    %275 = arith.maximumf %219, %274 : vector<64x2xf32>
    %cst_93 = arith.constant 0.000000e+00 : f32
    %276 = vector.broadcast %cst_93 : f32 to vector<64x2xf32>
    %277 = arith.maximumf %223, %276 : vector<64x2xf32>
    %cst_94 = arith.constant 0.000000e+00 : f32
    %278 = vector.broadcast %cst_94 : f32 to vector<64x2xf32>
    %279 = arith.maximumf %227, %278 : vector<64x2xf32>
    %cst_95 = arith.constant 0.000000e+00 : f32
    %280 = vector.broadcast %cst_95 : f32 to vector<64x2xf32>
    %281 = arith.maximumf %231, %280 : vector<64x2xf32>
    %cst_96 = arith.constant 0.000000e+00 : f32
    %282 = vector.broadcast %cst_96 : f32 to vector<64x2xf32>
    %283 = arith.maximumf %235, %282 : vector<64x2xf32>
    %cst_97 = arith.constant 0.000000e+00 : f32
    %284 = vector.broadcast %cst_97 : f32 to vector<64x2xf32>
    %285 = arith.maximumf %239, %284 : vector<64x2xf32>
    %cst_98 = arith.constant 0.000000e+00 : f32
    %286 = vector.broadcast %cst_98 : f32 to vector<64x2xf32>
    %287 = arith.maximumf %243, %286 : vector<64x2xf32>
    %cst_99 = arith.constant 0.000000e+00 : f32
    %288 = vector.broadcast %cst_99 : f32 to vector<64x2xf32>
    %289 = arith.maximumf %247, %288 : vector<64x2xf32>
    %cst_100 = arith.constant 0.000000e+00 : f32
    %290 = vector.broadcast %cst_100 : f32 to vector<64x2xf32>
    %291 = arith.maximumf %251, %290 : vector<64x2xf32>
    %cst_101 = arith.constant 0.000000e+00 : f32
    %292 = vector.broadcast %cst_101 : f32 to vector<64x2xf32>
    %293 = arith.maximumf %255, %292 : vector<64x2xf32>
    %cst_102 = arith.constant 0.000000e+00 : f32
    %294 = vector.broadcast %cst_102 : f32 to vector<64x2xf32>
    %295 = arith.maximumf %259, %294 : vector<64x2xf32>
    %cst_103 = arith.constant 0.000000e+00 : f32
    %296 = vector.broadcast %cst_103 : f32 to vector<64x2xf32>
    %297 = arith.maximumf %263, %296 : vector<64x2xf32>
    %cst_104 = arith.constant 0.000000e+00 : f32
    %298 = vector.broadcast %cst_104 : f32 to vector<64x2xf32>
    %299 = arith.maximumf %267, %298 : vector<64x2xf32>
    %300 = arith.truncf %269 : vector<64x2xf32> to vector<64x2xbf16>
    %c0_105 = arith.constant 0 : index
    %c0_106 = arith.constant 0 : index
    %c0_107 = arith.constant 0 : index
    %301 = vector.load %arg4[%c0_105, %c0_106, %c0_107] : memref<16x64x2xbf16, #tpu.memory_space<vmem>>, vector<1x64x2xbf16>
    %302 = vector.shape_cast %301 : vector<1x64x2xbf16> to vector<64x2xbf16>
    %303 = vector.shape_cast %300 : vector<64x2xbf16> to vector<1x64x2xbf16>
    tpu.vector_store %arg4[%c0_105, %c0_106, %c0_107], %303 {strides = array<i32>} : memref<16x64x2xbf16, #tpu.memory_space<vmem>>, vector<1x64x2xbf16>,
    %304 = arith.truncf %271 : vector<64x2xf32> to vector<64x2xbf16>
    %c1_108 = arith.constant 1 : index
    %c0_109 = arith.constant 0 : index
    %c0_110 = arith.constant 0 : index
    %305 = vector.load %arg4[%c1_108, %c0_109, %c0_110] : memref<16x64x2xbf16, #tpu.memory_space<vmem>>, vector<1x64x2xbf16>
    %306 = vector.shape_cast %305 : vector<1x64x2xbf16> to vector<64x2xbf16>
    %307 = vector.shape_cast %304 : vector<64x2xbf16> to vector<1x64x2xbf16>
    tpu.vector_store %arg4[%c1_108, %c0_109, %c0_110], %307 {strides = array<i32>} : memref<16x64x2xbf16, #tpu.memory_space<vmem>>, vector<1x64x2xbf16>,
    %308 = arith.truncf %273 : vector<64x2xf32> to vector<64x2xbf16>
    %c2_111 = arith.constant 2 : index
    %c0_112 = arith.constant 0 : index
    %c0_113 = arith.constant 0 : index
    %309 = vector.load %arg4[%c2_111, %c0_112, %c0_113] : memref<16x64x2xbf16, #tpu.memory_space<vmem>>, vector<1x64x2xbf16>
    %310 = vector.shape_cast %309 : vector<1x64x2xbf16> to vector<64x2xbf16>
    %311 = vector.shape_cast %308 : vector<64x2xbf16> to vector<1x64x2xbf16>
    tpu.vector_store %arg4[%c2_111, %c0_112, %c0_113], %311 {strides = array<i32>} : memref<16x64x2xbf16, #tpu.memory_space<vmem>>, vector<1x64x2xbf16>,
    %312 = arith.truncf %275 : vector<64x2xf32> to vector<64x2xbf16>
    %c3_114 = arith.constant 3 : index
    %c0_115 = arith.constant 0 : index
    %c0_116 = arith.constant 0 : index
    %313 = vector.load %arg4[%c3_114, %c0_115, %c0_116] : memref<16x64x2xbf16, #tpu.memory_space<vmem>>, vector<1x64x2xbf16>
    %314 = vector.shape_cast %313 : vector<1x64x2xbf16> to vector<64x2xbf16>
    %315 = vector.shape_cast %312 : vector<64x2xbf16> to vector<1x64x2xbf16>
    tpu.vector_store %arg4[%c3_114, %c0_115, %c0_116], %315 {strides = array<i32>} : memref<16x64x2xbf16, #tpu.memory_space<vmem>>, vector<1x64x2xbf16>,
    %316 = arith.truncf %277 : vector<64x2xf32> to vector<64x2xbf16>
    %c4_117 = arith.constant 4 : index
    %c0_118 = arith.constant 0 : index
    %c0_119 = arith.constant 0 : index
    %317 = vector.load %arg4[%c4_117, %c0_118, %c0_119] : memref<16x64x2xbf16, #tpu.memory_space<vmem>>, vector<1x64x2xbf16>
    %318 = vector.shape_cast %317 : vector<1x64x2xbf16> to vector<64x2xbf16>
    %319 = vector.shape_cast %316 : vector<64x2xbf16> to vector<1x64x2xbf16>
    tpu.vector_store %arg4[%c4_117, %c0_118, %c0_119], %319 {strides = array<i32>} : memref<16x64x2xbf16, #tpu.memory_space<vmem>>, vector<1x64x2xbf16>,
    %320 = arith.truncf %279 : vector<64x2xf32> to vector<64x2xbf16>
    %c5_120 = arith.constant 5 : index
    %c0_121 = arith.constant 0 : index
    %c0_122 = arith.constant 0 : index
    %321 = vector.load %arg4[%c5_120, %c0_121, %c0_122] : memref<16x64x2xbf16, #tpu.memory_space<vmem>>, vector<1x64x2xbf16>
    %322 = vector.shape_cast %321 : vector<1x64x2xbf16> to vector<64x2xbf16>
    %323 = vector.shape_cast %320 : vector<64x2xbf16> to vector<1x64x2xbf16>
    tpu.vector_store %arg4[%c5_120, %c0_121, %c0_122], %323 {strides = array<i32>} : memref<16x64x2xbf16, #tpu.memory_space<vmem>>, vector<1x64x2xbf16>,
    %324 = arith.truncf %281 : vector<64x2xf32> to vector<64x2xbf16>
    %c6_123 = arith.constant 6 : index
    %c0_124 = arith.constant 0 : index
    %c0_125 = arith.constant 0 : index
    %325 = vector.load %arg4[%c6_123, %c0_124, %c0_125] : memref<16x64x2xbf16, #tpu.memory_space<vmem>>, vector<1x64x2xbf16>
    %326 = vector.shape_cast %325 : vector<1x64x2xbf16> to vector<64x2xbf16>
    %327 = vector.shape_cast %324 : vector<64x2xbf16> to vector<1x64x2xbf16>
    tpu.vector_store %arg4[%c6_123, %c0_124, %c0_125], %327 {strides = array<i32>} : memref<16x64x2xbf16, #tpu.memory_space<vmem>>, vector<1x64x2xbf16>,
    %328 = arith.truncf %283 : vector<64x2xf32> to vector<64x2xbf16>
    %c7_126 = arith.constant 7 : index
    %c0_127 = arith.constant 0 : index
    %c0_128 = arith.constant 0 : index
    %329 = vector.load %arg4[%c7_126, %c0_127, %c0_128] : memref<16x64x2xbf16, #tpu.memory_space<vmem>>, vector<1x64x2xbf16>
    %330 = vector.shape_cast %329 : vector<1x64x2xbf16> to vector<64x2xbf16>
    %331 = vector.shape_cast %328 : vector<64x2xbf16> to vector<1x64x2xbf16>
    tpu.vector_store %arg4[%c7_126, %c0_127, %c0_128], %331 {strides = array<i32>} : memref<16x64x2xbf16, #tpu.memory_space<vmem>>, vector<1x64x2xbf16>,
    %332 = arith.truncf %285 : vector<64x2xf32> to vector<64x2xbf16>
    %c8_129 = arith.constant 8 : index
    %c0_130 = arith.constant 0 : index
    %c0_131 = arith.constant 0 : index
    %333 = vector.load %arg4[%c8_129, %c0_130, %c0_131] : memref<16x64x2xbf16, #tpu.memory_space<vmem>>, vector<1x64x2xbf16>
    %334 = vector.shape_cast %333 : vector<1x64x2xbf16> to vector<64x2xbf16>
    %335 = vector.shape_cast %332 : vector<64x2xbf16> to vector<1x64x2xbf16>
    tpu.vector_store %arg4[%c8_129, %c0_130, %c0_131], %335 {strides = array<i32>} : memref<16x64x2xbf16, #tpu.memory_space<vmem>>, vector<1x64x2xbf16>,
    %336 = arith.truncf %287 : vector<64x2xf32> to vector<64x2xbf16>
    %c9_132 = arith.constant 9 : index
    %c0_133 = arith.constant 0 : index
    %c0_134 = arith.constant 0 : index
    %337 = vector.load %arg4[%c9_132, %c0_133, %c0_134] : memref<16x64x2xbf16, #tpu.memory_space<vmem>>, vector<1x64x2xbf16>
    %338 = vector.shape_cast %337 : vector<1x64x2xbf16> to vector<64x2xbf16>
    %339 = vector.shape_cast %336 : vector<64x2xbf16> to vector<1x64x2xbf16>
    tpu.vector_store %arg4[%c9_132, %c0_133, %c0_134], %339 {strides = array<i32>} : memref<16x64x2xbf16, #tpu.memory_space<vmem>>, vector<1x64x2xbf16>,
    %340 = arith.truncf %289 : vector<64x2xf32> to vector<64x2xbf16>
    %c10_135 = arith.constant 10 : index
    %c0_136 = arith.constant 0 : index
    %c0_137 = arith.constant 0 : index
    %341 = vector.load %arg4[%c10_135, %c0_136, %c0_137] : memref<16x64x2xbf16, #tpu.memory_space<vmem>>, vector<1x64x2xbf16>
    %342 = vector.shape_cast %341 : vector<1x64x2xbf16> to vector<64x2xbf16>
    %343 = vector.shape_cast %340 : vector<64x2xbf16> to vector<1x64x2xbf16>
    tpu.vector_store %arg4[%c10_135, %c0_136, %c0_137], %343 {strides = array<i32>} : memref<16x64x2xbf16, #tpu.memory_space<vmem>>, vector<1x64x2xbf16>,
    %344 = arith.truncf %291 : vector<64x2xf32> to vector<64x2xbf16>
    %c11_138 = arith.constant 11 : index
    %c0_139 = arith.constant 0 : index
    %c0_140 = arith.constant 0 : index
    %345 = vector.load %arg4[%c11_138, %c0_139, %c0_140] : memref<16x64x2xbf16, #tpu.memory_space<vmem>>, vector<1x64x2xbf16>
    %346 = vector.shape_cast %345 : vector<1x64x2xbf16> to vector<64x2xbf16>
    %347 = vector.shape_cast %344 : vector<64x2xbf16> to vector<1x64x2xbf16>
    tpu.vector_store %arg4[%c11_138, %c0_139, %c0_140], %347 {strides = array<i32>} : memref<16x64x2xbf16, #tpu.memory_space<vmem>>, vector<1x64x2xbf16>,
    %348 = arith.truncf %293 : vector<64x2xf32> to vector<64x2xbf16>
    %c12_141 = arith.constant 12 : index
    %c0_142 = arith.constant 0 : index
    %c0_143 = arith.constant 0 : index
    %349 = vector.load %arg4[%c12_141, %c0_142, %c0_143] : memref<16x64x2xbf16, #tpu.memory_space<vmem>>, vector<1x64x2xbf16>
    %350 = vector.shape_cast %349 : vector<1x64x2xbf16> to vector<64x2xbf16>
    %351 = vector.shape_cast %348 : vector<64x2xbf16> to vector<1x64x2xbf16>
    tpu.vector_store %arg4[%c12_141, %c0_142, %c0_143], %351 {strides = array<i32>} : memref<16x64x2xbf16, #tpu.memory_space<vmem>>, vector<1x64x2xbf16>,
    %352 = arith.truncf %295 : vector<64x2xf32> to vector<64x2xbf16>
    %c13_144 = arith.constant 13 : index
    %c0_145 = arith.constant 0 : index
    %c0_146 = arith.constant 0 : index
    %353 = vector.load %arg4[%c13_144, %c0_145, %c0_146] : memref<16x64x2xbf16, #tpu.memory_space<vmem>>, vector<1x64x2xbf16>
    %354 = vector.shape_cast %353 : vector<1x64x2xbf16> to vector<64x2xbf16>
    %355 = vector.shape_cast %352 : vector<64x2xbf16> to vector<1x64x2xbf16>
    tpu.vector_store %arg4[%c13_144, %c0_145, %c0_146], %355 {strides = array<i32>} : memref<16x64x2xbf16, #tpu.memory_space<vmem>>, vector<1x64x2xbf16>,
    %356 = arith.truncf %297 : vector<64x2xf32> to vector<64x2xbf16>
    %c14_147 = arith.constant 14 : index
    %c0_148 = arith.constant 0 : index
    %c0_149 = arith.constant 0 : index
    %357 = vector.load %arg4[%c14_147, %c0_148, %c0_149] : memref<16x64x2xbf16, #tpu.memory_space<vmem>>, vector<1x64x2xbf16>
    %358 = vector.shape_cast %357 : vector<1x64x2xbf16> to vector<64x2xbf16>
    %359 = vector.shape_cast %356 : vector<64x2xbf16> to vector<1x64x2xbf16>
    tpu.vector_store %arg4[%c14_147, %c0_148, %c0_149], %359 {strides = array<i32>} : memref<16x64x2xbf16, #tpu.memory_space<vmem>>, vector<1x64x2xbf16>,
    %360 = arith.truncf %299 : vector<64x2xf32> to vector<64x2xbf16>
    %c15_150 = arith.constant 15 : index
    %c0_151 = arith.constant 0 : index
    %c0_152 = arith.constant 0 : index
    %361 = vector.load %arg4[%c15_150, %c0_151, %c0_152] : memref<16x64x2xbf16, #tpu.memory_space<vmem>>, vector<1x64x2xbf16>
    %362 = vector.shape_cast %361 : vector<1x64x2xbf16> to vector<64x2xbf16>
    %363 = vector.shape_cast %360 : vector<64x2xbf16> to vector<1x64x2xbf16>
    tpu.vector_store %arg4[%c15_150, %c0_151, %c0_152], %363 {strides = array<i32>} : memref<16x64x2xbf16, #tpu.memory_space<vmem>>, vector<1x64x2xbf16>,
    return
  }
}

module attributes {stable_mosaic.version = 11 : i64} {
  func.func @_phase_matmul_bn_act_kernel(%arg0: memref<4x256x32xbf16, #tpu.memory_space<vmem>>, %arg1: memref<4x32x256xbf16, #tpu.memory_space<vmem>>, %arg2: memref<32x1xf32, #tpu.memory_space<vmem>>, %arg3: memref<32x1xf32, #tpu.memory_space<vmem>>, %arg4: memref<4x32x32xbf16, #tpu.memory_space<vmem>>) attributes {dimension_semantics = [], scalar_prefetch = 0 : i64, scratch_operands = 0 : i64, tpu.core_type = #tpu.core_type<tc>} {
    %c0 = arith.constant 0 : index
    %c0_0 = arith.constant 0 : index
    %c0_1 = arith.constant 0 : index
    %0 = vector.load %arg0[%c0, %c0_0, %c0_1] : memref<4x256x32xbf16, #tpu.memory_space<vmem>>, vector<1x256x32xbf16>
    %1 = vector.shape_cast %0 : vector<1x256x32xbf16> to vector<256x32xbf16>
    %c0_2 = arith.constant 0 : index
    %c0_3 = arith.constant 0 : index
    %c0_4 = arith.constant 0 : index
    %2 = vector.load %arg1[%c0_2, %c0_3, %c0_4] : memref<4x32x256xbf16, #tpu.memory_space<vmem>>, vector<1x32x256xbf16>
    %3 = vector.shape_cast %2 : vector<1x32x256xbf16> to vector<32x256xbf16>
    %cst = arith.constant dense<0.000000e+00> : vector<32x32xf32>
    %4 = tpu.matmul %3, %1, %cst {dimension_numbers = #tpu.dot_dimension_numbers<[1], [0], [0], [1], [0, 0, 1, 1], [], []>} : vector<32x256xbf16>, vector<256x32xbf16>, vector<32x32xf32> -> vector<32x32xf32>
    %c1 = arith.constant 1 : index
    %c0_5 = arith.constant 0 : index
    %c0_6 = arith.constant 0 : index
    %5 = vector.load %arg0[%c1, %c0_5, %c0_6] : memref<4x256x32xbf16, #tpu.memory_space<vmem>>, vector<1x256x32xbf16>
    %6 = vector.shape_cast %5 : vector<1x256x32xbf16> to vector<256x32xbf16>
    %c1_7 = arith.constant 1 : index
    %c0_8 = arith.constant 0 : index
    %c0_9 = arith.constant 0 : index
    %7 = vector.load %arg1[%c1_7, %c0_8, %c0_9] : memref<4x32x256xbf16, #tpu.memory_space<vmem>>, vector<1x32x256xbf16>
    %8 = vector.shape_cast %7 : vector<1x32x256xbf16> to vector<32x256xbf16>
    %cst_10 = arith.constant dense<0.000000e+00> : vector<32x32xf32>
    %9 = tpu.matmul %8, %6, %cst_10 {dimension_numbers = #tpu.dot_dimension_numbers<[1], [0], [0], [1], [0, 0, 1, 1], [], []>} : vector<32x256xbf16>, vector<256x32xbf16>, vector<32x32xf32> -> vector<32x32xf32>
    %c2 = arith.constant 2 : index
    %c0_11 = arith.constant 0 : index
    %c0_12 = arith.constant 0 : index
    %10 = vector.load %arg0[%c2, %c0_11, %c0_12] : memref<4x256x32xbf16, #tpu.memory_space<vmem>>, vector<1x256x32xbf16>
    %11 = vector.shape_cast %10 : vector<1x256x32xbf16> to vector<256x32xbf16>
    %c2_13 = arith.constant 2 : index
    %c0_14 = arith.constant 0 : index
    %c0_15 = arith.constant 0 : index
    %12 = vector.load %arg1[%c2_13, %c0_14, %c0_15] : memref<4x32x256xbf16, #tpu.memory_space<vmem>>, vector<1x32x256xbf16>
    %13 = vector.shape_cast %12 : vector<1x32x256xbf16> to vector<32x256xbf16>
    %cst_16 = arith.constant dense<0.000000e+00> : vector<32x32xf32>
    %14 = tpu.matmul %13, %11, %cst_16 {dimension_numbers = #tpu.dot_dimension_numbers<[1], [0], [0], [1], [0, 0, 1, 1], [], []>} : vector<32x256xbf16>, vector<256x32xbf16>, vector<32x32xf32> -> vector<32x32xf32>
    %c3 = arith.constant 3 : index
    %c0_17 = arith.constant 0 : index
    %c0_18 = arith.constant 0 : index
    %15 = vector.load %arg0[%c3, %c0_17, %c0_18] : memref<4x256x32xbf16, #tpu.memory_space<vmem>>, vector<1x256x32xbf16>
    %16 = vector.shape_cast %15 : vector<1x256x32xbf16> to vector<256x32xbf16>
    %c3_19 = arith.constant 3 : index
    %c0_20 = arith.constant 0 : index
    %c0_21 = arith.constant 0 : index
    %17 = vector.load %arg1[%c3_19, %c0_20, %c0_21] : memref<4x32x256xbf16, #tpu.memory_space<vmem>>, vector<1x32x256xbf16>
    %18 = vector.shape_cast %17 : vector<1x32x256xbf16> to vector<32x256xbf16>
    %cst_22 = arith.constant dense<0.000000e+00> : vector<32x32xf32>
    %19 = tpu.matmul %18, %16, %cst_22 {dimension_numbers = #tpu.dot_dimension_numbers<[1], [0], [0], [1], [0, 0, 1, 1], [], []>} : vector<32x256xbf16>, vector<256x32xbf16>, vector<32x32xf32> -> vector<32x32xf32>
    %cst_23 = arith.constant dense<0.000000e+00> : vector<32xf32>
    %20 = vector.multi_reduction <add>, %4, %cst_23 [1] : vector<32x32xf32> to vector<32xf32>
    %21 = vector.shape_cast %20 : vector<32xf32> to vector<32x1xf32>
    %cst_24 = arith.constant dense<0.000000e+00> : vector<32xf32>
    %22 = vector.multi_reduction <add>, %9, %cst_24 [1] : vector<32x32xf32> to vector<32xf32>
    %23 = vector.shape_cast %22 : vector<32xf32> to vector<32x1xf32>
    %24 = arith.addf %21, %23 : vector<32x1xf32>
    %cst_25 = arith.constant dense<0.000000e+00> : vector<32xf32>
    %25 = vector.multi_reduction <add>, %14, %cst_25 [1] : vector<32x32xf32> to vector<32xf32>
    %26 = vector.shape_cast %25 : vector<32xf32> to vector<32x1xf32>
    %27 = arith.addf %24, %26 : vector<32x1xf32>
    %cst_26 = arith.constant dense<0.000000e+00> : vector<32xf32>
    %28 = vector.multi_reduction <add>, %19, %cst_26 [1] : vector<32x32xf32> to vector<32xf32>
    %29 = vector.shape_cast %28 : vector<32xf32> to vector<32x1xf32>
    %30 = arith.addf %27, %29 : vector<32x1xf32>
    %cst_27 = arith.constant 7.812500e-03 : f32
    %31 = vector.broadcast %cst_27 : f32 to vector<32x1xf32>
    %32 = arith.mulf %30, %31 : vector<32x1xf32>
    %33 = vector.broadcast %32 : vector<32x1xf32> to vector<32x32xf32>
    %34 = arith.subf %4, %33 : vector<32x32xf32>
    %35 = arith.mulf %34, %34 : vector<32x32xf32>
    %cst_28 = arith.constant dense<0.000000e+00> : vector<32xf32>
    %36 = vector.multi_reduction <add>, %35, %cst_28 [1] : vector<32x32xf32> to vector<32xf32>
    %37 = vector.shape_cast %36 : vector<32xf32> to vector<32x1xf32>
    %38 = vector.broadcast %32 : vector<32x1xf32> to vector<32x32xf32>
    %39 = arith.subf %9, %38 : vector<32x32xf32>
    %40 = arith.mulf %39, %39 : vector<32x32xf32>
    %cst_29 = arith.constant dense<0.000000e+00> : vector<32xf32>
    %41 = vector.multi_reduction <add>, %40, %cst_29 [1] : vector<32x32xf32> to vector<32xf32>
    %42 = vector.shape_cast %41 : vector<32xf32> to vector<32x1xf32>
    %43 = arith.addf %37, %42 : vector<32x1xf32>
    %44 = vector.broadcast %32 : vector<32x1xf32> to vector<32x32xf32>
    %45 = arith.subf %14, %44 : vector<32x32xf32>
    %46 = arith.mulf %45, %45 : vector<32x32xf32>
    %cst_30 = arith.constant dense<0.000000e+00> : vector<32xf32>
    %47 = vector.multi_reduction <add>, %46, %cst_30 [1] : vector<32x32xf32> to vector<32xf32>
    %48 = vector.shape_cast %47 : vector<32xf32> to vector<32x1xf32>
    %49 = arith.addf %43, %48 : vector<32x1xf32>
    %50 = vector.broadcast %32 : vector<32x1xf32> to vector<32x32xf32>
    %51 = arith.subf %19, %50 : vector<32x32xf32>
    %52 = arith.mulf %51, %51 : vector<32x32xf32>
    %cst_31 = arith.constant dense<0.000000e+00> : vector<32xf32>
    %53 = vector.multi_reduction <add>, %52, %cst_31 [1] : vector<32x32xf32> to vector<32xf32>
    %54 = vector.shape_cast %53 : vector<32xf32> to vector<32x1xf32>
    %55 = arith.addf %49, %54 : vector<32x1xf32>
    %cst_32 = arith.constant 7.812500e-03 : f32
    %56 = vector.broadcast %cst_32 : f32 to vector<32x1xf32>
    %57 = arith.mulf %55, %56 : vector<32x1xf32>
    %c0_33 = arith.constant 0 : index
    %c0_34 = arith.constant 0 : index
    %58 = vector.load %arg2[%c0_33, %c0_34] : memref<32x1xf32, #tpu.memory_space<vmem>>, vector<32x1xf32>
    %cst_35 = arith.constant 9.99999974E-6 : f32
    %59 = vector.broadcast %cst_35 : f32 to vector<32x1xf32>
    %60 = arith.addf %57, %59 : vector<32x1xf32>
    %61 = math.rsqrt %60 : vector<32x1xf32>
    %62 = arith.mulf %58, %61 : vector<32x1xf32>
    %c0_36 = arith.constant 0 : index
    %c0_37 = arith.constant 0 : index
    %63 = vector.load %arg3[%c0_36, %c0_37] : memref<32x1xf32, #tpu.memory_space<vmem>>, vector<32x1xf32>
    %64 = arith.mulf %32, %62 : vector<32x1xf32>
    %65 = arith.subf %63, %64 : vector<32x1xf32>
    %66 = vector.broadcast %62 : vector<32x1xf32> to vector<32x32xf32>
    %67 = arith.mulf %4, %66 : vector<32x32xf32>
    %68 = vector.broadcast %65 : vector<32x1xf32> to vector<32x32xf32>
    %69 = arith.addf %67, %68 : vector<32x32xf32>
    %70 = vector.broadcast %62 : vector<32x1xf32> to vector<32x32xf32>
    %71 = arith.mulf %9, %70 : vector<32x32xf32>
    %72 = vector.broadcast %65 : vector<32x1xf32> to vector<32x32xf32>
    %73 = arith.addf %71, %72 : vector<32x32xf32>
    %74 = vector.broadcast %62 : vector<32x1xf32> to vector<32x32xf32>
    %75 = arith.mulf %14, %74 : vector<32x32xf32>
    %76 = vector.broadcast %65 : vector<32x1xf32> to vector<32x32xf32>
    %77 = arith.addf %75, %76 : vector<32x32xf32>
    %78 = vector.broadcast %62 : vector<32x1xf32> to vector<32x32xf32>
    %79 = arith.mulf %19, %78 : vector<32x32xf32>
    %80 = vector.broadcast %65 : vector<32x1xf32> to vector<32x32xf32>
    %81 = arith.addf %79, %80 : vector<32x32xf32>
    %cst_38 = arith.constant 0.000000e+00 : f32
    %82 = vector.broadcast %cst_38 : f32 to vector<32x32xf32>
    %83 = arith.maximumf %69, %82 : vector<32x32xf32>
    %cst_39 = arith.constant 0.000000e+00 : f32
    %84 = vector.broadcast %cst_39 : f32 to vector<32x32xf32>
    %85 = arith.maximumf %73, %84 : vector<32x32xf32>
    %cst_40 = arith.constant 0.000000e+00 : f32
    %86 = vector.broadcast %cst_40 : f32 to vector<32x32xf32>
    %87 = arith.maximumf %77, %86 : vector<32x32xf32>
    %cst_41 = arith.constant 0.000000e+00 : f32
    %88 = vector.broadcast %cst_41 : f32 to vector<32x32xf32>
    %89 = arith.maximumf %81, %88 : vector<32x32xf32>
    %90 = arith.truncf %83 : vector<32x32xf32> to vector<32x32xbf16>
    %c0_42 = arith.constant 0 : index
    %c0_43 = arith.constant 0 : index
    %c0_44 = arith.constant 0 : index
    %91 = vector.load %arg4[%c0_42, %c0_43, %c0_44] : memref<4x32x32xbf16, #tpu.memory_space<vmem>>, vector<1x32x32xbf16>
    %92 = vector.shape_cast %91 : vector<1x32x32xbf16> to vector<32x32xbf16>
    %93 = vector.shape_cast %90 : vector<32x32xbf16> to vector<1x32x32xbf16>
    tpu.vector_store %arg4[%c0_42, %c0_43, %c0_44], %93 {strides = array<i32>} : memref<4x32x32xbf16, #tpu.memory_space<vmem>>, vector<1x32x32xbf16>,
    %94 = arith.truncf %85 : vector<32x32xf32> to vector<32x32xbf16>
    %c1_45 = arith.constant 1 : index
    %c0_46 = arith.constant 0 : index
    %c0_47 = arith.constant 0 : index
    %95 = vector.load %arg4[%c1_45, %c0_46, %c0_47] : memref<4x32x32xbf16, #tpu.memory_space<vmem>>, vector<1x32x32xbf16>
    %96 = vector.shape_cast %95 : vector<1x32x32xbf16> to vector<32x32xbf16>
    %97 = vector.shape_cast %94 : vector<32x32xbf16> to vector<1x32x32xbf16>
    tpu.vector_store %arg4[%c1_45, %c0_46, %c0_47], %97 {strides = array<i32>} : memref<4x32x32xbf16, #tpu.memory_space<vmem>>, vector<1x32x32xbf16>,
    %98 = arith.truncf %87 : vector<32x32xf32> to vector<32x32xbf16>
    %c2_48 = arith.constant 2 : index
    %c0_49 = arith.constant 0 : index
    %c0_50 = arith.constant 0 : index
    %99 = vector.load %arg4[%c2_48, %c0_49, %c0_50] : memref<4x32x32xbf16, #tpu.memory_space<vmem>>, vector<1x32x32xbf16>
    %100 = vector.shape_cast %99 : vector<1x32x32xbf16> to vector<32x32xbf16>
    %101 = vector.shape_cast %98 : vector<32x32xbf16> to vector<1x32x32xbf16>
    tpu.vector_store %arg4[%c2_48, %c0_49, %c0_50], %101 {strides = array<i32>} : memref<4x32x32xbf16, #tpu.memory_space<vmem>>, vector<1x32x32xbf16>,
    %102 = arith.truncf %89 : vector<32x32xf32> to vector<32x32xbf16>
    %c3_51 = arith.constant 3 : index
    %c0_52 = arith.constant 0 : index
    %c0_53 = arith.constant 0 : index
    %103 = vector.load %arg4[%c3_51, %c0_52, %c0_53] : memref<4x32x32xbf16, #tpu.memory_space<vmem>>, vector<1x32x32xbf16>
    %104 = vector.shape_cast %103 : vector<1x32x32xbf16> to vector<32x32xbf16>
    %105 = vector.shape_cast %102 : vector<32x32xbf16> to vector<1x32x32xbf16>
    tpu.vector_store %arg4[%c3_51, %c0_52, %c0_53], %105 {strides = array<i32>} : memref<4x32x32xbf16, #tpu.memory_space<vmem>>, vector<1x32x32xbf16>,
    return
  }
}

module attributes {stable_mosaic.version = 11 : i64} {
  func.func @_phase_matmul_bn_act_kernel(%arg0: memref<4x128x128xbf16, #tpu.memory_space<vmem>>, %arg1: memref<4x16x128xbf16, #tpu.memory_space<vmem>>, %arg2: memref<16x1xf32, #tpu.memory_space<vmem>>, %arg3: memref<16x1xf32, #tpu.memory_space<vmem>>, %arg4: memref<4x16x128xbf16, #tpu.memory_space<vmem>>) attributes {dimension_semantics = [], scalar_prefetch = 0 : i64, scratch_operands = 0 : i64, tpu.core_type = #tpu.core_type<tc>} {
    %c0 = arith.constant 0 : index
    %c0_0 = arith.constant 0 : index
    %c0_1 = arith.constant 0 : index
    %0 = vector.load %arg0[%c0, %c0_0, %c0_1] : memref<4x128x128xbf16, #tpu.memory_space<vmem>>, vector<1x128x128xbf16>
    %1 = vector.shape_cast %0 : vector<1x128x128xbf16> to vector<128x128xbf16>
    %c0_2 = arith.constant 0 : index
    %c0_3 = arith.constant 0 : index
    %c0_4 = arith.constant 0 : index
    %2 = vector.load %arg1[%c0_2, %c0_3, %c0_4] : memref<4x16x128xbf16, #tpu.memory_space<vmem>>, vector<1x16x128xbf16>
    %3 = vector.shape_cast %2 : vector<1x16x128xbf16> to vector<16x128xbf16>
    %cst = arith.constant dense<0.000000e+00> : vector<16x128xf32>
    %4 = tpu.matmul %3, %1, %cst {dimension_numbers = #tpu.dot_dimension_numbers<[1], [0], [0], [1], [0, 0, 1, 1], [], []>} : vector<16x128xbf16>, vector<128x128xbf16>, vector<16x128xf32> -> vector<16x128xf32>
    %c1 = arith.constant 1 : index
    %c0_5 = arith.constant 0 : index
    %c0_6 = arith.constant 0 : index
    %5 = vector.load %arg0[%c1, %c0_5, %c0_6] : memref<4x128x128xbf16, #tpu.memory_space<vmem>>, vector<1x128x128xbf16>
    %6 = vector.shape_cast %5 : vector<1x128x128xbf16> to vector<128x128xbf16>
    %c1_7 = arith.constant 1 : index
    %c0_8 = arith.constant 0 : index
    %c0_9 = arith.constant 0 : index
    %7 = vector.load %arg1[%c1_7, %c0_8, %c0_9] : memref<4x16x128xbf16, #tpu.memory_space<vmem>>, vector<1x16x128xbf16>
    %8 = vector.shape_cast %7 : vector<1x16x128xbf16> to vector<16x128xbf16>
    %cst_10 = arith.constant dense<0.000000e+00> : vector<16x128xf32>
    %9 = tpu.matmul %8, %6, %cst_10 {dimension_numbers = #tpu.dot_dimension_numbers<[1], [0], [0], [1], [0, 0, 1, 1], [], []>} : vector<16x128xbf16>, vector<128x128xbf16>, vector<16x128xf32> -> vector<16x128xf32>
    %c2 = arith.constant 2 : index
    %c0_11 = arith.constant 0 : index
    %c0_12 = arith.constant 0 : index
    %10 = vector.load %arg0[%c2, %c0_11, %c0_12] : memref<4x128x128xbf16, #tpu.memory_space<vmem>>, vector<1x128x128xbf16>
    %11 = vector.shape_cast %10 : vector<1x128x128xbf16> to vector<128x128xbf16>
    %c2_13 = arith.constant 2 : index
    %c0_14 = arith.constant 0 : index
    %c0_15 = arith.constant 0 : index
    %12 = vector.load %arg1[%c2_13, %c0_14, %c0_15] : memref<4x16x128xbf16, #tpu.memory_space<vmem>>, vector<1x16x128xbf16>
    %13 = vector.shape_cast %12 : vector<1x16x128xbf16> to vector<16x128xbf16>
    %cst_16 = arith.constant dense<0.000000e+00> : vector<16x128xf32>
    %14 = tpu.matmul %13, %11, %cst_16 {dimension_numbers = #tpu.dot_dimension_numbers<[1], [0], [0], [1], [0, 0, 1, 1], [], []>} : vector<16x128xbf16>, vector<128x128xbf16>, vector<16x128xf32> -> vector<16x128xf32>
    %c3 = arith.constant 3 : index
    %c0_17 = arith.constant 0 : index
    %c0_18 = arith.constant 0 : index
    %15 = vector.load %arg0[%c3, %c0_17, %c0_18] : memref<4x128x128xbf16, #tpu.memory_space<vmem>>, vector<1x128x128xbf16>
    %16 = vector.shape_cast %15 : vector<1x128x128xbf16> to vector<128x128xbf16>
    %c3_19 = arith.constant 3 : index
    %c0_20 = arith.constant 0 : index
    %c0_21 = arith.constant 0 : index
    %17 = vector.load %arg1[%c3_19, %c0_20, %c0_21] : memref<4x16x128xbf16, #tpu.memory_space<vmem>>, vector<1x16x128xbf16>
    %18 = vector.shape_cast %17 : vector<1x16x128xbf16> to vector<16x128xbf16>
    %cst_22 = arith.constant dense<0.000000e+00> : vector<16x128xf32>
    %19 = tpu.matmul %18, %16, %cst_22 {dimension_numbers = #tpu.dot_dimension_numbers<[1], [0], [0], [1], [0, 0, 1, 1], [], []>} : vector<16x128xbf16>, vector<128x128xbf16>, vector<16x128xf32> -> vector<16x128xf32>
    %cst_23 = arith.constant dense<0.000000e+00> : vector<16xf32>
    %20 = vector.multi_reduction <add>, %4, %cst_23 [1] : vector<16x128xf32> to vector<16xf32>
    %21 = vector.shape_cast %20 : vector<16xf32> to vector<16x1xf32>
    %cst_24 = arith.constant dense<0.000000e+00> : vector<16xf32>
    %22 = vector.multi_reduction <add>, %9, %cst_24 [1] : vector<16x128xf32> to vector<16xf32>
    %23 = vector.shape_cast %22 : vector<16xf32> to vector<16x1xf32>
    %24 = arith.addf %21, %23 : vector<16x1xf32>
    %cst_25 = arith.constant dense<0.000000e+00> : vector<16xf32>
    %25 = vector.multi_reduction <add>, %14, %cst_25 [1] : vector<16x128xf32> to vector<16xf32>
    %26 = vector.shape_cast %25 : vector<16xf32> to vector<16x1xf32>
    %27 = arith.addf %24, %26 : vector<16x1xf32>
    %cst_26 = arith.constant dense<0.000000e+00> : vector<16xf32>
    %28 = vector.multi_reduction <add>, %19, %cst_26 [1] : vector<16x128xf32> to vector<16xf32>
    %29 = vector.shape_cast %28 : vector<16xf32> to vector<16x1xf32>
    %30 = arith.addf %27, %29 : vector<16x1xf32>
    %cst_27 = arith.constant 0.001953125 : f32
    %31 = vector.broadcast %cst_27 : f32 to vector<16x1xf32>
    %32 = arith.mulf %30, %31 : vector<16x1xf32>
    %33 = vector.broadcast %32 : vector<16x1xf32> to vector<16x128xf32>
    %34 = arith.subf %4, %33 : vector<16x128xf32>
    %35 = arith.mulf %34, %34 : vector<16x128xf32>
    %cst_28 = arith.constant dense<0.000000e+00> : vector<16xf32>
    %36 = vector.multi_reduction <add>, %35, %cst_28 [1] : vector<16x128xf32> to vector<16xf32>
    %37 = vector.shape_cast %36 : vector<16xf32> to vector<16x1xf32>
    %38 = vector.broadcast %32 : vector<16x1xf32> to vector<16x128xf32>
    %39 = arith.subf %9, %38 : vector<16x128xf32>
    %40 = arith.mulf %39, %39 : vector<16x128xf32>
    %cst_29 = arith.constant dense<0.000000e+00> : vector<16xf32>
    %41 = vector.multi_reduction <add>, %40, %cst_29 [1] : vector<16x128xf32> to vector<16xf32>
    %42 = vector.shape_cast %41 : vector<16xf32> to vector<16x1xf32>
    %43 = arith.addf %37, %42 : vector<16x1xf32>
    %44 = vector.broadcast %32 : vector<16x1xf32> to vector<16x128xf32>
    %45 = arith.subf %14, %44 : vector<16x128xf32>
    %46 = arith.mulf %45, %45 : vector<16x128xf32>
    %cst_30 = arith.constant dense<0.000000e+00> : vector<16xf32>
    %47 = vector.multi_reduction <add>, %46, %cst_30 [1] : vector<16x128xf32> to vector<16xf32>
    %48 = vector.shape_cast %47 : vector<16xf32> to vector<16x1xf32>
    %49 = arith.addf %43, %48 : vector<16x1xf32>
    %50 = vector.broadcast %32 : vector<16x1xf32> to vector<16x128xf32>
    %51 = arith.subf %19, %50 : vector<16x128xf32>
    %52 = arith.mulf %51, %51 : vector<16x128xf32>
    %cst_31 = arith.constant dense<0.000000e+00> : vector<16xf32>
    %53 = vector.multi_reduction <add>, %52, %cst_31 [1] : vector<16x128xf32> to vector<16xf32>
    %54 = vector.shape_cast %53 : vector<16xf32> to vector<16x1xf32>
    %55 = arith.addf %49, %54 : vector<16x1xf32>
    %cst_32 = arith.constant 0.001953125 : f32
    %56 = vector.broadcast %cst_32 : f32 to vector<16x1xf32>
    %57 = arith.mulf %55, %56 : vector<16x1xf32>
    %c0_33 = arith.constant 0 : index
    %c0_34 = arith.constant 0 : index
    %58 = vector.load %arg2[%c0_33, %c0_34] : memref<16x1xf32, #tpu.memory_space<vmem>>, vector<16x1xf32>
    %cst_35 = arith.constant 9.99999974E-6 : f32
    %59 = vector.broadcast %cst_35 : f32 to vector<16x1xf32>
    %60 = arith.addf %57, %59 : vector<16x1xf32>
    %61 = math.rsqrt %60 : vector<16x1xf32>
    %62 = arith.mulf %58, %61 : vector<16x1xf32>
    %c0_36 = arith.constant 0 : index
    %c0_37 = arith.constant 0 : index
    %63 = vector.load %arg3[%c0_36, %c0_37] : memref<16x1xf32, #tpu.memory_space<vmem>>, vector<16x1xf32>
    %64 = arith.mulf %32, %62 : vector<16x1xf32>
    %65 = arith.subf %63, %64 : vector<16x1xf32>
    %66 = vector.broadcast %62 : vector<16x1xf32> to vector<16x128xf32>
    %67 = arith.mulf %4, %66 : vector<16x128xf32>
    %68 = vector.broadcast %65 : vector<16x1xf32> to vector<16x128xf32>
    %69 = arith.addf %67, %68 : vector<16x128xf32>
    %70 = vector.broadcast %62 : vector<16x1xf32> to vector<16x128xf32>
    %71 = arith.mulf %9, %70 : vector<16x128xf32>
    %72 = vector.broadcast %65 : vector<16x1xf32> to vector<16x128xf32>
    %73 = arith.addf %71, %72 : vector<16x128xf32>
    %74 = vector.broadcast %62 : vector<16x1xf32> to vector<16x128xf32>
    %75 = arith.mulf %14, %74 : vector<16x128xf32>
    %76 = vector.broadcast %65 : vector<16x1xf32> to vector<16x128xf32>
    %77 = arith.addf %75, %76 : vector<16x128xf32>
    %78 = vector.broadcast %62 : vector<16x1xf32> to vector<16x128xf32>
    %79 = arith.mulf %19, %78 : vector<16x128xf32>
    %80 = vector.broadcast %65 : vector<16x1xf32> to vector<16x128xf32>
    %81 = arith.addf %79, %80 : vector<16x128xf32>
    %cst_38 = arith.constant 0.000000e+00 : f32
    %82 = vector.broadcast %cst_38 : f32 to vector<16x128xf32>
    %83 = arith.maximumf %69, %82 : vector<16x128xf32>
    %cst_39 = arith.constant 0.000000e+00 : f32
    %84 = vector.broadcast %cst_39 : f32 to vector<16x128xf32>
    %85 = arith.maximumf %73, %84 : vector<16x128xf32>
    %cst_40 = arith.constant 0.000000e+00 : f32
    %86 = vector.broadcast %cst_40 : f32 to vector<16x128xf32>
    %87 = arith.maximumf %77, %86 : vector<16x128xf32>
    %cst_41 = arith.constant 0.000000e+00 : f32
    %88 = vector.broadcast %cst_41 : f32 to vector<16x128xf32>
    %89 = arith.maximumf %81, %88 : vector<16x128xf32>
    %90 = arith.truncf %83 : vector<16x128xf32> to vector<16x128xbf16>
    %c0_42 = arith.constant 0 : index
    %c0_43 = arith.constant 0 : index
    %c0_44 = arith.constant 0 : index
    %91 = vector.load %arg4[%c0_42, %c0_43, %c0_44] : memref<4x16x128xbf16, #tpu.memory_space<vmem>>, vector<1x16x128xbf16>
    %92 = vector.shape_cast %91 : vector<1x16x128xbf16> to vector<16x128xbf16>
    %93 = vector.shape_cast %90 : vector<16x128xbf16> to vector<1x16x128xbf16>
    tpu.vector_store %arg4[%c0_42, %c0_43, %c0_44], %93 {strides = array<i32>} : memref<4x16x128xbf16, #tpu.memory_space<vmem>>, vector<1x16x128xbf16>,
    %94 = arith.truncf %85 : vector<16x128xf32> to vector<16x128xbf16>
    %c1_45 = arith.constant 1 : index
    %c0_46 = arith.constant 0 : index
    %c0_47 = arith.constant 0 : index
    %95 = vector.load %arg4[%c1_45, %c0_46, %c0_47] : memref<4x16x128xbf16, #tpu.memory_space<vmem>>, vector<1x16x128xbf16>
    %96 = vector.shape_cast %95 : vector<1x16x128xbf16> to vector<16x128xbf16>
    %97 = vector.shape_cast %94 : vector<16x128xbf16> to vector<1x16x128xbf16>
    tpu.vector_store %arg4[%c1_45, %c0_46, %c0_47], %97 {strides = array<i32>} : memref<4x16x128xbf16, #tpu.memory_space<vmem>>, vector<1x16x128xbf16>,
    %98 = arith.truncf %87 : vector<16x128xf32> to vector<16x128xbf16>
    %c2_48 = arith.constant 2 : index
    %c0_49 = arith.constant 0 : index
    %c0_50 = arith.constant 0 : index
    %99 = vector.load %arg4[%c2_48, %c0_49, %c0_50] : memref<4x16x128xbf16, #tpu.memory_space<vmem>>, vector<1x16x128xbf16>
    %100 = vector.shape_cast %99 : vector<1x16x128xbf16> to vector<16x128xbf16>
    %101 = vector.shape_cast %98 : vector<16x128xbf16> to vector<1x16x128xbf16>
    tpu.vector_store %arg4[%c2_48, %c0_49, %c0_50], %101 {strides = array<i32>} : memref<4x16x128xbf16, #tpu.memory_space<vmem>>, vector<1x16x128xbf16>,
    %102 = arith.truncf %89 : vector<16x128xf32> to vector<16x128xbf16>
    %c3_51 = arith.constant 3 : index
    %c0_52 = arith.constant 0 : index
    %c0_53 = arith.constant 0 : index
    %103 = vector.load %arg4[%c3_51, %c0_52, %c0_53] : memref<4x16x128xbf16, #tpu.memory_space<vmem>>, vector<1x16x128xbf16>
    %104 = vector.shape_cast %103 : vector<1x16x128xbf16> to vector<16x128xbf16>
    %105 = vector.shape_cast %102 : vector<16x128xbf16> to vector<1x16x128xbf16>
    tpu.vector_store %arg4[%c3_51, %c0_52, %c0_53], %105 {strides = array<i32>} : memref<4x16x128xbf16, #tpu.memory_space<vmem>>, vector<1x16x128xbf16>,
    return
  }
}

module attributes {stable_mosaic.version = 11 : i64} {
  func.func @_phase_matmul_bn_act_kernel(%arg0: memref<4x64x512xbf16, #tpu.memory_space<vmem>>, %arg1: memref<4x8x64xbf16, #tpu.memory_space<vmem>>, %arg2: memref<8x1xf32, #tpu.memory_space<vmem>>, %arg3: memref<8x1xf32, #tpu.memory_space<vmem>>, %arg4: memref<4x8x512xbf16, #tpu.memory_space<vmem>>) attributes {dimension_semantics = [], scalar_prefetch = 0 : i64, scratch_operands = 0 : i64, tpu.core_type = #tpu.core_type<tc>} {
    %c0 = arith.constant 0 : index
    %c0_0 = arith.constant 0 : index
    %c0_1 = arith.constant 0 : index
    %0 = vector.load %arg0[%c0, %c0_0, %c0_1] : memref<4x64x512xbf16, #tpu.memory_space<vmem>>, vector<1x64x512xbf16>
    %1 = vector.shape_cast %0 : vector<1x64x512xbf16> to vector<64x512xbf16>
    %c0_2 = arith.constant 0 : index
    %c0_3 = arith.constant 0 : index
    %c0_4 = arith.constant 0 : index
    %2 = vector.load %arg1[%c0_2, %c0_3, %c0_4] : memref<4x8x64xbf16, #tpu.memory_space<vmem>>, vector<1x8x64xbf16>
    %3 = vector.shape_cast %2 : vector<1x8x64xbf16> to vector<8x64xbf16>
    %cst = arith.constant dense<0.000000e+00> : vector<8x512xf32>
    %4 = tpu.matmul %3, %1, %cst {dimension_numbers = #tpu.dot_dimension_numbers<[1], [0], [0], [1], [0, 0, 1, 1], [], []>} : vector<8x64xbf16>, vector<64x512xbf16>, vector<8x512xf32> -> vector<8x512xf32>
    %c1 = arith.constant 1 : index
    %c0_5 = arith.constant 0 : index
    %c0_6 = arith.constant 0 : index
    %5 = vector.load %arg0[%c1, %c0_5, %c0_6] : memref<4x64x512xbf16, #tpu.memory_space<vmem>>, vector<1x64x512xbf16>
    %6 = vector.shape_cast %5 : vector<1x64x512xbf16> to vector<64x512xbf16>
    %c1_7 = arith.constant 1 : index
    %c0_8 = arith.constant 0 : index
    %c0_9 = arith.constant 0 : index
    %7 = vector.load %arg1[%c1_7, %c0_8, %c0_9] : memref<4x8x64xbf16, #tpu.memory_space<vmem>>, vector<1x8x64xbf16>
    %8 = vector.shape_cast %7 : vector<1x8x64xbf16> to vector<8x64xbf16>
    %cst_10 = arith.constant dense<0.000000e+00> : vector<8x512xf32>
    %9 = tpu.matmul %8, %6, %cst_10 {dimension_numbers = #tpu.dot_dimension_numbers<[1], [0], [0], [1], [0, 0, 1, 1], [], []>} : vector<8x64xbf16>, vector<64x512xbf16>, vector<8x512xf32> -> vector<8x512xf32>
    %c2 = arith.constant 2 : index
    %c0_11 = arith.constant 0 : index
    %c0_12 = arith.constant 0 : index
    %10 = vector.load %arg0[%c2, %c0_11, %c0_12] : memref<4x64x512xbf16, #tpu.memory_space<vmem>>, vector<1x64x512xbf16>
    %11 = vector.shape_cast %10 : vector<1x64x512xbf16> to vector<64x512xbf16>
    %c2_13 = arith.constant 2 : index
    %c0_14 = arith.constant 0 : index
    %c0_15 = arith.constant 0 : index
    %12 = vector.load %arg1[%c2_13, %c0_14, %c0_15] : memref<4x8x64xbf16, #tpu.memory_space<vmem>>, vector<1x8x64xbf16>
    %13 = vector.shape_cast %12 : vector<1x8x64xbf16> to vector<8x64xbf16>
    %cst_16 = arith.constant dense<0.000000e+00> : vector<8x512xf32>
    %14 = tpu.matmul %13, %11, %cst_16 {dimension_numbers = #tpu.dot_dimension_numbers<[1], [0], [0], [1], [0, 0, 1, 1], [], []>} : vector<8x64xbf16>, vector<64x512xbf16>, vector<8x512xf32> -> vector<8x512xf32>
    %c3 = arith.constant 3 : index
    %c0_17 = arith.constant 0 : index
    %c0_18 = arith.constant 0 : index
    %15 = vector.load %arg0[%c3, %c0_17, %c0_18] : memref<4x64x512xbf16, #tpu.memory_space<vmem>>, vector<1x64x512xbf16>
    %16 = vector.shape_cast %15 : vector<1x64x512xbf16> to vector<64x512xbf16>
    %c3_19 = arith.constant 3 : index
    %c0_20 = arith.constant 0 : index
    %c0_21 = arith.constant 0 : index
    %17 = vector.load %arg1[%c3_19, %c0_20, %c0_21] : memref<4x8x64xbf16, #tpu.memory_space<vmem>>, vector<1x8x64xbf16>
    %18 = vector.shape_cast %17 : vector<1x8x64xbf16> to vector<8x64xbf16>
    %cst_22 = arith.constant dense<0.000000e+00> : vector<8x512xf32>
    %19 = tpu.matmul %18, %16, %cst_22 {dimension_numbers = #tpu.dot_dimension_numbers<[1], [0], [0], [1], [0, 0, 1, 1], [], []>} : vector<8x64xbf16>, vector<64x512xbf16>, vector<8x512xf32> -> vector<8x512xf32>
    %cst_23 = arith.constant dense<0.000000e+00> : vector<8xf32>
    %20 = vector.multi_reduction <add>, %4, %cst_23 [1] : vector<8x512xf32> to vector<8xf32>
    %21 = vector.shape_cast %20 : vector<8xf32> to vector<8x1xf32>
    %cst_24 = arith.constant dense<0.000000e+00> : vector<8xf32>
    %22 = vector.multi_reduction <add>, %9, %cst_24 [1] : vector<8x512xf32> to vector<8xf32>
    %23 = vector.shape_cast %22 : vector<8xf32> to vector<8x1xf32>
    %24 = arith.addf %21, %23 : vector<8x1xf32>
    %cst_25 = arith.constant dense<0.000000e+00> : vector<8xf32>
    %25 = vector.multi_reduction <add>, %14, %cst_25 [1] : vector<8x512xf32> to vector<8xf32>
    %26 = vector.shape_cast %25 : vector<8xf32> to vector<8x1xf32>
    %27 = arith.addf %24, %26 : vector<8x1xf32>
    %cst_26 = arith.constant dense<0.000000e+00> : vector<8xf32>
    %28 = vector.multi_reduction <add>, %19, %cst_26 [1] : vector<8x512xf32> to vector<8xf32>
    %29 = vector.shape_cast %28 : vector<8xf32> to vector<8x1xf32>
    %30 = arith.addf %27, %29 : vector<8x1xf32>
    %cst_27 = arith.constant 4.8828125E-4 : f32
    %31 = vector.broadcast %cst_27 : f32 to vector<8x1xf32>
    %32 = arith.mulf %30, %31 : vector<8x1xf32>
    %33 = vector.broadcast %32 : vector<8x1xf32> to vector<8x512xf32>
    %34 = arith.subf %4, %33 : vector<8x512xf32>
    %35 = arith.mulf %34, %34 : vector<8x512xf32>
    %cst_28 = arith.constant dense<0.000000e+00> : vector<8xf32>
    %36 = vector.multi_reduction <add>, %35, %cst_28 [1] : vector<8x512xf32> to vector<8xf32>
    %37 = vector.shape_cast %36 : vector<8xf32> to vector<8x1xf32>
    %38 = vector.broadcast %32 : vector<8x1xf32> to vector<8x512xf32>
    %39 = arith.subf %9, %38 : vector<8x512xf32>
    %40 = arith.mulf %39, %39 : vector<8x512xf32>
    %cst_29 = arith.constant dense<0.000000e+00> : vector<8xf32>
    %41 = vector.multi_reduction <add>, %40, %cst_29 [1] : vector<8x512xf32> to vector<8xf32>
    %42 = vector.shape_cast %41 : vector<8xf32> to vector<8x1xf32>
    %43 = arith.addf %37, %42 : vector<8x1xf32>
    %44 = vector.broadcast %32 : vector<8x1xf32> to vector<8x512xf32>
    %45 = arith.subf %14, %44 : vector<8x512xf32>
    %46 = arith.mulf %45, %45 : vector<8x512xf32>
    %cst_30 = arith.constant dense<0.000000e+00> : vector<8xf32>
    %47 = vector.multi_reduction <add>, %46, %cst_30 [1] : vector<8x512xf32> to vector<8xf32>
    %48 = vector.shape_cast %47 : vector<8xf32> to vector<8x1xf32>
    %49 = arith.addf %43, %48 : vector<8x1xf32>
    %50 = vector.broadcast %32 : vector<8x1xf32> to vector<8x512xf32>
    %51 = arith.subf %19, %50 : vector<8x512xf32>
    %52 = arith.mulf %51, %51 : vector<8x512xf32>
    %cst_31 = arith.constant dense<0.000000e+00> : vector<8xf32>
    %53 = vector.multi_reduction <add>, %52, %cst_31 [1] : vector<8x512xf32> to vector<8xf32>
    %54 = vector.shape_cast %53 : vector<8xf32> to vector<8x1xf32>
    %55 = arith.addf %49, %54 : vector<8x1xf32>
    %cst_32 = arith.constant 4.8828125E-4 : f32
    %56 = vector.broadcast %cst_32 : f32 to vector<8x1xf32>
    %57 = arith.mulf %55, %56 : vector<8x1xf32>
    %c0_33 = arith.constant 0 : index
    %c0_34 = arith.constant 0 : index
    %58 = vector.load %arg2[%c0_33, %c0_34] : memref<8x1xf32, #tpu.memory_space<vmem>>, vector<8x1xf32>
    %cst_35 = arith.constant 9.99999974E-6 : f32
    %59 = vector.broadcast %cst_35 : f32 to vector<8x1xf32>
    %60 = arith.addf %57, %59 : vector<8x1xf32>
    %61 = math.rsqrt %60 : vector<8x1xf32>
    %62 = arith.mulf %58, %61 : vector<8x1xf32>
    %c0_36 = arith.constant 0 : index
    %c0_37 = arith.constant 0 : index
    %63 = vector.load %arg3[%c0_36, %c0_37] : memref<8x1xf32, #tpu.memory_space<vmem>>, vector<8x1xf32>
    %64 = arith.mulf %32, %62 : vector<8x1xf32>
    %65 = arith.subf %63, %64 : vector<8x1xf32>
    %66 = vector.broadcast %62 : vector<8x1xf32> to vector<8x512xf32>
    %67 = arith.mulf %4, %66 : vector<8x512xf32>
    %68 = vector.broadcast %65 : vector<8x1xf32> to vector<8x512xf32>
    %69 = arith.addf %67, %68 : vector<8x512xf32>
    %70 = vector.broadcast %62 : vector<8x1xf32> to vector<8x512xf32>
    %71 = arith.mulf %9, %70 : vector<8x512xf32>
    %72 = vector.broadcast %65 : vector<8x1xf32> to vector<8x512xf32>
    %73 = arith.addf %71, %72 : vector<8x512xf32>
    %74 = vector.broadcast %62 : vector<8x1xf32> to vector<8x512xf32>
    %75 = arith.mulf %14, %74 : vector<8x512xf32>
    %76 = vector.broadcast %65 : vector<8x1xf32> to vector<8x512xf32>
    %77 = arith.addf %75, %76 : vector<8x512xf32>
    %78 = vector.broadcast %62 : vector<8x1xf32> to vector<8x512xf32>
    %79 = arith.mulf %19, %78 : vector<8x512xf32>
    %80 = vector.broadcast %65 : vector<8x1xf32> to vector<8x512xf32>
    %81 = arith.addf %79, %80 : vector<8x512xf32>
    %cst_38 = arith.constant 0.000000e+00 : f32
    %82 = vector.broadcast %cst_38 : f32 to vector<8x512xf32>
    %83 = arith.maximumf %69, %82 : vector<8x512xf32>
    %cst_39 = arith.constant 0.000000e+00 : f32
    %84 = vector.broadcast %cst_39 : f32 to vector<8x512xf32>
    %85 = arith.maximumf %73, %84 : vector<8x512xf32>
    %cst_40 = arith.constant 0.000000e+00 : f32
    %86 = vector.broadcast %cst_40 : f32 to vector<8x512xf32>
    %87 = arith.maximumf %77, %86 : vector<8x512xf32>
    %cst_41 = arith.constant 0.000000e+00 : f32
    %88 = vector.broadcast %cst_41 : f32 to vector<8x512xf32>
    %89 = arith.maximumf %81, %88 : vector<8x512xf32>
    %90 = arith.truncf %83 : vector<8x512xf32> to vector<8x512xbf16>
    %c0_42 = arith.constant 0 : index
    %c0_43 = arith.constant 0 : index
    %c0_44 = arith.constant 0 : index
    %91 = vector.load %arg4[%c0_42, %c0_43, %c0_44] : memref<4x8x512xbf16, #tpu.memory_space<vmem>>, vector<1x8x512xbf16>
    %92 = vector.shape_cast %91 : vector<1x8x512xbf16> to vector<8x512xbf16>
    %93 = vector.shape_cast %90 : vector<8x512xbf16> to vector<1x8x512xbf16>
    tpu.vector_store %arg4[%c0_42, %c0_43, %c0_44], %93 {strides = array<i32>} : memref<4x8x512xbf16, #tpu.memory_space<vmem>>, vector<1x8x512xbf16>,
    %94 = arith.truncf %85 : vector<8x512xf32> to vector<8x512xbf16>
    %c1_45 = arith.constant 1 : index
    %c0_46 = arith.constant 0 : index
    %c0_47 = arith.constant 0 : index
    %95 = vector.load %arg4[%c1_45, %c0_46, %c0_47] : memref<4x8x512xbf16, #tpu.memory_space<vmem>>, vector<1x8x512xbf16>
    %96 = vector.shape_cast %95 : vector<1x8x512xbf16> to vector<8x512xbf16>
    %97 = vector.shape_cast %94 : vector<8x512xbf16> to vector<1x8x512xbf16>
    tpu.vector_store %arg4[%c1_45, %c0_46, %c0_47], %97 {strides = array<i32>} : memref<4x8x512xbf16, #tpu.memory_space<vmem>>, vector<1x8x512xbf16>,
    %98 = arith.truncf %87 : vector<8x512xf32> to vector<8x512xbf16>
    %c2_48 = arith.constant 2 : index
    %c0_49 = arith.constant 0 : index
    %c0_50 = arith.constant 0 : index
    %99 = vector.load %arg4[%c2_48, %c0_49, %c0_50] : memref<4x8x512xbf16, #tpu.memory_space<vmem>>, vector<1x8x512xbf16>
    %100 = vector.shape_cast %99 : vector<1x8x512xbf16> to vector<8x512xbf16>
    %101 = vector.shape_cast %98 : vector<8x512xbf16> to vector<1x8x512xbf16>
    tpu.vector_store %arg4[%c2_48, %c0_49, %c0_50], %101 {strides = array<i32>} : memref<4x8x512xbf16, #tpu.memory_space<vmem>>, vector<1x8x512xbf16>,
    %102 = arith.truncf %89 : vector<8x512xf32> to vector<8x512xbf16>
    %c3_51 = arith.constant 3 : index
    %c0_52 = arith.constant 0 : index
    %c0_53 = arith.constant 0 : index
    %103 = vector.load %arg4[%c3_51, %c0_52, %c0_53] : memref<4x8x512xbf16, #tpu.memory_space<vmem>>, vector<1x8x512xbf16>
    %104 = vector.shape_cast %103 : vector<1x8x512xbf16> to vector<8x512xbf16>
    %105 = vector.shape_cast %102 : vector<8x512xbf16> to vector<1x8x512xbf16>
    tpu.vector_store %arg4[%c3_51, %c0_52, %c0_53], %105 {strides = array<i32>} : memref<4x8x512xbf16, #tpu.memory_space<vmem>>, vector<1x8x512xbf16>,
    return
  }
}

module attributes {stable_mosaic.version = 11 : i64} {
  func.func @_phase_matmul_bn_act_kernel(%arg0: memref<4x32x2048xbf16, #tpu.memory_space<vmem>>, %arg1: memref<4x3x32xbf16, #tpu.memory_space<vmem>>, %arg2: memref<3x1xf32, #tpu.memory_space<vmem>>, %arg3: memref<3x1xf32, #tpu.memory_space<vmem>>, %arg4: memref<4x3x2048xf32, #tpu.memory_space<vmem>>) attributes {dimension_semantics = [], scalar_prefetch = 0 : i64, scratch_operands = 0 : i64, tpu.core_type = #tpu.core_type<tc>} {
    %c0 = arith.constant 0 : index
    %c0_0 = arith.constant 0 : index
    %c0_1 = arith.constant 0 : index
    %0 = vector.load %arg0[%c0, %c0_0, %c0_1] : memref<4x32x2048xbf16, #tpu.memory_space<vmem>>, vector<1x32x2048xbf16>
    %1 = vector.shape_cast %0 : vector<1x32x2048xbf16> to vector<32x2048xbf16>
    %c0_2 = arith.constant 0 : index
    %c0_3 = arith.constant 0 : index
    %c0_4 = arith.constant 0 : index
    %2 = vector.load %arg1[%c0_2, %c0_3, %c0_4] : memref<4x3x32xbf16, #tpu.memory_space<vmem>>, vector<1x3x32xbf16>
    %3 = vector.shape_cast %2 : vector<1x3x32xbf16> to vector<3x32xbf16>
    %cst = arith.constant dense<0.000000e+00> : vector<3x2048xf32>
    %4 = tpu.matmul %3, %1, %cst {dimension_numbers = #tpu.dot_dimension_numbers<[1], [0], [0], [1], [0, 0, 1, 1], [], []>} : vector<3x32xbf16>, vector<32x2048xbf16>, vector<3x2048xf32> -> vector<3x2048xf32>
    %c1 = arith.constant 1 : index
    %c0_5 = arith.constant 0 : index
    %c0_6 = arith.constant 0 : index
    %5 = vector.load %arg0[%c1, %c0_5, %c0_6] : memref<4x32x2048xbf16, #tpu.memory_space<vmem>>, vector<1x32x2048xbf16>
    %6 = vector.shape_cast %5 : vector<1x32x2048xbf16> to vector<32x2048xbf16>
    %c1_7 = arith.constant 1 : index
    %c0_8 = arith.constant 0 : index
    %c0_9 = arith.constant 0 : index
    %7 = vector.load %arg1[%c1_7, %c0_8, %c0_9] : memref<4x3x32xbf16, #tpu.memory_space<vmem>>, vector<1x3x32xbf16>
    %8 = vector.shape_cast %7 : vector<1x3x32xbf16> to vector<3x32xbf16>
    %cst_10 = arith.constant dense<0.000000e+00> : vector<3x2048xf32>
    %9 = tpu.matmul %8, %6, %cst_10 {dimension_numbers = #tpu.dot_dimension_numbers<[1], [0], [0], [1], [0, 0, 1, 1], [], []>} : vector<3x32xbf16>, vector<32x2048xbf16>, vector<3x2048xf32> -> vector<3x2048xf32>
    %c2 = arith.constant 2 : index
    %c0_11 = arith.constant 0 : index
    %c0_12 = arith.constant 0 : index
    %10 = vector.load %arg0[%c2, %c0_11, %c0_12] : memref<4x32x2048xbf16, #tpu.memory_space<vmem>>, vector<1x32x2048xbf16>
    %11 = vector.shape_cast %10 : vector<1x32x2048xbf16> to vector<32x2048xbf16>
    %c2_13 = arith.constant 2 : index
    %c0_14 = arith.constant 0 : index
    %c0_15 = arith.constant 0 : index
    %12 = vector.load %arg1[%c2_13, %c0_14, %c0_15] : memref<4x3x32xbf16, #tpu.memory_space<vmem>>, vector<1x3x32xbf16>
    %13 = vector.shape_cast %12 : vector<1x3x32xbf16> to vector<3x32xbf16>
    %cst_16 = arith.constant dense<0.000000e+00> : vector<3x2048xf32>
    %14 = tpu.matmul %13, %11, %cst_16 {dimension_numbers = #tpu.dot_dimension_numbers<[1], [0], [0], [1], [0, 0, 1, 1], [], []>} : vector<3x32xbf16>, vector<32x2048xbf16>, vector<3x2048xf32> -> vector<3x2048xf32>
    %c3 = arith.constant 3 : index
    %c0_17 = arith.constant 0 : index
    %c0_18 = arith.constant 0 : index
    %15 = vector.load %arg0[%c3, %c0_17, %c0_18] : memref<4x32x2048xbf16, #tpu.memory_space<vmem>>, vector<1x32x2048xbf16>
    %16 = vector.shape_cast %15 : vector<1x32x2048xbf16> to vector<32x2048xbf16>
    %c3_19 = arith.constant 3 : index
    %c0_20 = arith.constant 0 : index
    %c0_21 = arith.constant 0 : index
    %17 = vector.load %arg1[%c3_19, %c0_20, %c0_21] : memref<4x3x32xbf16, #tpu.memory_space<vmem>>, vector<1x3x32xbf16>
    %18 = vector.shape_cast %17 : vector<1x3x32xbf16> to vector<3x32xbf16>
    %cst_22 = arith.constant dense<0.000000e+00> : vector<3x2048xf32>
    %19 = tpu.matmul %18, %16, %cst_22 {dimension_numbers = #tpu.dot_dimension_numbers<[1], [0], [0], [1], [0, 0, 1, 1], [], []>} : vector<3x32xbf16>, vector<32x2048xbf16>, vector<3x2048xf32> -> vector<3x2048xf32>
    %20 = math.tanh %4 : vector<3x2048xf32>
    %21 = math.tanh %9 : vector<3x2048xf32>
    %22 = math.tanh %14 : vector<3x2048xf32>
    %23 = math.tanh %19 : vector<3x2048xf32>
    %c0_23 = arith.constant 0 : index
    %c0_24 = arith.constant 0 : index
    %c0_25 = arith.constant 0 : index
    %24 = vector.load %arg4[%c0_23, %c0_24, %c0_25] : memref<4x3x2048xf32, #tpu.memory_space<vmem>>, vector<1x3x2048xf32>
    %25 = vector.shape_cast %24 : vector<1x3x2048xf32> to vector<3x2048xf32>
    %26 = vector.shape_cast %20 : vector<3x2048xf32> to vector<1x3x2048xf32>
    tpu.vector_store %arg4[%c0_23, %c0_24, %c0_25], %26 {strides = array<i32>} : memref<4x3x2048xf32, #tpu.memory_space<vmem>>, vector<1x3x2048xf32>,
    %c1_26 = arith.constant 1 : index
    %c0_27 = arith.constant 0 : index
    %c0_28 = arith.constant 0 : index
    %27 = vector.load %arg4[%c1_26, %c0_27, %c0_28] : memref<4x3x2048xf32, #tpu.memory_space<vmem>>, vector<1x3x2048xf32>
    %28 = vector.shape_cast %27 : vector<1x3x2048xf32> to vector<3x2048xf32>
    %29 = vector.shape_cast %21 : vector<3x2048xf32> to vector<1x3x2048xf32>
    tpu.vector_store %arg4[%c1_26, %c0_27, %c0_28], %29 {strides = array<i32>} : memref<4x3x2048xf32, #tpu.memory_space<vmem>>, vector<1x3x2048xf32>,
    %c2_29 = arith.constant 2 : index
    %c0_30 = arith.constant 0 : index
    %c0_31 = arith.constant 0 : index
    %30 = vector.load %arg4[%c2_29, %c0_30, %c0_31] : memref<4x3x2048xf32, #tpu.memory_space<vmem>>, vector<1x3x2048xf32>
    %31 = vector.shape_cast %30 : vector<1x3x2048xf32> to vector<3x2048xf32>
    %32 = vector.shape_cast %22 : vector<3x2048xf32> to vector<1x3x2048xf32>
    tpu.vector_store %arg4[%c2_29, %c0_30, %c0_31], %32 {strides = array<i32>} : memref<4x3x2048xf32, #tpu.memory_space<vmem>>, vector<1x3x2048xf32>,
    %c3_32 = arith.constant 3 : index
    %c0_33 = arith.constant 0 : index
    %c0_34 = arith.constant 0 : index
    %33 = vector.load %arg4[%c3_32, %c0_33, %c0_34] : memref<4x3x2048xf32, #tpu.memory_space<vmem>>, vector<1x3x2048xf32>
    %34 = vector.shape_cast %33 : vector<1x3x2048xf32> to vector<3x2048xf32>
    %35 = vector.shape_cast %23 : vector<3x2048xf32> to vector<1x3x2048xf32>
    tpu.vector_store %arg4[%c3_32, %c0_33, %c0_34], %35 {strides = array<i32>} : memref<4x3x2048xf32, #tpu.memory_space<vmem>>, vector<1x3x2048xf32>,
    return
  }
}

</mosaic_0001>

<llo_original>
// kernel: generator_forward.6
$region0: #{generator_forward.6}
  #allocation0 [shape = 'u32[]', space=smem, size = 0x4, offset = 0x4, fixed_abs, tag = 'smem constant byte address 0x4 - core index']
  #allocation1 [shape = 'u32[144,128]{1,0:T(1,128)}', space=vmem, size = 0x12000, scoped, tag = 'internal scratch']
  %s0 = inlined_call_operand.vmem [shape: bf16[4,256,32], index: 0, kind: input, shape index: {}]
  %s1 = inlined_call_operand.hbm [shape: bf16[4,32,256], index: 1, kind: input, shape index: {}]
  %s2 = inlined_call_operand.vmem [shape: f32[32,1], index: 2, kind: input, shape index: {}]
  %s3 = inlined_call_operand.vmem [shape: f32[32,1], index: 3, kind: input, shape index: {}]
  %s4 = inlined_call_operand.vmem [shape: bf16[4,32,32], index: 4, kind: output, shape index: {}]
  %s5 = sld [smem:[#allocation0]]
  $region30: #{generator_forward.6} parent=0
    _
  %s7 = ssub.s32 1, %s5
  %s8 = scalar_select 0, %s7, %s5
  $region1: #{generator_forward.6} parent=0
    #allocation2 [shape = 'u8[65536]{0}', space=vmem, size = 0x10000, scoped, tag = 'input window, operand 1, single buffered']
    #allocation3 [shape = 's32[1]{0}', space=sflag, size = 0x4, scoped, tag = 'scoped memory for generator_forward.6']
    %9 = vsyncpa [#allocation3], 0
    // Predicated region
    $region2: #{generator_forward.6} parent=1 // pred_check
      _
    $region3: #{generator_forward.6} parent=1 // pred_check_branch
      %11 = sbr.rel (0) target = $region5
    $region4: #{generator_forward.6} parent=1 // pred_region
      _
    $region5: #{generator_forward.6} parent=1 // pred_fallthru
      _
    // Predicated region
    $region6: #{generator_forward.6} parent=1 // pred_check
      _
    $region7: #{generator_forward.6} parent=1 // pred_check_branch
      %13 = sbr.rel (0) target = $region9
    $region8: #{generator_forward.6} parent=1 // pred_region
      %s15 = ssub.s32 2048, 2048
      %16 = vsyncadd [#allocation3], %s15
      %s17 = sshll.u32 [#allocation2], 4
      %s18 = int_to_ptr.vmem [resolvable:$true] %s17
      %23 = dma.hbm_to_vmem [thread:$0]  %s1, 2048, %s18, [#allocation3], 128, 128, 8
    $region9: #{generator_forward.6} parent=1 // pred_fallthru
      _
    // Predicated region
    $region10: #{generator_forward.6} parent=1 // pred_check
      _
    $region11: #{generator_forward.6} parent=1 // pred_check_branch
      %25 = sbr.rel (0) target = $region13
    $region12: #{generator_forward.6} parent=1 // pred_region
      _
    $region13: #{generator_forward.6} parent=1 // pred_fallthru
      _
    // Predicated region
    $region14: #{generator_forward.6} parent=1 // pred_check
      _
    $region15: #{generator_forward.6} parent=1 // pred_check_branch
      %27 = sbr.rel (0) target = $region17
    $region16: #{generator_forward.6} parent=1 // pred_region
      _
    $region17: #{generator_forward.6} parent=1 // pred_fallthru
      _
    // Predicated region
    $region18: #{generator_forward.6} parent=1 // pred_check
      _
    $region19: #{generator_forward.6} parent=1 // pred_check_branch
      %29 = sbr.rel (0) target = $region21
    $region20: #{generator_forward.6} parent=1 // pred_region
      %30 = dma.done [#allocation3], 2048
    $region21: #{generator_forward.6} parent=1 // pred_fallthru
      _
    %v32 = vld [vmem:[%s0] sm:$0xf]
    %v33 = vld [vmem:[%s0 + $0x4] sm:$0xf]
    %v34 = vld [vmem:[%s0 + $0x8] sm:$0xf]
    %v35 = vld [vmem:[%s0 + $0xc] sm:$0xf]
    %v36 = vld [vmem:[%s0 + $0x10] sm:$0xf]
    %v37 = vld [vmem:[%s0 + $0x14] sm:$0xf]
    %v38 = vld [vmem:[%s0 + $0x18] sm:$0xf]
    %v39 = vld [vmem:[%s0 + $0x1c] sm:$0xf]
    %v40 = vld [vmem:[%s0 + $0x20] sm:$0xf]
    %v41 = vld [vmem:[%s0 + $0x24] sm:$0xf]
    %v42 = vld [vmem:[%s0 + $0x28] sm:$0xf]
    %v43 = vld [vmem:[%s0 + $0x2c] sm:$0xf]
    %v44 = vld [vmem:[%s0 + $0x30] sm:$0xf]
    %v45 = vld [vmem:[%s0 + $0x34] sm:$0xf]
    %v46 = vld [vmem:[%s0 + $0x38] sm:$0xf]
    %v47 = vld [vmem:[%s0 + $0x3c] sm:$0xf]
    %v48 = vld [vmem:[%s0 + $0x40] sm:$0xf]
    %v49 = vld [vmem:[%s0 + $0x44] sm:$0xf]
    %v50 = vld [vmem:[%s0 + $0x48] sm:$0xf]
    %v51 = vld [vmem:[%s0 + $0x4c] sm:$0xf]
    %v52 = vld [vmem:[%s0 + $0x50] sm:$0xf]
    %v53 = vld [vmem:[%s0 + $0x54] sm:$0xf]
    %v54 = vld [vmem:[%s0 + $0x58] sm:$0xf]
    %v55 = vld [vmem:[%s0 + $0x5c] sm:$0xf]
    %v56 = vld [vmem:[%s0 + $0x60] sm:$0xf]
    %v57 = vld [vmem:[%s0 + $0x64] sm:$0xf]
    %v58 = vld [vmem:[%s0 + $0x68] sm:$0xf]
    %v59 = vld [vmem:[%s0 + $0x6c] sm:$0xf]
    %v60 = vld [vmem:[%s0 + $0x70] sm:$0xf]
    %v61 = vld [vmem:[%s0 + $0x74] sm:$0xf]
    %v62 = vld [vmem:[%s0 + $0x78] sm:$0xf]
    %v63 = vld [vmem:[%s0 + $0x7c] sm:$0xf]
    %v64 = vld [vmem:[#allocation2] sm:$0xff]
    %v65 = vld [vmem:[#allocation2 + $0x8] sm:$0xff]
    %v66 = vld [vmem:[#allocation2 + $0x10] sm:$0xff]
    %v67 = vld [vmem:[#allocation2 + $0x18] sm:$0xff]
    %v72 = vunpack.c.l.b16 %v64
    %v73 = vunpack.c.h.b16 %v64
    %v74 = vunpack.c.l.b16 %v65
    %v75 = vunpack.c.h.b16 %v65
    %v76 = vunpack.c.l.b16 %v66
    %v77 = vunpack.c.h.b16 %v66
    %v78 = vunpack.c.l.b16 %v67
    %v79 = vunpack.c.h.b16 %v67
    %v80 = vpack.c.b16 %v74, %v72
    %v81 = vpack.c.b16 %v75, %v73
    %v82 = vpack.c.b16 %v78, %v76
    %v83 = vpack.c.b16 %v79, %v77
    %v120 = vunpack.c.l.b16 %v32
    %v121 = vunpack.c.l.b16 %v33
    %v122 = vunpack.c.l.b16 %v34
    %v123 = vunpack.c.l.b16 %v35
    %v124 = vunpack.c.l.b16 %v36
    %v125 = vunpack.c.l.b16 %v37
    %v126 = vunpack.c.l.b16 %v38
    %v127 = vunpack.c.l.b16 %v39
    %v128 = vunpack.c.l.b16 %v40
    %v129 = vunpack.c.l.b16 %v41
    %v130 = vunpack.c.l.b16 %v42
    %v131 = vunpack.c.l.b16 %v43
    %v132 = vunpack.c.l.b16 %v44
    %v133 = vunpack.c.l.b16 %v45
    %v134 = vunpack.c.l.b16 %v46
    %v135 = vunpack.c.l.b16 %v47
    %v136 = vunpack.c.l.b16 %v48
    %v137 = vunpack.c.l.b16 %v49
    %v138 = vunpack.c.l.b16 %v50
    %v139 = vunpack.c.l.b16 %v51
    %v140 = vunpack.c.l.b16 %v52
    %v141 = vunpack.c.l.b16 %v53
    %v142 = vunpack.c.l.b16 %v54
    %v143 = vunpack.c.l.b16 %v55
    %v144 = vunpack.c.l.b16 %v56
    %v145 = vunpack.c.l.b16 %v57
    %v146 = vunpack.c.l.b16 %v58
    %v147 = vunpack.c.l.b16 %v59
    %v148 = vunpack.c.l.b16 %v60
    %v149 = vunpack.c.l.b16 %v61
    %v150 = vunpack.c.l.b16 %v62
    %v151 = vunpack.c.l.b16 %v63
    %v152 = vpack.c.b16 %v121, %v120
    %v153 = vpack.c.b16 %v123, %v122
    %v154 = vpack.c.b16 %v125, %v124
    %v155 = vpack.c.b16 %v127, %v126
    %v156 = vpack.c.b16 %v129, %v128
    %v157 = vpack.c.b16 %v131, %v130
    %v158 = vpack.c.b16 %v133, %v132
    %v159 = vpack.c.b16 %v135, %v134
    %v160 = vpack.c.b16 %v137, %v136
    %v161 = vpack.c.b16 %v139, %v138
    %v162 = vpack.c.b16 %v141, %v140
    %v163 = vpack.c.b16 %v143, %v142
    %v164 = vpack.c.b16 %v145, %v144
    %v165 = vpack.c.b16 %v147, %v146
    %v166 = vpack.c.b16 %v149, %v148
    %v167 = vpack.c.b16 %v151, %v150
    %184 = vmatprep.subr.bf16.mxu0 0
    %185 = vmatpush1.bf16.msra.mxu0 %v159
    %186 = vmatprep.subr.bf16.mxu0 0
    %187 = vmatpush1.bf16.msra.mxu0 %v158
    %188 = vmatprep.subr.bf16.mxu0 0
    %189 = vmatpush1.bf16.msra.mxu0 %v157
    %190 = vmatprep.subr.bf16.mxu0 0
    %191 = vmatpush1.bf16.msra.mxu0 %v156
    %192 = vmatprep.subr.bf16.mxu0 0
    %193 = vmatpush1.bf16.msra.mxu0 %v155
    %194 = vmatprep.subr.bf16.mxu0 0
    %195 = vmatpush1.bf16.msra.mxu0 %v154
    %196 = vmatprep.subr.bf16.mxu0 0
    %197 = vmatpush1.bf16.msra.mxu0 %v153
    %198 = vmatprep.subr.bf16.mxu0 0
    %199 = vmatpush1.bf16.msra.mxu0 %v152
    %200 = vmatprep.subr.bf16.mxu0 0
    %201 = vmatpush2.bf16.msra.mxu0 %v167
    %202 = vmatprep.subr.bf16.mxu0 0
    %203 = vmatpush2.bf16.msra.mxu0 %v166
    %204 = vmatprep.subr.bf16.mxu0 0
    %205 = vmatpush2.bf16.msra.mxu0 %v165
    %206 = vmatprep.subr.bf16.mxu0 0
    %207 = vmatpush2.bf16.msra.mxu0 %v164
    %208 = vmatprep.subr.bf16.mxu0 0
    %209 = vmatpush2.bf16.msra.mxu0 %v163
    %210 = vmatprep.subr.bf16.mxu0 0
    %211 = vmatpush2.bf16.msra.mxu0 %v162
    %212 = vmatprep.subr.bf16.mxu0 0
    %213 = vmatpush2.bf16.msra.mxu0 %v161
    %214 = vmatprep.subr.bf16.mxu0 0
    %215 = vmatpush2.bf16.msra.mxu0 %v160
    %216 = vmatprep.mubr.bf16.mxu0 %v81
    %217 = vmatmul.mubr.bf16.gmra.mxu0 %v80
    %v218 = vpop.f32.mrf.mxu0
    %v219 = vadd.f32 0.0, %v218
    %v220 = vpop.f32.mrf.mxu0
    %v221 = vpop.f32.mrf.mxu0
    %v222 = vadd.f32 0.0, %v221
    %v223 = vpop.f32.mrf.mxu0
    %224 = vmatprep.mubr.bf16.mxu0 %v83
    %225 = vmatmul.mubr.bf16.gmra.mxu0 %v82
    %v226 = vpop.f32.mrf.mxu0
    %v227 = vadd.f32 0.0, %v226
    %v228 = vpop.f32.mrf.mxu0
    %v229 = vpop.f32.mrf.mxu0
    %v230 = vadd.f32 0.0, %v229
    %v231 = vpop.f32.mrf.mxu0
    %232 = vdwg.mxu0
    %s233 = scalar_lea.vmem %s0, 128
    %v234 = vld [vmem:[%s233] sm:$0xf]
    %v235 = vld [vmem:[%s233 + $0x4] sm:$0xf]
    %v236 = vld [vmem:[%s233 + $0x8] sm:$0xf]
    %v237 = vld [vmem:[%s233 + $0xc] sm:$0xf]
    %v238 = vld [vmem:[%s233 + $0x10] sm:$0xf]
    %v239 = vld [vmem:[%s233 + $0x14] sm:$0xf]
    %v240 = vld [vmem:[%s233 + $0x18] sm:$0xf]
    %v241 = vld [vmem:[%s233 + $0x1c] sm:$0xf]
    %v242 = vld [vmem:[%s233 + $0x20] sm:$0xf]
    %v243 = vld [vmem:[%s233 + $0x24] sm:$0xf]
    %v244 = vld [vmem:[%s233 + $0x28] sm:$0xf]
    %v245 = vld [vmem:[%s233 + $0x2c] sm:$0xf]
    %v246 = vld [vmem:[%s233 + $0x30] sm:$0xf]
    %v247 = vld [vmem:[%s233 + $0x34] sm:$0xf]
    %v248 = vld [vmem:[%s233 + $0x38] sm:$0xf]
    %v249 = vld [vmem:[%s233 + $0x3c] sm:$0xf]
    %v250 = vld [vmem:[%s233 + $0x40] sm:$0xf]
    %v251 = vld [vmem:[%s233 + $0x44] sm:$0xf]
    %v252 = vld [vmem:[%s233 + $0x48] sm:$0xf]
    %v253 = vld [vmem:[%s233 + $0x4c] sm:$0xf]
    %v254 = vld [vmem:[%s233 + $0x50] sm:$0xf]
    %v255 = vld [vmem:[%s233 + $0x54] sm:$0xf]
    %v256 = vld [vmem:[%s233 + $0x58] sm:$0xf]
    %v257 = vld [vmem:[%s233 + $0x5c] sm:$0xf]
    %v258 = vld [vmem:[%s233 + $0x60] sm:$0xf]
    %v259 = vld [vmem:[%s233 + $0x64] sm:$0xf]
    %v260 = vld [vmem:[%s233 + $0x68] sm:$0xf]
    %v261 = vld [vmem:[%s233 + $0x6c] sm:$0xf]
    %v262 = vld [vmem:[%s233 + $0x70] sm:$0xf]
    %v263 = vld [vmem:[%s233 + $0x74] sm:$0xf]
    %v264 = vld [vmem:[%s233 + $0x78] sm:$0xf]
    %v265 = vld [vmem:[%s233 + $0x7c] sm:$0xf]
    %s266 = scalar_lea.vmem [#allocation2], 32
    %v267 = vld [vmem:[%s266] sm:$0xff]
    %v268 = vld [vmem:[%s266 + $0x8] sm:$0xff]
    %v269 = vld [vmem:[%s266 + $0x10] sm:$0xff]
    %v270 = vld [vmem:[%s266 + $0x18] sm:$0xff]
    %v275 = vunpack.c.l.b16 %v267
    %v276 = vunpack.c.h.b16 %v267
    %v277 = vunpack.c.l.b16 %v268
    %v278 = vunpack.c.h.b16 %v268
    %v279 = vunpack.c.l.b16 %v269
    %v280 = vunpack.c.h.b16 %v269
    %v281 = vunpack.c.l.b16 %v270
    %v282 = vunpack.c.h.b16 %v270
    %v283 = vpack.c.b16 %v277, %v275
    %v284 = vpack.c.b16 %v278, %v276
    %v285 = vpack.c.b16 %v281, %v279
    %v286 = vpack.c.b16 %v282, %v280
    %v323 = vunpack.c.l.b16 %v234
    %v324 = vunpack.c.l.b16 %v235
    %v325 = vunpack.c.l.b16 %v236
    %v326 = vunpack.c.l.b16 %v237
    %v327 = vunpack.c.l.b16 %v238
    %v328 = vunpack.c.l.b16 %v239
    %v329 = vunpack.c.l.b16 %v240
    %v330 = vunpack.c.l.b16 %v241
    %v331 = vunpack.c.l.b16 %v242
    %v332 = vunpack.c.l.b16 %v243
    %v333 = vunpack.c.l.b16 %v244
    %v334 = vunpack.c.l.b16 %v245
    %v335 = vunpack.c.l.b16 %v246
    %v336 = vunpack.c.l.b16 %v247
    %v337 = vunpack.c.l.b16 %v248
    %v338 = vunpack.c.l.b16 %v249
    %v339 = vunpack.c.l.b16 %v250
    %v340 = vunpack.c.l.b16 %v251
    %v341 = vunpack.c.l.b16 %v252
    %v342 = vunpack.c.l.b16 %v253
    %v343 = vunpack.c.l.b16 %v254
    %v344 = vunpack.c.l.b16 %v255
    %v345 = vunpack.c.l.b16 %v256
    %v346 = vunpack.c.l.b16 %v257
    %v347 = vunpack.c.l.b16 %v258
    %v348 = vunpack.c.l.b16 %v259
    %v349 = vunpack.c.l.b16 %v260
    %v350 = vunpack.c.l.b16 %v261
    %v351 = vunpack.c.l.b16 %v262
    %v352 = vunpack.c.l.b16 %v263
    %v353 = vunpack.c.l.b16 %v264
    %v354 = vunpack.c.l.b16 %v265
    %v355 = vpack.c.b16 %v324, %v323
    %v356 = vpack.c.b16 %v326, %v325
    %v357 = vpack.c.b16 %v328, %v327
    %v358 = vpack.c.b16 %v330, %v329
    %v359 = vpack.c.b16 %v332, %v331
    %v360 = vpack.c.b16 %v334, %v333
    %v361 = vpack.c.b16 %v336, %v335
    %v362 = vpack.c.b16 %v338, %v337
    %v363 = vpack.c.b16 %v340, %v339
    %v364 = vpack.c.b16 %v342, %v341
    %v365 = vpack.c.b16 %v344, %v343
    %v366 = vpack.c.b16 %v346, %v345
    %v367 = vpack.c.b16 %v348, %v347
    %v368 = vpack.c.b16 %v350, %v349
    %v369 = vpack.c.b16 %v352, %v351
    %v370 = vpack.c.b16 %v354, %v353
    %387 = vmatprep.subr.bf16.mxu0 0
    %388 = vmatpush1.bf16.msra.mxu0 %v362
    %389 = vmatprep.subr.bf16.mxu0 0
    %390 = vmatpush1.bf16.msra.mxu0 %v361
    %391 = vmatprep.subr.bf16.mxu0 0
    %392 = vmatpush1.bf16.msra.mxu0 %v360
    %393 = vmatprep.subr.bf16.mxu0 0
    %394 = vmatpush1.bf16.msra.mxu0 %v359
    %395 = vmatprep.subr.bf16.mxu0 0
    %396 = vmatpush1.bf16.msra.mxu0 %v358
    %397 = vmatprep.subr.bf16.mxu0 0
    %398 = vmatpush1.bf16.msra.mxu0 %v357
    %399 = vmatprep.subr.bf16.mxu0 0
    %400 = vmatpush1.bf16.msra.mxu0 %v356
    %401 = vmatprep.subr.bf16.mxu0 0
    %402 = vmatpush1.bf16.msra.mxu0 %v355
    %403 = vmatprep.subr.bf16.mxu0 0
    %404 = vmatpush2.bf16.msra.mxu0 %v370
    %405 = vmatprep.subr.bf16.mxu0 0
    %406 = vmatpush2.bf16.msra.mxu0 %v369
    %407 = vmatprep.subr.bf16.mxu0 0
    %408 = vmatpush2.bf16.msra.mxu0 %v368
    %409 = vmatprep.subr.bf16.mxu0 0
    %410 = vmatpush2.bf16.msra.mxu0 %v367
    %411 = vmatprep.subr.bf16.mxu0 0
    %412 = vmatpush2.bf16.msra.mxu0 %v366
    %413 = vmatprep.subr.bf16.mxu0 0
    %414 = vmatpush2.bf16.msra.mxu0 %v365
    %415 = vmatprep.subr.bf16.mxu0 0
    %416 = vmatpush2.bf16.msra.mxu0 %v364
    %417 = vmatprep.subr.bf16.mxu0 0
    %418 = vmatpush2.bf16.msra.mxu0 %v363
    %419 = vmatprep.mubr.bf16.mxu0 %v284
    %420 = vmatmul.mubr.bf16.gmra.mxu0 %v283
    %v421 = vpop.f32.mrf.mxu0
    %v422 = vadd.f32 0.0, %v421
    %v423 = vpop.f32.mrf.mxu0
    %v424 = vpop.f32.mrf.mxu0
    %v425 = vadd.f32 0.0, %v424
    %v426 = vpop.f32.mrf.mxu0
    %427 = vmatprep.mubr.bf16.mxu0 %v286
    %428 = vmatmul.mubr.bf16.gmra.mxu0 %v285
    %v429 = vpop.f32.mrf.mxu0
    %v430 = vadd.f32 0.0, %v429
    %v431 = vpop.f32.mrf.mxu0
    %v432 = vpop.f32.mrf.mxu0
    %v433 = vadd.f32 0.0, %v432
    %v434 = vpop.f32.mrf.mxu0
    %435 = vdwg.mxu0
    %s436 = scalar_lea.vmem %s0, 256
    %v437 = vld [vmem:[%s436] sm:$0xf]
    %v438 = vld [vmem:[%s436 + $0x4] sm:$0xf]
    %v439 = vld [vmem:[%s436 + $0x8] sm:$0xf]
    %v440 = vld [vmem:[%s436 + $0xc] sm:$0xf]
    %v441 = vld [vmem:[%s436 + $0x10] sm:$0xf]
    %v442 = vld [vmem:[%s436 + $0x14] sm:$0xf]
    %v443 = vld [vmem:[%s436 + $0x18] sm:$0xf]
    %v444 = vld [vmem:[%s436 + $0x1c] sm:$0xf]
    %v445 = vld [vmem:[%s436 + $0x20] sm:$0xf]
    %v446 = vld [vmem:[%s436 + $0x24] sm:$0xf]
    %v447 = vld [vmem:[%s436 + $0x28] sm:$0xf]
    %v448 = vld [vmem:[%s436 + $0x2c] sm:$0xf]
    %v449 = vld [vmem:[%s436 + $0x30] sm:$0xf]
    %v450 = vld [vmem:[%s436 + $0x34] sm:$0xf]
    %v451 = vld [vmem:[%s436 + $0x38] sm:$0xf]
    %v452 = vld [vmem:[%s436 + $0x3c] sm:$0xf]
    %v453 = vld [vmem:[%s436 + $0x40] sm:$0xf]
    %v454 = vld [vmem:[%s436 + $0x44] sm:$0xf]
    %v455 = vld [vmem:[%s436 + $0x48] sm:$0xf]
    %v456 = vld [vmem:[%s436 + $0x4c] sm:$0xf]
    %v457 = vld [vmem:[%s436 + $0x50] sm:$0xf]
    %v458 = vld [vmem:[%s436 + $0x54] sm:$0xf]
    %v459 = vld [vmem:[%s436 + $0x58] sm:$0xf]
    %v460 = vld [vmem:[%s436 + $0x5c] sm:$0xf]
    %v461 = vld [vmem:[%s436 + $0x60] sm:$0xf]
    %v462 = vld [vmem:[%s436 + $0x64] sm:$0xf]
    %v463 = vld [vmem:[%s436 + $0x68] sm:$0xf]
    %v464 = vld [vmem:[%s436 + $0x6c] sm:$0xf]
    %v465 = vld [vmem:[%s436 + $0x70] sm:$0xf]
    %v466 = vld [vmem:[%s436 + $0x74] sm:$0xf]
    %v467 = vld [vmem:[%s436 + $0x78] sm:$0xf]
    %v468 = vld [vmem:[%s436 + $0x7c] sm:$0xf]
    %s469 = scalar_lea.vmem [#allocation2], 64
    %v470 = vld [vmem:[%s469] sm:$0xff]
    %v471 = vld [vmem:[%s469 + $0x8] sm:$0xff]
    %v472 = vld [vmem:[%s469 + $0x10] sm:$0xff]
    %v473 = vld [vmem:[%s469 + $0x18] sm:$0xff]
    %v478 = vunpack.c.l.b16 %v470
    %v479 = vunpack.c.h.b16 %v470
    %v480 = vunpack.c.l.b16 %v471
    %v481 = vunpack.c.h.b16 %v471
    %v482 = vunpack.c.l.b16 %v472
    %v483 = vunpack.c.h.b16 %v472
    %v484 = vunpack.c.l.b16 %v473
    %v485 = vunpack.c.h.b16 %v473
    %v486 = vpack.c.b16 %v480, %v478
    %v487 = vpack.c.b16 %v481, %v479
    %v488 = vpack.c.b16 %v484, %v482
    %v489 = vpack.c.b16 %v485, %v483
    %v526 = vunpack.c.l.b16 %v437
    %v527 = vunpack.c.l.b16 %v438
    %v528 = vunpack.c.l.b16 %v439
    %v529 = vunpack.c.l.b16 %v440
    %v530 = vunpack.c.l.b16 %v441
    %v531 = vunpack.c.l.b16 %v442
    %v532 = vunpack.c.l.b16 %v443
    %v533 = vunpack.c.l.b16 %v444
    %v534 = vunpack.c.l.b16 %v445
    %v535 = vunpack.c.l.b16 %v446
    %v536 = vunpack.c.l.b16 %v447
    %v537 = vunpack.c.l.b16 %v448
    %v538 = vunpack.c.l.b16 %v449
    %v539 = vunpack.c.l.b16 %v450
    %v540 = vunpack.c.l.b16 %v451
    %v541 = vunpack.c.l.b16 %v452
    %v542 = vunpack.c.l.b16 %v453
    %v543 = vunpack.c.l.b16 %v454
    %v544 = vunpack.c.l.b16 %v455
    %v545 = vunpack.c.l.b16 %v456
    %v546 = vunpack.c.l.b16 %v457
    %v547 = vunpack.c.l.b16 %v458
    %v548 = vunpack.c.l.b16 %v459
    %v549 = vunpack.c.l.b16 %v460
    %v550 = vunpack.c.l.b16 %v461
    %v551 = vunpack.c.l.b16 %v462
    %v552 = vunpack.c.l.b16 %v463
    %v553 = vunpack.c.l.b16 %v464
    %v554 = vunpack.c.l.b16 %v465
    %v555 = vunpack.c.l.b16 %v466
    %v556 = vunpack.c.l.b16 %v467
    %v557 = vunpack.c.l.b16 %v468
    %v558 = vpack.c.b16 %v527, %v526
    %v559 = vpack.c.b16 %v529, %v528
    %v560 = vpack.c.b16 %v531, %v530
    %v561 = vpack.c.b16 %v533, %v532
    %v562 = vpack.c.b16 %v535, %v534
    %v563 = vpack.c.b16 %v537, %v536
    %v564 = vpack.c.b16 %v539, %v538
    %v565 = vpack.c.b16 %v541, %v540
    %v566 = vpack.c.b16 %v543, %v542
    %v567 = vpack.c.b16 %v545, %v544
    %v568 = vpack.c.b16 %v547, %v546
    %v569 = vpack.c.b16 %v549, %v548
    %v570 = vpack.c.b16 %v551, %v550
    %v571 = vpack.c.b16 %v553, %v552
    %v572 = vpack.c.b16 %v555, %v554
    %v573 = vpack.c.b16 %v557, %v556
    %590 = vmatprep.subr.bf16.mxu0 0
    %591 = vmatpush1.bf16.msra.mxu0 %v565
    %592 = vmatprep.subr.bf16.mxu0 0
    %593 = vmatpush1.bf16.msra.mxu0 %v564
    %594 = vmatprep.subr.bf16.mxu0 0
    %595 = vmatpush1.bf16.msra.mxu0 %v563
    %596 = vmatprep.subr.bf16.mxu0 0
    %597 = vmatpush1.bf16.msra.mxu0 %v562
    %598 = vmatprep.subr.bf16.mxu0 0
    %599 = vmatpush1.bf16.msra.mxu0 %v561
    %600 = vmatprep.subr.bf16.mxu0 0
    %601 = vmatpush1.bf16.msra.mxu0 %v560
    %602 = vmatprep.subr.bf16.mxu0 0
    %603 = vmatpush1.bf16.msra.mxu0 %v559
    %604 = vmatprep.subr.bf16.mxu0 0
    %605 = vmatpush1.bf16.msra.mxu0 %v558
    %606 = vmatprep.subr.bf16.mxu0 0
    %607 = vmatpush2.bf16.msra.mxu0 %v573
    %608 = vmatprep.subr.bf16.mxu0 0
    %609 = vmatpush2.bf16.msra.mxu0 %v572
    %610 = vmatprep.subr.bf16.mxu0 0
    %611 = vmatpush2.bf16.msra.mxu0 %v571
    %612 = vmatprep.subr.bf16.mxu0 0
    %613 = vmatpush2.bf16.msra.mxu0 %v570
    %614 = vmatprep.subr.bf16.mxu0 0
    %615 = vmatpush2.bf16.msra.mxu0 %v569
    %616 = vmatprep.subr.bf16.mxu0 0
    %617 = vmatpush2.bf16.msra.mxu0 %v568
    %618 = vmatprep.subr.bf16.mxu0 0
    %619 = vmatpush2.bf16.msra.mxu0 %v567
    %620 = vmatprep.subr.bf16.mxu0 0
    %621 = vmatpush2.bf16.msra.mxu0 %v566
    %622 = vmatprep.mubr.bf16.mxu0 %v487
    %623 = vmatmul.mubr.bf16.gmra.mxu0 %v486
    %v624 = vpop.f32.mrf.mxu0
    %v625 = vadd.f32 0.0, %v624
    %v626 = vpop.f32.mrf.mxu0
    %v627 = vpop.f32.mrf.mxu0
    %v628 = vadd.f32 0.0, %v627
    %v629 = vpop.f32.mrf.mxu0
    %630 = vmatprep.mubr.bf16.mxu0 %v489
    %631 = vmatmul.mubr.bf16.gmra.mxu0 %v488
    %v632 = vpop.f32.mrf.mxu0
    %v633 = vadd.f32 0.0, %v632
    %v634 = vpop.f32.mrf.mxu0
    %v635 = vpop.f32.mrf.mxu0
    %v636 = vadd.f32 0.0, %v635
    %v637 = vpop.f32.mrf.mxu0
    %638 = vdwg.mxu0
    %s639 = scalar_lea.vmem %s0, 384
    %v640 = vld [vmem:[%s639] sm:$0xf]
    %v641 = vld [vmem:[%s639 + $0x4] sm:$0xf]
    %v642 = vld [vmem:[%s639 + $0x8] sm:$0xf]
    %v643 = vld [vmem:[%s639 + $0xc] sm:$0xf]
    %v644 = vld [vmem:[%s639 + $0x10] sm:$0xf]
    %v645 = vld [vmem:[%s639 + $0x14] sm:$0xf]
    %v646 = vld [vmem:[%s639 + $0x18] sm:$0xf]
    %v647 = vld [vmem:[%s639 + $0x1c] sm:$0xf]
    %v648 = vld [vmem:[%s639 + $0x20] sm:$0xf]
    %v649 = vld [vmem:[%s639 + $0x24] sm:$0xf]
    %v650 = vld [vmem:[%s639 + $0x28] sm:$0xf]
    %v651 = vld [vmem:[%s639 + $0x2c] sm:$0xf]
    %v652 = vld [vmem:[%s639 + $0x30] sm:$0xf]
    %v653 = vld [vmem:[%s639 + $0x34] sm:$0xf]
    %v654 = vld [vmem:[%s639 + $0x38] sm:$0xf]
    %v655 = vld [vmem:[%s639 + $0x3c] sm:$0xf]
    %v656 = vld [vmem:[%s639 + $0x40] sm:$0xf]
    %v657 = vld [vmem:[%s639 + $0x44] sm:$0xf]
    %v658 = vld [vmem:[%s639 + $0x48] sm:$0xf]
    %v659 = vld [vmem:[%s639 + $0x4c] sm:$0xf]
    %v660 = vld [vmem:[%s639 + $0x50] sm:$0xf]
    %v661 = vld [vmem:[%s639 + $0x54] sm:$0xf]
    %v662 = vld [vmem:[%s639 + $0x58] sm:$0xf]
    %v663 = vld [vmem:[%s639 + $0x5c] sm:$0xf]
    %v664 = vld [vmem:[%s639 + $0x60] sm:$0xf]
    %v665 = vld [vmem:[%s639 + $0x64] sm:$0xf]
    %v666 = vld [vmem:[%s639 + $0x68] sm:$0xf]
    %v667 = vld [vmem:[%s639 + $0x6c] sm:$0xf]
    %v668 = vld [vmem:[%s639 + $0x70] sm:$0xf]
    %v669 = vld [vmem:[%s639 + $0x74] sm:$0xf]
    %v670 = vld [vmem:[%s639 + $0x78] sm:$0xf]
    %v671 = vld [vmem:[%s639 + $0x7c] sm:$0xf]
    %s672 = scalar_lea.vmem [#allocation2], 96
    %v673 = vld [vmem:[%s672] sm:$0xff]
    %v674 = vld [vmem:[%s672 + $0x8] sm:$0xff]
    %v675 = vld [vmem:[%s672 + $0x10] sm:$0xff]
    %v676 = vld [vmem:[%s672 + $0x18] sm:$0xff]
    %v681 = vunpack.c.l.b16 %v673
    %v682 = vunpack.c.h.b16 %v673
    %v683 = vunpack.c.l.b16 %v674
    %v684 = vunpack.c.h.b16 %v674
    %v685 = vunpack.c.l.b16 %v675
    %v686 = vunpack.c.h.b16 %v675
    %v687 = vunpack.c.l.b16 %v676
    %v688 = vunpack.c.h.b16 %v676
    %v689 = vpack.c.b16 %v683, %v681
    %v690 = vpack.c.b16 %v684, %v682
    %v691 = vpack.c.b16 %v687, %v685
    %v692 = vpack.c.b16 %v688, %v686
    %v729 = vunpack.c.l.b16 %v640
    %v730 = vunpack.c.l.b16 %v641
    %v731 = vunpack.c.l.b16 %v642
    %v732 = vunpack.c.l.b16 %v643
    %v733 = vunpack.c.l.b16 %v644
    %v734 = vunpack.c.l.b16 %v645
    %v735 = vunpack.c.l.b16 %v646
    %v736 = vunpack.c.l.b16 %v647
    %v737 = vunpack.c.l.b16 %v648
    %v738 = vunpack.c.l.b16 %v649
    %v739 = vunpack.c.l.b16 %v650
    %v740 = vunpack.c.l.b16 %v651
    %v741 = vunpack.c.l.b16 %v652
    %v742 = vunpack.c.l.b16 %v653
    %v743 = vunpack.c.l.b16 %v654
    %v744 = vunpack.c.l.b16 %v655
    %v745 = vunpack.c.l.b16 %v656
    %v746 = vunpack.c.l.b16 %v657
    %v747 = vunpack.c.l.b16 %v658
    %v748 = vunpack.c.l.b16 %v659
    %v749 = vunpack.c.l.b16 %v660
    %v750 = vunpack.c.l.b16 %v661
    %v751 = vunpack.c.l.b16 %v662
    %v752 = vunpack.c.l.b16 %v663
    %v753 = vunpack.c.l.b16 %v664
    %v754 = vunpack.c.l.b16 %v665
    %v755 = vunpack.c.l.b16 %v666
    %v756 = vunpack.c.l.b16 %v667
    %v757 = vunpack.c.l.b16 %v668
    %v758 = vunpack.c.l.b16 %v669
    %v759 = vunpack.c.l.b16 %v670
    %v760 = vunpack.c.l.b16 %v671
    %v761 = vpack.c.b16 %v730, %v729
    %v762 = vpack.c.b16 %v732, %v731
    %v763 = vpack.c.b16 %v734, %v733
    %v764 = vpack.c.b16 %v736, %v735
    %v765 = vpack.c.b16 %v738, %v737
    %v766 = vpack.c.b16 %v740, %v739
    %v767 = vpack.c.b16 %v742, %v741
    %v768 = vpack.c.b16 %v744, %v743
    %v769 = vpack.c.b16 %v746, %v745
    %v770 = vpack.c.b16 %v748, %v747
    %v771 = vpack.c.b16 %v750, %v749
    %v772 = vpack.c.b16 %v752, %v751
    %v773 = vpack.c.b16 %v754, %v753
    %v774 = vpack.c.b16 %v756, %v755
    %v775 = vpack.c.b16 %v758, %v757
    %v776 = vpack.c.b16 %v760, %v759
    %793 = vmatprep.subr.bf16.mxu0 0
    %794 = vmatpush1.bf16.msra.mxu0 %v768
    %795 = vmatprep.subr.bf16.mxu0 0
    %796 = vmatpush1.bf16.msra.mxu0 %v767
    %797 = vmatprep.subr.bf16.mxu0 0
    %798 = vmatpush1.bf16.msra.mxu0 %v766
    %799 = vmatprep.subr.bf16.mxu0 0
    %800 = vmatpush1.bf16.msra.mxu0 %v765
    %801 = vmatprep.subr.bf16.mxu0 0
    %802 = vmatpush1.bf16.msra.mxu0 %v764
    %803 = vmatprep.subr.bf16.mxu0 0
    %804 = vmatpush1.bf16.msra.mxu0 %v763
    %805 = vmatprep.subr.bf16.mxu0 0
    %806 = vmatpush1.bf16.msra.mxu0 %v762
    %807 = vmatprep.subr.bf16.mxu0 0
    %808 = vmatpush1.bf16.msra.mxu0 %v761
    %809 = vmatprep.subr.bf16.mxu0 0
    %810 = vmatpush2.bf16.msra.mxu0 %v776
    %811 = vmatprep.subr.bf16.mxu0 0
    %812 = vmatpush2.bf16.msra.mxu0 %v775
    %813 = vmatprep.subr.bf16.mxu0 0
    %814 = vmatpush2.bf16.msra.mxu0 %v774
    %815 = vmatprep.subr.bf16.mxu0 0
    %816 = vmatpush2.bf16.msra.mxu0 %v773
    %817 = vmatprep.subr.bf16.mxu0 0
    %818 = vmatpush2.bf16.msra.mxu0 %v772
    %819 = vmatprep.subr.bf16.mxu0 0
    %820 = vmatpush2.bf16.msra.mxu0 %v771
    %821 = vmatprep.subr.bf16.mxu0 0
    %822 = vmatpush2.bf16.msra.mxu0 %v770
    %823 = vmatprep.subr.bf16.mxu0 0
    %824 = vmatpush2.bf16.msra.mxu0 %v769
    %825 = vmatprep.mubr.bf16.mxu0 %v690
    %826 = vmatmul.mubr.bf16.gmra.mxu0 %v689
    %v827 = vpop.f32.mrf.mxu0
    %v828 = vadd.f32 0.0, %v827
    %v829 = vpop.f32.mrf.mxu0
    %v830 = vpop.f32.mrf.mxu0
    %v831 = vadd.f32 0.0, %v830
    %v832 = vpop.f32.mrf.mxu0
    %833 = vmatprep.mubr.bf16.mxu0 %v692
    %834 = vmatmul.mubr.bf16.gmra.mxu0 %v691
    %v835 = vpop.f32.mrf.mxu0
    %v836 = vadd.f32 0.0, %v835
    %v837 = vpop.f32.mrf.mxu0
    %v838 = vpop.f32.mrf.mxu0
    %v839 = vadd.f32 0.0, %v838
    %v840 = vpop.f32.mrf.mxu0
    %841 = vdwg.mxu0
    %vm842 = vcmask 261120
    %v843 = vsel %vm842, %v219, 0.0
    %844 = vadd.xlane.f32.xlu0 %v843
    %v845 = vpop.xlane.xlu0 %844
    %v846 = vsel %vm842, %v222, 0.0
    %847 = vadd.xlane.f32.xlu0 %v846
    %v848 = vpop.xlane.xlu0 %847
    %v849 = vsel %vm842, %v227, 0.0
    %850 = vadd.xlane.f32.xlu0 %v849
    %v851 = vpop.xlane.xlu0 %850
    %v852 = vsel %vm842, %v230, 0.0
    %853 = vadd.xlane.f32.xlu0 %v852
    %v854 = vpop.xlane.xlu0 %853
    %v855 = vsel %vm842, %v422, 0.0
    %856 = vadd.xlane.f32.xlu0 %v855
    %v857 = vpop.xlane.xlu0 %856
    %v858 = vsel %vm842, %v425, 0.0
    %859 = vadd.xlane.f32.xlu0 %v858
    %v860 = vpop.xlane.xlu0 %859
    %v861 = vsel %vm842, %v430, 0.0
    %862 = vadd.xlane.f32.xlu0 %v861
    %v863 = vpop.xlane.xlu0 %862
    %v864 = vsel %vm842, %v433, 0.0
    %865 = vadd.xlane.f32.xlu0 %v864
    %v866 = vpop.xlane.xlu0 %865
    %v867 = vadd.f32 %v845, %v857
    %v868 = vadd.f32 %v848, %v860
    %v869 = vadd.f32 %v851, %v863
    %v870 = vadd.f32 %v854, %v866
    %v871 = vsel %vm842, %v625, 0.0
    %872 = vadd.xlane.f32.xlu0 %v871
    %v873 = vpop.xlane.xlu0 %872
    %v874 = vsel %vm842, %v628, 0.0
    %875 = vadd.xlane.f32.xlu0 %v874
    %v876 = vpop.xlane.xlu0 %875
    %v877 = vsel %vm842, %v633, 0.0
    %878 = vadd.xlane.f32.xlu0 %v877
    %v879 = vpop.xlane.xlu0 %878
    %v880 = vsel %vm842, %v636, 0.0
    %881 = vadd.xlane.f32.xlu0 %v880
    %v882 = vpop.xlane.xlu0 %881
    %v883 = vadd.f32 %v867, %v873
    %v884 = vadd.f32 %v868, %v876
    %v885 = vadd.f32 %v869, %v879
    %v886 = vadd.f32 %v870, %v882
    %v887 = vsel %vm842, %v828, 0.0
    %888 = vadd.xlane.f32.xlu0 %v887
    %v889 = vpop.xlane.xlu0 %888
    %v890 = vsel %vm842, %v831, 0.0
    %891 = vadd.xlane.f32.xlu0 %v890
    %v892 = vpop.xlane.xlu0 %891
    %v893 = vsel %vm842, %v836, 0.0
    %894 = vadd.xlane.f32.xlu0 %v893
    %v895 = vpop.xlane.xlu0 %894
    %v896 = vsel %vm842, %v839, 0.0
    %897 = vadd.xlane.f32.xlu0 %v896
    %v898 = vpop.xlane.xlu0 %897
    %v899 = vadd.f32 %v883, %v889
    %v900 = vadd.f32 %v884, %v892
    %v901 = vadd.f32 %v885, %v895
    %v902 = vadd.f32 %v886, %v898
    %v903 = vmul.f32 %v899, 0.0078125
    %v904 = vmul.f32 %v900, 0.0078125
    %v905 = vmul.f32 %v901, 0.0078125
    %v906 = vmul.f32 %v902, 0.0078125
    %v907 = vsub.f32 %v219, %v903
    %v908 = vsub.f32 %v222, %v904
    %v909 = vsub.f32 %v227, %v905
    %v910 = vsub.f32 %v230, %v906
    %v911 = vmul.f32 %v907, %v907
    %v912 = vmul.f32 %v908, %v908
    %v913 = vmul.f32 %v909, %v909
    %v914 = vmul.f32 %v910, %v910
    %v915 = vsel %vm842, %v911, 0.0
    %916 = vadd.xlane.f32.xlu0 %v915
    %v917 = vpop.xlane.xlu0 %916
    %v918 = vsel %vm842, %v912, 0.0
    %919 = vadd.xlane.f32.xlu0 %v918
    %v920 = vpop.xlane.xlu0 %919
    %v921 = vsel %vm842, %v913, 0.0
    %922 = vadd.xlane.f32.xlu0 %v921
    %v923 = vpop.xlane.xlu0 %922
    %v924 = vsel %vm842, %v914, 0.0
    %925 = vadd.xlane.f32.xlu0 %v924
    %v926 = vpop.xlane.xlu0 %925
    %v927 = vsub.f32 %v422, %v903
    %v928 = vsub.f32 %v425, %v904
    %v929 = vsub.f32 %v430, %v905
    %v930 = vsub.f32 %v433, %v906
    %v931 = vmul.f32 %v927, %v927
    %v932 = vmul.f32 %v928, %v928
    %v933 = vmul.f32 %v929, %v929
    %v934 = vmul.f32 %v930, %v930
    %v935 = vsel %vm842, %v931, 0.0
    %936 = vadd.xlane.f32.xlu0 %v935
    %v937 = vpop.xlane.xlu0 %936
    %v938 = vsel %vm842, %v932, 0.0
    %939 = vadd.xlane.f32.xlu0 %v938
    %v940 = vpop.xlane.xlu0 %939
    %v941 = vsel %vm842, %v933, 0.0
    %942 = vadd.xlane.f32.xlu0 %v941
    %v943 = vpop.xlane.xlu0 %942
    %v944 = vsel %vm842, %v934, 0.0
    %945 = vadd.xlane.f32.xlu0 %v944
    %v946 = vpop.xlane.xlu0 %945
    %v947 = vadd.f32 %v917, %v937
    %v948 = vadd.f32 %v920, %v940
    %v949 = vadd.f32 %v923, %v943
    %v950 = vadd.f32 %v926, %v946
    %v951 = vsub.f32 %v625, %v903
    %v952 = vsub.f32 %v628, %v904
    %v953 = vsub.f32 %v633, %v905
    %v954 = vsub.f32 %v636, %v906
    %v955 = vmul.f32 %v951, %v951
    %v956 = vmul.f32 %v952, %v952
    %v957 = vmul.f32 %v953, %v953
    %v958 = vmul.f32 %v954, %v954
    %v959 = vsel %vm842, %v955, 0.0
    %960 = vadd.xlane.f32.xlu0 %v959
    %v961 = vpop.xlane.xlu0 %960
    %v962 = vsel %vm842, %v956, 0.0
    %963 = vadd.xlane.f32.xlu0 %v962
    %v964 = vpop.xlane.xlu0 %963
    %v965 = vsel %vm842, %v957, 0.0
    %966 = vadd.xlane.f32.xlu0 %v965
    %v967 = vpop.xlane.xlu0 %966
    %v968 = vsel %vm842, %v958, 0.0
    %969 = vadd.xlane.f32.xlu0 %v968
    %v970 = vpop.xlane.xlu0 %969
    %v971 = vadd.f32 %v947, %v961
    %v972 = vadd.f32 %v948, %v964
    %v973 = vadd.f32 %v949, %v967
    %v974 = vadd.f32 %v950, %v970
    %v975 = vsub.f32 %v828, %v903
    %v976 = vsub.f32 %v831, %v904
    %v977 = vsub.f32 %v836, %v905
    %v978 = vsub.f32 %v839, %v906
    %v979 = vmul.f32 %v975, %v975
    %v980 = vmul.f32 %v976, %v976
    %v981 = vmul.f32 %v977, %v977
    %v982 = vmul.f32 %v978, %v978
    %v983 = vsel %vm842, %v979, 0.0
    %984 = vadd.xlane.f32.xlu0 %v983
    %v985 = vpop.xlane.xlu0 %984
    %v986 = vsel %vm842, %v980, 0.0
    %987 = vadd.xlane.f32.xlu0 %v986
    %v988 = vpop.xlane.xlu0 %987
    %v989 = vsel %vm842, %v981, 0.0
    %990 = vadd.xlane.f32.xlu0 %v989
    %v991 = vpop.xlane.xlu0 %990
    %v992 = vsel %vm842, %v982, 0.0
    %993 = vadd.xlane.f32.xlu0 %v992
    %v994 = vpop.xlane.xlu0 %993
    %v995 = vadd.f32 %v971, %v985
    %v996 = vadd.f32 %v972, %v988
    %v997 = vadd.f32 %v973, %v991
    %v998 = vadd.f32 %v974, %v994
    %v999 = vmul.f32 %v995, 0.0078125
    %v1000 = vmul.f32 %v996, 0.0078125
    %v1001 = vmul.f32 %v997, 0.0078125
    %v1002 = vmul.f32 %v998, 0.0078125
    %v1003 = vld [vmem:[%s2] sm:$0xff]
    %v1004 = vld [vmem:[%s2 + $0x8] sm:$0xff]
    %v1005 = vld [vmem:[%s2 + $0x10] sm:$0xff]
    %v1006 = vld [vmem:[%s2 + $0x18] sm:$0xff]
    %v1007 = vadd.f32 %v999, 1e-05
    %v1008 = vadd.f32 %v1000, 1e-05
    %v1009 = vadd.f32 %v1001, 1e-05
    %v1010 = vadd.f32 %v1002, 1e-05
    %v1011 = vrsqrt.pop %v1007
    %v1012 = vrsqrt.pop %v1008
    %v1013 = vrsqrt.pop %v1009
    %v1014 = vrsqrt.pop %v1010
    %v1015 = vmul.f32 %v1003, %v1011
    %v1016 = vmul.f32 %v1004, %v1012
    %v1017 = vmul.f32 %v1005, %v1013
    %v1018 = vmul.f32 %v1006, %v1014
    %v1019 = vld [vmem:[%s3] sm:$0xff]
    %v1020 = vld [vmem:[%s3 + $0x8] sm:$0xff]
    %v1021 = vld [vmem:[%s3 + $0x10] sm:$0xff]
    %v1022 = vld [vmem:[%s3 + $0x18] sm:$0xff]
    %v1023 = vmul.f32 %v903, %v1015
    %v1024 = vmul.f32 %v904, %v1016
    %v1025 = vmul.f32 %v905, %v1017
    %v1026 = vmul.f32 %v906, %v1018
    %v1027 = vsub.f32 %v1019, %v1023
    %v1028 = vsub.f32 %v1020, %v1024
    %v1029 = vsub.f32 %v1021, %v1025
    %v1030 = vsub.f32 %v1022, %v1026
    %1032 = vset.pattern.permute.xlu0 0
    %1033 = vperm.xlu0 %1032, %v1015
    %v1034 = vpop.permute.xlu0 %1033
    %1037 = vset.pattern.permute.xlu0 0
    %1038 = vperm.xlu0 %1037, %v1016
    %v1039 = vpop.permute.xlu0 %1038
    %1042 = vset.pattern.permute.xlu0 0
    %1043 = vperm.xlu0 %1042, %v1017
    %v1044 = vpop.permute.xlu0 %1043
    %1047 = vset.pattern.permute.xlu0 0
    %1048 = vperm.xlu0 %1047, %v1018
    %v1049 = vpop.permute.xlu0 %1048
    %v1051 = vmul.f32 %v219, %v1034
    %v1052 = vmul.f32 %v222, %v1039
    %v1053 = vmul.f32 %v227, %v1044
    %v1054 = vmul.f32 %v230, %v1049
    %1056 = vset.pattern.permute.xlu0 0
    %1057 = vperm.xlu0 %1056, %v1027
    %v1058 = vpop.permute.xlu0 %1057
    %1061 = vset.pattern.permute.xlu0 0
    %1062 = vperm.xlu0 %1061, %v1028
    %v1063 = vpop.permute.xlu0 %1062
    %1066 = vset.pattern.permute.xlu0 0
    %1067 = vperm.xlu0 %1066, %v1029
    %v1068 = vpop.permute.xlu0 %1067
    %1071 = vset.pattern.permute.xlu0 0
    %1072 = vperm.xlu0 %1071, %v1030
    %v1073 = vpop.permute.xlu0 %1072
    %v1075 = vadd.f32 %v1051, %v1058
    %v1076 = vadd.f32 %v1052, %v1063
    %v1077 = vadd.f32 %v1053, %v1068
    %v1078 = vadd.f32 %v1054, %v1073
    %v1079 = vmul.f32 %v422, %v1034
    %v1080 = vmul.f32 %v425, %v1039
    %v1081 = vmul.f32 %v430, %v1044
    %v1082 = vmul.f32 %v433, %v1049
    %v1083 = vadd.f32 %v1079, %v1058
    %v1084 = vadd.f32 %v1080, %v1063
    %v1085 = vadd.f32 %v1081, %v1068
    %v1086 = vadd.f32 %v1082, %v1073
    %v1087 = vmul.f32 %v625, %v1034
    %v1088 = vmul.f32 %v628, %v1039
    %v1089 = vmul.f32 %v633, %v1044
    %v1090 = vmul.f32 %v636, %v1049
    %v1091 = vadd.f32 %v1087, %v1058
    %v1092 = vadd.f32 %v1088, %v1063
    %v1093 = vadd.f32 %v1089, %v1068
    %v1094 = vadd.f32 %v1090, %v1073
    %v1095 = vmul.f32 %v828, %v1034
    %v1096 = vmul.f32 %v831, %v1039
    %v1097 = vmul.f32 %v836, %v1044
    %v1098 = vmul.f32 %v839, %v1049
    %v1099 = vadd.f32 %v1095, %v1058
    %v1100 = vadd.f32 %v1096, %v1063
    %v1101 = vadd.f32 %v1097, %v1068
    %v1102 = vadd.f32 %v1098, %v1073
    %v1103 = vmax.f32 %v1075, 0.0
    %v1104 = vmax.f32 %v1076, 0.0
    %v1105 = vmax.f32 %v1077, 0.0
    %v1106 = vmax.f32 %v1078, 0.0
    %v1107 = vmax.f32 %v1083, 0.0
    %v1108 = vmax.f32 %v1084, 0.0
    %v1109 = vmax.f32 %v1085, 0.0
    %v1110 = vmax.f32 %v1086, 0.0
    %v1111 = vmax.f32 %v1091, 0.0
    %v1112 = vmax.f32 %v1092, 0.0
    %v1113 = vmax.f32 %v1093, 0.0
    %v1114 = vmax.f32 %v1094, 0.0
    %v1115 = vmax.f32 %v1099, 0.0
    %v1116 = vmax.f32 %v1100, 0.0
    %v1117 = vmax.f32 %v1101, 0.0
    %v1118 = vmax.f32 %v1102, 0.0
    %v1119 = vpack.c.bf16 %v1104, %v1103
    %v1120 = vpack.c.bf16 %v1106, %v1105
    %v1123 = vunpack.c.l.b16 %v1119
    %v1124 = vunpack.c.h.b16 %v1119
    %v1125 = vunpack.c.l.b16 %v1120
    %v1126 = vunpack.c.h.b16 %v1120
    %v1127 = vpack.c.b16 %v1123, %v1123
    %v1128 = vpack.c.b16 %v1124, %v1124
    %v1129 = vpack.c.b16 %v1125, %v1125
    %v1130 = vpack.c.b16 %v1126, %v1126
    %vm1135 = vcmask 257024
    %1136 = vst.msk [vmem:[%s4] sm:$0xf] %vm1135, %v1127
    %1137 = vst.msk [vmem:[%s4 + $0x4] sm:$0xf] %vm1135, %v1128
    %1138 = vst.msk [vmem:[%s4 + $0x8] sm:$0xf] %vm1135, %v1129
    %1139 = vst.msk [vmem:[%s4 + $0xc] sm:$0xf] %vm1135, %v1130
    %v1140 = vpack.c.bf16 %v1108, %v1107
    %v1141 = vpack.c.bf16 %v1110, %v1109
    %v1144 = vunpack.c.l.b16 %v1140
    %v1145 = vunpack.c.h.b16 %v1140
    %v1146 = vunpack.c.l.b16 %v1141
    %v1147 = vunpack.c.h.b16 %v1141
    %v1148 = vpack.c.b16 %v1144, %v1144
    %v1149 = vpack.c.b16 %v1145, %v1145
    %v1150 = vpack.c.b16 %v1146, %v1146
    %v1151 = vpack.c.b16 %v1147, %v1147
    %s1156 = scalar_lea.vmem %s4, 16
    %1157 = vst.msk [vmem:[%s1156] sm:$0xf] %vm1135, %v1148
    %1158 = vst.msk [vmem:[%s1156 + $0x4] sm:$0xf] %vm1135, %v1149
    %1159 = vst.msk [vmem:[%s1156 + $0x8] sm:$0xf] %vm1135, %v1150
    %1160 = vst.msk [vmem:[%s1156 + $0xc] sm:$0xf] %vm1135, %v1151
    %v1161 = vpack.c.bf16 %v1112, %v1111
    %v1162 = vpack.c.bf16 %v1114, %v1113
    %v1165 = vunpack.c.l.b16 %v1161
    %v1166 = vunpack.c.h.b16 %v1161
    %v1167 = vunpack.c.l.b16 %v1162
    %v1168 = vunpack.c.h.b16 %v1162
    %v1169 = vpack.c.b16 %v1165, %v1165
    %v1170 = vpack.c.b16 %v1166, %v1166
    %v1171 = vpack.c.b16 %v1167, %v1167
    %v1172 = vpack.c.b16 %v1168, %v1168
    %s1177 = scalar_lea.vmem %s4, 32
    %1178 = vst.msk [vmem:[%s1177] sm:$0xf] %vm1135, %v1169
    %1179 = vst.msk [vmem:[%s1177 + $0x4] sm:$0xf] %vm1135, %v1170
    %1180 = vst.msk [vmem:[%s1177 + $0x8] sm:$0xf] %vm1135, %v1171
    %1181 = vst.msk [vmem:[%s1177 + $0xc] sm:$0xf] %vm1135, %v1172
    %v1182 = vpack.c.bf16 %v1116, %v1115
    %v1183 = vpack.c.bf16 %v1118, %v1117
    %v1186 = vunpack.c.l.b16 %v1182
    %v1187 = vunpack.c.h.b16 %v1182
    %v1188 = vunpack.c.l.b16 %v1183
    %v1189 = vunpack.c.h.b16 %v1183
    %v1190 = vpack.c.b16 %v1186, %v1186
    %v1191 = vpack.c.b16 %v1187, %v1187
    %v1192 = vpack.c.b16 %v1188, %v1188
    %v1193 = vpack.c.b16 %v1189, %v1189
    %s1198 = scalar_lea.vmem %s4, 48
    %1199 = vst.msk [vmem:[%s1198] sm:$0xf] %vm1135, %v1190
    %1200 = vst.msk [vmem:[%s1198 + $0x4] sm:$0xf] %vm1135, %v1191
    %1201 = vst.msk [vmem:[%s1198 + $0x8] sm:$0xf] %vm1135, %v1192
    %1202 = vst.msk [vmem:[%s1198 + $0xc] sm:$0xf] %vm1135, %v1193
    // Predicated region
    $region22: #{generator_forward.6} parent=1 // pred_check
      _
    $region23: #{generator_forward.6} parent=1 // pred_check_branch
      %1204 = sbr.rel (0) target = $region25
    $region24: #{generator_forward.6} parent=1 // pred_region
      _
    $region25: #{generator_forward.6} parent=1 // pred_fallthru
      _
    // Predicated region
    $region26: #{generator_forward.6} parent=1 // pred_check
      _
    $region27: #{generator_forward.6} parent=1 // pred_check_branch
      %1206 = sbr.rel (0) target = $region29
    $region28: #{generator_forward.6} parent=1 // pred_region
      _
    $region29: #{generator_forward.6} parent=1 // pred_fallthru
      _
    %1207 = vsyncpa [#allocation3], 1

// kernel: generator_forward.7
$region0: #{generator_forward.7}
  #allocation0 [shape = 'u32[]', space=smem, size = 0x4, offset = 0x4, fixed_abs, tag = 'smem constant byte address 0x4 - core index']
  #allocation1 [shape = 'u32[144,128]{1,0:T(1,128)}', space=vmem, size = 0x12000, scoped, tag = 'internal scratch']
  %s0 = inlined_call_operand.vmem [shape: bf16[4,128,128], index: 0, kind: input, shape index: {}]
  %s1 = inlined_call_operand.hbm [shape: bf16[4,16,128], index: 1, kind: input, shape index: {}]
  %s2 = inlined_call_operand.vmem [shape: f32[16,1], index: 2, kind: input, shape index: {}]
  %s3 = inlined_call_operand.vmem [shape: f32[16,1], index: 3, kind: input, shape index: {}]
  %s4 = inlined_call_operand.vmem [shape: bf16[4,16,128], index: 4, kind: output, shape index: {}]
  %s5 = sld [smem:[#allocation0]]
  $region30: #{generator_forward.7} parent=0
    _
  %s7 = ssub.s32 1, %s5
  %s8 = scalar_select 0, %s7, %s5
  $region1: #{generator_forward.7} parent=0
    #allocation2 [shape = 'u8[16384]{0}', space=vmem, size = 0x4000, scoped, tag = 'input window, operand 1, single buffered']
    #allocation3 [shape = 's32[1]{0}', space=sflag, size = 0x4, scoped, tag = 'scoped memory for generator_forward.7']
    %9 = vsyncpa [#allocation3], 0
    // Predicated region
    $region2: #{generator_forward.7} parent=1 // pred_check
      _
    $region3: #{generator_forward.7} parent=1 // pred_check_branch
      %11 = sbr.rel (0) target = $region5
    $region4: #{generator_forward.7} parent=1 // pred_region
      _
    $region5: #{generator_forward.7} parent=1 // pred_fallthru
      _
    // Predicated region
    $region6: #{generator_forward.7} parent=1 // pred_check
      _
    $region7: #{generator_forward.7} parent=1 // pred_check_branch
      %13 = sbr.rel (0) target = $region9
    $region8: #{generator_forward.7} parent=1 // pred_region
      %s15 = ssub.s32 512, 512
      %16 = vsyncadd [#allocation3], %s15
      %s17 = sshll.u32 [#allocation2], 4
      %s18 = int_to_ptr.vmem [resolvable:$true] %s17
      %23 = dma.hbm_to_vmem [thread:$0]  %s1, 512, %s18, [#allocation3], 64, 64, 4
    $region9: #{generator_forward.7} parent=1 // pred_fallthru
      _
    // Predicated region
    $region10: #{generator_forward.7} parent=1 // pred_check
      _
    $region11: #{generator_forward.7} parent=1 // pred_check_branch
      %25 = sbr.rel (0) target = $region13
    $region12: #{generator_forward.7} parent=1 // pred_region
      _
    $region13: #{generator_forward.7} parent=1 // pred_fallthru
      _
    // Predicated region
    $region14: #{generator_forward.7} parent=1 // pred_check
      _
    $region15: #{generator_forward.7} parent=1 // pred_check_branch
      %27 = sbr.rel (0) target = $region17
    $region16: #{generator_forward.7} parent=1 // pred_region
      _
    $region17: #{generator_forward.7} parent=1 // pred_fallthru
      _
    // Predicated region
    $region18: #{generator_forward.7} parent=1 // pred_check
      _
    $region19: #{generator_forward.7} parent=1 // pred_check_branch
      %29 = sbr.rel (0) target = $region21
    $region20: #{generator_forward.7} parent=1 // pred_region
      %30 = dma.done [#allocation3], 512
    $region21: #{generator_forward.7} parent=1 // pred_fallthru
      _
    %v32 = vld [vmem:[%s0] sm:$0xf]
    %v33 = vld [vmem:[%s0 + $0x4] sm:$0xf]
    %v34 = vld [vmem:[%s0 + $0x8] sm:$0xf]
    %v35 = vld [vmem:[%s0 + $0xc] sm:$0xf]
    %v36 = vld [vmem:[%s0 + $0x10] sm:$0xf]
    %v37 = vld [vmem:[%s0 + $0x14] sm:$0xf]
    %v38 = vld [vmem:[%s0 + $0x18] sm:$0xf]
    %v39 = vld [vmem:[%s0 + $0x1c] sm:$0xf]
    %v40 = vld [vmem:[%s0 + $0x20] sm:$0xf]
    %v41 = vld [vmem:[%s0 + $0x24] sm:$0xf]
    %v42 = vld [vmem:[%s0 + $0x28] sm:$0xf]
    %v43 = vld [vmem:[%s0 + $0x2c] sm:$0xf]
    %v44 = vld [vmem:[%s0 + $0x30] sm:$0xf]
    %v45 = vld [vmem:[%s0 + $0x34] sm:$0xf]
    %v46 = vld [vmem:[%s0 + $0x38] sm:$0xf]
    %v47 = vld [vmem:[%s0 + $0x3c] sm:$0xf]
    %v48 = vld [vmem:[#allocation2] sm:$0xf]
    %v49 = vld [vmem:[#allocation2 + $0x4] sm:$0xf]
    %v52 = vunpack.c.l.b16 %v48
    %v53 = vunpack.c.l.b16 %v49
    %v54 = vpack.c.b16 %v53, %v52
    %v72 = vunpack.c.l.b16 %v32
    %v73 = vunpack.c.l.b16 %v33
    %v74 = vunpack.c.l.b16 %v34
    %v75 = vunpack.c.l.b16 %v35
    %v76 = vunpack.c.l.b16 %v36
    %v77 = vunpack.c.l.b16 %v37
    %v78 = vunpack.c.l.b16 %v38
    %v79 = vunpack.c.l.b16 %v39
    %v80 = vunpack.c.l.b16 %v40
    %v81 = vunpack.c.l.b16 %v41
    %v82 = vunpack.c.l.b16 %v42
    %v83 = vunpack.c.l.b16 %v43
    %v84 = vunpack.c.l.b16 %v44
    %v85 = vunpack.c.l.b16 %v45
    %v86 = vunpack.c.l.b16 %v46
    %v87 = vunpack.c.l.b16 %v47
    %v88 = vpack.c.b16 %v73, %v72
    %v89 = vpack.c.b16 %v75, %v74
    %v90 = vpack.c.b16 %v77, %v76
    %v91 = vpack.c.b16 %v79, %v78
    %v92 = vpack.c.b16 %v81, %v80
    %v93 = vpack.c.b16 %v83, %v82
    %v94 = vpack.c.b16 %v85, %v84
    %v95 = vpack.c.b16 %v87, %v86
    %104 = vmatprep.subr.bf16.mxu0 0
    %105 = vmatpush1.bf16.msra.mxu0 %v95
    %106 = vmatprep.subr.bf16.mxu0 0
    %107 = vmatpush1.bf16.msra.mxu0 %v94
    %108 = vmatprep.subr.bf16.mxu0 0
    %109 = vmatpush1.bf16.msra.mxu0 %v93
    %110 = vmatprep.subr.bf16.mxu0 0
    %111 = vmatpush1.bf16.msra.mxu0 %v92
    %112 = vmatprep.subr.bf16.mxu0 0
    %113 = vmatpush1.bf16.msra.mxu0 %v91
    %114 = vmatprep.subr.bf16.mxu0 0
    %115 = vmatpush1.bf16.msra.mxu0 %v90
    %116 = vmatprep.subr.bf16.mxu0 0
    %117 = vmatpush1.bf16.msra.mxu0 %v89
    %118 = vmatprep.subr.bf16.mxu0 0
    %119 = vmatpush1.bf16.msra.mxu0 %v88
    %120 = vmatprep.subr.bf16.mxu0 0
    %121 = vmatpush2.bf16.msra.mxu0 0
    %122 = vmatprep.subr.bf16.mxu0 0
    %123 = vmatpush2.bf16.msra.mxu0 0
    %124 = vmatprep.subr.bf16.mxu0 0
    %125 = vmatpush2.bf16.msra.mxu0 0
    %126 = vmatprep.subr.bf16.mxu0 0
    %127 = vmatpush2.bf16.msra.mxu0 0
    %128 = vmatprep.subr.bf16.mxu0 0
    %129 = vmatpush2.bf16.msra.mxu0 0
    %130 = vmatprep.subr.bf16.mxu0 0
    %131 = vmatpush2.bf16.msra.mxu0 0
    %132 = vmatprep.subr.bf16.mxu0 0
    %133 = vmatpush2.bf16.msra.mxu0 0
    %134 = vmatprep.subr.bf16.mxu0 0
    %135 = vmatpush2.bf16.msra.mxu0 0
    %136 = vmatprep.mubr.bf16.mxu0 0
    %137 = vmatmul.mubr.bf16.gmra.mxu0 %v54
    %v138 = vpop.f32.mrf.mxu0
    %v139 = vadd.f32 0.0, %v138
    %v140 = vpop.f32.mrf.mxu0
    %v141 = vpop.f32.mrf.mxu0
    %v142 = vadd.f32 0.0, %v141
    %v143 = vpop.f32.mrf.mxu0
    %144 = vdwg.mxu0
    %s145 = scalar_lea.vmem %s0, 64
    %v146 = vld [vmem:[%s145] sm:$0xf]
    %v147 = vld [vmem:[%s145 + $0x4] sm:$0xf]
    %v148 = vld [vmem:[%s145 + $0x8] sm:$0xf]
    %v149 = vld [vmem:[%s145 + $0xc] sm:$0xf]
    %v150 = vld [vmem:[%s145 + $0x10] sm:$0xf]
    %v151 = vld [vmem:[%s145 + $0x14] sm:$0xf]
    %v152 = vld [vmem:[%s145 + $0x18] sm:$0xf]
    %v153 = vld [vmem:[%s145 + $0x1c] sm:$0xf]
    %v154 = vld [vmem:[%s145 + $0x20] sm:$0xf]
    %v155 = vld [vmem:[%s145 + $0x24] sm:$0xf]
    %v156 = vld [vmem:[%s145 + $0x28] sm:$0xf]
    %v157 = vld [vmem:[%s145 + $0x2c] sm:$0xf]
    %v158 = vld [vmem:[%s145 + $0x30] sm:$0xf]
    %v159 = vld [vmem:[%s145 + $0x34] sm:$0xf]
    %v160 = vld [vmem:[%s145 + $0x38] sm:$0xf]
    %v161 = vld [vmem:[%s145 + $0x3c] sm:$0xf]
    %s162 = scalar_lea.vmem [#allocation2], 8
    %v163 = vld [vmem:[%s162] sm:$0xf]
    %v164 = vld [vmem:[%s162 + $0x4] sm:$0xf]
    %v167 = vunpack.c.l.b16 %v163
    %v168 = vunpack.c.l.b16 %v164
    %v169 = vpack.c.b16 %v168, %v167
    %v187 = vunpack.c.l.b16 %v146
    %v188 = vunpack.c.l.b16 %v147
    %v189 = vunpack.c.l.b16 %v148
    %v190 = vunpack.c.l.b16 %v149
    %v191 = vunpack.c.l.b16 %v150
    %v192 = vunpack.c.l.b16 %v151
    %v193 = vunpack.c.l.b16 %v152
    %v194 = vunpack.c.l.b16 %v153
    %v195 = vunpack.c.l.b16 %v154
    %v196 = vunpack.c.l.b16 %v155
    %v197 = vunpack.c.l.b16 %v156
    %v198 = vunpack.c.l.b16 %v157
    %v199 = vunpack.c.l.b16 %v158
    %v200 = vunpack.c.l.b16 %v159
    %v201 = vunpack.c.l.b16 %v160
    %v202 = vunpack.c.l.b16 %v161
    %v203 = vpack.c.b16 %v188, %v187
    %v204 = vpack.c.b16 %v190, %v189
    %v205 = vpack.c.b16 %v192, %v191
    %v206 = vpack.c.b16 %v194, %v193
    %v207 = vpack.c.b16 %v196, %v195
    %v208 = vpack.c.b16 %v198, %v197
    %v209 = vpack.c.b16 %v200, %v199
    %v210 = vpack.c.b16 %v202, %v201
    %219 = vmatprep.subr.bf16.mxu0 0
    %220 = vmatpush1.bf16.msra.mxu0 %v210
    %221 = vmatprep.subr.bf16.mxu0 0
    %222 = vmatpush1.bf16.msra.mxu0 %v209
    %223 = vmatprep.subr.bf16.mxu0 0
    %224 = vmatpush1.bf16.msra.mxu0 %v208
    %225 = vmatprep.subr.bf16.mxu0 0
    %226 = vmatpush1.bf16.msra.mxu0 %v207
    %227 = vmatprep.subr.bf16.mxu0 0
    %228 = vmatpush1.bf16.msra.mxu0 %v206
    %229 = vmatprep.subr.bf16.mxu0 0
    %230 = vmatpush1.bf16.msra.mxu0 %v205
    %231 = vmatprep.subr.bf16.mxu0 0
    %232 = vmatpush1.bf16.msra.mxu0 %v204
    %233 = vmatprep.subr.bf16.mxu0 0
    %234 = vmatpush1.bf16.msra.mxu0 %v203
    %235 = vmatprep.subr.bf16.mxu0 0
    %236 = vmatpush2.bf16.msra.mxu0 0
    %237 = vmatprep.subr.bf16.mxu0 0
    %238 = vmatpush2.bf16.msra.mxu0 0
    %239 = vmatprep.subr.bf16.mxu0 0
    %240 = vmatpush2.bf16.msra.mxu0 0
    %241 = vmatprep.subr.bf16.mxu0 0
    %242 = vmatpush2.bf16.msra.mxu0 0
    %243 = vmatprep.subr.bf16.mxu0 0
    %244 = vmatpush2.bf16.msra.mxu0 0
    %245 = vmatprep.subr.bf16.mxu0 0
    %246 = vmatpush2.bf16.msra.mxu0 0
    %247 = vmatprep.subr.bf16.mxu0 0
    %248 = vmatpush2.bf16.msra.mxu0 0
    %249 = vmatprep.subr.bf16.mxu0 0
    %250 = vmatpush2.bf16.msra.mxu0 0
    %251 = vmatprep.mubr.bf16.mxu0 0
    %252 = vmatmul.mubr.bf16.gmra.mxu0 %v169
    %v253 = vpop.f32.mrf.mxu0
    %v254 = vadd.f32 0.0, %v253
    %v255 = vpop.f32.mrf.mxu0
    %v256 = vpop.f32.mrf.mxu0
    %v257 = vadd.f32 0.0, %v256
    %v258 = vpop.f32.mrf.mxu0
    %259 = vdwg.mxu0
    %s260 = scalar_lea.vmem %s0, 128
    %v261 = vld [vmem:[%s260] sm:$0xf]
    %v262 = vld [vmem:[%s260 + $0x4] sm:$0xf]
    %v263 = vld [vmem:[%s260 + $0x8] sm:$0xf]
    %v264 = vld [vmem:[%s260 + $0xc] sm:$0xf]
    %v265 = vld [vmem:[%s260 + $0x10] sm:$0xf]
    %v266 = vld [vmem:[%s260 + $0x14] sm:$0xf]
    %v267 = vld [vmem:[%s260 + $0x18] sm:$0xf]
    %v268 = vld [vmem:[%s260 + $0x1c] sm:$0xf]
    %v269 = vld [vmem:[%s260 + $0x20] sm:$0xf]
    %v270 = vld [vmem:[%s260 + $0x24] sm:$0xf]
    %v271 = vld [vmem:[%s260 + $0x28] sm:$0xf]
    %v272 = vld [vmem:[%s260 + $0x2c] sm:$0xf]
    %v273 = vld [vmem:[%s260 + $0x30] sm:$0xf]
    %v274 = vld [vmem:[%s260 + $0x34] sm:$0xf]
    %v275 = vld [vmem:[%s260 + $0x38] sm:$0xf]
    %v276 = vld [vmem:[%s260 + $0x3c] sm:$0xf]
    %s277 = scalar_lea.vmem [#allocation2], 16
    %v278 = vld [vmem:[%s277] sm:$0xf]
    %v279 = vld [vmem:[%s277 + $0x4] sm:$0xf]
    %v282 = vunpack.c.l.b16 %v278
    %v283 = vunpack.c.l.b16 %v279
    %v284 = vpack.c.b16 %v283, %v282
    %v302 = vunpack.c.l.b16 %v261
    %v303 = vunpack.c.l.b16 %v262
    %v304 = vunpack.c.l.b16 %v263
    %v305 = vunpack.c.l.b16 %v264
    %v306 = vunpack.c.l.b16 %v265
    %v307 = vunpack.c.l.b16 %v266
    %v308 = vunpack.c.l.b16 %v267
    %v309 = vunpack.c.l.b16 %v268
    %v310 = vunpack.c.l.b16 %v269
    %v311 = vunpack.c.l.b16 %v270
    %v312 = vunpack.c.l.b16 %v271
    %v313 = vunpack.c.l.b16 %v272
    %v314 = vunpack.c.l.b16 %v273
    %v315 = vunpack.c.l.b16 %v274
    %v316 = vunpack.c.l.b16 %v275
    %v317 = vunpack.c.l.b16 %v276
    %v318 = vpack.c.b16 %v303, %v302
    %v319 = vpack.c.b16 %v305, %v304
    %v320 = vpack.c.b16 %v307, %v306
    %v321 = vpack.c.b16 %v309, %v308
    %v322 = vpack.c.b16 %v311, %v310
    %v323 = vpack.c.b16 %v313, %v312
    %v324 = vpack.c.b16 %v315, %v314
    %v325 = vpack.c.b16 %v317, %v316
    %334 = vmatprep.subr.bf16.mxu0 0
    %335 = vmatpush1.bf16.msra.mxu0 %v325
    %336 = vmatprep.subr.bf16.mxu0 0
    %337 = vmatpush1.bf16.msra.mxu0 %v324
    %338 = vmatprep.subr.bf16.mxu0 0
    %339 = vmatpush1.bf16.msra.mxu0 %v323
    %340 = vmatprep.subr.bf16.mxu0 0
    %341 = vmatpush1.bf16.msra.mxu0 %v322
    %342 = vmatprep.subr.bf16.mxu0 0
    %343 = vmatpush1.bf16.msra.mxu0 %v321
    %344 = vmatprep.subr.bf16.mxu0 0
    %345 = vmatpush1.bf16.msra.mxu0 %v320
    %346 = vmatprep.subr.bf16.mxu0 0
    %347 = vmatpush1.bf16.msra.mxu0 %v319
    %348 = vmatprep.subr.bf16.mxu0 0
    %349 = vmatpush1.bf16.msra.mxu0 %v318
    %350 = vmatprep.subr.bf16.mxu0 0
    %351 = vmatpush2.bf16.msra.mxu0 0
    %352 = vmatprep.subr.bf16.mxu0 0
    %353 = vmatpush2.bf16.msra.mxu0 0
    %354 = vmatprep.subr.bf16.mxu0 0
    %355 = vmatpush2.bf16.msra.mxu0 0
    %356 = vmatprep.subr.bf16.mxu0 0
    %357 = vmatpush2.bf16.msra.mxu0 0
    %358 = vmatprep.subr.bf16.mxu0 0
    %359 = vmatpush2.bf16.msra.mxu0 0
    %360 = vmatprep.subr.bf16.mxu0 0
    %361 = vmatpush2.bf16.msra.mxu0 0
    %362 = vmatprep.subr.bf16.mxu0 0
    %363 = vmatpush2.bf16.msra.mxu0 0
    %364 = vmatprep.subr.bf16.mxu0 0
    %365 = vmatpush2.bf16.msra.mxu0 0
    %366 = vmatprep.mubr.bf16.mxu0 0
    %367 = vmatmul.mubr.bf16.gmra.mxu0 %v284
    %v368 = vpop.f32.mrf.mxu0
    %v369 = vadd.f32 0.0, %v368
    %v370 = vpop.f32.mrf.mxu0
    %v371 = vpop.f32.mrf.mxu0
    %v372 = vadd.f32 0.0, %v371
    %v373 = vpop.f32.mrf.mxu0
    %374 = vdwg.mxu0
    %s375 = scalar_lea.vmem %s0, 192
    %v376 = vld [vmem:[%s375] sm:$0xf]
    %v377 = vld [vmem:[%s375 + $0x4] sm:$0xf]
    %v378 = vld [vmem:[%s375 + $0x8] sm:$0xf]
    %v379 = vld [vmem:[%s375 + $0xc] sm:$0xf]
    %v380 = vld [vmem:[%s375 + $0x10] sm:$0xf]
    %v381 = vld [vmem:[%s375 + $0x14] sm:$0xf]
    %v382 = vld [vmem:[%s375 + $0x18] sm:$0xf]
    %v383 = vld [vmem:[%s375 + $0x1c] sm:$0xf]
    %v384 = vld [vmem:[%s375 + $0x20] sm:$0xf]
    %v385 = vld [vmem:[%s375 + $0x24] sm:$0xf]
    %v386 = vld [vmem:[%s375 + $0x28] sm:$0xf]
    %v387 = vld [vmem:[%s375 + $0x2c] sm:$0xf]
    %v388 = vld [vmem:[%s375 + $0x30] sm:$0xf]
    %v389 = vld [vmem:[%s375 + $0x34] sm:$0xf]
    %v390 = vld [vmem:[%s375 + $0x38] sm:$0xf]
    %v391 = vld [vmem:[%s375 + $0x3c] sm:$0xf]
    %s392 = scalar_lea.vmem [#allocation2], 24
    %v393 = vld [vmem:[%s392] sm:$0xf]
    %v394 = vld [vmem:[%s392 + $0x4] sm:$0xf]
    %v397 = vunpack.c.l.b16 %v393
    %v398 = vunpack.c.l.b16 %v394
    %v399 = vpack.c.b16 %v398, %v397
    %v417 = vunpack.c.l.b16 %v376
    %v418 = vunpack.c.l.b16 %v377
    %v419 = vunpack.c.l.b16 %v378
    %v420 = vunpack.c.l.b16 %v379
    %v421 = vunpack.c.l.b16 %v380
    %v422 = vunpack.c.l.b16 %v381
    %v423 = vunpack.c.l.b16 %v382
    %v424 = vunpack.c.l.b16 %v383
    %v425 = vunpack.c.l.b16 %v384
    %v426 = vunpack.c.l.b16 %v385
    %v427 = vunpack.c.l.b16 %v386
    %v428 = vunpack.c.l.b16 %v387
    %v429 = vunpack.c.l.b16 %v388
    %v430 = vunpack.c.l.b16 %v389
    %v431 = vunpack.c.l.b16 %v390
    %v432 = vunpack.c.l.b16 %v391
    %v433 = vpack.c.b16 %v418, %v417
    %v434 = vpack.c.b16 %v420, %v419
    %v435 = vpack.c.b16 %v422, %v421
    %v436 = vpack.c.b16 %v424, %v423
    %v437 = vpack.c.b16 %v426, %v425
    %v438 = vpack.c.b16 %v428, %v427
    %v439 = vpack.c.b16 %v430, %v429
    %v440 = vpack.c.b16 %v432, %v431
    %449 = vmatprep.subr.bf16.mxu0 0
    %450 = vmatpush1.bf16.msra.mxu0 %v440
    %451 = vmatprep.subr.bf16.mxu0 0
    %452 = vmatpush1.bf16.msra.mxu0 %v439
    %453 = vmatprep.subr.bf16.mxu0 0
    %454 = vmatpush1.bf16.msra.mxu0 %v438
    %455 = vmatprep.subr.bf16.mxu0 0
    %456 = vmatpush1.bf16.msra.mxu0 %v437
    %457 = vmatprep.subr.bf16.mxu0 0
    %458 = vmatpush1.bf16.msra.mxu0 %v436
    %459 = vmatprep.subr.bf16.mxu0 0
    %460 = vmatpush1.bf16.msra.mxu0 %v435
    %461 = vmatprep.subr.bf16.mxu0 0
    %462 = vmatpush1.bf16.msra.mxu0 %v434
    %463 = vmatprep.subr.bf16.mxu0 0
    %464 = vmatpush1.bf16.msra.mxu0 %v433
    %465 = vmatprep.subr.bf16.mxu0 0
    %466 = vmatpush2.bf16.msra.mxu0 0
    %467 = vmatprep.subr.bf16.mxu0 0
    %468 = vmatpush2.bf16.msra.mxu0 0
    %469 = vmatprep.subr.bf16.mxu0 0
    %470 = vmatpush2.bf16.msra.mxu0 0
    %471 = vmatprep.subr.bf16.mxu0 0
    %472 = vmatpush2.bf16.msra.mxu0 0
    %473 = vmatprep.subr.bf16.mxu0 0
    %474 = vmatpush2.bf16.msra.mxu0 0
    %475 = vmatprep.subr.bf16.mxu0 0
    %476 = vmatpush2.bf16.msra.mxu0 0
    %477 = vmatprep.subr.bf16.mxu0 0
    %478 = vmatpush2.bf16.msra.mxu0 0
    %479 = vmatprep.subr.bf16.mxu0 0
    %480 = vmatpush2.bf16.msra.mxu0 0
    %481 = vmatprep.mubr.bf16.mxu0 0
    %482 = vmatmul.mubr.bf16.gmra.mxu0 %v399
    %v483 = vpop.f32.mrf.mxu0
    %v484 = vadd.f32 0.0, %v483
    %v485 = vpop.f32.mrf.mxu0
    %v486 = vpop.f32.mrf.mxu0
    %v487 = vadd.f32 0.0, %v486
    %v488 = vpop.f32.mrf.mxu0
    %489 = vdwg.mxu0
    %490 = vadd.xlane.f32.xlu0 %v139
    %v491 = vpop.xlane.xlu0 %490
    %492 = vadd.xlane.f32.xlu0 %v142
    %v493 = vpop.xlane.xlu0 %492
    %494 = vadd.xlane.f32.xlu0 %v254
    %v495 = vpop.xlane.xlu0 %494
    %496 = vadd.xlane.f32.xlu0 %v257
    %v497 = vpop.xlane.xlu0 %496
    %v498 = vadd.f32 %v491, %v495
    %v499 = vadd.f32 %v493, %v497
    %500 = vadd.xlane.f32.xlu0 %v369
    %v501 = vpop.xlane.xlu0 %500
    %502 = vadd.xlane.f32.xlu0 %v372
    %v503 = vpop.xlane.xlu0 %502
    %v504 = vadd.f32 %v498, %v501
    %v505 = vadd.f32 %v499, %v503
    %506 = vadd.xlane.f32.xlu0 %v484
    %v507 = vpop.xlane.xlu0 %506
    %508 = vadd.xlane.f32.xlu0 %v487
    %v509 = vpop.xlane.xlu0 %508
    %v510 = vadd.f32 %v504, %v507
    %v511 = vadd.f32 %v505, %v509
    %v512 = vmul.f32 %v510, 0.001953125
    %v513 = vmul.f32 %v511, 0.001953125
    %v514 = vsub.f32 %v139, %v512
    %v515 = vsub.f32 %v142, %v513
    %v516 = vmul.f32 %v514, %v514
    %v517 = vmul.f32 %v515, %v515
    %518 = vadd.xlane.f32.xlu0 %v516
    %v519 = vpop.xlane.xlu0 %518
    %520 = vadd.xlane.f32.xlu0 %v517
    %v521 = vpop.xlane.xlu0 %520
    %v522 = vsub.f32 %v254, %v512
    %v523 = vsub.f32 %v257, %v513
    %v524 = vmul.f32 %v522, %v522
    %v525 = vmul.f32 %v523, %v523
    %526 = vadd.xlane.f32.xlu0 %v524
    %v527 = vpop.xlane.xlu0 %526
    %528 = vadd.xlane.f32.xlu0 %v525
    %v529 = vpop.xlane.xlu0 %528
    %v530 = vadd.f32 %v519, %v527
    %v531 = vadd.f32 %v521, %v529
    %v532 = vsub.f32 %v369, %v512
    %v533 = vsub.f32 %v372, %v513
    %v534 = vmul.f32 %v532, %v532
    %v535 = vmul.f32 %v533, %v533
    %536 = vadd.xlane.f32.xlu0 %v534
    %v537 = vpop.xlane.xlu0 %536
    %538 = vadd.xlane.f32.xlu0 %v535
    %v539 = vpop.xlane.xlu0 %538
    %v540 = vadd.f32 %v530, %v537
    %v541 = vadd.f32 %v531, %v539
    %v542 = vsub.f32 %v484, %v512
    %v543 = vsub.f32 %v487, %v513
    %v544 = vmul.f32 %v542, %v542
    %v545 = vmul.f32 %v543, %v543
    %546 = vadd.xlane.f32.xlu0 %v544
    %v547 = vpop.xlane.xlu0 %546
    %548 = vadd.xlane.f32.xlu0 %v545
    %v549 = vpop.xlane.xlu0 %548
    %v550 = vadd.f32 %v540, %v547
    %v551 = vadd.f32 %v541, %v549
    %v552 = vmul.f32 %v550, 0.001953125
    %v553 = vmul.f32 %v551, 0.001953125
    %v554 = vld [vmem:[%s2] sm:$0xff]
    %v555 = vld [vmem:[%s2 + $0x8] sm:$0xff]
    %v556 = vadd.f32 %v552, 1e-05
    %v557 = vadd.f32 %v553, 1e-05
    %v558 = vrsqrt.pop %v556
    %v559 = vrsqrt.pop %v557
    %v560 = vmul.f32 %v554, %v558
    %v561 = vmul.f32 %v555, %v559
    %v562 = vld [vmem:[%s3] sm:$0xff]
    %v563 = vld [vmem:[%s3 + $0x8] sm:$0xff]
    %v564 = vmul.f32 %v512, %v560
    %v565 = vmul.f32 %v513, %v561
    %v566 = vsub.f32 %v562, %v564
    %v567 = vsub.f32 %v563, %v565
    %569 = vset.pattern.permute.xlu0 0
    %570 = vperm.xlu0 %569, %v560
    %v571 = vpop.permute.xlu0 %570
    %574 = vset.pattern.permute.xlu0 0
    %575 = vperm.xlu0 %574, %v561
    %v576 = vpop.permute.xlu0 %575
    %v578 = vmul.f32 %v139, %v571
    %v579 = vmul.f32 %v142, %v576
    %581 = vset.pattern.permute.xlu0 0
    %582 = vperm.xlu0 %581, %v566
    %v583 = vpop.permute.xlu0 %582
    %586 = vset.pattern.permute.xlu0 0
    %587 = vperm.xlu0 %586, %v567
    %v588 = vpop.permute.xlu0 %587
    %v590 = vadd.f32 %v578, %v583
    %v591 = vadd.f32 %v579, %v588
    %v592 = vmul.f32 %v254, %v571
    %v593 = vmul.f32 %v257, %v576
    %v594 = vadd.f32 %v592, %v583
    %v595 = vadd.f32 %v593, %v588
    %v596 = vmul.f32 %v369, %v571
    %v597 = vmul.f32 %v372, %v576
    %v598 = vadd.f32 %v596, %v583
    %v599 = vadd.f32 %v597, %v588
    %v600 = vmul.f32 %v484, %v571
    %v601 = vmul.f32 %v487, %v576
    %v602 = vadd.f32 %v600, %v583
    %v603 = vadd.f32 %v601, %v588
    %v604 = vmax.f32 %v590, 0.0
    %v605 = vmax.f32 %v591, 0.0
    %v606 = vmax.f32 %v594, 0.0
    %v607 = vmax.f32 %v595, 0.0
    %v608 = vmax.f32 %v598, 0.0
    %v609 = vmax.f32 %v599, 0.0
    %v610 = vmax.f32 %v602, 0.0
    %v611 = vmax.f32 %v603, 0.0
    %v612 = vpack.c.bf16 %v605, %v604
    %v614 = vunpack.c.l.b16 %v612
    %v615 = vunpack.c.h.b16 %v612
    %v616 = vpack.c.b16 %v614, %v614
    %v617 = vpack.c.b16 %v615, %v615
    %620 = vst [vmem:[%s4] sm:$0xf] %v616
    %621 = vst [vmem:[%s4 + $0x4] sm:$0xf] %v617
    %v622 = vpack.c.bf16 %v607, %v606
    %v624 = vunpack.c.l.b16 %v622
    %v625 = vunpack.c.h.b16 %v622
    %v626 = vpack.c.b16 %v624, %v624
    %v627 = vpack.c.b16 %v625, %v625
    %s630 = scalar_lea.vmem %s4, 8
    %631 = vst [vmem:[%s630] sm:$0xf] %v626
    %632 = vst [vmem:[%s630 + $0x4] sm:$0xf] %v627
    %v633 = vpack.c.bf16 %v609, %v608
    %v635 = vunpack.c.l.b16 %v633
    %v636 = vunpack.c.h.b16 %v633
    %v637 = vpack.c.b16 %v635, %v635
    %v638 = vpack.c.b16 %v636, %v636
    %s641 = scalar_lea.vmem %s4, 16
    %642 = vst [vmem:[%s641] sm:$0xf] %v637
    %643 = vst [vmem:[%s641 + $0x4] sm:$0xf] %v638
    %v644 = vpack.c.bf16 %v611, %v610
    %v646 = vunpack.c.l.b16 %v644
    %v647 = vunpack.c.h.b16 %v644
    %v648 = vpack.c.b16 %v646, %v646
    %v649 = vpack.c.b16 %v647, %v647
    %s652 = scalar_lea.vmem %s4, 24
    %653 = vst [vmem:[%s652] sm:$0xf] %v648
    %654 = vst [vmem:[%s652 + $0x4] sm:$0xf] %v649
    // Predicated region
    $region22: #{generator_forward.7} parent=1 // pred_check
      _
    $region23: #{generator_forward.7} parent=1 // pred_check_branch
      %656 = sbr.rel (0) target = $region25
    $region24: #{generator_forward.7} parent=1 // pred_region
      _
    $region25: #{generator_forward.7} parent=1 // pred_fallthru
      _
    // Predicated region
    $region26: #{generator_forward.7} parent=1 // pred_check
      _
    $region27: #{generator_forward.7} parent=1 // pred_check_branch
      %658 = sbr.rel (0) target = $region29
    $region28: #{generator_forward.7} parent=1 // pred_region
      _
    $region29: #{generator_forward.7} parent=1 // pred_fallthru
      _
    %659 = vsyncpa [#allocation3], 1

// kernel: generator_forward.5
$region0: #{generator_forward.5}
  #allocation0 [shape = 'u32[]', space=smem, size = 0x4, offset = 0x4, fixed_abs, tag = 'smem constant byte address 0x4 - core index']
  #allocation1 [shape = 'u32[144,128]{1,0:T(1,128)}', space=vmem, size = 0x12000, scoped, tag = 'internal scratch']
  %s0 = inlined_call_operand.vmem [shape: bf16[1,16,2], index: 0, kind: input, shape index: {}]
  %s1 = inlined_call_operand.vmem [shape: bf16[16,64,16], index: 1, kind: input, shape index: {}]
  %s2 = inlined_call_operand.vmem [shape: f32[64,1], index: 2, kind: input, shape index: {}]
  %s3 = inlined_call_operand.vmem [shape: f32[64,1], index: 3, kind: input, shape index: {}]
  %s4 = inlined_call_operand.vmem [shape: bf16[16,64,2], index: 4, kind: output, shape index: {}]
  %s5 = sld [smem:[#allocation0]]
  $region26: #{generator_forward.5} parent=0
    _
  %s7 = ssub.s32 1, %s5
  %s8 = scalar_select 0, %s7, %s5
  // Predicated region
  $region2: #{generator_forward.5} parent=0 // pred_check
    _
  $region3: #{generator_forward.5} parent=0 // pred_check_branch
    %10 = sbr.rel (0) target = $region5
  $region4: #{generator_forward.5} parent=0 // pred_region
    _
  $region5: #{generator_forward.5} parent=0 // pred_fallthru
    _
  // Predicated region
  $region6: #{generator_forward.5} parent=0 // pred_check
    _
  $region7: #{generator_forward.5} parent=0 // pred_check_branch
    %12 = sbr.rel (0) target = $region9
  $region8: #{generator_forward.5} parent=0 // pred_region
    _
  $region9: #{generator_forward.5} parent=0 // pred_fallthru
    _
  // Predicated region
  $region10: #{generator_forward.5} parent=0 // pred_check
    _
  $region11: #{generator_forward.5} parent=0 // pred_check_branch
    %14 = sbr.rel (0) target = $region13
  $region12: #{generator_forward.5} parent=0 // pred_region
    _
  $region13: #{generator_forward.5} parent=0 // pred_fallthru
    _
  // Predicated region
  $region14: #{generator_forward.5} parent=0 // pred_check
    _
  $region15: #{generator_forward.5} parent=0 // pred_check_branch
    %16 = sbr.rel (0) target = $region17
  $region16: #{generator_forward.5} parent=0 // pred_region
    _
  $region17: #{generator_forward.5} parent=0 // pred_fallthru
    _
  %v18 = vld [vmem:[%s0] sm:$0xf]
  %v19 = vld [vmem:[%s0 + $0x4] sm:$0xf]
  %v20 = vld [vmem:[%s1] sm:$0xf]
  %v21 = vld [vmem:[%s1 + $0x4] sm:$0xf]
  %v22 = vld [vmem:[%s1 + $0x8] sm:$0xf]
  %v23 = vld [vmem:[%s1 + $0xc] sm:$0xf]
  %v24 = vld [vmem:[%s1 + $0x10] sm:$0xf]
  %v25 = vld [vmem:[%s1 + $0x14] sm:$0xf]
  %v26 = vld [vmem:[%s1 + $0x18] sm:$0xf]
  %v27 = vld [vmem:[%s1 + $0x1c] sm:$0xf]
  %v36 = vunpack.c.l.b16 %v20
  %v37 = vunpack.c.l.b16 %v21
  %v38 = vunpack.c.l.b16 %v22
  %v39 = vunpack.c.l.b16 %v23
  %v40 = vunpack.c.l.b16 %v24
  %v41 = vunpack.c.l.b16 %v25
  %v42 = vunpack.c.l.b16 %v26
  %v43 = vunpack.c.l.b16 %v27
  %v44 = vpack.c.b16 %v37, %v36
  %v45 = vpack.c.b16 %v39, %v38
  %v46 = vpack.c.b16 %v41, %v40
  %v47 = vpack.c.b16 %v43, %v42
  %v50 = vunpack.c.l.b16 %v18
  %v51 = vunpack.c.l.b16 %v19
  %v52 = vpack.c.b16 %v51, %v50
  %vm54 = vcmask 130048
  %v56 = vsel %vm54, %v44, 0
  %v59 = vsel %vm54, %v45, 0
  %v62 = vsel %vm54, %v46, 0
  %v65 = vsel %vm54, %v47, 0
  %67 = vmatprep.subr.bf16.mxu0 0
  %68 = vmatpush1.bf16.msra.mxu0 0
  %69 = vmatprep.subr.bf16.mxu0 0
  %70 = vmatpush1.bf16.msra.mxu0 0
  %71 = vmatprep.subr.bf16.mxu0 0
  %72 = vmatpush1.bf16.msra.mxu0 0
  %73 = vmatprep.subr.bf16.mxu0 0
  %74 = vmatpush1.bf16.msra.mxu0 0
  %75 = vmatprep.subr.bf16.mxu0 0
  %76 = vmatpush1.bf16.msra.mxu0 0
  %77 = vmatprep.subr.bf16.mxu0 0
  %78 = vmatpush1.bf16.msra.mxu0 0
  %79 = vmatprep.subr.bf16.mxu0 0
  %80 = vmatpush1.bf16.msra.mxu0 0
  %81 = vmatprep.subr.bf16.mxu0 0
  %82 = vmatpush1.bf16.msra.mxu0 %v52
  %83 = vmatprep.subr.bf16.mxu0 0
  %84 = vmatpush2.bf16.msra.mxu0 0
  %85 = vmatprep.subr.bf16.mxu0 0
  %86 = vmatpush2.bf16.msra.mxu0 0
  %87 = vmatprep.subr.bf16.mxu0 0
  %88 = vmatpush2.bf16.msra.mxu0 0
  %89 = vmatprep.subr.bf16.mxu0 0
  %90 = vmatpush2.bf16.msra.mxu0 0
  %91 = vmatprep.subr.bf16.mxu0 0
  %92 = vmatpush2.bf16.msra.mxu0 0
  %93 = vmatprep.subr.bf16.mxu0 0
  %94 = vmatpush2.bf16.msra.mxu0 0
  %95 = vmatprep.subr.bf16.mxu0 0
  %96 = vmatpush2.bf16.msra.mxu0 0
  %97 = vmatprep.subr.bf16.mxu0 0
  %98 = vmatpush2.bf16.msra.mxu0 0
  %99 = vmatprep.mubr.bf16.mxu0 0
  %100 = vmatmul.mubr.bf16.gmra.mxu0 %v56
  %v101 = vpop.f32.mrf.mxu0
  %v102 = vadd.f32 0.0, %v101
  %v103 = vpop.f32.mrf.mxu0
  %v104 = vpop.f32.mrf.mxu0
  %v105 = vadd.f32 0.0, %v104
  %v106 = vpop.f32.mrf.mxu0
  %107 = vmatprep.mubr.bf16.mxu0 0
  %108 = vmatmul.mubr.bf16.gmra.mxu0 %v59
  %v109 = vpop.f32.mrf.mxu0
  %v110 = vadd.f32 0.0, %v109
  %v111 = vpop.f32.mrf.mxu0
  %v112 = vpop.f32.mrf.mxu0
  %v113 = vadd.f32 0.0, %v112
  %v114 = vpop.f32.mrf.mxu0
  %115 = vmatprep.mubr.bf16.mxu0 0
  %116 = vmatmul.mubr.bf16.gmra.mxu0 %v62
  %v117 = vpop.f32.mrf.mxu0
  %v118 = vadd.f32 0.0, %v117
  %v119 = vpop.f32.mrf.mxu0
  %v120 = vpop.f32.mrf.mxu0
  %v121 = vadd.f32 0.0, %v120
  %v122 = vpop.f32.mrf.mxu0
  %123 = vmatprep.mubr.bf16.mxu0 0
  %124 = vmatmul.mubr.bf16.gmra.mxu0 %v65
  %v125 = vpop.f32.mrf.mxu0
  %v126 = vadd.f32 0.0, %v125
  %v127 = vpop.f32.mrf.mxu0
  %v128 = vpop.f32.mrf.mxu0
  %v129 = vadd.f32 0.0, %v128
  %v130 = vpop.f32.mrf.mxu0
  %131 = vdwg.mxu0
  %s132 = scalar_lea.vmem %s1, 32
  %v133 = vld [vmem:[%s132] sm:$0xf]
  %v134 = vld [vmem:[%s132 + $0x4] sm:$0xf]
  %v135 = vld [vmem:[%s132 + $0x8] sm:$0xf]
  %v136 = vld [vmem:[%s132 + $0xc] sm:$0xf]
  %v137 = vld [vmem:[%s132 + $0x10] sm:$0xf]
  %v138 = vld [vmem:[%s132 + $0x14] sm:$0xf]
  %v139 = vld [vmem:[%s132 + $0x18] sm:$0xf]
  %v140 = vld [vmem:[%s132 + $0x1c] sm:$0xf]
  %v149 = vunpack.c.l.b16 %v133
  %v150 = vunpack.c.l.b16 %v134
  %v151 = vunpack.c.l.b16 %v135
  %v152 = vunpack.c.l.b16 %v136
  %v153 = vunpack.c.l.b16 %v137
  %v154 = vunpack.c.l.b16 %v138
  %v155 = vunpack.c.l.b16 %v139
  %v156 = vunpack.c.l.b16 %v140
  %v157 = vpack.c.b16 %v150, %v149
  %v158 = vpack.c.b16 %v152, %v151
  %v159 = vpack.c.b16 %v154, %v153
  %v160 = vpack.c.b16 %v156, %v155
  %v162 = vsel %vm54, %v157, 0
  %v165 = vsel %vm54, %v158, 0
  %v168 = vsel %vm54, %v159, 0
  %v171 = vsel %vm54, %v160, 0
  %173 = vmatprep.subr.bf16.mxu0 0
  %174 = vmatpush1.bf16.msra.mxu0 0
  %175 = vmatprep.subr.bf16.mxu0 0
  %176 = vmatpush1.bf16.msra.mxu0 0
  %177 = vmatprep.subr.bf16.mxu0 0
  %178 = vmatpush1.bf16.msra.mxu0 0
  %179 = vmatprep.subr.bf16.mxu0 0
  %180 = vmatpush1.bf16.msra.mxu0 0
  %181 = vmatprep.subr.bf16.mxu0 0
  %182 = vmatpush1.bf16.msra.mxu0 0
  %183 = vmatprep.subr.bf16.mxu0 0
  %184 = vmatpush1.bf16.msra.mxu0 0
  %185 = vmatprep.subr.bf16.mxu0 0
  %186 = vmatpush1.bf16.msra.mxu0 0
  %187 = vmatprep.subr.bf16.mxu0 0
  %188 = vmatpush1.bf16.msra.mxu0 %v52
  %189 = vmatprep.subr.bf16.mxu0 0
  %190 = vmatpush2.bf16.msra.mxu0 0
  %191 = vmatprep.subr.bf16.mxu0 0
  %192 = vmatpush2.bf16.msra.mxu0 0
  %193 = vmatprep.subr.bf16.mxu0 0
  %194 = vmatpush2.bf16.msra.mxu0 0
  %195 = vmatprep.subr.bf16.mxu0 0
  %196 = vmatpush2.bf16.msra.mxu0 0
  %197 = vmatprep.subr.bf16.mxu0 0
  %198 = vmatpush2.bf16.msra.mxu0 0
  %199 = vmatprep.subr.bf16.mxu0 0
  %200 = vmatpush2.bf16.msra.mxu0 0
  %201 = vmatprep.subr.bf16.mxu0 0
  %202 = vmatpush2.bf16.msra.mxu0 0
  %203 = vmatprep.subr.bf16.mxu0 0
  %204 = vmatpush2.bf16.msra.mxu0 0
  %205 = vmatprep.mubr.bf16.mxu0 0
  %206 = vmatmul.mubr.bf16.gmra.mxu0 %v162
  %v207 = vpop.f32.mrf.mxu0
  %v208 = vadd.f32 0.0, %v207
  %v209 = vpop.f32.mrf.mxu0
  %v210 = vpop.f32.mrf.mxu0
  %v211 = vadd.f32 0.0, %v210
  %v212 = vpop.f32.mrf.mxu0
  %213 = vmatprep.mubr.bf16.mxu0 0
  %214 = vmatmul.mubr.bf16.gmra.mxu0 %v165
  %v215 = vpop.f32.mrf.mxu0
  %v216 = vadd.f32 0.0, %v215
  %v217 = vpop.f32.mrf.mxu0
  %v218 = vpop.f32.mrf.mxu0
  %v219 = vadd.f32 0.0, %v218
  %v220 = vpop.f32.mrf.mxu0
  %221 = vmatprep.mubr.bf16.mxu0 0
  %222 = vmatmul.mubr.bf16.gmra.mxu0 %v168
  %v223 = vpop.f32.mrf.mxu0
  %v224 = vadd.f32 0.0, %v223
  %v225 = vpop.f32.mrf.mxu0
  %v226 = vpop.f32.mrf.mxu0
  %v227 = vadd.f32 0.0, %v226
  %v228 = vpop.f32.mrf.mxu0
  %229 = vmatprep.mubr.bf16.mxu0 0
  %230 = vmatmul.mubr.bf16.gmra.mxu0 %v171
  %v231 = vpop.f32.mrf.mxu0
  %v232 = vadd.f32 0.0, %v231
  %v233 = vpop.f32.mrf.mxu0
  %v234 = vpop.f32.mrf.mxu0
  %v235 = vadd.f32 0.0, %v234
  %v236 = vpop.f32.mrf.mxu0
  %237 = vdwg.mxu0
  %s238 = scalar_lea.vmem %s1, 64
  %v239 = vld [vmem:[%s238] sm:$0xf]
  %v240 = vld [vmem:[%s238 + $0x4] sm:$0xf]
  %v241 = vld [vmem:[%s238 + $0x8] sm:$0xf]
  %v242 = vld [vmem:[%s238 + $0xc] sm:$0xf]
  %v243 = vld [vmem:[%s238 + $0x10] sm:$0xf]
  %v244 = vld [vmem:[%s238 + $0x14] sm:$0xf]
  %v245 = vld [vmem:[%s238 + $0x18] sm:$0xf]
  %v246 = vld [vmem:[%s238 + $0x1c] sm:$0xf]
  %v255 = vunpack.c.l.b16 %v239
  %v256 = vunpack.c.l.b16 %v240
  %v257 = vunpack.c.l.b16 %v241
  %v258 = vunpack.c.l.b16 %v242
  %v259 = vunpack.c.l.b16 %v243
  %v260 = vunpack.c.l.b16 %v244
  %v261 = vunpack.c.l.b16 %v245
  %v262 = vunpack.c.l.b16 %v246
  %v263 = vpack.c.b16 %v256, %v255
  %v264 = vpack.c.b16 %v258, %v257
  %v265 = vpack.c.b16 %v260, %v259
  %v266 = vpack.c.b16 %v262, %v261
  %v268 = vsel %vm54, %v263, 0
  %v271 = vsel %vm54, %v264, 0
  %v274 = vsel %vm54, %v265, 0
  %v277 = vsel %vm54, %v266, 0
  %279 = vmatprep.subr.bf16.mxu0 0
  %280 = vmatpush1.bf16.msra.mxu0 0
  %281 = vmatprep.subr.bf16.mxu0 0
  %282 = vmatpush1.bf16.msra.mxu0 0
  %283 = vmatprep.subr.bf16.mxu0 0
  %284 = vmatpush1.bf16.msra.mxu0 0
  %285 = vmatprep.subr.bf16.mxu0 0
  %286 = vmatpush1.bf16.msra.mxu0 0
  %287 = vmatprep.subr.bf16.mxu0 0
  %288 = vmatpush1.bf16.msra.mxu0 0
  %289 = vmatprep.subr.bf16.mxu0 0
  %290 = vmatpush1.bf16.msra.mxu0 0
  %291 = vmatprep.subr.bf16.mxu0 0
  %292 = vmatpush1.bf16.msra.mxu0 0
  %293 = vmatprep.subr.bf16.mxu0 0
  %294 = vmatpush1.bf16.msra.mxu0 %v52
  %295 = vmatprep.subr.bf16.mxu0 0
  %296 = vmatpush2.bf16.msra.mxu0 0
  %297 = vmatprep.subr.bf16.mxu0 0
  %298 = vmatpush2.bf16.msra.mxu0 0
  %299 = vmatprep.subr.bf16.mxu0 0
  %300 = vmatpush2.bf16.msra.mxu0 0
  %301 = vmatprep.subr.bf16.mxu0 0
  %302 = vmatpush2.bf16.msra.mxu0 0
  %303 = vmatprep.subr.bf16.mxu0 0
  %304 = vmatpush2.bf16.msra.mxu0 0
  %305 = vmatprep.subr.bf16.mxu0 0
  %306 = vmatpush2.bf16.msra.mxu0 0
  %307 = vmatprep.subr.bf16.mxu0 0
  %308 = vmatpush2.bf16.msra.mxu0 0
  %309 = vmatprep.subr.bf16.mxu0 0
  %310 = vmatpush2.bf16.msra.mxu0 0
  %311 = vmatprep.mubr.bf16.mxu0 0
  %312 = vmatmul.mubr.bf16.gmra.mxu0 %v268
  %v313 = vpop.f32.mrf.mxu0
  %v314 = vadd.f32 0.0, %v313
  %v315 = vpop.f32.mrf.mxu0
  %v316 = vpop.f32.mrf.mxu0
  %v317 = vadd.f32 0.0, %v316
  %v318 = vpop.f32.mrf.mxu0
  %319 = vmatprep.mubr.bf16.mxu0 0
  %320 = vmatmul.mubr.bf16.gmra.mxu0 %v271
  %v321 = vpop.f32.mrf.mxu0
  %v322 = vadd.f32 0.0, %v321
  %v323 = vpop.f32.mrf.mxu0
  %v324 = vpop.f32.mrf.mxu0
  %v325 = vadd.f32 0.0, %v324
  %v326 = vpop.f32.mrf.mxu0
  %327 = vmatprep.mubr.bf16.mxu0 0
  %328 = vmatmul.mubr.bf16.gmra.mxu0 %v274
  %v329 = vpop.f32.mrf.mxu0
  %v330 = vadd.f32 0.0, %v329
  %v331 = vpop.f32.mrf.mxu0
  %v332 = vpop.f32.mrf.mxu0
  %v333 = vadd.f32 0.0, %v332
  %v334 = vpop.f32.mrf.mxu0
  %335 = vmatprep.mubr.bf16.mxu0 0
  %336 = vmatmul.mubr.bf16.gmra.mxu0 %v277
  %v337 = vpop.f32.mrf.mxu0
  %v338 = vadd.f32 0.0, %v337
  %v339 = vpop.f32.mrf.mxu0
  %v340 = vpop.f32.mrf.mxu0
  %v341 = vadd.f32 0.0, %v340
  %v342 = vpop.f32.mrf.mxu0
  %343 = vdwg.mxu0
  %s344 = scalar_lea.vmem %s1, 96
  %v345 = vld [vmem:[%s344] sm:$0xf]
  %v346 = vld [vmem:[%s344 + $0x4] sm:$0xf]
  %v347 = vld [vmem:[%s344 + $0x8] sm:$0xf]
  %v348 = vld [vmem:[%s344 + $0xc] sm:$0xf]
  %v349 = vld [vmem:[%s344 + $0x10] sm:$0xf]
  %v350 = vld [vmem:[%s344 + $0x14] sm:$0xf]
  %v351 = vld [vmem:[%s344 + $0x18] sm:$0xf]
  %v352 = vld [vmem:[%s344 + $0x1c] sm:$0xf]
  %v361 = vunpack.c.l.b16 %v345
  %v362 = vunpack.c.l.b16 %v346
  %v363 = vunpack.c.l.b16 %v347
  %v364 = vunpack.c.l.b16 %v348
  %v365 = vunpack.c.l.b16 %v349
  %v366 = vunpack.c.l.b16 %v350
  %v367 = vunpack.c.l.b16 %v351
  %v368 = vunpack.c.l.b16 %v352
  %v369 = vpack.c.b16 %v362, %v361
  %v370 = vpack.c.b16 %v364, %v363
  %v371 = vpack.c.b16 %v366, %v365
  %v372 = vpack.c.b16 %v368, %v367
  %v374 = vsel %vm54, %v369, 0
  %v377 = vsel %vm54, %v370, 0
  %v380 = vsel %vm54, %v371, 0
  %v383 = vsel %vm54, %v372, 0
  %385 = vmatprep.subr.bf16.mxu0 0
  %386 = vmatpush1.bf16.msra.mxu0 0
  %387 = vmatprep.subr.bf16.mxu0 0
  %388 = vmatpush1.bf16.msra.mxu0 0
  %389 = vmatprep.subr.bf16.mxu0 0
  %390 = vmatpush1.bf16.msra.mxu0 0
  %391 = vmatprep.subr.bf16.mxu0 0
  %392 = vmatpush1.bf16.msra.mxu0 0
  %393 = vmatprep.subr.bf16.mxu0 0
  %394 = vmatpush1.bf16.msra.mxu0 0
  %395 = vmatprep.subr.bf16.mxu0 0
  %396 = vmatpush1.bf16.msra.mxu0 0
  %397 = vmatprep.subr.bf16.mxu0 0
  %398 = vmatpush1.bf16.msra.mxu0 0
  %399 = vmatprep.subr.bf16.mxu0 0
  %400 = vmatpush1.bf16.msra.mxu0 %v52
  %401 = vmatprep.subr.bf16.mxu0 0
  %402 = vmatpush2.bf16.msra.mxu0 0
  %403 = vmatprep.subr.bf16.mxu0 0
  %404 = vmatpush2.bf16.msra.mxu0 0
  %405 = vmatprep.subr.bf16.mxu0 0
  %406 = vmatpush2.bf16.msra.mxu0 0
  %407 = vmatprep.subr.bf16.mxu0 0
  %408 = vmatpush2.bf16.msra.mxu0 0
  %409 = vmatprep.subr.bf16.mxu0 0
  %410 = vmatpush2.bf16.msra.mxu0 0
  %411 = vmatprep.subr.bf16.mxu0 0
  %412 = vmatpush2.bf16.msra.mxu0 0
  %413 = vmatprep.subr.bf16.mxu0 0
  %414 = vmatpush2.bf16.msra.mxu0 0
  %415 = vmatprep.subr.bf16.mxu0 0
  %416 = vmatpush2.bf16.msra.mxu0 0
  %417 = vmatprep.mubr.bf16.mxu0 0
  %418 = vmatmul.mubr.bf16.gmra.mxu0 %v374
  %v419 = vpop.f32.mrf.mxu0
  %v420 = vadd.f32 0.0, %v419
  %v421 = vpop.f32.mrf.mxu0
  %v422 = vpop.f32.mrf.mxu0
  %v423 = vadd.f32 0.0, %v422
  %v424 = vpop.f32.mrf.mxu0
  %425 = vmatprep.mubr.bf16.mxu0 0
  %426 = vmatmul.mubr.bf16.gmra.mxu0 %v377
  %v427 = vpop.f32.mrf.mxu0
  %v428 = vadd.f32 0.0, %v427
  %v429 = vpop.f32.mrf.mxu0
  %v430 = vpop.f32.mrf.mxu0
  %v431 = vadd.f32 0.0, %v430
  %v432 = vpop.f32.mrf.mxu0
  %433 = vmatprep.mubr.bf16.mxu0 0
  %434 = vmatmul.mubr.bf16.gmra.mxu0 %v380
  %v435 = vpop.f32.mrf.mxu0
  %v436 = vadd.f32 0.0, %v435
  %v437 = vpop.f32.mrf.mxu0
  %v438 = vpop.f32.mrf.mxu0
  %v439 = vadd.f32 0.0, %v438
  %v440 = vpop.f32.mrf.mxu0
  %441 = vmatprep.mubr.bf16.mxu0 0
  %442 = vmatmul.mubr.bf16.gmra.mxu0 %v383
  %v443 = vpop.f32.mrf.mxu0
  %v444 = vadd.f32 0.0, %v443
  %v445 = vpop.f32.mrf.mxu0
  %v446 = vpop.f32.mrf.mxu0
  %v447 = vadd.f32 0.0, %v446
  %v448 = vpop.f32.mrf.mxu0
  %449 = vdwg.mxu0
  %s450 = scalar_lea.vmem %s1, 128
  %v451 = vld [vmem:[%s450] sm:$0xf]
  %v452 = vld [vmem:[%s450 + $0x4] sm:$0xf]
  %v453 = vld [vmem:[%s450 + $0x8] sm:$0xf]
  %v454 = vld [vmem:[%s450 + $0xc] sm:$0xf]
  %v455 = vld [vmem:[%s450 + $0x10] sm:$0xf]
  %v456 = vld [vmem:[%s450 + $0x14] sm:$0xf]
  %v457 = vld [vmem:[%s450 + $0x18] sm:$0xf]
  %v458 = vld [vmem:[%s450 + $0x1c] sm:$0xf]
  %v467 = vunpack.c.l.b16 %v451
  %v468 = vunpack.c.l.b16 %v452
  %v469 = vunpack.c.l.b16 %v453
  %v470 = vunpack.c.l.b16 %v454
  %v471 = vunpack.c.l.b16 %v455
  %v472 = vunpack.c.l.b16 %v456
  %v473 = vunpack.c.l.b16 %v457
  %v474 = vunpack.c.l.b16 %v458
  %v475 = vpack.c.b16 %v468, %v467
  %v476 = vpack.c.b16 %v470, %v469
  %v477 = vpack.c.b16 %v472, %v471
  %v478 = vpack.c.b16 %v474, %v473
  %v480 = vsel %vm54, %v475, 0
  %v483 = vsel %vm54, %v476, 0
  %v486 = vsel %vm54, %v477, 0
  %v489 = vsel %vm54, %v478, 0
  %491 = vmatprep.subr.bf16.mxu0 0
  %492 = vmatpush1.bf16.msra.mxu0 0
  %493 = vmatprep.subr.bf16.mxu0 0
  %494 = vmatpush1.bf16.msra.mxu0 0
  %495 = vmatprep.subr.bf16.mxu0 0
  %496 = vmatpush1.bf16.msra.mxu0 0
  %497 = vmatprep.subr.bf16.mxu0 0
  %498 = vmatpush1.bf16.msra.mxu0 0
  %499 = vmatprep.subr.bf16.mxu0 0
  %500 = vmatpush1.bf16.msra.mxu0 0
  %501 = vmatprep.subr.bf16.mxu0 0
  %502 = vmatpush1.bf16.msra.mxu0 0
  %503 = vmatprep.subr.bf16.mxu0 0
  %504 = vmatpush1.bf16.msra.mxu0 0
  %505 = vmatprep.subr.bf16.mxu0 0
  %506 = vmatpush1.bf16.msra.mxu0 %v52
  %507 = vmatprep.subr.bf16.mxu0 0
  %508 = vmatpush2.bf16.msra.mxu0 0
  %509 = vmatprep.subr.bf16.mxu0 0
  %510 = vmatpush2.bf16.msra.mxu0 0
  %511 = vmatprep.subr.bf16.mxu0 0
  %512 = vmatpush2.bf16.msra.mxu0 0
  %513 = vmatprep.subr.bf16.mxu0 0
  %514 = vmatpush2.bf16.msra.mxu0 0
  %515 = vmatprep.subr.bf16.mxu0 0
  %516 = vmatpush2.bf16.msra.mxu0 0
  %517 = vmatprep.subr.bf16.mxu0 0
  %518 = vmatpush2.bf16.msra.mxu0 0
  %519 = vmatprep.subr.bf16.mxu0 0
  %520 = vmatpush2.bf16.msra.mxu0 0
  %521 = vmatprep.subr.bf16.mxu0 0
  %522 = vmatpush2.bf16.msra.mxu0 0
  %523 = vmatprep.mubr.bf16.mxu0 0
  %524 = vmatmul.mubr.bf16.gmra.mxu0 %v480
  %v525 = vpop.f32.mrf.mxu0
  %v526 = vadd.f32 0.0, %v525
  %v527 = vpop.f32.mrf.mxu0
  %v528 = vpop.f32.mrf.mxu0
  %v529 = vadd.f32 0.0, %v528
  %v530 = vpop.f32.mrf.mxu0
  %531 = vmatprep.mubr.bf16.mxu0 0
  %532 = vmatmul.mubr.bf16.gmra.mxu0 %v483
  %v533 = vpop.f32.mrf.mxu0
  %v534 = vadd.f32 0.0, %v533
  %v535 = vpop.f32.mrf.mxu0
  %v536 = vpop.f32.mrf.mxu0
  %v537 = vadd.f32 0.0, %v536
  %v538 = vpop.f32.mrf.mxu0
  %539 = vmatprep.mubr.bf16.mxu0 0
  %540 = vmatmul.mubr.bf16.gmra.mxu0 %v486
  %v541 = vpop.f32.mrf.mxu0
  %v542 = vadd.f32 0.0, %v541
  %v543 = vpop.f32.mrf.mxu0
  %v544 = vpop.f32.mrf.mxu0
  %v545 = vadd.f32 0.0, %v544
  %v546 = vpop.f32.mrf.mxu0
  %547 = vmatprep.mubr.bf16.mxu0 0
  %548 = vmatmul.mubr.bf16.gmra.mxu0 %v489
  %v549 = vpop.f32.mrf.mxu0
  %v550 = vadd.f32 0.0, %v549
  %v551 = vpop.f32.mrf.mxu0
  %v552 = vpop.f32.mrf.mxu0
  %v553 = vadd.f32 0.0, %v552
  %v554 = vpop.f32.mrf.mxu0
  %555 = vdwg.mxu0
  %s556 = scalar_lea.vmem %s1, 160
  %v557 = vld [vmem:[%s556] sm:$0xf]
  %v558 = vld [vmem:[%s556 + $0x4] sm:$0xf]
  %v559 = vld [vmem:[%s556 + $0x8] sm:$0xf]
  %v560 = vld [vmem:[%s556 + $0xc] sm:$0xf]
  %v561 = vld [vmem:[%s556 + $0x10] sm:$0xf]
  %v562 = vld [vmem:[%s556 + $0x14] sm:$0xf]
  %v563 = vld [vmem:[%s556 + $0x18] sm:$0xf]
  %v564 = vld [vmem:[%s556 + $0x1c] sm:$0xf]
  %v573 = vunpack.c.l.b16 %v557
  %v574 = vunpack.c.l.b16 %v558
  %v575 = vunpack.c.l.b16 %v559
  %v576 = vunpack.c.l.b16 %v560
  %v577 = vunpack.c.l.b16 %v561
  %v578 = vunpack.c.l.b16 %v562
  %v579 = vunpack.c.l.b16 %v563
  %v580 = vunpack.c.l.b16 %v564
  %v581 = vpack.c.b16 %v574, %v573
  %v582 = vpack.c.b16 %v576, %v575
  %v583 = vpack.c.b16 %v578, %v577
  %v584 = vpack.c.b16 %v580, %v579
  %v586 = vsel %vm54, %v581, 0
  %v589 = vsel %vm54, %v582, 0
  %v592 = vsel %vm54, %v583, 0
  %v595 = vsel %vm54, %v584, 0
  %597 = vmatprep.subr.bf16.mxu0 0
  %598 = vmatpush1.bf16.msra.mxu0 0
  %599 = vmatprep.subr.bf16.mxu0 0
  %600 = vmatpush1.bf16.msra.mxu0 0
  %601 = vmatprep.subr.bf16.mxu0 0
  %602 = vmatpush1.bf16.msra.mxu0 0
  %603 = vmatprep.subr.bf16.mxu0 0
  %604 = vmatpush1.bf16.msra.mxu0 0
  %605 = vmatprep.subr.bf16.mxu0 0
  %606 = vmatpush1.bf16.msra.mxu0 0
  %607 = vmatprep.subr.bf16.mxu0 0
  %608 = vmatpush1.bf16.msra.mxu0 0
  %609 = vmatprep.subr.bf16.mxu0 0
  %610 = vmatpush1.bf16.msra.mxu0 0
  %611 = vmatprep.subr.bf16.mxu0 0
  %612 = vmatpush1.bf16.msra.mxu0 %v52
  %613 = vmatprep.subr.bf16.mxu0 0
  %614 = vmatpush2.bf16.msra.mxu0 0
  %615 = vmatprep.subr.bf16.mxu0 0
  %616 = vmatpush2.bf16.msra.mxu0 0
  %617 = vmatprep.subr.bf16.mxu0 0
  %618 = vmatpush2.bf16.msra.mxu0 0
  %619 = vmatprep.subr.bf16.mxu0 0
  %620 = vmatpush2.bf16.msra.mxu0 0
  %621 = vmatprep.subr.bf16.mxu0 0
  %622 = vmatpush2.bf16.msra.mxu0 0
  %623 = vmatprep.subr.bf16.mxu0 0
  %624 = vmatpush2.bf16.msra.mxu0 0
  %625 = vmatprep.subr.bf16.mxu0 0
  %626 = vmatpush2.bf16.msra.mxu0 0
  %627 = vmatprep.subr.bf16.mxu0 0
  %628 = vmatpush2.bf16.msra.mxu0 0
  %629 = vmatprep.mubr.bf16.mxu0 0
  %630 = vmatmul.mubr.bf16.gmra.mxu0 %v586
  %v631 = vpop.f32.mrf.mxu0
  %v632 = vadd.f32 0.0, %v631
  %v633 = vpop.f32.mrf.mxu0
  %v634 = vpop.f32.mrf.mxu0
  %v635 = vadd.f32 0.0, %v634
  %v636 = vpop.f32.mrf.mxu0
  %637 = vmatprep.mubr.bf16.mxu0 0
  %638 = vmatmul.mubr.bf16.gmra.mxu0 %v589
  %v639 = vpop.f32.mrf.mxu0
  %v640 = vadd.f32 0.0, %v639
  %v641 = vpop.f32.mrf.mxu0
  %v642 = vpop.f32.mrf.mxu0
  %v643 = vadd.f32 0.0, %v642
  %v644 = vpop.f32.mrf.mxu0
  %645 = vmatprep.mubr.bf16.mxu0 0
  %646 = vmatmul.mubr.bf16.gmra.mxu0 %v592
  %v647 = vpop.f32.mrf.mxu0
  %v648 = vadd.f32 0.0, %v647
  %v649 = vpop.f32.mrf.mxu0
  %v650 = vpop.f32.mrf.mxu0
  %v651 = vadd.f32 0.0, %v650
  %v652 = vpop.f32.mrf.mxu0
  %653 = vmatprep.mubr.bf16.mxu0 0
  %654 = vmatmul.mubr.bf16.gmra.mxu0 %v595
  %v655 = vpop.f32.mrf.mxu0
  %v656 = vadd.f32 0.0, %v655
  %v657 = vpop.f32.mrf.mxu0
  %v658 = vpop.f32.mrf.mxu0
  %v659 = vadd.f32 0.0, %v658
  %v660 = vpop.f32.mrf.mxu0
  %661 = vdwg.mxu0
  %s662 = scalar_lea.vmem %s1, 192
  %v663 = vld [vmem:[%s662] sm:$0xf]
  %v664 = vld [vmem:[%s662 + $0x4] sm:$0xf]
  %v665 = vld [vmem:[%s662 + $0x8] sm:$0xf]
  %v666 = vld [vmem:[%s662 + $0xc] sm:$0xf]
  %v667 = vld [vmem:[%s662 + $0x10] sm:$0xf]
  %v668 = vld [vmem:[%s662 + $0x14] sm:$0xf]
  %v669 = vld [vmem:[%s662 + $0x18] sm:$0xf]
  %v670 = vld [vmem:[%s662 + $0x1c] sm:$0xf]
  %v679 = vunpack.c.l.b16 %v663
  %v680 = vunpack.c.l.b16 %v664
  %v681 = vunpack.c.l.b16 %v665
  %v682 = vunpack.c.l.b16 %v666
  %v683 = vunpack.c.l.b16 %v667
  %v684 = vunpack.c.l.b16 %v668
  %v685 = vunpack.c.l.b16 %v669
  %v686 = vunpack.c.l.b16 %v670
  %v687 = vpack.c.b16 %v680, %v679
  %v688 = vpack.c.b16 %v682, %v681
  %v689 = vpack.c.b16 %v684, %v683
  %v690 = vpack.c.b16 %v686, %v685
  %v692 = vsel %vm54, %v687, 0
  %v695 = vsel %vm54, %v688, 0
  %v698 = vsel %vm54, %v689, 0
  %v701 = vsel %vm54, %v690, 0
  %703 = vmatprep.subr.bf16.mxu0 0
  %704 = vmatpush1.bf16.msra.mxu0 0
  %705 = vmatprep.subr.bf16.mxu0 0
  %706 = vmatpush1.bf16.msra.mxu0 0
  %707 = vmatprep.subr.bf16.mxu0 0
  %708 = vmatpush1.bf16.msra.mxu0 0
  %709 = vmatprep.subr.bf16.mxu0 0
  %710 = vmatpush1.bf16.msra.mxu0 0
  %711 = vmatprep.subr.bf16.mxu0 0
  %712 = vmatpush1.bf16.msra.mxu0 0
  %713 = vmatprep.subr.bf16.mxu0 0
  %714 = vmatpush1.bf16.msra.mxu0 0
  %715 = vmatprep.subr.bf16.mxu0 0
  %716 = vmatpush1.bf16.msra.mxu0 0
  %717 = vmatprep.subr.bf16.mxu0 0
  %718 = vmatpush1.bf16.msra.mxu0 %v52
  %719 = vmatprep.subr.bf16.mxu0 0
  %720 = vmatpush2.bf16.msra.mxu0 0
  %721 = vmatprep.subr.bf16.mxu0 0
  %722 = vmatpush2.bf16.msra.mxu0 0
  %723 = vmatprep.subr.bf16.mxu0 0
  %724 = vmatpush2.bf16.msra.mxu0 0
  %725 = vmatprep.subr.bf16.mxu0 0
  %726 = vmatpush2.bf16.msra.mxu0 0
  %727 = vmatprep.subr.bf16.mxu0 0
  %728 = vmatpush2.bf16.msra.mxu0 0
  %729 = vmatprep.subr.bf16.mxu0 0
  %730 = vmatpush2.bf16.msra.mxu0 0
  %731 = vmatprep.subr.bf16.mxu0 0
  %732 = vmatpush2.bf16.msra.mxu0 0
  %733 = vmatprep.subr.bf16.mxu0 0
  %734 = vmatpush2.bf16.msra.mxu0 0
  %735 = vmatprep.mubr.bf16.mxu0 0
  %736 = vmatmul.mubr.bf16.gmra.mxu0 %v692
  %v737 = vpop.f32.mrf.mxu0
  %v738 = vadd.f32 0.0, %v737
  %v739 = vpop.f32.mrf.mxu0
  %v740 = vpop.f32.mrf.mxu0
  %v741 = vadd.f32 0.0, %v740
  %v742 = vpop.f32.mrf.mxu0
  %743 = vmatprep.mubr.bf16.mxu0 0
  %744 = vmatmul.mubr.bf16.gmra.mxu0 %v695
  %v745 = vpop.f32.mrf.mxu0
  %v746 = vadd.f32 0.0, %v745
  %v747 = vpop.f32.mrf.mxu0
  %v748 = vpop.f32.mrf.mxu0
  %v749 = vadd.f32 0.0, %v748
  %v750 = vpop.f32.mrf.mxu0
  %751 = vmatprep.mubr.bf16.mxu0 0
  %752 = vmatmul.mubr.bf16.gmra.mxu0 %v698
  %v753 = vpop.f32.mrf.mxu0
  %v754 = vadd.f32 0.0, %v753
  %v755 = vpop.f32.mrf.mxu0
  %v756 = vpop.f32.mrf.mxu0
  %v757 = vadd.f32 0.0, %v756
  %v758 = vpop.f32.mrf.mxu0
  %759 = vmatprep.mubr.bf16.mxu0 0
  %760 = vmatmul.mubr.bf16.gmra.mxu0 %v701
  %v761 = vpop.f32.mrf.mxu0
  %v762 = vadd.f32 0.0, %v761
  %v763 = vpop.f32.mrf.mxu0
  %v764 = vpop.f32.mrf.mxu0
  %v765 = vadd.f32 0.0, %v764
  %v766 = vpop.f32.mrf.mxu0
  %767 = vdwg.mxu0
  %s768 = scalar_lea.vmem %s1, 224
  %v769 = vld [vmem:[%s768] sm:$0xf]
  %v770 = vld [vmem:[%s768 + $0x4] sm:$0xf]
  %v771 = vld [vmem:[%s768 + $0x8] sm:$0xf]
  %v772 = vld [vmem:[%s768 + $0xc] sm:$0xf]
  %v773 = vld [vmem:[%s768 + $0x10] sm:$0xf]
  %v774 = vld [vmem:[%s768 + $0x14] sm:$0xf]
  %v775 = vld [vmem:[%s768 + $0x18] sm:$0xf]
  %v776 = vld [vmem:[%s768 + $0x1c] sm:$0xf]
  %v785 = vunpack.c.l.b16 %v769
  %v786 = vunpack.c.l.b16 %v770
  %v787 = vunpack.c.l.b16 %v771
  %v788 = vunpack.c.l.b16 %v772
  %v789 = vunpack.c.l.b16 %v773
  %v790 = vunpack.c.l.b16 %v774
  %v791 = vunpack.c.l.b16 %v775
  %v792 = vunpack.c.l.b16 %v776
  %v793 = vpack.c.b16 %v786, %v785
  %v794 = vpack.c.b16 %v788, %v787
  %v795 = vpack.c.b16 %v790, %v789
  %v796 = vpack.c.b16 %v792, %v791
  %v798 = vsel %vm54, %v793, 0
  %v801 = vsel %vm54, %v794, 0
  %v804 = vsel %vm54, %v795, 0
  %v807 = vsel %vm54, %v796, 0
  %809 = vmatprep.subr.bf16.mxu0 0
  %810 = vmatpush1.bf16.msra.mxu0 0
  %811 = vmatprep.subr.bf16.mxu0 0
  %812 = vmatpush1.bf16.msra.mxu0 0
  %813 = vmatprep.subr.bf16.mxu0 0
  %814 = vmatpush1.bf16.msra.mxu0 0
  %815 = vmatprep.subr.bf16.mxu0 0
  %816 = vmatpush1.bf16.msra.mxu0 0
  %817 = vmatprep.subr.bf16.mxu0 0
  %818 = vmatpush1.bf16.msra.mxu0 0
  %819 = vmatprep.subr.bf16.mxu0 0
  %820 = vmatpush1.bf16.msra.mxu0 0
  %821 = vmatprep.subr.bf16.mxu0 0
  %822 = vmatpush1.bf16.msra.mxu0 0
  %823 = vmatprep.subr.bf16.mxu0 0
  %824 = vmatpush1.bf16.msra.mxu0 %v52
  %825 = vmatprep.subr.bf16.mxu0 0
  %826 = vmatpush2.bf16.msra.mxu0 0
  %827 = vmatprep.subr.bf16.mxu0 0
  %828 = vmatpush2.bf16.msra.mxu0 0
  %829 = vmatprep.subr.bf16.mxu0 0
  %830 = vmatpush2.bf16.msra.mxu0 0
  %831 = vmatprep.subr.bf16.mxu0 0
  %832 = vmatpush2.bf16.msra.mxu0 0
  %833 = vmatprep.subr.bf16.mxu0 0
  %834 = vmatpush2.bf16.msra.mxu0 0
  %835 = vmatprep.subr.bf16.mxu0 0
  %836 = vmatpush2.bf16.msra.mxu0 0
  %837 = vmatprep.subr.bf16.mxu0 0
  %838 = vmatpush2.bf16.msra.mxu0 0
  %839 = vmatprep.subr.bf16.mxu0 0
  %840 = vmatpush2.bf16.msra.mxu0 0
  %841 = vmatprep.mubr.bf16.mxu0 0
  %842 = vmatmul.mubr.bf16.gmra.mxu0 %v798
  %v843 = vpop.f32.mrf.mxu0
  %v844 = vadd.f32 0.0, %v843
  %v845 = vpop.f32.mrf.mxu0
  %v846 = vpop.f32.mrf.mxu0
  %v847 = vadd.f32 0.0, %v846
  %v848 = vpop.f32.mrf.mxu0
  %849 = vmatprep.mubr.bf16.mxu0 0
  %850 = vmatmul.mubr.bf16.gmra.mxu0 %v801
  %v851 = vpop.f32.mrf.mxu0
  %v852 = vadd.f32 0.0, %v851
  %v853 = vpop.f32.mrf.mxu0
  %v854 = vpop.f32.mrf.mxu0
  %v855 = vadd.f32 0.0, %v854
  %v856 = vpop.f32.mrf.mxu0
  %857 = vmatprep.mubr.bf16.mxu0 0
  %858 = vmatmul.mubr.bf16.gmra.mxu0 %v804
  %v859 = vpop.f32.mrf.mxu0
  %v860 = vadd.f32 0.0, %v859
  %v861 = vpop.f32.mrf.mxu0
  %v862 = vpop.f32.mrf.mxu0
  %v863 = vadd.f32 0.0, %v862
  %v864 = vpop.f32.mrf.mxu0
  %865 = vmatprep.mubr.bf16.mxu0 0
  %866 = vmatmul.mubr.bf16.gmra.mxu0 %v807
  %v867 = vpop.f32.mrf.mxu0
  %v868 = vadd.f32 0.0, %v867
  %v869 = vpop.f32.mrf.mxu0
  %v870 = vpop.f32.mrf.mxu0
  %v871 = vadd.f32 0.0, %v870
  %v872 = vpop.f32.mrf.mxu0
  %873 = vdwg.mxu0
  %s874 = scalar_lea.vmem %s1, 256
  %v875 = vld [vmem:[%s874] sm:$0xf]
  %v876 = vld [vmem:[%s874 + $0x4] sm:$0xf]
  %v877 = vld [vmem:[%s874 + $0x8] sm:$0xf]
  %v878 = vld [vmem:[%s874 + $0xc] sm:$0xf]
  %v879 = vld [vmem:[%s874 + $0x10] sm:$0xf]
  %v880 = vld [vmem:[%s874 + $0x14] sm:$0xf]
  %v881 = vld [vmem:[%s874 + $0x18] sm:$0xf]
  %v882 = vld [vmem:[%s874 + $0x1c] sm:$0xf]
  %v891 = vunpack.c.l.b16 %v875
  %v892 = vunpack.c.l.b16 %v876
  %v893 = vunpack.c.l.b16 %v877
  %v894 = vunpack.c.l.b16 %v878
  %v895 = vunpack.c.l.b16 %v879
  %v896 = vunpack.c.l.b16 %v880
  %v897 = vunpack.c.l.b16 %v881
  %v898 = vunpack.c.l.b16 %v882
  %v899 = vpack.c.b16 %v892, %v891
  %v900 = vpack.c.b16 %v894, %v893
  %v901 = vpack.c.b16 %v896, %v895
  %v902 = vpack.c.b16 %v898, %v897
  %v904 = vsel %vm54, %v899, 0
  %v907 = vsel %vm54, %v900, 0
  %v910 = vsel %vm54, %v901, 0
  %v913 = vsel %vm54, %v902, 0
  %915 = vmatprep.subr.bf16.mxu0 0
  %916 = vmatpush1.bf16.msra.mxu0 0
  %917 = vmatprep.subr.bf16.mxu0 0
  %918 = vmatpush1.bf16.msra.mxu0 0
  %919 = vmatprep.subr.bf16.mxu0 0
  %920 = vmatpush1.bf16.msra.mxu0 0
  %921 = vmatprep.subr.bf16.mxu0 0
  %922 = vmatpush1.bf16.msra.mxu0 0
  %923 = vmatprep.subr.bf16.mxu0 0
  %924 = vmatpush1.bf16.msra.mxu0 0
  %925 = vmatprep.subr.bf16.mxu0 0
  %926 = vmatpush1.bf16.msra.mxu0 0
  %927 = vmatprep.subr.bf16.mxu0 0
  %928 = vmatpush1.bf16.msra.mxu0 0
  %929 = vmatprep.subr.bf16.mxu0 0
  %930 = vmatpush1.bf16.msra.mxu0 %v52
  %931 = vmatprep.subr.bf16.mxu0 0
  %932 = vmatpush2.bf16.msra.mxu0 0
  %933 = vmatprep.subr.bf16.mxu0 0
  %934 = vmatpush2.bf16.msra.mxu0 0
  %935 = vmatprep.subr.bf16.mxu0 0
  %936 = vmatpush2.bf16.msra.mxu0 0
  %937 = vmatprep.subr.bf16.mxu0 0
  %938 = vmatpush2.bf16.msra.mxu0 0
  %939 = vmatprep.subr.bf16.mxu0 0
  %940 = vmatpush2.bf16.msra.mxu0 0
  %941 = vmatprep.subr.bf16.mxu0 0
  %942 = vmatpush2.bf16.msra.mxu0 0
  %943 = vmatprep.subr.bf16.mxu0 0
  %944 = vmatpush2.bf16.msra.mxu0 0
  %945 = vmatprep.subr.bf16.mxu0 0
  %946 = vmatpush2.bf16.msra.mxu0 0
  %947 = vmatprep.mubr.bf16.mxu0 0
  %948 = vmatmul.mubr.bf16.gmra.mxu0 %v904
  %v949 = vpop.f32.mrf.mxu0
  %v950 = vadd.f32 0.0, %v949
  %v951 = vpop.f32.mrf.mxu0
  %v952 = vpop.f32.mrf.mxu0
  %v953 = vadd.f32 0.0, %v952
  %v954 = vpop.f32.mrf.mxu0
  %955 = vmatprep.mubr.bf16.mxu0 0
  %956 = vmatmul.mubr.bf16.gmra.mxu0 %v907
  %v957 = vpop.f32.mrf.mxu0
  %v958 = vadd.f32 0.0, %v957
  %v959 = vpop.f32.mrf.mxu0
  %v960 = vpop.f32.mrf.mxu0
  %v961 = vadd.f32 0.0, %v960
  %v962 = vpop.f32.mrf.mxu0
  %963 = vmatprep.mubr.bf16.mxu0 0
  %964 = vmatmul.mubr.bf16.gmra.mxu0 %v910
  %v965 = vpop.f32.mrf.mxu0
  %v966 = vadd.f32 0.0, %v965
  %v967 = vpop.f32.mrf.mxu0
  %v968 = vpop.f32.mrf.mxu0
  %v969 = vadd.f32 0.0, %v968
  %v970 = vpop.f32.mrf.mxu0
  %971 = vmatprep.mubr.bf16.mxu0 0
  %972 = vmatmul.mubr.bf16.gmra.mxu0 %v913
  %v973 = vpop.f32.mrf.mxu0
  %v974 = vadd.f32 0.0, %v973
  %v975 = vpop.f32.mrf.mxu0
  %v976 = vpop.f32.mrf.mxu0
  %v977 = vadd.f32 0.0, %v976
  %v978 = vpop.f32.mrf.mxu0
  %979 = vdwg.mxu0
  %s980 = scalar_lea.vmem %s1, 288
  %v981 = vld [vmem:[%s980] sm:$0xf]
  %v982 = vld [vmem:[%s980 + $0x4] sm:$0xf]
  %v983 = vld [vmem:[%s980 + $0x8] sm:$0xf]
  %v984 = vld [vmem:[%s980 + $0xc] sm:$0xf]
  %v985 = vld [vmem:[%s980 + $0x10] sm:$0xf]
  %v986 = vld [vmem:[%s980 + $0x14] sm:$0xf]
  %v987 = vld [vmem:[%s980 + $0x18] sm:$0xf]
  %v988 = vld [vmem:[%s980 + $0x1c] sm:$0xf]
  %v997 = vunpack.c.l.b16 %v981
  %v998 = vunpack.c.l.b16 %v982
  %v999 = vunpack.c.l.b16 %v983
  %v1000 = vunpack.c.l.b16 %v984
  %v1001 = vunpack.c.l.b16 %v985
  %v1002 = vunpack.c.l.b16 %v986
  %v1003 = vunpack.c.l.b16 %v987
  %v1004 = vunpack.c.l.b16 %v988
  %v1005 = vpack.c.b16 %v998, %v997
  %v1006 = vpack.c.b16 %v1000, %v999
  %v1007 = vpack.c.b16 %v1002, %v1001
  %v1008 = vpack.c.b16 %v1004, %v1003
  %v1010 = vsel %vm54, %v1005, 0
  %v1013 = vsel %vm54, %v1006, 0
  %v1016 = vsel %vm54, %v1007, 0
  %v1019 = vsel %vm54, %v1008, 0
  %1021 = vmatprep.subr.bf16.mxu0 0
  %1022 = vmatpush1.bf16.msra.mxu0 0
  %1023 = vmatprep.subr.bf16.mxu0 0
  %1024 = vmatpush1.bf16.msra.mxu0 0
  %1025 = vmatprep.subr.bf16.mxu0 0
  %1026 = vmatpush1.bf16.msra.mxu0 0
  %1027 = vmatprep.subr.bf16.mxu0 0
  %1028 = vmatpush1.bf16.msra.mxu0 0
  %1029 = vmatprep.subr.bf16.mxu0 0
  %1030 = vmatpush1.bf16.msra.mxu0 0
  %1031 = vmatprep.subr.bf16.mxu0 0
  %1032 = vmatpush1.bf16.msra.mxu0 0
  %1033 = vmatprep.subr.bf16.mxu0 0
  %1034 = vmatpush1.bf16.msra.mxu0 0
  %1035 = vmatprep.subr.bf16.mxu0 0
  %1036 = vmatpush1.bf16.msra.mxu0 %v52
  %1037 = vmatprep.subr.bf16.mxu0 0
  %1038 = vmatpush2.bf16.msra.mxu0 0
  %1039 = vmatprep.subr.bf16.mxu0 0
  %1040 = vmatpush2.bf16.msra.mxu0 0
  %1041 = vmatprep.subr.bf16.mxu0 0
  %1042 = vmatpush2.bf16.msra.mxu0 0
  %1043 = vmatprep.subr.bf16.mxu0 0
  %1044 = vmatpush2.bf16.msra.mxu0 0
  %1045 = vmatprep.subr.bf16.mxu0 0
  %1046 = vmatpush2.bf16.msra.mxu0 0
  %1047 = vmatprep.subr.bf16.mxu0 0
  %1048 = vmatpush2.bf16.msra.mxu0 0
  %1049 = vmatprep.subr.bf16.mxu0 0
  %1050 = vmatpush2.bf16.msra.mxu0 0
  %1051 = vmatprep.subr.bf16.mxu0 0
  %1052 = vmatpush2.bf16.msra.mxu0 0
  %1053 = vmatprep.mubr.bf16.mxu0 0
  %1054 = vmatmul.mubr.bf16.gmra.mxu0 %v1010
  %v1055 = vpop.f32.mrf.mxu0
  %v1056 = vadd.f32 0.0, %v1055
  %v1057 = vpop.f32.mrf.mxu0
  %v1058 = vpop.f32.mrf.mxu0
  %v1059 = vadd.f32 0.0, %v1058
  %v1060 = vpop.f32.mrf.mxu0
  %1061 = vmatprep.mubr.bf16.mxu0 0
  %1062 = vmatmul.mubr.bf16.gmra.mxu0 %v1013
  %v1063 = vpop.f32.mrf.mxu0
  %v1064 = vadd.f32 0.0, %v1063
  %v1065 = vpop.f32.mrf.mxu0
  %v1066 = vpop.f32.mrf.mxu0
  %v1067 = vadd.f32 0.0, %v1066
  %v1068 = vpop.f32.mrf.mxu0
  %1069 = vmatprep.mubr.bf16.mxu0 0
  %1070 = vmatmul.mubr.bf16.gmra.mxu0 %v1016
  %v1071 = vpop.f32.mrf.mxu0
  %v1072 = vadd.f32 0.0, %v1071
  %v1073 = vpop.f32.mrf.mxu0
  %v1074 = vpop.f32.mrf.mxu0
  %v1075 = vadd.f32 0.0, %v1074
  %v1076 = vpop.f32.mrf.mxu0
  %1077 = vmatprep.mubr.bf16.mxu0 0
  %1078 = vmatmul.mubr.bf16.gmra.mxu0 %v1019
  %v1079 = vpop.f32.mrf.mxu0
  %v1080 = vadd.f32 0.0, %v1079
  %v1081 = vpop.f32.mrf.mxu0
  %v1082 = vpop.f32.mrf.mxu0
  %v1083 = vadd.f32 0.0, %v1082
  %v1084 = vpop.f32.mrf.mxu0
  %1085 = vdwg.mxu0
  %s1086 = scalar_lea.vmem %s1, 320
  %v1087 = vld [vmem:[%s1086] sm:$0xf]
  %v1088 = vld [vmem:[%s1086 + $0x4] sm:$0xf]
  %v1089 = vld [vmem:[%s1086 + $0x8] sm:$0xf]
  %v1090 = vld [vmem:[%s1086 + $0xc] sm:$0xf]
  %v1091 = vld [vmem:[%s1086 + $0x10] sm:$0xf]
  %v1092 = vld [vmem:[%s1086 + $0x14] sm:$0xf]
  %v1093 = vld [vmem:[%s1086 + $0x18] sm:$0xf]
  %v1094 = vld [vmem:[%s1086 + $0x1c] sm:$0xf]
  %v1103 = vunpack.c.l.b16 %v1087
  %v1104 = vunpack.c.l.b16 %v1088
  %v1105 = vunpack.c.l.b16 %v1089
  %v1106 = vunpack.c.l.b16 %v1090
  %v1107 = vunpack.c.l.b16 %v1091
  %v1108 = vunpack.c.l.b16 %v1092
  %v1109 = vunpack.c.l.b16 %v1093
  %v1110 = vunpack.c.l.b16 %v1094
  %v1111 = vpack.c.b16 %v1104, %v1103
  %v1112 = vpack.c.b16 %v1106, %v1105
  %v1113 = vpack.c.b16 %v1108, %v1107
  %v1114 = vpack.c.b16 %v1110, %v1109
  %v1116 = vsel %vm54, %v1111, 0
  %v1119 = vsel %vm54, %v1112, 0
  %v1122 = vsel %vm54, %v1113, 0
  %v1125 = vsel %vm54, %v1114, 0
  %1127 = vmatprep.subr.bf16.mxu0 0
  %1128 = vmatpush1.bf16.msra.mxu0 0
  %1129 = vmatprep.subr.bf16.mxu0 0
  %1130 = vmatpush1.bf16.msra.mxu0 0
  %1131 = vmatprep.subr.bf16.mxu0 0
  %1132 = vmatpush1.bf16.msra.mxu0 0
  %1133 = vmatprep.subr.bf16.mxu0 0
  %1134 = vmatpush1.bf16.msra.mxu0 0
  %1135 = vmatprep.subr.bf16.mxu0 0
  %1136 = vmatpush1.bf16.msra.mxu0 0
  %1137 = vmatprep.subr.bf16.mxu0 0
  %1138 = vmatpush1.bf16.msra.mxu0 0
  %1139 = vmatprep.subr.bf16.mxu0 0
  %1140 = vmatpush1.bf16.msra.mxu0 0
  %1141 = vmatprep.subr.bf16.mxu0 0
  %1142 = vmatpush1.bf16.msra.mxu0 %v52
  %1143 = vmatprep.subr.bf16.mxu0 0
  %1144 = vmatpush2.bf16.msra.mxu0 0
  %1145 = vmatprep.subr.bf16.mxu0 0
  %1146 = vmatpush2.bf16.msra.mxu0 0
  %1147 = vmatprep.subr.bf16.mxu0 0
  %1148 = vmatpush2.bf16.msra.mxu0 0
  %1149 = vmatprep.subr.bf16.mxu0 0
  %1150 = vmatpush2.bf16.msra.mxu0 0
  %1151 = vmatprep.subr.bf16.mxu0 0
  %1152 = vmatpush2.bf16.msra.mxu0 0
  %1153 = vmatprep.subr.bf16.mxu0 0
  %1154 = vmatpush2.bf16.msra.mxu0 0
  %1155 = vmatprep.subr.bf16.mxu0 0
  %1156 = vmatpush2.bf16.msra.mxu0 0
  %1157 = vmatprep.subr.bf16.mxu0 0
  %1158 = vmatpush2.bf16.msra.mxu0 0
  %1159 = vmatprep.mubr.bf16.mxu0 0
  %1160 = vmatmul.mubr.bf16.gmra.mxu0 %v1116
  %v1161 = vpop.f32.mrf.mxu0
  %v1162 = vadd.f32 0.0, %v1161
  %v1163 = vpop.f32.mrf.mxu0
  %v1164 = vpop.f32.mrf.mxu0
  %v1165 = vadd.f32 0.0, %v1164
  %v1166 = vpop.f32.mrf.mxu0
  %1167 = vmatprep.mubr.bf16.mxu0 0
  %1168 = vmatmul.mubr.bf16.gmra.mxu0 %v1119
  %v1169 = vpop.f32.mrf.mxu0
  %v1170 = vadd.f32 0.0, %v1169
  %v1171 = vpop.f32.mrf.mxu0
  %v1172 = vpop.f32.mrf.mxu0
  %v1173 = vadd.f32 0.0, %v1172
  %v1174 = vpop.f32.mrf.mxu0
  %1175 = vmatprep.mubr.bf16.mxu0 0
  %1176 = vmatmul.mubr.bf16.gmra.mxu0 %v1122
  %v1177 = vpop.f32.mrf.mxu0
  %v1178 = vadd.f32 0.0, %v1177
  %v1179 = vpop.f32.mrf.mxu0
  %v1180 = vpop.f32.mrf.mxu0
  %v1181 = vadd.f32 0.0, %v1180
  %v1182 = vpop.f32.mrf.mxu0
  %1183 = vmatprep.mubr.bf16.mxu0 0
  %1184 = vmatmul.mubr.bf16.gmra.mxu0 %v1125
  %v1185 = vpop.f32.mrf.mxu0
  %v1186 = vadd.f32 0.0, %v1185
  %v1187 = vpop.f32.mrf.mxu0
  %v1188 = vpop.f32.mrf.mxu0
  %v1189 = vadd.f32 0.0, %v1188
  %v1190 = vpop.f32.mrf.mxu0
  %1191 = vdwg.mxu0
  %s1192 = scalar_lea.vmem %s1, 352
  %v1193 = vld [vmem:[%s1192] sm:$0xf]
  %v1194 = vld [vmem:[%s1192 + $0x4] sm:$0xf]
  %v1195 = vld [vmem:[%s1192 + $0x8] sm:$0xf]
  %v1196 = vld [vmem:[%s1192 + $0xc] sm:$0xf]
  %v1197 = vld [vmem:[%s1192 + $0x10] sm:$0xf]
  %v1198 = vld [vmem:[%s1192 + $0x14] sm:$0xf]
  %v1199 = vld [vmem:[%s1192 + $0x18] sm:$0xf]
  %v1200 = vld [vmem:[%s1192 + $0x1c] sm:$0xf]
  %v1209 = vunpack.c.l.b16 %v1193
  %v1210 = vunpack.c.l.b16 %v1194
  %v1211 = vunpack.c.l.b16 %v1195
  %v1212 = vunpack.c.l.b16 %v1196
  %v1213 = vunpack.c.l.b16 %v1197
  %v1214 = vunpack.c.l.b16 %v1198
  %v1215 = vunpack.c.l.b16 %v1199
  %v1216 = vunpack.c.l.b16 %v1200
  %v1217 = vpack.c.b16 %v1210, %v1209
  %v1218 = vpack.c.b16 %v1212, %v1211
  %v1219 = vpack.c.b16 %v1214, %v1213
  %v1220 = vpack.c.b16 %v1216, %v1215
  %v1222 = vsel %vm54, %v1217, 0
  %v1225 = vsel %vm54, %v1218, 0
  %v1228 = vsel %vm54, %v1219, 0
  %v1231 = vsel %vm54, %v1220, 0
  %1233 = vmatprep.subr.bf16.mxu0 0
  %1234 = vmatpush1.bf16.msra.mxu0 0
  %1235 = vmatprep.subr.bf16.mxu0 0
  %1236 = vmatpush1.bf16.msra.mxu0 0
  %1237 = vmatprep.subr.bf16.mxu0 0
  %1238 = vmatpush1.bf16.msra.mxu0 0
  %1239 = vmatprep.subr.bf16.mxu0 0
  %1240 = vmatpush1.bf16.msra.mxu0 0
  %1241 = vmatprep.subr.bf16.mxu0 0
  %1242 = vmatpush1.bf16.msra.mxu0 0
  %1243 = vmatprep.subr.bf16.mxu0 0
  %1244 = vmatpush1.bf16.msra.mxu0 0
  %1245 = vmatprep.subr.bf16.mxu0 0
  %1246 = vmatpush1.bf16.msra.mxu0 0
  %1247 = vmatprep.subr.bf16.mxu0 0
  %1248 = vmatpush1.bf16.msra.mxu0 %v52
  %1249 = vmatprep.subr.bf16.mxu0 0
  %1250 = vmatpush2.bf16.msra.mxu0 0
  %1251 = vmatprep.subr.bf16.mxu0 0
  %1252 = vmatpush2.bf16.msra.mxu0 0
  %1253 = vmatprep.subr.bf16.mxu0 0
  %1254 = vmatpush2.bf16.msra.mxu0 0
  %1255 = vmatprep.subr.bf16.mxu0 0
  %1256 = vmatpush2.bf16.msra.mxu0 0
  %1257 = vmatprep.subr.bf16.mxu0 0
  %1258 = vmatpush2.bf16.msra.mxu0 0
  %1259 = vmatprep.subr.bf16.mxu0 0
  %1260 = vmatpush2.bf16.msra.mxu0 0
  %1261 = vmatprep.subr.bf16.mxu0 0
  %1262 = vmatpush2.bf16.msra.mxu0 0
  %1263 = vmatprep.subr.bf16.mxu0 0
  %1264 = vmatpush2.bf16.msra.mxu0 0
  %1265 = vmatprep.mubr.bf16.mxu0 0
  %1266 = vmatmul.mubr.bf16.gmra.mxu0 %v1222
  %v1267 = vpop.f32.mrf.mxu0
  %v1268 = vadd.f32 0.0, %v1267
  %v1269 = vpop.f32.mrf.mxu0
  %v1270 = vpop.f32.mrf.mxu0
  %v1271 = vadd.f32 0.0, %v1270
  %v1272 = vpop.f32.mrf.mxu0
  %1273 = vmatprep.mubr.bf16.mxu0 0
  %1274 = vmatmul.mubr.bf16.gmra.mxu0 %v1225
  %v1275 = vpop.f32.mrf.mxu0
  %v1276 = vadd.f32 0.0, %v1275
  %v1277 = vpop.f32.mrf.mxu0
  %v1278 = vpop.f32.mrf.mxu0
  %v1279 = vadd.f32 0.0, %v1278
  %v1280 = vpop.f32.mrf.mxu0
  %1281 = vmatprep.mubr.bf16.mxu0 0
  %1282 = vmatmul.mubr.bf16.gmra.mxu0 %v1228
  %v1283 = vpop.f32.mrf.mxu0
  %v1284 = vadd.f32 0.0, %v1283
  %v1285 = vpop.f32.mrf.mxu0
  %v1286 = vpop.f32.mrf.mxu0
  %v1287 = vadd.f32 0.0, %v1286
  %v1288 = vpop.f32.mrf.mxu0
  %1289 = vmatprep.mubr.bf16.mxu0 0
  %1290 = vmatmul.mubr.bf16.gmra.mxu0 %v1231
  %v1291 = vpop.f32.mrf.mxu0
  %v1292 = vadd.f32 0.0, %v1291
  %v1293 = vpop.f32.mrf.mxu0
  %v1294 = vpop.f32.mrf.mxu0
  %v1295 = vadd.f32 0.0, %v1294
  %v1296 = vpop.f32.mrf.mxu0
  %1297 = vdwg.mxu0
  %s1298 = scalar_lea.vmem %s1, 384
  %v1299 = vld [vmem:[%s1298] sm:$0xf]
  %v1300 = vld [vmem:[%s1298 + $0x4] sm:$0xf]
  %v1301 = vld [vmem:[%s1298 + $0x8] sm:$0xf]
  %v1302 = vld [vmem:[%s1298 + $0xc] sm:$0xf]
  %v1303 = vld [vmem:[%s1298 + $0x10] sm:$0xf]
  %v1304 = vld [vmem:[%s1298 + $0x14] sm:$0xf]
  %v1305 = vld [vmem:[%s1298 + $0x18] sm:$0xf]
  %v1306 = vld [vmem:[%s1298 + $0x1c] sm:$0xf]
  %v1315 = vunpack.c.l.b16 %v1299
  %v1316 = vunpack.c.l.b16 %v1300
  %v1317 = vunpack.c.l.b16 %v1301
  %v1318 = vunpack.c.l.b16 %v1302
  %v1319 = vunpack.c.l.b16 %v1303
  %v1320 = vunpack.c.l.b16 %v1304
  %v1321 = vunpack.c.l.b16 %v1305
  %v1322 = vunpack.c.l.b16 %v1306
  %v1323 = vpack.c.b16 %v1316, %v1315
  %v1324 = vpack.c.b16 %v1318, %v1317
  %v1325 = vpack.c.b16 %v1320, %v1319
  %v1326 = vpack.c.b16 %v1322, %v1321
  %v1328 = vsel %vm54, %v1323, 0
  %v1331 = vsel %vm54, %v1324, 0
  %v1334 = vsel %vm54, %v1325, 0
  %v1337 = vsel %vm54, %v1326, 0
  %1339 = vmatprep.subr.bf16.mxu0 0
  %1340 = vmatpush1.bf16.msra.mxu0 0
  %1341 = vmatprep.subr.bf16.mxu0 0
  %1342 = vmatpush1.bf16.msra.mxu0 0
  %1343 = vmatprep.subr.bf16.mxu0 0
  %1344 = vmatpush1.bf16.msra.mxu0 0
  %1345 = vmatprep.subr.bf16.mxu0 0
  %1346 = vmatpush1.bf16.msra.mxu0 0
  %1347 = vmatprep.subr.bf16.mxu0 0
  %1348 = vmatpush1.bf16.msra.mxu0 0
  %1349 = vmatprep.subr.bf16.mxu0 0
  %1350 = vmatpush1.bf16.msra.mxu0 0
  %1351 = vmatprep.subr.bf16.mxu0 0
  %1352 = vmatpush1.bf16.msra.mxu0 0
  %1353 = vmatprep.subr.bf16.mxu0 0
  %1354 = vmatpush1.bf16.msra.mxu0 %v52
  %1355 = vmatprep.subr.bf16.mxu0 0
  %1356 = vmatpush2.bf16.msra.mxu0 0
  %1357 = vmatprep.subr.bf16.mxu0 0
  %1358 = vmatpush2.bf16.msra.mxu0 0
  %1359 = vmatprep.subr.bf16.mxu0 0
  %1360 = vmatpush2.bf16.msra.mxu0 0
  %1361 = vmatprep.subr.bf16.mxu0 0
  %1362 = vmatpush2.bf16.msra.mxu0 0
  %1363 = vmatprep.subr.bf16.mxu0 0
  %1364 = vmatpush2.bf16.msra.mxu0 0
  %1365 = vmatprep.subr.bf16.mxu0 0
  %1366 = vmatpush2.bf16.msra.mxu0 0
  %1367 = vmatprep.subr.bf16.mxu0 0
  %1368 = vmatpush2.bf16.msra.mxu0 0
  %1369 = vmatprep.subr.bf16.mxu0 0
  %1370 = vmatpush2.bf16.msra.mxu0 0
  %1371 = vmatprep.mubr.bf16.mxu0 0
  %1372 = vmatmul.mubr.bf16.gmra.mxu0 %v1328
  %v1373 = vpop.f32.mrf.mxu0
  %v1374 = vadd.f32 0.0, %v1373
  %v1375 = vpop.f32.mrf.mxu0
  %v1376 = vpop.f32.mrf.mxu0
  %v1377 = vadd.f32 0.0, %v1376
  %v1378 = vpop.f32.mrf.mxu0
  %1379 = vmatprep.mubr.bf16.mxu0 0
  %1380 = vmatmul.mubr.bf16.gmra.mxu0 %v1331
  %v1381 = vpop.f32.mrf.mxu0
  %v1382 = vadd.f32 0.0, %v1381
  %v1383 = vpop.f32.mrf.mxu0
  %v1384 = vpop.f32.mrf.mxu0
  %v1385 = vadd.f32 0.0, %v1384
  %v1386 = vpop.f32.mrf.mxu0
  %1387 = vmatprep.mubr.bf16.mxu0 0
  %1388 = vmatmul.mubr.bf16.gmra.mxu0 %v1334
  %v1389 = vpop.f32.mrf.mxu0
  %v1390 = vadd.f32 0.0, %v1389
  %v1391 = vpop.f32.mrf.mxu0
  %v1392 = vpop.f32.mrf.mxu0
  %v1393 = vadd.f32 0.0, %v1392
  %v1394 = vpop.f32.mrf.mxu0
  %1395 = vmatprep.mubr.bf16.mxu0 0
  %1396 = vmatmul.mubr.bf16.gmra.mxu0 %v1337
  %v1397 = vpop.f32.mrf.mxu0
  %v1398 = vadd.f32 0.0, %v1397
  %v1399 = vpop.f32.mrf.mxu0
  %v1400 = vpop.f32.mrf.mxu0
  %v1401 = vadd.f32 0.0, %v1400
  %v1402 = vpop.f32.mrf.mxu0
  %1403 = vdwg.mxu0
  %s1404 = scalar_lea.vmem %s1, 416
  %v1405 = vld [vmem:[%s1404] sm:$0xf]
  %v1406 = vld [vmem:[%s1404 + $0x4] sm:$0xf]
  %v1407 = vld [vmem:[%s1404 + $0x8] sm:$0xf]
  %v1408 = vld [vmem:[%s1404 + $0xc] sm:$0xf]
  %v1409 = vld [vmem:[%s1404 + $0x10] sm:$0xf]
  %v1410 = vld [vmem:[%s1404 + $0x14] sm:$0xf]
  %v1411 = vld [vmem:[%s1404 + $0x18] sm:$0xf]
  %v1412 = vld [vmem:[%s1404 + $0x1c] sm:$0xf]
  %v1421 = vunpack.c.l.b16 %v1405
  %v1422 = vunpack.c.l.b16 %v1406
  %v1423 = vunpack.c.l.b16 %v1407
  %v1424 = vunpack.c.l.b16 %v1408
  %v1425 = vunpack.c.l.b16 %v1409
  %v1426 = vunpack.c.l.b16 %v1410
  %v1427 = vunpack.c.l.b16 %v1411
  %v1428 = vunpack.c.l.b16 %v1412
  %v1429 = vpack.c.b16 %v1422, %v1421
  %v1430 = vpack.c.b16 %v1424, %v1423
  %v1431 = vpack.c.b16 %v1426, %v1425
  %v1432 = vpack.c.b16 %v1428, %v1427
  %v1434 = vsel %vm54, %v1429, 0
  %v1437 = vsel %vm54, %v1430, 0
  %v1440 = vsel %vm54, %v1431, 0
  %v1443 = vsel %vm54, %v1432, 0
  %1445 = vmatprep.subr.bf16.mxu0 0
  %1446 = vmatpush1.bf16.msra.mxu0 0
  %1447 = vmatprep.subr.bf16.mxu0 0
  %1448 = vmatpush1.bf16.msra.mxu0 0
  %1449 = vmatprep.subr.bf16.mxu0 0
  %1450 = vmatpush1.bf16.msra.mxu0 0
  %1451 = vmatprep.subr.bf16.mxu0 0
  %1452 = vmatpush1.bf16.msra.mxu0 0
  %1453 = vmatprep.subr.bf16.mxu0 0
  %1454 = vmatpush1.bf16.msra.mxu0 0
  %1455 = vmatprep.subr.bf16.mxu0 0
  %1456 = vmatpush1.bf16.msra.mxu0 0
  %1457 = vmatprep.subr.bf16.mxu0 0
  %1458 = vmatpush1.bf16.msra.mxu0 0
  %1459 = vmatprep.subr.bf16.mxu0 0
  %1460 = vmatpush1.bf16.msra.mxu0 %v52
  %1461 = vmatprep.subr.bf16.mxu0 0
  %1462 = vmatpush2.bf16.msra.mxu0 0
  %1463 = vmatprep.subr.bf16.mxu0 0
  %1464 = vmatpush2.bf16.msra.mxu0 0
  %1465 = vmatprep.subr.bf16.mxu0 0
  %1466 = vmatpush2.bf16.msra.mxu0 0
  %1467 = vmatprep.subr.bf16.mxu0 0
  %1468 = vmatpush2.bf16.msra.mxu0 0
  %1469 = vmatprep.subr.bf16.mxu0 0
  %1470 = vmatpush2.bf16.msra.mxu0 0
  %1471 = vmatprep.subr.bf16.mxu0 0
  %1472 = vmatpush2.bf16.msra.mxu0 0
  %1473 = vmatprep.subr.bf16.mxu0 0
  %1474 = vmatpush2.bf16.msra.mxu0 0
  %1475 = vmatprep.subr.bf16.mxu0 0
  %1476 = vmatpush2.bf16.msra.mxu0 0
  %1477 = vmatprep.mubr.bf16.mxu0 0
  %1478 = vmatmul.mubr.bf16.gmra.mxu0 %v1434
  %v1479 = vpop.f32.mrf.mxu0
  %v1480 = vadd.f32 0.0, %v1479
  %v1481 = vpop.f32.mrf.mxu0
  %v1482 = vpop.f32.mrf.mxu0
  %v1483 = vadd.f32 0.0, %v1482
  %v1484 = vpop.f32.mrf.mxu0
  %1485 = vmatprep.mubr.bf16.mxu0 0
  %1486 = vmatmul.mubr.bf16.gmra.mxu0 %v1437
  %v1487 = vpop.f32.mrf.mxu0
  %v1488 = vadd.f32 0.0, %v1487
  %v1489 = vpop.f32.mrf.mxu0
  %v1490 = vpop.f32.mrf.mxu0
  %v1491 = vadd.f32 0.0, %v1490
  %v1492 = vpop.f32.mrf.mxu0
  %1493 = vmatprep.mubr.bf16.mxu0 0
  %1494 = vmatmul.mubr.bf16.gmra.mxu0 %v1440
  %v1495 = vpop.f32.mrf.mxu0
  %v1496 = vadd.f32 0.0, %v1495
  %v1497 = vpop.f32.mrf.mxu0
  %v1498 = vpop.f32.mrf.mxu0
  %v1499 = vadd.f32 0.0, %v1498
  %v1500 = vpop.f32.mrf.mxu0
  %1501 = vmatprep.mubr.bf16.mxu0 0
  %1502 = vmatmul.mubr.bf16.gmra.mxu0 %v1443
  %v1503 = vpop.f32.mrf.mxu0
  %v1504 = vadd.f32 0.0, %v1503
  %v1505 = vpop.f32.mrf.mxu0
  %v1506 = vpop.f32.mrf.mxu0
  %v1507 = vadd.f32 0.0, %v1506
  %v1508 = vpop.f32.mrf.mxu0
  %1509 = vdwg.mxu0
  %s1510 = scalar_lea.vmem %s1, 448
  %v1511 = vld [vmem:[%s1510] sm:$0xf]
  %v1512 = vld [vmem:[%s1510 + $0x4] sm:$0xf]
  %v1513 = vld [vmem:[%s1510 + $0x8] sm:$0xf]
  %v1514 = vld [vmem:[%s1510 + $0xc] sm:$0xf]
  %v1515 = vld [vmem:[%s1510 + $0x10] sm:$0xf]
  %v1516 = vld [vmem:[%s1510 + $0x14] sm:$0xf]
  %v1517 = vld [vmem:[%s1510 + $0x18] sm:$0xf]
  %v1518 = vld [vmem:[%s1510 + $0x1c] sm:$0xf]
  %v1527 = vunpack.c.l.b16 %v1511
  %v1528 = vunpack.c.l.b16 %v1512
  %v1529 = vunpack.c.l.b16 %v1513
  %v1530 = vunpack.c.l.b16 %v1514
  %v1531 = vunpack.c.l.b16 %v1515
  %v1532 = vunpack.c.l.b16 %v1516
  %v1533 = vunpack.c.l.b16 %v1517
  %v1534 = vunpack.c.l.b16 %v1518
  %v1535 = vpack.c.b16 %v1528, %v1527
  %v1536 = vpack.c.b16 %v1530, %v1529
  %v1537 = vpack.c.b16 %v1532, %v1531
  %v1538 = vpack.c.b16 %v1534, %v1533
  %v1540 = vsel %vm54, %v1535, 0
  %v1543 = vsel %vm54, %v1536, 0
  %v1546 = vsel %vm54, %v1537, 0
  %v1549 = vsel %vm54, %v1538, 0
  %1551 = vmatprep.subr.bf16.mxu0 0
  %1552 = vmatpush1.bf16.msra.mxu0 0
  %1553 = vmatprep.subr.bf16.mxu0 0
  %1554 = vmatpush1.bf16.msra.mxu0 0
  %1555 = vmatprep.subr.bf16.mxu0 0
  %1556 = vmatpush1.bf16.msra.mxu0 0
  %1557 = vmatprep.subr.bf16.mxu0 0
  %1558 = vmatpush1.bf16.msra.mxu0 0
  %1559 = vmatprep.subr.bf16.mxu0 0
  %1560 = vmatpush1.bf16.msra.mxu0 0
  %1561 = vmatprep.subr.bf16.mxu0 0
  %1562 = vmatpush1.bf16.msra.mxu0 0
  %1563 = vmatprep.subr.bf16.mxu0 0
  %1564 = vmatpush1.bf16.msra.mxu0 0
  %1565 = vmatprep.subr.bf16.mxu0 0
  %1566 = vmatpush1.bf16.msra.mxu0 %v52
  %1567 = vmatprep.subr.bf16.mxu0 0
  %1568 = vmatpush2.bf16.msra.mxu0 0
  %1569 = vmatprep.subr.bf16.mxu0 0
  %1570 = vmatpush2.bf16.msra.mxu0 0
  %1571 = vmatprep.subr.bf16.mxu0 0
  %1572 = vmatpush2.bf16.msra.mxu0 0
  %1573 = vmatprep.subr.bf16.mxu0 0
  %1574 = vmatpush2.bf16.msra.mxu0 0
  %1575 = vmatprep.subr.bf16.mxu0 0
  %1576 = vmatpush2.bf16.msra.mxu0 0
  %1577 = vmatprep.subr.bf16.mxu0 0
  %1578 = vmatpush2.bf16.msra.mxu0 0
  %1579 = vmatprep.subr.bf16.mxu0 0
  %1580 = vmatpush2.bf16.msra.mxu0 0
  %1581 = vmatprep.subr.bf16.mxu0 0
  %1582 = vmatpush2.bf16.msra.mxu0 0
  %1583 = vmatprep.mubr.bf16.mxu0 0
  %1584 = vmatmul.mubr.bf16.gmra.mxu0 %v1540
  %v1585 = vpop.f32.mrf.mxu0
  %v1586 = vadd.f32 0.0, %v1585
  %v1587 = vpop.f32.mrf.mxu0
  %v1588 = vpop.f32.mrf.mxu0
  %v1589 = vadd.f32 0.0, %v1588
  %v1590 = vpop.f32.mrf.mxu0
  %1591 = vmatprep.mubr.bf16.mxu0 0
  %1592 = vmatmul.mubr.bf16.gmra.mxu0 %v1543
  %v1593 = vpop.f32.mrf.mxu0
  %v1594 = vadd.f32 0.0, %v1593
  %v1595 = vpop.f32.mrf.mxu0
  %v1596 = vpop.f32.mrf.mxu0
  %v1597 = vadd.f32 0.0, %v1596
  %v1598 = vpop.f32.mrf.mxu0
  %1599 = vmatprep.mubr.bf16.mxu0 0
  %1600 = vmatmul.mubr.bf16.gmra.mxu0 %v1546
  %v1601 = vpop.f32.mrf.mxu0
  %v1602 = vadd.f32 0.0, %v1601
  %v1603 = vpop.f32.mrf.mxu0
  %v1604 = vpop.f32.mrf.mxu0
  %v1605 = vadd.f32 0.0, %v1604
  %v1606 = vpop.f32.mrf.mxu0
  %1607 = vmatprep.mubr.bf16.mxu0 0
  %1608 = vmatmul.mubr.bf16.gmra.mxu0 %v1549
  %v1609 = vpop.f32.mrf.mxu0
  %v1610 = vadd.f32 0.0, %v1609
  %v1611 = vpop.f32.mrf.mxu0
  %v1612 = vpop.f32.mrf.mxu0
  %v1613 = vadd.f32 0.0, %v1612
  %v1614 = vpop.f32.mrf.mxu0
  %1615 = vdwg.mxu0
  %s1616 = scalar_lea.vmem %s1, 480
  %v1617 = vld [vmem:[%s1616] sm:$0xf]
  %v1618 = vld [vmem:[%s1616 + $0x4] sm:$0xf]
  %v1619 = vld [vmem:[%s1616 + $0x8] sm:$0xf]
  %v1620 = vld [vmem:[%s1616 + $0xc] sm:$0xf]
  %v1621 = vld [vmem:[%s1616 + $0x10] sm:$0xf]
  %v1622 = vld [vmem:[%s1616 + $0x14] sm:$0xf]
  %v1623 = vld [vmem:[%s1616 + $0x18] sm:$0xf]
  %v1624 = vld [vmem:[%s1616 + $0x1c] sm:$0xf]
  %v1633 = vunpack.c.l.b16 %v1617
  %v1634 = vunpack.c.l.b16 %v1618
  %v1635 = vunpack.c.l.b16 %v1619
  %v1636 = vunpack.c.l.b16 %v1620
  %v1637 = vunpack.c.l.b16 %v1621
  %v1638 = vunpack.c.l.b16 %v1622
  %v1639 = vunpack.c.l.b16 %v1623
  %v1640 = vunpack.c.l.b16 %v1624
  %v1641 = vpack.c.b16 %v1634, %v1633
  %v1642 = vpack.c.b16 %v1636, %v1635
  %v1643 = vpack.c.b16 %v1638, %v1637
  %v1644 = vpack.c.b16 %v1640, %v1639
  %v1646 = vsel %vm54, %v1641, 0
  %v1649 = vsel %vm54, %v1642, 0
  %v1652 = vsel %vm54, %v1643, 0
  %v1655 = vsel %vm54, %v1644, 0
  %1657 = vmatprep.subr.bf16.mxu0 0
  %1658 = vmatpush1.bf16.msra.mxu0 0
  %1659 = vmatprep.subr.bf16.mxu0 0
  %1660 = vmatpush1.bf16.msra.mxu0 0
  %1661 = vmatprep.subr.bf16.mxu0 0
  %1662 = vmatpush1.bf16.msra.mxu0 0
  %1663 = vmatprep.subr.bf16.mxu0 0
  %1664 = vmatpush1.bf16.msra.mxu0 0
  %1665 = vmatprep.subr.bf16.mxu0 0
  %1666 = vmatpush1.bf16.msra.mxu0 0
  %1667 = vmatprep.subr.bf16.mxu0 0
  %1668 = vmatpush1.bf16.msra.mxu0 0
  %1669 = vmatprep.subr.bf16.mxu0 0
  %1670 = vmatpush1.bf16.msra.mxu0 0
  %1671 = vmatprep.subr.bf16.mxu0 0
  %1672 = vmatpush1.bf16.msra.mxu0 %v52
  %1673 = vmatprep.subr.bf16.mxu0 0
  %1674 = vmatpush2.bf16.msra.mxu0 0
  %1675 = vmatprep.subr.bf16.mxu0 0
  %1676 = vmatpush2.bf16.msra.mxu0 0
  %1677 = vmatprep.subr.bf16.mxu0 0
  %1678 = vmatpush2.bf16.msra.mxu0 0
  %1679 = vmatprep.subr.bf16.mxu0 0
  %1680 = vmatpush2.bf16.msra.mxu0 0
  %1681 = vmatprep.subr.bf16.mxu0 0
  %1682 = vmatpush2.bf16.msra.mxu0 0
  %1683 = vmatprep.subr.bf16.mxu0 0
  %1684 = vmatpush2.bf16.msra.mxu0 0
  %1685 = vmatprep.subr.bf16.mxu0 0
  %1686 = vmatpush2.bf16.msra.mxu0 0
  %1687 = vmatprep.subr.bf16.mxu0 0
  %1688 = vmatpush2.bf16.msra.mxu0 0
  %1689 = vmatprep.mubr.bf16.mxu0 0
  %1690 = vmatmul.mubr.bf16.gmra.mxu0 %v1646
  %v1691 = vpop.f32.mrf.mxu0
  %v1692 = vadd.f32 0.0, %v1691
  %v1693 = vpop.f32.mrf.mxu0
  %v1694 = vpop.f32.mrf.mxu0
  %v1695 = vadd.f32 0.0, %v1694
  %v1696 = vpop.f32.mrf.mxu0
  %1697 = vmatprep.mubr.bf16.mxu0 0
  %1698 = vmatmul.mubr.bf16.gmra.mxu0 %v1649
  %v1699 = vpop.f32.mrf.mxu0
  %v1700 = vadd.f32 0.0, %v1699
  %v1701 = vpop.f32.mrf.mxu0
  %v1702 = vpop.f32.mrf.mxu0
  %v1703 = vadd.f32 0.0, %v1702
  %v1704 = vpop.f32.mrf.mxu0
  %1705 = vmatprep.mubr.bf16.mxu0 0
  %1706 = vmatmul.mubr.bf16.gmra.mxu0 %v1652
  %v1707 = vpop.f32.mrf.mxu0
  %v1708 = vadd.f32 0.0, %v1707
  %v1709 = vpop.f32.mrf.mxu0
  %v1710 = vpop.f32.mrf.mxu0
  %v1711 = vadd.f32 0.0, %v1710
  %v1712 = vpop.f32.mrf.mxu0
  %1713 = vmatprep.mubr.bf16.mxu0 0
  %1714 = vmatmul.mubr.bf16.gmra.mxu0 %v1655
  %v1715 = vpop.f32.mrf.mxu0
  %v1716 = vadd.f32 0.0, %v1715
  %v1717 = vpop.f32.mrf.mxu0
  %v1718 = vpop.f32.mrf.mxu0
  %v1719 = vadd.f32 0.0, %v1718
  %v1720 = vpop.f32.mrf.mxu0
  %1721 = vdwg.mxu0
  %vm1722 = vcmask 15360
  %v1723 = vsel %vm1722, %v102, 0.0
  %1724 = vadd.xlane.f32.xlu0 %v1723
  %v1725 = vpop.xlane.xlu0 %1724
  %v1726 = vsel %vm1722, %v105, 0.0
  %1727 = vadd.xlane.f32.xlu0 %v1726
  %v1728 = vpop.xlane.xlu0 %1727
  %v1729 = vsel %vm1722, %v110, 0.0
  %1730 = vadd.xlane.f32.xlu0 %v1729
  %v1731 = vpop.xlane.xlu0 %1730
  %v1732 = vsel %vm1722, %v113, 0.0
  %1733 = vadd.xlane.f32.xlu0 %v1732
  %v1734 = vpop.xlane.xlu0 %1733
  %v1735 = vsel %vm1722, %v118, 0.0
  %1736 = vadd.xlane.f32.xlu0 %v1735
  %v1737 = vpop.xlane.xlu0 %1736
  %v1738 = vsel %vm1722, %v121, 0.0
  %1739 = vadd.xlane.f32.xlu0 %v1738
  %v1740 = vpop.xlane.xlu0 %1739
  %v1741 = vsel %vm1722, %v126, 0.0
  %1742 = vadd.xlane.f32.xlu0 %v1741
  %v1743 = vpop.xlane.xlu0 %1742
  %v1744 = vsel %vm1722, %v129, 0.0
  %1745 = vadd.xlane.f32.xlu0 %v1744
  %v1746 = vpop.xlane.xlu0 %1745
  %v1747 = vsel %vm1722, %v208, 0.0
  %1748 = vadd.xlane.f32.xlu0 %v1747
  %v1749 = vpop.xlane.xlu0 %1748
  %v1750 = vsel %vm1722, %v211, 0.0
  %1751 = vadd.xlane.f32.xlu0 %v1750
  %v1752 = vpop.xlane.xlu0 %1751
  %v1753 = vsel %vm1722, %v216, 0.0
  %1754 = vadd.xlane.f32.xlu0 %v1753
  %v1755 = vpop.xlane.xlu0 %1754
  %v1756 = vsel %vm1722, %v219, 0.0
  %1757 = vadd.xlane.f32.xlu0 %v1756
  %v1758 = vpop.xlane.xlu0 %1757
  %v1759 = vsel %vm1722, %v224, 0.0
  %1760 = vadd.xlane.f32.xlu0 %v1759
  %v1761 = vpop.xlane.xlu0 %1760
  %v1762 = vsel %vm1722, %v227, 0.0
  %1763 = vadd.xlane.f32.xlu0 %v1762
  %v1764 = vpop.xlane.xlu0 %1763
  %v1765 = vsel %vm1722, %v232, 0.0
  %1766 = vadd.xlane.f32.xlu0 %v1765
  %v1767 = vpop.xlane.xlu0 %1766
  %v1768 = vsel %vm1722, %v235, 0.0
  %1769 = vadd.xlane.f32.xlu0 %v1768
  %v1770 = vpop.xlane.xlu0 %1769
  %v1771 = vadd.f32 %v1725, %v1749
  %v1772 = vadd.f32 %v1728, %v1752
  %v1773 = vadd.f32 %v1731, %v1755
  %v1774 = vadd.f32 %v1734, %v1758
  %v1775 = vadd.f32 %v1737, %v1761
  %v1776 = vadd.f32 %v1740, %v1764
  %v1777 = vadd.f32 %v1743, %v1767
  %v1778 = vadd.f32 %v1746, %v1770
  %v1779 = vsel %vm1722, %v314, 0.0
  %1780 = vadd.xlane.f32.xlu0 %v1779
  %v1781 = vpop.xlane.xlu0 %1780
  %v1782 = vsel %vm1722, %v317, 0.0
  %1783 = vadd.xlane.f32.xlu0 %v1782
  %v1784 = vpop.xlane.xlu0 %1783
  %v1785 = vsel %vm1722, %v322, 0.0
  %1786 = vadd.xlane.f32.xlu0 %v1785
  %v1787 = vpop.xlane.xlu0 %1786
  %v1788 = vsel %vm1722, %v325, 0.0
  %1789 = vadd.xlane.f32.xlu0 %v1788
  %v1790 = vpop.xlane.xlu0 %1789
  %v1791 = vsel %vm1722, %v330, 0.0
  %1792 = vadd.xlane.f32.xlu0 %v1791
  %v1793 = vpop.xlane.xlu0 %1792
  %v1794 = vsel %vm1722, %v333, 0.0
  %1795 = vadd.xlane.f32.xlu0 %v1794
  %v1796 = vpop.xlane.xlu0 %1795
  %v1797 = vsel %vm1722, %v338, 0.0
  %1798 = vadd.xlane.f32.xlu0 %v1797
  %v1799 = vpop.xlane.xlu0 %1798
  %v1800 = vsel %vm1722, %v341, 0.0
  %1801 = vadd.xlane.f32.xlu0 %v1800
  %v1802 = vpop.xlane.xlu0 %1801
  %v1803 = vadd.f32 %v1771, %v1781
  %v1804 = vadd.f32 %v1772, %v1784
  %v1805 = vadd.f32 %v1773, %v1787
  %v1806 = vadd.f32 %v1774, %v1790
  %v1807 = vadd.f32 %v1775, %v1793
  %v1808 = vadd.f32 %v1776, %v1796
  %v1809 = vadd.f32 %v1777, %v1799
  %v1810 = vadd.f32 %v1778, %v1802
  %v1811 = vsel %vm1722, %v420, 0.0
  %1812 = vadd.xlane.f32.xlu0 %v1811
  %v1813 = vpop.xlane.xlu0 %1812
  %v1814 = vsel %vm1722, %v423, 0.0
  %1815 = vadd.xlane.f32.xlu0 %v1814
  %v1816 = vpop.xlane.xlu0 %1815
  %v1817 = vsel %vm1722, %v428, 0.0
  %1818 = vadd.xlane.f32.xlu0 %v1817
  %v1819 = vpop.xlane.xlu0 %1818
  %v1820 = vsel %vm1722, %v431, 0.0
  %1821 = vadd.xlane.f32.xlu0 %v1820
  %v1822 = vpop.xlane.xlu0 %1821
  %v1823 = vsel %vm1722, %v436, 0.0
  %1824 = vadd.xlane.f32.xlu0 %v1823
  %v1825 = vpop.xlane.xlu0 %1824
  %v1826 = vsel %vm1722, %v439, 0.0
  %1827 = vadd.xlane.f32.xlu0 %v1826
  %v1828 = vpop.xlane.xlu0 %1827
  %v1829 = vsel %vm1722, %v444, 0.0
  %1830 = vadd.xlane.f32.xlu0 %v1829
  %v1831 = vpop.xlane.xlu0 %1830
  %v1832 = vsel %vm1722, %v447, 0.0
  %1833 = vadd.xlane.f32.xlu0 %v1832
  %v1834 = vpop.xlane.xlu0 %1833
  %v1835 = vadd.f32 %v1803, %v1813
  %v1836 = vadd.f32 %v1804, %v1816
  %v1837 = vadd.f32 %v1805, %v1819
  %v1838 = vadd.f32 %v1806, %v1822
  %v1839 = vadd.f32 %v1807, %v1825
  %v1840 = vadd.f32 %v1808, %v1828
  %v1841 = vadd.f32 %v1809, %v1831
  %v1842 = vadd.f32 %v1810, %v1834
  %v1843 = vsel %vm1722, %v526, 0.0
  %1844 = vadd.xlane.f32.xlu0 %v1843
  %v1845 = vpop.xlane.xlu0 %1844
  %v1846 = vsel %vm1722, %v529, 0.0
  %1847 = vadd.xlane.f32.xlu0 %v1846
  %v1848 = vpop.xlane.xlu0 %1847
  %v1849 = vsel %vm1722, %v534, 0.0
  %1850 = vadd.xlane.f32.xlu0 %v1849
  %v1851 = vpop.xlane.xlu0 %1850
  %v1852 = vsel %vm1722, %v537, 0.0
  %1853 = vadd.xlane.f32.xlu0 %v1852
  %v1854 = vpop.xlane.xlu0 %1853
  %v1855 = vsel %vm1722, %v542, 0.0
  %1856 = vadd.xlane.f32.xlu0 %v1855
  %v1857 = vpop.xlane.xlu0 %1856
  %v1858 = vsel %vm1722, %v545, 0.0
  %1859 = vadd.xlane.f32.xlu0 %v1858
  %v1860 = vpop.xlane.xlu0 %1859
  %v1861 = vsel %vm1722, %v550, 0.0
  %1862 = vadd.xlane.f32.xlu0 %v1861
  %v1863 = vpop.xlane.xlu0 %1862
  %v1864 = vsel %vm1722, %v553, 0.0
  %1865 = vadd.xlane.f32.xlu0 %v1864
  %v1866 = vpop.xlane.xlu0 %1865
  %v1867 = vadd.f32 %v1835, %v1845
  %v1868 = vadd.f32 %v1836, %v1848
  %v1869 = vadd.f32 %v1837, %v1851
  %v1870 = vadd.f32 %v1838, %v1854
  %v1871 = vadd.f32 %v1839, %v1857
  %v1872 = vadd.f32 %v1840, %v1860
  %v1873 = vadd.f32 %v1841, %v1863
  %v1874 = vadd.f32 %v1842, %v1866
  %v1875 = vsel %vm1722, %v632, 0.0
  %1876 = vadd.xlane.f32.xlu0 %v1875
  %v1877 = vpop.xlane.xlu0 %1876
  %v1878 = vsel %vm1722, %v635, 0.0
  %1879 = vadd.xlane.f32.xlu0 %v1878
  %v1880 = vpop.xlane.xlu0 %1879
  %v1881 = vsel %vm1722, %v640, 0.0
  %1882 = vadd.xlane.f32.xlu0 %v1881
  %v1883 = vpop.xlane.xlu0 %1882
  %v1884 = vsel %vm1722, %v643, 0.0
  %1885 = vadd.xlane.f32.xlu0 %v1884
  %v1886 = vpop.xlane.xlu0 %1885
  %v1887 = vsel %vm1722, %v648, 0.0
  %1888 = vadd.xlane.f32.xlu0 %v1887
  %v1889 = vpop.xlane.xlu0 %1888
  %v1890 = vsel %vm1722, %v651, 0.0
  %1891 = vadd.xlane.f32.xlu0 %v1890
  %v1892 = vpop.xlane.xlu0 %1891
  %v1893 = vsel %vm1722, %v656, 0.0
  %1894 = vadd.xlane.f32.xlu0 %v1893
  %v1895 = vpop.xlane.xlu0 %1894
  %v1896 = vsel %vm1722, %v659, 0.0
  %1897 = vadd.xlane.f32.xlu0 %v1896
  %v1898 = vpop.xlane.xlu0 %1897
  %v1899 = vadd.f32 %v1867, %v1877
  %v1900 = vadd.f32 %v1868, %v1880
  %v1901 = vadd.f32 %v1869, %v1883
  %v1902 = vadd.f32 %v1870, %v1886
  %v1903 = vadd.f32 %v1871, %v1889
  %v1904 = vadd.f32 %v1872, %v1892
  %v1905 = vadd.f32 %v1873, %v1895
  %v1906 = vadd.f32 %v1874, %v1898
  %v1907 = vsel %vm1722, %v738, 0.0
  %1908 = vadd.xlane.f32.xlu0 %v1907
  %v1909 = vpop.xlane.xlu0 %1908
  %v1910 = vsel %vm1722, %v741, 0.0
  %1911 = vadd.xlane.f32.xlu0 %v1910
  %v1912 = vpop.xlane.xlu0 %1911
  %v1913 = vsel %vm1722, %v746, 0.0
  %1914 = vadd.xlane.f32.xlu0 %v1913
  %v1915 = vpop.xlane.xlu0 %1914
  %v1916 = vsel %vm1722, %v749, 0.0
  %1917 = vadd.xlane.f32.xlu0 %v1916
  %v1918 = vpop.xlane.xlu0 %1917
  %v1919 = vsel %vm1722, %v754, 0.0
  %1920 = vadd.xlane.f32.xlu0 %v1919
  %v1921 = vpop.xlane.xlu0 %1920
  %v1922 = vsel %vm1722, %v757, 0.0
  %1923 = vadd.xlane.f32.xlu0 %v1922
  %v1924 = vpop.xlane.xlu0 %1923
  %v1925 = vsel %vm1722, %v762, 0.0
  %1926 = vadd.xlane.f32.xlu0 %v1925
  %v1927 = vpop.xlane.xlu0 %1926
  %v1928 = vsel %vm1722, %v765, 0.0
  %1929 = vadd.xlane.f32.xlu0 %v1928
  %v1930 = vpop.xlane.xlu0 %1929
  %v1931 = vadd.f32 %v1899, %v1909
  %v1932 = vadd.f32 %v1900, %v1912
  %v1933 = vadd.f32 %v1901, %v1915
  %v1934 = vadd.f32 %v1902, %v1918
  %v1935 = vadd.f32 %v1903, %v1921
  %v1936 = vadd.f32 %v1904, %v1924
  %v1937 = vadd.f32 %v1905, %v1927
  %v1938 = vadd.f32 %v1906, %v1930
  %v1939 = vsel %vm1722, %v844, 0.0
  %1940 = vadd.xlane.f32.xlu0 %v1939
  %v1941 = vpop.xlane.xlu0 %1940
  %v1942 = vsel %vm1722, %v847, 0.0
  %1943 = vadd.xlane.f32.xlu0 %v1942
  %v1944 = vpop.xlane.xlu0 %1943
  %v1945 = vsel %vm1722, %v852, 0.0
  %1946 = vadd.xlane.f32.xlu0 %v1945
  %v1947 = vpop.xlane.xlu0 %1946
  %v1948 = vsel %vm1722, %v855, 0.0
  %1949 = vadd.xlane.f32.xlu0 %v1948
  %v1950 = vpop.xlane.xlu0 %1949
  %v1951 = vsel %vm1722, %v860, 0.0
  %1952 = vadd.xlane.f32.xlu0 %v1951
  %v1953 = vpop.xlane.xlu0 %1952
  %v1954 = vsel %vm1722, %v863, 0.0
  %1955 = vadd.xlane.f32.xlu0 %v1954
  %v1956 = vpop.xlane.xlu0 %1955
  %v1957 = vsel %vm1722, %v868, 0.0
  %1958 = vadd.xlane.f32.xlu0 %v1957
  %v1959 = vpop.xlane.xlu0 %1958
  %v1960 = vsel %vm1722, %v871, 0.0
  %1961 = vadd.xlane.f32.xlu0 %v1960
  %v1962 = vpop.xlane.xlu0 %1961
  %v1963 = vadd.f32 %v1931, %v1941
  %v1964 = vadd.f32 %v1932, %v1944
  %v1965 = vadd.f32 %v1933, %v1947
  %v1966 = vadd.f32 %v1934, %v1950
  %v1967 = vadd.f32 %v1935, %v1953
  %v1968 = vadd.f32 %v1936, %v1956
  %v1969 = vadd.f32 %v1937, %v1959
  %v1970 = vadd.f32 %v1938, %v1962
  %v1971 = vsel %vm1722, %v950, 0.0
  %1972 = vadd.xlane.f32.xlu0 %v1971
  %v1973 = vpop.xlane.xlu0 %1972
  %v1974 = vsel %vm1722, %v953, 0.0
  %1975 = vadd.xlane.f32.xlu0 %v1974
  %v1976 = vpop.xlane.xlu0 %1975
  %v1977 = vsel %vm1722, %v958, 0.0
  %1978 = vadd.xlane.f32.xlu0 %v1977
  %v1979 = vpop.xlane.xlu0 %1978
  %v1980 = vsel %vm1722, %v961, 0.0
  %1981 = vadd.xlane.f32.xlu0 %v1980
  %v1982 = vpop.xlane.xlu0 %1981
  %v1983 = vsel %vm1722, %v966, 0.0
  %1984 = vadd.xlane.f32.xlu0 %v1983
  %v1985 = vpop.xlane.xlu0 %1984
  %v1986 = vsel %vm1722, %v969, 0.0
  %1987 = vadd.xlane.f32.xlu0 %v1986
  %v1988 = vpop.xlane.xlu0 %1987
  %v1989 = vsel %vm1722, %v974, 0.0
  %1990 = vadd.xlane.f32.xlu0 %v1989
  %v1991 = vpop.xlane.xlu0 %1990
  %v1992 = vsel %vm1722, %v977, 0.0
  %1993 = vadd.xlane.f32.xlu0 %v1992
  %v1994 = vpop.xlane.xlu0 %1993
  %v1995 = vadd.f32 %v1963, %v1973
  %v1996 = vadd.f32 %v1964, %v1976
  %v1997 = vadd.f32 %v1965, %v1979
  %v1998 = vadd.f32 %v1966, %v1982
  %v1999 = vadd.f32 %v1967, %v1985
  %v2000 = vadd.f32 %v1968, %v1988
  %v2001 = vadd.f32 %v1969, %v1991
  %v2002 = vadd.f32 %v1970, %v1994
  %v2003 = vsel %vm1722, %v1056, 0.0
  %2004 = vadd.xlane.f32.xlu0 %v2003
  %v2005 = vpop.xlane.xlu0 %2004
  %v2006 = vsel %vm1722, %v1059, 0.0
  %2007 = vadd.xlane.f32.xlu0 %v2006
  %v2008 = vpop.xlane.xlu0 %2007
  %v2009 = vsel %vm1722, %v1064, 0.0
  %2010 = vadd.xlane.f32.xlu0 %v2009
  %v2011 = vpop.xlane.xlu0 %2010
  %v2012 = vsel %vm1722, %v1067, 0.0
  %2013 = vadd.xlane.f32.xlu0 %v2012
  %v2014 = vpop.xlane.xlu0 %2013
  %v2015 = vsel %vm1722, %v1072, 0.0
  %2016 = vadd.xlane.f32.xlu0 %v2015
  %v2017 = vpop.xlane.xlu0 %2016
  %v2018 = vsel %vm1722, %v1075, 0.0
  %2019 = vadd.xlane.f32.xlu0 %v2018
  %v2020 = vpop.xlane.xlu0 %2019
  %v2021 = vsel %vm1722, %v1080, 0.0
  %2022 = vadd.xlane.f32.xlu0 %v2021
  %v2023 = vpop.xlane.xlu0 %2022
  %v2024 = vsel %vm1722, %v1083, 0.0
  %2025 = vadd.xlane.f32.xlu0 %v2024
  %v2026 = vpop.xlane.xlu0 %2025
  %v2027 = vadd.f32 %v1995, %v2005
  %v2028 = vadd.f32 %v1996, %v2008
  %v2029 = vadd.f32 %v1997, %v2011
  %v2030 = vadd.f32 %v1998, %v2014
  %v2031 = vadd.f32 %v1999, %v2017
  %v2032 = vadd.f32 %v2000, %v2020
  %v2033 = vadd.f32 %v2001, %v2023
  %v2034 = vadd.f32 %v2002, %v2026
  %v2035 = vsel %vm1722, %v1162, 0.0
  %2036 = vadd.xlane.f32.xlu0 %v2035
  %v2037 = vpop.xlane.xlu0 %2036
  %v2038 = vsel %vm1722, %v1165, 0.0
  %2039 = vadd.xlane.f32.xlu0 %v2038
  %v2040 = vpop.xlane.xlu0 %2039
  %v2041 = vsel %vm1722, %v1170, 0.0
  %2042 = vadd.xlane.f32.xlu0 %v2041
  %v2043 = vpop.xlane.xlu0 %2042
  %v2044 = vsel %vm1722, %v1173, 0.0
  %2045 = vadd.xlane.f32.xlu0 %v2044
  %v2046 = vpop.xlane.xlu0 %2045
  %v2047 = vsel %vm1722, %v1178, 0.0
  %2048 = vadd.xlane.f32.xlu0 %v2047
  %v2049 = vpop.xlane.xlu0 %2048
  %v2050 = vsel %vm1722, %v1181, 0.0
  %2051 = vadd.xlane.f32.xlu0 %v2050
  %v2052 = vpop.xlane.xlu0 %2051
  %v2053 = vsel %vm1722, %v1186, 0.0
  %2054 = vadd.xlane.f32.xlu0 %v2053
  %v2055 = vpop.xlane.xlu0 %2054
  %v2056 = vsel %vm1722, %v1189, 0.0
  %2057 = vadd.xlane.f32.xlu0 %v2056
  %v2058 = vpop.xlane.xlu0 %2057
  %v2059 = vadd.f32 %v2027, %v2037
  %v2060 = vadd.f32 %v2028, %v2040
  %v2061 = vadd.f32 %v2029, %v2043
  %v2062 = vadd.f32 %v2030, %v2046
  %v2063 = vadd.f32 %v2031, %v2049
  %v2064 = vadd.f32 %v2032, %v2052
  %v2065 = vadd.f32 %v2033, %v2055
  %v2066 = vadd.f32 %v2034, %v2058
  %v2067 = vsel %vm1722, %v1268, 0.0
  %2068 = vadd.xlane.f32.xlu0 %v2067
  %v2069 = vpop.xlane.xlu0 %2068
  %v2070 = vsel %vm1722, %v1271, 0.0
  %2071 = vadd.xlane.f32.xlu0 %v2070
  %v2072 = vpop.xlane.xlu0 %2071
  %v2073 = vsel %vm1722, %v1276, 0.0
  %2074 = vadd.xlane.f32.xlu0 %v2073
  %v2075 = vpop.xlane.xlu0 %2074
  %v2076 = vsel %vm1722, %v1279, 0.0
  %2077 = vadd.xlane.f32.xlu0 %v2076
  %v2078 = vpop.xlane.xlu0 %2077
  %v2079 = vsel %vm1722, %v1284, 0.0
  %2080 = vadd.xlane.f32.xlu0 %v2079
  %v2081 = vpop.xlane.xlu0 %2080
  %v2082 = vsel %vm1722, %v1287, 0.0
  %2083 = vadd.xlane.f32.xlu0 %v2082
  %v2084 = vpop.xlane.xlu0 %2083
  %v2085 = vsel %vm1722, %v1292, 0.0
  %2086 = vadd.xlane.f32.xlu0 %v2085
  %v2087 = vpop.xlane.xlu0 %2086
  %v2088 = vsel %vm1722, %v1295, 0.0
  %2089 = vadd.xlane.f32.xlu0 %v2088
  %v2090 = vpop.xlane.xlu0 %2089
  %v2091 = vadd.f32 %v2059, %v2069
  %v2092 = vadd.f32 %v2060, %v2072
  %v2093 = vadd.f32 %v2061, %v2075
  %v2094 = vadd.f32 %v2062, %v2078
  %v2095 = vadd.f32 %v2063, %v2081
  %v2096 = vadd.f32 %v2064, %v2084
  %v2097 = vadd.f32 %v2065, %v2087
  %v2098 = vadd.f32 %v2066, %v2090
  %v2099 = vsel %vm1722, %v1374, 0.0
  %2100 = vadd.xlane.f32.xlu0 %v2099
  %v2101 = vpop.xlane.xlu0 %2100
  %v2102 = vsel %vm1722, %v1377, 0.0
  %2103 = vadd.xlane.f32.xlu0 %v2102
  %v2104 = vpop.xlane.xlu0 %2103
  %v2105 = vsel %vm1722, %v1382, 0.0
  %2106 = vadd.xlane.f32.xlu0 %v2105
  %v2107 = vpop.xlane.xlu0 %2106
  %v2108 = vsel %vm1722, %v1385, 0.0
  %2109 = vadd.xlane.f32.xlu0 %v2108
  %v2110 = vpop.xlane.xlu0 %2109
  %v2111 = vsel %vm1722, %v1390, 0.0
  %2112 = vadd.xlane.f32.xlu0 %v2111
  %v2113 = vpop.xlane.xlu0 %2112
  %v2114 = vsel %vm1722, %v1393, 0.0
  %2115 = vadd.xlane.f32.xlu0 %v2114
  %v2116 = vpop.xlane.xlu0 %2115
  %v2117 = vsel %vm1722, %v1398, 0.0
  %2118 = vadd.xlane.f32.xlu0 %v2117
  %v2119 = vpop.xlane.xlu0 %2118
  %v2120 = vsel %vm1722, %v1401, 0.0
  %2121 = vadd.xlane.f32.xlu0 %v2120
  %v2122 = vpop.xlane.xlu0 %2121
  %v2123 = vadd.f32 %v2091, %v2101
  %v2124 = vadd.f32 %v2092, %v2104
  %v2125 = vadd.f32 %v2093, %v2107
  %v2126 = vadd.f32 %v2094, %v2110
  %v2127 = vadd.f32 %v2095, %v2113
  %v2128 = vadd.f32 %v2096, %v2116
  %v2129 = vadd.f32 %v2097, %v2119
  %v2130 = vadd.f32 %v2098, %v2122
  %v2131 = vsel %vm1722, %v1480, 0.0
  %2132 = vadd.xlane.f32.xlu0 %v2131
  %v2133 = vpop.xlane.xlu0 %2132
  %v2134 = vsel %vm1722, %v1483, 0.0
  %2135 = vadd.xlane.f32.xlu0 %v2134
  %v2136 = vpop.xlane.xlu0 %2135
  %v2137 = vsel %vm1722, %v1488, 0.0
  %2138 = vadd.xlane.f32.xlu0 %v2137
  %v2139 = vpop.xlane.xlu0 %2138
  %v2140 = vsel %vm1722, %v1491, 0.0
  %2141 = vadd.xlane.f32.xlu0 %v2140
  %v2142 = vpop.xlane.xlu0 %2141
  %v2143 = vsel %vm1722, %v1496, 0.0
  %2144 = vadd.xlane.f32.xlu0 %v2143
  %v2145 = vpop.xlane.xlu0 %2144
  %v2146 = vsel %vm1722, %v1499, 0.0
  %2147 = vadd.xlane.f32.xlu0 %v2146
  %v2148 = vpop.xlane.xlu0 %2147
  %v2149 = vsel %vm1722, %v1504, 0.0
  %2150 = vadd.xlane.f32.xlu0 %v2149
  %v2151 = vpop.xlane.xlu0 %2150
  %v2152 = vsel %vm1722, %v1507, 0.0
  %2153 = vadd.xlane.f32.xlu0 %v2152
  %v2154 = vpop.xlane.xlu0 %2153
  %v2155 = vadd.f32 %v2123, %v2133
  %v2156 = vadd.f32 %v2124, %v2136
  %v2157 = vadd.f32 %v2125, %v2139
  %v2158 = vadd.f32 %v2126, %v2142
  %v2159 = vadd.f32 %v2127, %v2145
  %v2160 = vadd.f32 %v2128, %v2148
  %v2161 = vadd.f32 %v2129, %v2151
  %v2162 = vadd.f32 %v2130, %v2154
  %v2163 = vsel %vm1722, %v1586, 0.0
  %2164 = vadd.xlane.f32.xlu0 %v2163
  %v2165 = vpop.xlane.xlu0 %2164
  %v2166 = vsel %vm1722, %v1589, 0.0
  %2167 = vadd.xlane.f32.xlu0 %v2166
  %v2168 = vpop.xlane.xlu0 %2167
  %v2169 = vsel %vm1722, %v1594, 0.0
  %2170 = vadd.xlane.f32.xlu0 %v2169
  %v2171 = vpop.xlane.xlu0 %2170
  %v2172 = vsel %vm1722, %v1597, 0.0
  %2173 = vadd.xlane.f32.xlu0 %v2172
  %v2174 = vpop.xlane.xlu0 %2173
  %v2175 = vsel %vm1722, %v1602, 0.0
  %2176 = vadd.xlane.f32.xlu0 %v2175
  %v2177 = vpop.xlane.xlu0 %2176
  %v2178 = vsel %vm1722, %v1605, 0.0
  %2179 = vadd.xlane.f32.xlu0 %v2178
  %v2180 = vpop.xlane.xlu0 %2179
  %v2181 = vsel %vm1722, %v1610, 0.0
  %2182 = vadd.xlane.f32.xlu0 %v2181
  %v2183 = vpop.xlane.xlu0 %2182
  %v2184 = vsel %vm1722, %v1613, 0.0
  %2185 = vadd.xlane.f32.xlu0 %v2184
  %v2186 = vpop.xlane.xlu0 %2185
  %v2187 = vadd.f32 %v2155, %v2165
  %v2188 = vadd.f32 %v2156, %v2168
  %v2189 = vadd.f32 %v2157, %v2171
  %v2190 = vadd.f32 %v2158, %v2174
  %v2191 = vadd.f32 %v2159, %v2177
  %v2192 = vadd.f32 %v2160, %v2180
  %v2193 = vadd.f32 %v2161, %v2183
  %v2194 = vadd.f32 %v2162, %v2186
  %v2195 = vsel %vm1722, %v1692, 0.0
  %2196 = vadd.xlane.f32.xlu0 %v2195
  %v2197 = vpop.xlane.xlu0 %2196
  %v2198 = vsel %vm1722, %v1695, 0.0
  %2199 = vadd.xlane.f32.xlu0 %v2198
  %v2200 = vpop.xlane.xlu0 %2199
  %v2201 = vsel %vm1722, %v1700, 0.0
  %2202 = vadd.xlane.f32.xlu0 %v2201
  %v2203 = vpop.xlane.xlu0 %2202
  %v2204 = vsel %vm1722, %v1703, 0.0
  %2205 = vadd.xlane.f32.xlu0 %v2204
  %v2206 = vpop.xlane.xlu0 %2205
  %v2207 = vsel %vm1722, %v1708, 0.0
  %2208 = vadd.xlane.f32.xlu0 %v2207
  %v2209 = vpop.xlane.xlu0 %2208
  %v2210 = vsel %vm1722, %v1711, 0.0
  %2211 = vadd.xlane.f32.xlu0 %v2210
  %v2212 = vpop.xlane.xlu0 %2211
  %v2213 = vsel %vm1722, %v1716, 0.0
  %2214 = vadd.xlane.f32.xlu0 %v2213
  %v2215 = vpop.xlane.xlu0 %2214
  %v2216 = vsel %vm1722, %v1719, 0.0
  %2217 = vadd.xlane.f32.xlu0 %v2216
  %v2218 = vpop.xlane.xlu0 %2217
  %v2219 = vadd.f32 %v2187, %v2197
  %v2220 = vadd.f32 %v2188, %v2200
  %v2221 = vadd.f32 %v2189, %v2203
  %v2222 = vadd.f32 %v2190, %v2206
  %v2223 = vadd.f32 %v2191, %v2209
  %v2224 = vadd.f32 %v2192, %v2212
  %v2225 = vadd.f32 %v2193, %v2215
  %v2226 = vadd.f32 %v2194, %v2218
  %v2227 = vmul.f32 %v2219, 0.03125
  %v2228 = vmul.f32 %v2220, 0.03125
  %v2229 = vmul.f32 %v2221, 0.03125
  %v2230 = vmul.f32 %v2222, 0.03125
  %v2231 = vmul.f32 %v2223, 0.03125
  %v2232 = vmul.f32 %v2224, 0.03125
  %v2233 = vmul.f32 %v2225, 0.03125
  %v2234 = vmul.f32 %v2226, 0.03125
  %v2235 = vsub.f32 %v102, %v2227
  %v2236 = vsub.f32 %v105, %v2228
  %v2237 = vsub.f32 %v110, %v2229
  %v2238 = vsub.f32 %v113, %v2230
  %v2239 = vsub.f32 %v118, %v2231
  %v2240 = vsub.f32 %v121, %v2232
  %v2241 = vsub.f32 %v126, %v2233
  %v2242 = vsub.f32 %v129, %v2234
  %v2243 = vmul.f32 %v2235, %v2235
  %v2244 = vmul.f32 %v2236, %v2236
  %v2245 = vmul.f32 %v2237, %v2237
  %v2246 = vmul.f32 %v2238, %v2238
  %v2247 = vmul.f32 %v2239, %v2239
  %v2248 = vmul.f32 %v2240, %v2240
  %v2249 = vmul.f32 %v2241, %v2241
  %v2250 = vmul.f32 %v2242, %v2242
  %v2251 = vsel %vm1722, %v2243, 0.0
  %2252 = vadd.xlane.f32.xlu0 %v2251
  %v2253 = vpop.xlane.xlu0 %2252
  %v2254 = vsel %vm1722, %v2244, 0.0
  %2255 = vadd.xlane.f32.xlu0 %v2254
  %v2256 = vpop.xlane.xlu0 %2255
  %v2257 = vsel %vm1722, %v2245, 0.0
  %2258 = vadd.xlane.f32.xlu0 %v2257
  %v2259 = vpop.xlane.xlu0 %2258
  %v2260 = vsel %vm1722, %v2246, 0.0
  %2261 = vadd.xlane.f32.xlu0 %v2260
  %v2262 = vpop.xlane.xlu0 %2261
  %v2263 = vsel %vm1722, %v2247, 0.0
  %2264 = vadd.xlane.f32.xlu0 %v2263
  %v2265 = vpop.xlane.xlu0 %2264
  %v2266 = vsel %vm1722, %v2248, 0.0
  %2267 = vadd.xlane.f32.xlu0 %v2266
  %v2268 = vpop.xlane.xlu0 %2267
  %v2269 = vsel %vm1722, %v2249, 0.0
  %2270 = vadd.xlane.f32.xlu0 %v2269
  %v2271 = vpop.xlane.xlu0 %2270
  %v2272 = vsel %vm1722, %v2250, 0.0
  %2273 = vadd.xlane.f32.xlu0 %v2272
  %v2274 = vpop.xlane.xlu0 %2273
  %v2275 = vsub.f32 %v208, %v2227
  %v2276 = vsub.f32 %v211, %v2228
  %v2277 = vsub.f32 %v216, %v2229
  %v2278 = vsub.f32 %v219, %v2230
  %v2279 = vsub.f32 %v224, %v2231
  %v2280 = vsub.f32 %v227, %v2232
  %v2281 = vsub.f32 %v232, %v2233
  %v2282 = vsub.f32 %v235, %v2234
  %v2283 = vmul.f32 %v2275, %v2275
  %v2284 = vmul.f32 %v2276, %v2276
  %v2285 = vmul.f32 %v2277, %v2277
  %v2286 = vmul.f32 %v2278, %v2278
  %v2287 = vmul.f32 %v2279, %v2279
  %v2288 = vmul.f32 %v2280, %v2280
  %v2289 = vmul.f32 %v2281, %v2281
  %v2290 = vmul.f32 %v2282, %v2282
  %v2291 = vsel %vm1722, %v2283, 0.0
  %2292 = vadd.xlane.f32.xlu0 %v2291
  %v2293 = vpop.xlane.xlu0 %2292
  %v2294 = vsel %vm1722, %v2284, 0.0
  %2295 = vadd.xlane.f32.xlu0 %v2294
  %v2296 = vpop.xlane.xlu0 %2295
  %v2297 = vsel %vm1722, %v2285, 0.0
  %2298 = vadd.xlane.f32.xlu0 %v2297
  %v2299 = vpop.xlane.xlu0 %2298
  %v2300 = vsel %vm1722, %v2286, 0.0
  %2301 = vadd.xlane.f32.xlu0 %v2300
  %v2302 = vpop.xlane.xlu0 %2301
  %v2303 = vsel %vm1722, %v2287, 0.0
  %2304 = vadd.xlane.f32.xlu0 %v2303
  %v2305 = vpop.xlane.xlu0 %2304
  %v2306 = vsel %vm1722, %v2288, 0.0
  %2307 = vadd.xlane.f32.xlu0 %v2306
  %v2308 = vpop.xlane.xlu0 %2307
  %v2309 = vsel %vm1722, %v2289, 0.0
  %2310 = vadd.xlane.f32.xlu0 %v2309
  %v2311 = vpop.xlane.xlu0 %2310
  %v2312 = vsel %vm1722, %v2290, 0.0
  %2313 = vadd.xlane.f32.xlu0 %v2312
  %v2314 = vpop.xlane.xlu0 %2313
  %v2315 = vadd.f32 %v2253, %v2293
  %v2316 = vadd.f32 %v2256, %v2296
  %v2317 = vadd.f32 %v2259, %v2299
  %v2318 = vadd.f32 %v2262, %v2302
  %v2319 = vadd.f32 %v2265, %v2305
  %v2320 = vadd.f32 %v2268, %v2308
  %v2321 = vadd.f32 %v2271, %v2311
  %v2322 = vadd.f32 %v2274, %v2314
  %v2323 = vsub.f32 %v314, %v2227
  %v2324 = vsub.f32 %v317, %v2228
  %v2325 = vsub.f32 %v322, %v2229
  %v2326 = vsub.f32 %v325, %v2230
  %v2327 = vsub.f32 %v330, %v2231
  %v2328 = vsub.f32 %v333, %v2232
  %v2329 = vsub.f32 %v338, %v2233
  %v2330 = vsub.f32 %v341, %v2234
  %v2331 = vmul.f32 %v2323, %v2323
  %v2332 = vmul.f32 %v2324, %v2324
  %v2333 = vmul.f32 %v2325, %v2325
  %v2334 = vmul.f32 %v2326, %v2326
  %v2335 = vmul.f32 %v2327, %v2327
  %v2336 = vmul.f32 %v2328, %v2328
  %v2337 = vmul.f32 %v2329, %v2329
  %v2338 = vmul.f32 %v2330, %v2330
  %v2339 = vsel %vm1722, %v2331, 0.0
  %2340 = vadd.xlane.f32.xlu0 %v2339
  %v2341 = vpop.xlane.xlu0 %2340
  %v2342 = vsel %vm1722, %v2332, 0.0
  %2343 = vadd.xlane.f32.xlu0 %v2342
  %v2344 = vpop.xlane.xlu0 %2343
  %v2345 = vsel %vm1722, %v2333, 0.0
  %2346 = vadd.xlane.f32.xlu0 %v2345
  %v2347 = vpop.xlane.xlu0 %2346
  %v2348 = vsel %vm1722, %v2334, 0.0
  %2349 = vadd.xlane.f32.xlu0 %v2348
  %v2350 = vpop.xlane.xlu0 %2349
  %v2351 = vsel %vm1722, %v2335, 0.0
  %2352 = vadd.xlane.f32.xlu0 %v2351
  %v2353 = vpop.xlane.xlu0 %2352
  %v2354 = vsel %vm1722, %v2336, 0.0
  %2355 = vadd.xlane.f32.xlu0 %v2354
  %v2356 = vpop.xlane.xlu0 %2355
  %v2357 = vsel %vm1722, %v2337, 0.0
  %2358 = vadd.xlane.f32.xlu0 %v2357
  %v2359 = vpop.xlane.xlu0 %2358
  %v2360 = vsel %vm1722, %v2338, 0.0
  %2361 = vadd.xlane.f32.xlu0 %v2360
  %v2362 = vpop.xlane.xlu0 %2361
  %v2363 = vadd.f32 %v2315, %v2341
  %v2364 = vadd.f32 %v2316, %v2344
  %v2365 = vadd.f32 %v2317, %v2347
  %v2366 = vadd.f32 %v2318, %v2350
  %v2367 = vadd.f32 %v2319, %v2353
  %v2368 = vadd.f32 %v2320, %v2356
  %v2369 = vadd.f32 %v2321, %v2359
  %v2370 = vadd.f32 %v2322, %v2362
  %v2371 = vsub.f32 %v420, %v2227
  %v2372 = vsub.f32 %v423, %v2228
  %v2373 = vsub.f32 %v428, %v2229
  %v2374 = vsub.f32 %v431, %v2230
  %v2375 = vsub.f32 %v436, %v2231
  %v2376 = vsub.f32 %v439, %v2232
  %v2377 = vsub.f32 %v444, %v2233
  %v2378 = vsub.f32 %v447, %v2234
  %v2379 = vmul.f32 %v2371, %v2371
  %v2380 = vmul.f32 %v2372, %v2372
  %v2381 = vmul.f32 %v2373, %v2373
  %v2382 = vmul.f32 %v2374, %v2374
  %v2383 = vmul.f32 %v2375, %v2375
  %v2384 = vmul.f32 %v2376, %v2376
  %v2385 = vmul.f32 %v2377, %v2377
  %v2386 = vmul.f32 %v2378, %v2378
  %v2387 = vsel %vm1722, %v2379, 0.0
  %2388 = vadd.xlane.f32.xlu0 %v2387
  %v2389 = vpop.xlane.xlu0 %2388
  %v2390 = vsel %vm1722, %v2380, 0.0
  %2391 = vadd.xlane.f32.xlu0 %v2390
  %v2392 = vpop.xlane.xlu0 %2391
  %v2393 = vsel %vm1722, %v2381, 0.0
  %2394 = vadd.xlane.f32.xlu0 %v2393
  %v2395 = vpop.xlane.xlu0 %2394
  %v2396 = vsel %vm1722, %v2382, 0.0
  %2397 = vadd.xlane.f32.xlu0 %v2396
  %v2398 = vpop.xlane.xlu0 %2397
  %v2399 = vsel %vm1722, %v2383, 0.0
  %2400 = vadd.xlane.f32.xlu0 %v2399
  %v2401 = vpop.xlane.xlu0 %2400
  %v2402 = vsel %vm1722, %v2384, 0.0
  %2403 = vadd.xlane.f32.xlu0 %v2402
  %v2404 = vpop.xlane.xlu0 %2403
  %v2405 = vsel %vm1722, %v2385, 0.0
  %2406 = vadd.xlane.f32.xlu0 %v2405
  %v2407 = vpop.xlane.xlu0 %2406
  %v2408 = vsel %vm1722, %v2386, 0.0
  %2409 = vadd.xlane.f32.xlu0 %v2408
  %v2410 = vpop.xlane.xlu0 %2409
  %v2411 = vadd.f32 %v2363, %v2389
  %v2412 = vadd.f32 %v2364, %v2392
  %v2413 = vadd.f32 %v2365, %v2395
  %v2414 = vadd.f32 %v2366, %v2398
  %v2415 = vadd.f32 %v2367, %v2401
  %v2416 = vadd.f32 %v2368, %v2404
  %v2417 = vadd.f32 %v2369, %v2407
  %v2418 = vadd.f32 %v2370, %v2410
  %v2419 = vsub.f32 %v526, %v2227
  %v2420 = vsub.f32 %v529, %v2228
  %v2421 = vsub.f32 %v534, %v2229
  %v2422 = vsub.f32 %v537, %v2230
  %v2423 = vsub.f32 %v542, %v2231
  %v2424 = vsub.f32 %v545, %v2232
  %v2425 = vsub.f32 %v550, %v2233
  %v2426 = vsub.f32 %v553, %v2234
  %v2427 = vmul.f32 %v2419, %v2419
  %v2428 = vmul.f32 %v2420, %v2420
  %v2429 = vmul.f32 %v2421, %v2421
  %v2430 = vmul.f32 %v2422, %v2422
  %v2431 = vmul.f32 %v2423, %v2423
  %v2432 = vmul.f32 %v2424, %v2424
  %v2433 = vmul.f32 %v2425, %v2425
  %v2434 = vmul.f32 %v2426, %v2426
  %v2435 = vsel %vm1722, %v2427, 0.0
  %2436 = vadd.xlane.f32.xlu0 %v2435
  %v2437 = vpop.xlane.xlu0 %2436
  %v2438 = vsel %vm1722, %v2428, 0.0
  %2439 = vadd.xlane.f32.xlu0 %v2438
  %v2440 = vpop.xlane.xlu0 %2439
  %v2441 = vsel %vm1722, %v2429, 0.0
  %2442 = vadd.xlane.f32.xlu0 %v2441
  %v2443 = vpop.xlane.xlu0 %2442
  %v2444 = vsel %vm1722, %v2430, 0.0
  %2445 = vadd.xlane.f32.xlu0 %v2444
  %v2446 = vpop.xlane.xlu0 %2445
  %v2447 = vsel %vm1722, %v2431, 0.0
  %2448 = vadd.xlane.f32.xlu0 %v2447
  %v2449 = vpop.xlane.xlu0 %2448
  %v2450 = vsel %vm1722, %v2432, 0.0
  %2451 = vadd.xlane.f32.xlu0 %v2450
  %v2452 = vpop.xlane.xlu0 %2451
  %v2453 = vsel %vm1722, %v2433, 0.0
  %2454 = vadd.xlane.f32.xlu0 %v2453
  %v2455 = vpop.xlane.xlu0 %2454
  %v2456 = vsel %vm1722, %v2434, 0.0
  %2457 = vadd.xlane.f32.xlu0 %v2456
  %v2458 = vpop.xlane.xlu0 %2457
  %v2459 = vadd.f32 %v2411, %v2437
  %v2460 = vadd.f32 %v2412, %v2440
  %v2461 = vadd.f32 %v2413, %v2443
  %v2462 = vadd.f32 %v2414, %v2446
  %v2463 = vadd.f32 %v2415, %v2449
  %v2464 = vadd.f32 %v2416, %v2452
  %v2465 = vadd.f32 %v2417, %v2455
  %v2466 = vadd.f32 %v2418, %v2458
  %v2467 = vsub.f32 %v632, %v2227
  %v2468 = vsub.f32 %v635, %v2228
  %v2469 = vsub.f32 %v640, %v2229
  %v2470 = vsub.f32 %v643, %v2230
  %v2471 = vsub.f32 %v648, %v2231
  %v2472 = vsub.f32 %v651, %v2232
  %v2473 = vsub.f32 %v656, %v2233
  %v2474 = vsub.f32 %v659, %v2234
  %v2475 = vmul.f32 %v2467, %v2467
  %v2476 = vmul.f32 %v2468, %v2468
  %v2477 = vmul.f32 %v2469, %v2469
  %v2478 = vmul.f32 %v2470, %v2470
  %v2479 = vmul.f32 %v2471, %v2471
  %v2480 = vmul.f32 %v2472, %v2472
  %v2481 = vmul.f32 %v2473, %v2473
  %v2482 = vmul.f32 %v2474, %v2474
  %v2483 = vsel %vm1722, %v2475, 0.0
  %2484 = vadd.xlane.f32.xlu0 %v2483
  %v2485 = vpop.xlane.xlu0 %2484
  %v2486 = vsel %vm1722, %v2476, 0.0
  %2487 = vadd.xlane.f32.xlu0 %v2486
  %v2488 = vpop.xlane.xlu0 %2487
  %v2489 = vsel %vm1722, %v2477, 0.0
  %2490 = vadd.xlane.f32.xlu0 %v2489
  %v2491 = vpop.xlane.xlu0 %2490
  %v2492 = vsel %vm1722, %v2478, 0.0
  %2493 = vadd.xlane.f32.xlu0 %v2492
  %v2494 = vpop.xlane.xlu0 %2493
  %v2495 = vsel %vm1722, %v2479, 0.0
  %2496 = vadd.xlane.f32.xlu0 %v2495
  %v2497 = vpop.xlane.xlu0 %2496
  %v2498 = vsel %vm1722, %v2480, 0.0
  %2499 = vadd.xlane.f32.xlu0 %v2498
  %v2500 = vpop.xlane.xlu0 %2499
  %v2501 = vsel %vm1722, %v2481, 0.0
  %2502 = vadd.xlane.f32.xlu0 %v2501
  %v2503 = vpop.xlane.xlu0 %2502
  %v2504 = vsel %vm1722, %v2482, 0.0
  %2505 = vadd.xlane.f32.xlu0 %v2504
  %v2506 = vpop.xlane.xlu0 %2505
  %v2507 = vadd.f32 %v2459, %v2485
  %v2508 = vadd.f32 %v2460, %v2488
  %v2509 = vadd.f32 %v2461, %v2491
  %v2510 = vadd.f32 %v2462, %v2494
  %v2511 = vadd.f32 %v2463, %v2497
  %v2512 = vadd.f32 %v2464, %v2500
  %v2513 = vadd.f32 %v2465, %v2503
  %v2514 = vadd.f32 %v2466, %v2506
  %v2515 = vsub.f32 %v738, %v2227
  %v2516 = vsub.f32 %v741, %v2228
  %v2517 = vsub.f32 %v746, %v2229
  %v2518 = vsub.f32 %v749, %v2230
  %v2519 = vsub.f32 %v754, %v2231
  %v2520 = vsub.f32 %v757, %v2232
  %v2521 = vsub.f32 %v762, %v2233
  %v2522 = vsub.f32 %v765, %v2234
  %v2523 = vmul.f32 %v2515, %v2515
  %v2524 = vmul.f32 %v2516, %v2516
  %v2525 = vmul.f32 %v2517, %v2517
  %v2526 = vmul.f32 %v2518, %v2518
  %v2527 = vmul.f32 %v2519, %v2519
  %v2528 = vmul.f32 %v2520, %v2520
  %v2529 = vmul.f32 %v2521, %v2521
  %v2530 = vmul.f32 %v2522, %v2522
  %v2531 = vsel %vm1722, %v2523, 0.0
  %2532 = vadd.xlane.f32.xlu0 %v2531
  %v2533 = vpop.xlane.xlu0 %2532
  %v2534 = vsel %vm1722, %v2524, 0.0
  %2535 = vadd.xlane.f32.xlu0 %v2534
  %v2536 = vpop.xlane.xlu0 %2535
  %v2537 = vsel %vm1722, %v2525, 0.0
  %2538 = vadd.xlane.f32.xlu0 %v2537
  %v2539 = vpop.xlane.xlu0 %2538
  %v2540 = vsel %vm1722, %v2526, 0.0
  %2541 = vadd.xlane.f32.xlu0 %v2540
  %v2542 = vpop.xlane.xlu0 %2541
  %v2543 = vsel %vm1722, %v2527, 0.0
  %2544 = vadd.xlane.f32.xlu0 %v2543
  %v2545 = vpop.xlane.xlu0 %2544
  %v2546 = vsel %vm1722, %v2528, 0.0
  %2547 = vadd.xlane.f32.xlu0 %v2546
  %v2548 = vpop.xlane.xlu0 %2547
  %v2549 = vsel %vm1722, %v2529, 0.0
  %2550 = vadd.xlane.f32.xlu0 %v2549
  %v2551 = vpop.xlane.xlu0 %2550
  %v2552 = vsel %vm1722, %v2530, 0.0
  %2553 = vadd.xlane.f32.xlu0 %v2552
  %v2554 = vpop.xlane.xlu0 %2553
  %v2555 = vadd.f32 %v2507, %v2533
  %v2556 = vadd.f32 %v2508, %v2536
  %v2557 = vadd.f32 %v2509, %v2539
  %v2558 = vadd.f32 %v2510, %v2542
  %v2559 = vadd.f32 %v2511, %v2545
  %v2560 = vadd.f32 %v2512, %v2548
  %v2561 = vadd.f32 %v2513, %v2551
  %v2562 = vadd.f32 %v2514, %v2554
  %v2563 = vsub.f32 %v844, %v2227
  %v2564 = vsub.f32 %v847, %v2228
  %v2565 = vsub.f32 %v852, %v2229
  %v2566 = vsub.f32 %v855, %v2230
  %v2567 = vsub.f32 %v860, %v2231
  %v2568 = vsub.f32 %v863, %v2232
  %v2569 = vsub.f32 %v868, %v2233
  %v2570 = vsub.f32 %v871, %v2234
  %v2571 = vmul.f32 %v2563, %v2563
  %v2572 = vmul.f32 %v2564, %v2564
  %v2573 = vmul.f32 %v2565, %v2565
  %v2574 = vmul.f32 %v2566, %v2566
  %v2575 = vmul.f32 %v2567, %v2567
  %v2576 = vmul.f32 %v2568, %v2568
  %v2577 = vmul.f32 %v2569, %v2569
  %v2578 = vmul.f32 %v2570, %v2570
  %v2579 = vsel %vm1722, %v2571, 0.0
  %2580 = vadd.xlane.f32.xlu0 %v2579
  %v2581 = vpop.xlane.xlu0 %2580
  %v2582 = vsel %vm1722, %v2572, 0.0
  %2583 = vadd.xlane.f32.xlu0 %v2582
  %v2584 = vpop.xlane.xlu0 %2583
  %v2585 = vsel %vm1722, %v2573, 0.0
  %2586 = vadd.xlane.f32.xlu0 %v2585
  %v2587 = vpop.xlane.xlu0 %2586
  %v2588 = vsel %vm1722, %v2574, 0.0
  %2589 = vadd.xlane.f32.xlu0 %v2588
  %v2590 = vpop.xlane.xlu0 %2589
  %v2591 = vsel %vm1722, %v2575, 0.0
  %2592 = vadd.xlane.f32.xlu0 %v2591
  %v2593 = vpop.xlane.xlu0 %2592
  %v2594 = vsel %vm1722, %v2576, 0.0
  %2595 = vadd.xlane.f32.xlu0 %v2594
  %v2596 = vpop.xlane.xlu0 %2595
  %v2597 = vsel %vm1722, %v2577, 0.0
  %2598 = vadd.xlane.f32.xlu0 %v2597
  %v2599 = vpop.xlane.xlu0 %2598
  %v2600 = vsel %vm1722, %v2578, 0.0
  %2601 = vadd.xlane.f32.xlu0 %v2600
  %v2602 = vpop.xlane.xlu0 %2601
  %v2603 = vadd.f32 %v2555, %v2581
  %v2604 = vadd.f32 %v2556, %v2584
  %v2605 = vadd.f32 %v2557, %v2587
  %v2606 = vadd.f32 %v2558, %v2590
  %v2607 = vadd.f32 %v2559, %v2593
  %v2608 = vadd.f32 %v2560, %v2596
  %v2609 = vadd.f32 %v2561, %v2599
  %v2610 = vadd.f32 %v2562, %v2602
  %v2611 = vsub.f32 %v950, %v2227
  %v2612 = vsub.f32 %v953, %v2228
  %v2613 = vsub.f32 %v958, %v2229
  %v2614 = vsub.f32 %v961, %v2230
  %v2615 = vsub.f32 %v966, %v2231
  %v2616 = vsub.f32 %v969, %v2232
  %v2617 = vsub.f32 %v974, %v2233
  %v2618 = vsub.f32 %v977, %v2234
  %v2619 = vmul.f32 %v2611, %v2611
  %v2620 = vmul.f32 %v2612, %v2612
  %v2621 = vmul.f32 %v2613, %v2613
  %v2622 = vmul.f32 %v2614, %v2614
  %v2623 = vmul.f32 %v2615, %v2615
  %v2624 = vmul.f32 %v2616, %v2616
  %v2625 = vmul.f32 %v2617, %v2617
  %v2626 = vmul.f32 %v2618, %v2618
  %v2627 = vsel %vm1722, %v2619, 0.0
  %2628 = vadd.xlane.f32.xlu0 %v2627
  %v2629 = vpop.xlane.xlu0 %2628
  %v2630 = vsel %vm1722, %v2620, 0.0
  %2631 = vadd.xlane.f32.xlu0 %v2630
  %v2632 = vpop.xlane.xlu0 %2631
  %v2633 = vsel %vm1722, %v2621, 0.0
  %2634 = vadd.xlane.f32.xlu0 %v2633
  %v2635 = vpop.xlane.xlu0 %2634
  %v2636 = vsel %vm1722, %v2622, 0.0
  %2637 = vadd.xlane.f32.xlu0 %v2636
  %v2638 = vpop.xlane.xlu0 %2637
  %v2639 = vsel %vm1722, %v2623, 0.0
  %2640 = vadd.xlane.f32.xlu0 %v2639
  %v2641 = vpop.xlane.xlu0 %2640
  %v2642 = vsel %vm1722, %v2624, 0.0
  %2643 = vadd.xlane.f32.xlu0 %v2642
  %v2644 = vpop.xlane.xlu0 %2643
  %v2645 = vsel %vm1722, %v2625, 0.0
  %2646 = vadd.xlane.f32.xlu0 %v2645
  %v2647 = vpop.xlane.xlu0 %2646
  %v2648 = vsel %vm1722, %v2626, 0.0
  %2649 = vadd.xlane.f32.xlu0 %v2648
  %v2650 = vpop.xlane.xlu0 %2649
  %v2651 = vadd.f32 %v2603, %v2629
  %v2652 = vadd.f32 %v2604, %v2632
  %v2653 = vadd.f32 %v2605, %v2635
  %v2654 = vadd.f32 %v2606, %v2638
  %v2655 = vadd.f32 %v2607, %v2641
  %v2656 = vadd.f32 %v2608, %v2644
  %v2657 = vadd.f32 %v2609, %v2647
  %v2658 = vadd.f32 %v2610, %v2650
  %v2659 = vsub.f32 %v1056, %v2227
  %v2660 = vsub.f32 %v1059, %v2228
  %v2661 = vsub.f32 %v1064, %v2229
  %v2662 = vsub.f32 %v1067, %v2230
  %v2663 = vsub.f32 %v1072, %v2231
  %v2664 = vsub.f32 %v1075, %v2232
  %v2665 = vsub.f32 %v1080, %v2233
  %v2666 = vsub.f32 %v1083, %v2234
  %v2667 = vmul.f32 %v2659, %v2659
  %v2668 = vmul.f32 %v2660, %v2660
  %v2669 = vmul.f32 %v2661, %v2661
  %v2670 = vmul.f32 %v2662, %v2662
  %v2671 = vmul.f32 %v2663, %v2663
  %v2672 = vmul.f32 %v2664, %v2664
  %v2673 = vmul.f32 %v2665, %v2665
  %v2674 = vmul.f32 %v2666, %v2666
  %v2675 = vsel %vm1722, %v2667, 0.0
  %2676 = vadd.xlane.f32.xlu0 %v2675
  %v2677 = vpop.xlane.xlu0 %2676
  %v2678 = vsel %vm1722, %v2668, 0.0
  %2679 = vadd.xlane.f32.xlu0 %v2678
  %v2680 = vpop.xlane.xlu0 %2679
  %v2681 = vsel %vm1722, %v2669, 0.0
  %2682 = vadd.xlane.f32.xlu0 %v2681
  %v2683 = vpop.xlane.xlu0 %2682
  %v2684 = vsel %vm1722, %v2670, 0.0
  %2685 = vadd.xlane.f32.xlu0 %v2684
  %v2686 = vpop.xlane.xlu0 %2685
  %v2687 = vsel %vm1722, %v2671, 0.0
  %2688 = vadd.xlane.f32.xlu0 %v2687
  %v2689 = vpop.xlane.xlu0 %2688
  %v2690 = vsel %vm1722, %v2672, 0.0
  %2691 = vadd.xlane.f32.xlu0 %v2690
  %v2692 = vpop.xlane.xlu0 %2691
  %v2693 = vsel %vm1722, %v2673, 0.0
  %2694 = vadd.xlane.f32.xlu0 %v2693
  %v2695 = vpop.xlane.xlu0 %2694
  %v2696 = vsel %vm1722, %v2674, 0.0
  %2697 = vadd.xlane.f32.xlu0 %v2696
  %v2698 = vpop.xlane.xlu0 %2697
  %v2699 = vadd.f32 %v2651, %v2677
  %v2700 = vadd.f32 %v2652, %v2680
  %v2701 = vadd.f32 %v2653, %v2683
  %v2702 = vadd.f32 %v2654, %v2686
  %v2703 = vadd.f32 %v2655, %v2689
  %v2704 = vadd.f32 %v2656, %v2692
  %v2705 = vadd.f32 %v2657, %v2695
  %v2706 = vadd.f32 %v2658, %v2698
  %v2707 = vsub.f32 %v1162, %v2227
  %v2708 = vsub.f32 %v1165, %v2228
  %v2709 = vsub.f32 %v1170, %v2229
  %v2710 = vsub.f32 %v1173, %v2230
  %v2711 = vsub.f32 %v1178, %v2231
  %v2712 = vsub.f32 %v1181, %v2232
  %v2713 = vsub.f32 %v1186, %v2233
  %v2714 = vsub.f32 %v1189, %v2234
  %v2715 = vmul.f32 %v2707, %v2707
  %v2716 = vmul.f32 %v2708, %v2708
  %v2717 = vmul.f32 %v2709, %v2709
  %v2718 = vmul.f32 %v2710, %v2710
  %v2719 = vmul.f32 %v2711, %v2711
  %v2720 = vmul.f32 %v2712, %v2712
  %v2721 = vmul.f32 %v2713, %v2713
  %v2722 = vmul.f32 %v2714, %v2714
  %v2723 = vsel %vm1722, %v2715, 0.0
  %2724 = vadd.xlane.f32.xlu0 %v2723
  %v2725 = vpop.xlane.xlu0 %2724
  %v2726 = vsel %vm1722, %v2716, 0.0
  %2727 = vadd.xlane.f32.xlu0 %v2726
  %v2728 = vpop.xlane.xlu0 %2727
  %v2729 = vsel %vm1722, %v2717, 0.0
  %2730 = vadd.xlane.f32.xlu0 %v2729
  %v2731 = vpop.xlane.xlu0 %2730
  %v2732 = vsel %vm1722, %v2718, 0.0
  %2733 = vadd.xlane.f32.xlu0 %v2732
  %v2734 = vpop.xlane.xlu0 %2733
  %v2735 = vsel %vm1722, %v2719, 0.0
  %2736 = vadd.xlane.f32.xlu0 %v2735
  %v2737 = vpop.xlane.xlu0 %2736
  %v2738 = vsel %vm1722, %v2720, 0.0
  %2739 = vadd.xlane.f32.xlu0 %v2738
  %v2740 = vpop.xlane.xlu0 %2739
  %v2741 = vsel %vm1722, %v2721, 0.0
  %2742 = vadd.xlane.f32.xlu0 %v2741
  %v2743 = vpop.xlane.xlu0 %2742
  %v2744 = vsel %vm1722, %v2722, 0.0
  %2745 = vadd.xlane.f32.xlu0 %v2744
  %v2746 = vpop.xlane.xlu0 %2745
  %v2747 = vadd.f32 %v2699, %v2725
  %v2748 = vadd.f32 %v2700, %v2728
  %v2749 = vadd.f32 %v2701, %v2731
  %v2750 = vadd.f32 %v2702, %v2734
  %v2751 = vadd.f32 %v2703, %v2737
  %v2752 = vadd.f32 %v2704, %v2740
  %v2753 = vadd.f32 %v2705, %v2743
  %v2754 = vadd.f32 %v2706, %v2746
  %v2755 = vsub.f32 %v1268, %v2227
  %v2756 = vsub.f32 %v1271, %v2228
  %v2757 = vsub.f32 %v1276, %v2229
  %v2758 = vsub.f32 %v1279, %v2230
  %v2759 = vsub.f32 %v1284, %v2231
  %v2760 = vsub.f32 %v1287, %v2232
  %v2761 = vsub.f32 %v1292, %v2233
  %v2762 = vsub.f32 %v1295, %v2234
  %v2763 = vmul.f32 %v2755, %v2755
  %v2764 = vmul.f32 %v2756, %v2756
  %v2765 = vmul.f32 %v2757, %v2757
  %v2766 = vmul.f32 %v2758, %v2758
  %v2767 = vmul.f32 %v2759, %v2759
  %v2768 = vmul.f32 %v2760, %v2760
  %v2769 = vmul.f32 %v2761, %v2761
  %v2770 = vmul.f32 %v2762, %v2762
  %v2771 = vsel %vm1722, %v2763, 0.0
  %2772 = vadd.xlane.f32.xlu0 %v2771
  %v2773 = vpop.xlane.xlu0 %2772
  %v2774 = vsel %vm1722, %v2764, 0.0
  %2775 = vadd.xlane.f32.xlu0 %v2774
  %v2776 = vpop.xlane.xlu0 %2775
  %v2777 = vsel %vm1722, %v2765, 0.0
  %2778 = vadd.xlane.f32.xlu0 %v2777
  %v2779 = vpop.xlane.xlu0 %2778
  %v2780 = vsel %vm1722, %v2766, 0.0
  %2781 = vadd.xlane.f32.xlu0 %v2780
  %v2782 = vpop.xlane.xlu0 %2781
  %v2783 = vsel %vm1722, %v2767, 0.0
  %2784 = vadd.xlane.f32.xlu0 %v2783
  %v2785 = vpop.xlane.xlu0 %2784
  %v2786 = vsel %vm1722, %v2768, 0.0
  %2787 = vadd.xlane.f32.xlu0 %v2786
  %v2788 = vpop.xlane.xlu0 %2787
  %v2789 = vsel %vm1722, %v2769, 0.0
  %2790 = vadd.xlane.f32.xlu0 %v2789
  %v2791 = vpop.xlane.xlu0 %2790
  %v2792 = vsel %vm1722, %v2770, 0.0
  %2793 = vadd.xlane.f32.xlu0 %v2792
  %v2794 = vpop.xlane.xlu0 %2793
  %v2795 = vadd.f32 %v2747, %v2773
  %v2796 = vadd.f32 %v2748, %v2776
  %v2797 = vadd.f32 %v2749, %v2779
  %v2798 = vadd.f32 %v2750, %v2782
  %v2799 = vadd.f32 %v2751, %v2785
  %v2800 = vadd.f32 %v2752, %v2788
  %v2801 = vadd.f32 %v2753, %v2791
  %v2802 = vadd.f32 %v2754, %v2794
  %v2803 = vsub.f32 %v1374, %v2227
  %v2804 = vsub.f32 %v1377, %v2228
  %v2805 = vsub.f32 %v1382, %v2229
  %v2806 = vsub.f32 %v1385, %v2230
  %v2807 = vsub.f32 %v1390, %v2231
  %v2808 = vsub.f32 %v1393, %v2232
  %v2809 = vsub.f32 %v1398, %v2233
  %v2810 = vsub.f32 %v1401, %v2234
  %v2811 = vmul.f32 %v2803, %v2803
  %v2812 = vmul.f32 %v2804, %v2804
  %v2813 = vmul.f32 %v2805, %v2805
  %v2814 = vmul.f32 %v2806, %v2806
  %v2815 = vmul.f32 %v2807, %v2807
  %v2816 = vmul.f32 %v2808, %v2808
  %v2817 = vmul.f32 %v2809, %v2809
  %v2818 = vmul.f32 %v2810, %v2810
  %v2819 = vsel %vm1722, %v2811, 0.0
  %2820 = vadd.xlane.f32.xlu0 %v2819
  %v2821 = vpop.xlane.xlu0 %2820
  %v2822 = vsel %vm1722, %v2812, 0.0
  %2823 = vadd.xlane.f32.xlu0 %v2822
  %v2824 = vpop.xlane.xlu0 %2823
  %v2825 = vsel %vm1722, %v2813, 0.0
  %2826 = vadd.xlane.f32.xlu0 %v2825
  %v2827 = vpop.xlane.xlu0 %2826
  %v2828 = vsel %vm1722, %v2814, 0.0
  %2829 = vadd.xlane.f32.xlu0 %v2828
  %v2830 = vpop.xlane.xlu0 %2829
  %v2831 = vsel %vm1722, %v2815, 0.0
  %2832 = vadd.xlane.f32.xlu0 %v2831
  %v2833 = vpop.xlane.xlu0 %2832
  %v2834 = vsel %vm1722, %v2816, 0.0
  %2835 = vadd.xlane.f32.xlu0 %v2834
  %v2836 = vpop.xlane.xlu0 %2835
  %v2837 = vsel %vm1722, %v2817, 0.0
  %2838 = vadd.xlane.f32.xlu0 %v2837
  %v2839 = vpop.xlane.xlu0 %2838
  %v2840 = vsel %vm1722, %v2818, 0.0
  %2841 = vadd.xlane.f32.xlu0 %v2840
  %v2842 = vpop.xlane.xlu0 %2841
  %v2843 = vadd.f32 %v2795, %v2821
  %v2844 = vadd.f32 %v2796, %v2824
  %v2845 = vadd.f32 %v2797, %v2827
  %v2846 = vadd.f32 %v2798, %v2830
  %v2847 = vadd.f32 %v2799, %v2833
  %v2848 = vadd.f32 %v2800, %v2836
  %v2849 = vadd.f32 %v2801, %v2839
  %v2850 = vadd.f32 %v2802, %v2842
  %v2851 = vsub.f32 %v1480, %v2227
  %v2852 = vsub.f32 %v1483, %v2228
  %v2853 = vsub.f32 %v1488, %v2229
  %v2854 = vsub.f32 %v1491, %v2230
  %v2855 = vsub.f32 %v1496, %v2231
  %v2856 = vsub.f32 %v1499, %v2232
  %v2857 = vsub.f32 %v1504, %v2233
  %v2858 = vsub.f32 %v1507, %v2234
  %v2859 = vmul.f32 %v2851, %v2851
  %v2860 = vmul.f32 %v2852, %v2852
  %v2861 = vmul.f32 %v2853, %v2853
  %v2862 = vmul.f32 %v2854, %v2854
  %v2863 = vmul.f32 %v2855, %v2855
  %v2864 = vmul.f32 %v2856, %v2856
  %v2865 = vmul.f32 %v2857, %v2857
  %v2866 = vmul.f32 %v2858, %v2858
  %v2867 = vsel %vm1722, %v2859, 0.0
  %2868 = vadd.xlane.f32.xlu0 %v2867
  %v2869 = vpop.xlane.xlu0 %2868
  %v2870 = vsel %vm1722, %v2860, 0.0
  %2871 = vadd.xlane.f32.xlu0 %v2870
  %v2872 = vpop.xlane.xlu0 %2871
  %v2873 = vsel %vm1722, %v2861, 0.0
  %2874 = vadd.xlane.f32.xlu0 %v2873
  %v2875 = vpop.xlane.xlu0 %2874
  %v2876 = vsel %vm1722, %v2862, 0.0
  %2877 = vadd.xlane.f32.xlu0 %v2876
  %v2878 = vpop.xlane.xlu0 %2877
  %v2879 = vsel %vm1722, %v2863, 0.0
  %2880 = vadd.xlane.f32.xlu0 %v2879
  %v2881 = vpop.xlane.xlu0 %2880
  %v2882 = vsel %vm1722, %v2864, 0.0
  %2883 = vadd.xlane.f32.xlu0 %v2882
  %v2884 = vpop.xlane.xlu0 %2883
  %v2885 = vsel %vm1722, %v2865, 0.0
  %2886 = vadd.xlane.f32.xlu0 %v2885
  %v2887 = vpop.xlane.xlu0 %2886
  %v2888 = vsel %vm1722, %v2866, 0.0
  %2889 = vadd.xlane.f32.xlu0 %v2888
  %v2890 = vpop.xlane.xlu0 %2889
  %v2891 = vadd.f32 %v2843, %v2869
  %v2892 = vadd.f32 %v2844, %v2872
  %v2893 = vadd.f32 %v2845, %v2875
  %v2894 = vadd.f32 %v2846, %v2878
  %v2895 = vadd.f32 %v2847, %v2881
  %v2896 = vadd.f32 %v2848, %v2884
  %v2897 = vadd.f32 %v2849, %v2887
  %v2898 = vadd.f32 %v2850, %v2890
  %v2899 = vsub.f32 %v1586, %v2227
  %v2900 = vsub.f32 %v1589, %v2228
  %v2901 = vsub.f32 %v1594, %v2229
  %v2902 = vsub.f32 %v1597, %v2230
  %v2903 = vsub.f32 %v1602, %v2231
  %v2904 = vsub.f32 %v1605, %v2232
  %v2905 = vsub.f32 %v1610, %v2233
  %v2906 = vsub.f32 %v1613, %v2234
  %v2907 = vmul.f32 %v2899, %v2899
  %v2908 = vmul.f32 %v2900, %v2900
  %v2909 = vmul.f32 %v2901, %v2901
  %v2910 = vmul.f32 %v2902, %v2902
  %v2911 = vmul.f32 %v2903, %v2903
  %v2912 = vmul.f32 %v2904, %v2904
  %v2913 = vmul.f32 %v2905, %v2905
  %v2914 = vmul.f32 %v2906, %v2906
  %v2915 = vsel %vm1722, %v2907, 0.0
  %2916 = vadd.xlane.f32.xlu0 %v2915
  %v2917 = vpop.xlane.xlu0 %2916
  %v2918 = vsel %vm1722, %v2908, 0.0
  %2919 = vadd.xlane.f32.xlu0 %v2918
  %v2920 = vpop.xlane.xlu0 %2919
  %v2921 = vsel %vm1722, %v2909, 0.0
  %2922 = vadd.xlane.f32.xlu0 %v2921
  %v2923 = vpop.xlane.xlu0 %2922
  %v2924 = vsel %vm1722, %v2910, 0.0
  %2925 = vadd.xlane.f32.xlu0 %v2924
  %v2926 = vpop.xlane.xlu0 %2925
  %v2927 = vsel %vm1722, %v2911, 0.0
  %2928 = vadd.xlane.f32.xlu0 %v2927
  %v2929 = vpop.xlane.xlu0 %2928
  %v2930 = vsel %vm1722, %v2912, 0.0
  %2931 = vadd.xlane.f32.xlu0 %v2930
  %v2932 = vpop.xlane.xlu0 %2931
  %v2933 = vsel %vm1722, %v2913, 0.0
  %2934 = vadd.xlane.f32.xlu0 %v2933
  %v2935 = vpop.xlane.xlu0 %2934
  %v2936 = vsel %vm1722, %v2914, 0.0
  %2937 = vadd.xlane.f32.xlu0 %v2936
  %v2938 = vpop.xlane.xlu0 %2937
  %v2939 = vadd.f32 %v2891, %v2917
  %v2940 = vadd.f32 %v2892, %v2920
  %v2941 = vadd.f32 %v2893, %v2923
  %v2942 = vadd.f32 %v2894, %v2926
  %v2943 = vadd.f32 %v2895, %v2929
  %v2944 = vadd.f32 %v2896, %v2932
  %v2945 = vadd.f32 %v2897, %v2935
  %v2946 = vadd.f32 %v2898, %v2938
  %v2947 = vsub.f32 %v1692, %v2227
  %v2948 = vsub.f32 %v1695, %v2228
  %v2949 = vsub.f32 %v1700, %v2229
  %v2950 = vsub.f32 %v1703, %v2230
  %v2951 = vsub.f32 %v1708, %v2231
  %v2952 = vsub.f32 %v1711, %v2232
  %v2953 = vsub.f32 %v1716, %v2233
  %v2954 = vsub.f32 %v1719, %v2234
  %v2955 = vmul.f32 %v2947, %v2947
  %v2956 = vmul.f32 %v2948, %v2948
  %v2957 = vmul.f32 %v2949, %v2949
  %v2958 = vmul.f32 %v2950, %v2950
  %v2959 = vmul.f32 %v2951, %v2951
  %v2960 = vmul.f32 %v2952, %v2952
  %v2961 = vmul.f32 %v2953, %v2953
  %v2962 = vmul.f32 %v2954, %v2954
  %v2963 = vsel %vm1722, %v2955, 0.0
  %2964 = vadd.xlane.f32.xlu0 %v2963
  %v2965 = vpop.xlane.xlu0 %2964
  %v2966 = vsel %vm1722, %v2956, 0.0
  %2967 = vadd.xlane.f32.xlu0 %v2966
  %v2968 = vpop.xlane.xlu0 %2967
  %v2969 = vsel %vm1722, %v2957, 0.0
  %2970 = vadd.xlane.f32.xlu0 %v2969
  %v2971 = vpop.xlane.xlu0 %2970
  %v2972 = vsel %vm1722, %v2958, 0.0
  %2973 = vadd.xlane.f32.xlu0 %v2972
  %v2974 = vpop.xlane.xlu0 %2973
  %v2975 = vsel %vm1722, %v2959, 0.0
  %2976 = vadd.xlane.f32.xlu0 %v2975
  %v2977 = vpop.xlane.xlu0 %2976
  %v2978 = vsel %vm1722, %v2960, 0.0
  %2979 = vadd.xlane.f32.xlu0 %v2978
  %v2980 = vpop.xlane.xlu0 %2979
  %v2981 = vsel %vm1722, %v2961, 0.0
  %2982 = vadd.xlane.f32.xlu0 %v2981
  %v2983 = vpop.xlane.xlu0 %2982
  %v2984 = vsel %vm1722, %v2962, 0.0
  %2985 = vadd.xlane.f32.xlu0 %v2984
  %v2986 = vpop.xlane.xlu0 %2985
  %v2987 = vadd.f32 %v2939, %v2965
  %v2988 = vadd.f32 %v2940, %v2968
  %v2989 = vadd.f32 %v2941, %v2971
  %v2990 = vadd.f32 %v2942, %v2974
  %v2991 = vadd.f32 %v2943, %v2977
  %v2992 = vadd.f32 %v2944, %v2980
  %v2993 = vadd.f32 %v2945, %v2983
  %v2994 = vadd.f32 %v2946, %v2986
  %v2995 = vmul.f32 %v2987, 0.03125
  %v2996 = vmul.f32 %v2988, 0.03125
  %v2997 = vmul.f32 %v2989, 0.03125
  %v2998 = vmul.f32 %v2990, 0.03125
  %v2999 = vmul.f32 %v2991, 0.03125
  %v3000 = vmul.f32 %v2992, 0.03125
  %v3001 = vmul.f32 %v2993, 0.03125
  %v3002 = vmul.f32 %v2994, 0.03125
  %v3003 = vld [vmem:[%s2] sm:$0xff]
  %v3004 = vld [vmem:[%s2 + $0x8] sm:$0xff]
  %v3005 = vld [vmem:[%s2 + $0x10] sm:$0xff]
  %v3006 = vld [vmem:[%s2 + $0x18] sm:$0xff]
  %v3007 = vld [vmem:[%s2 + $0x20] sm:$0xff]
  %v3008 = vld [vmem:[%s2 + $0x28] sm:$0xff]
  %v3009 = vld [vmem:[%s2 + $0x30] sm:$0xff]
  %v3010 = vld [vmem:[%s2 + $0x38] sm:$0xff]
  %v3011 = vadd.f32 %v2995, 1e-05
  %v3012 = vadd.f32 %v2996, 1e-05
  %v3013 = vadd.f32 %v2997, 1e-05
  %v3014 = vadd.f32 %v2998, 1e-05
  %v3015 = vadd.f32 %v2999, 1e-05
  %v3016 = vadd.f32 %v3000, 1e-05
  %v3017 = vadd.f32 %v3001, 1e-05
  %v3018 = vadd.f32 %v3002, 1e-05
  %v3019 = vrsqrt.pop %v3011
  %v3020 = vrsqrt.pop %v3012
  %v3021 = vrsqrt.pop %v3013
  %v3022 = vrsqrt.pop %v3014
  %v3023 = vrsqrt.pop %v3015
  %v3024 = vrsqrt.pop %v3016
  %v3025 = vrsqrt.pop %v3017
  %v3026 = vrsqrt.pop %v3018
  %v3027 = vmul.f32 %v3003, %v3019
  %v3028 = vmul.f32 %v3004, %v3020
  %v3029 = vmul.f32 %v3005, %v3021
  %v3030 = vmul.f32 %v3006, %v3022
  %v3031 = vmul.f32 %v3007, %v3023
  %v3032 = vmul.f32 %v3008, %v3024
  %v3033 = vmul.f32 %v3009, %v3025
  %v3034 = vmul.f32 %v3010, %v3026
  %v3035 = vld [vmem:[%s3] sm:$0xff]
  %v3036 = vld [vmem:[%s3 + $0x8] sm:$0xff]
  %v3037 = vld [vmem:[%s3 + $0x10] sm:$0xff]
  %v3038 = vld [vmem:[%s3 + $0x18] sm:$0xff]
  %v3039 = vld [vmem:[%s3 + $0x20] sm:$0xff]
  %v3040 = vld [vmem:[%s3 + $0x28] sm:$0xff]
  %v3041 = vld [vmem:[%s3 + $0x30] sm:$0xff]
  %v3042 = vld [vmem:[%s3 + $0x38] sm:$0xff]
  %v3043 = vmul.f32 %v2227, %v3027
  %v3044 = vmul.f32 %v2228, %v3028
  %v3045 = vmul.f32 %v2229, %v3029
  %v3046 = vmul.f32 %v2230, %v3030
  %v3047 = vmul.f32 %v2231, %v3031
  %v3048 = vmul.f32 %v2232, %v3032
  %v3049 = vmul.f32 %v2233, %v3033
  %v3050 = vmul.f32 %v2234, %v3034
  %v3051 = vsub.f32 %v3035, %v3043
  %v3052 = vsub.f32 %v3036, %v3044
  %v3053 = vsub.f32 %v3037, %v3045
  %v3054 = vsub.f32 %v3038, %v3046
  %v3055 = vsub.f32 %v3039, %v3047
  %v3056 = vsub.f32 %v3040, %v3048
  %v3057 = vsub.f32 %v3041, %v3049
  %v3058 = vsub.f32 %v3042, %v3050
  %3060 = vset.pattern.permute.xlu0 0
  %3061 = vperm.xlu0 %3060, %v3027
  %v3062 = vpop.permute.xlu0 %3061
  %3065 = vset.pattern.permute.xlu0 0
  %3066 = vperm.xlu0 %3065, %v3028
  %v3067 = vpop.permute.xlu0 %3066
  %3070 = vset.pattern.permute.xlu0 0
  %3071 = vperm.xlu0 %3070, %v3029
  %v3072 = vpop.permute.xlu0 %3071
  %3075 = vset.pattern.permute.xlu0 0
  %3076 = vperm.xlu0 %3075, %v3030
  %v3077 = vpop.permute.xlu0 %3076
  %3080 = vset.pattern.permute.xlu0 0
  %3081 = vperm.xlu0 %3080, %v3031
  %v3082 = vpop.permute.xlu0 %3081
  %3085 = vset.pattern.permute.xlu0 0
  %3086 = vperm.xlu0 %3085, %v3032
  %v3087 = vpop.permute.xlu0 %3086
  %3090 = vset.pattern.permute.xlu0 0
  %3091 = vperm.xlu0 %3090, %v3033
  %v3092 = vpop.permute.xlu0 %3091
  %3095 = vset.pattern.permute.xlu0 0
  %3096 = vperm.xlu0 %3095, %v3034
  %v3097 = vpop.permute.xlu0 %3096
  %v3099 = vmul.f32 %v102, %v3062
  %v3100 = vmul.f32 %v105, %v3067
  %v3101 = vmul.f32 %v110, %v3072
  %v3102 = vmul.f32 %v113, %v3077
  %v3103 = vmul.f32 %v118, %v3082
  %v3104 = vmul.f32 %v121, %v3087
  %v3105 = vmul.f32 %v126, %v3092
  %v3106 = vmul.f32 %v129, %v3097
  %3108 = vset.pattern.permute.xlu0 0
  %3109 = vperm.xlu0 %3108, %v3051
  %v3110 = vpop.permute.xlu0 %3109
  %3113 = vset.pattern.permute.xlu0 0
  %3114 = vperm.xlu0 %3113, %v3052
  %v3115 = vpop.permute.xlu0 %3114
  %3118 = vset.pattern.permute.xlu0 0
  %3119 = vperm.xlu0 %3118, %v3053
  %v3120 = vpop.permute.xlu0 %3119
  %3123 = vset.pattern.permute.xlu0 0
  %3124 = vperm.xlu0 %3123, %v3054
  %v3125 = vpop.permute.xlu0 %3124
  %3128 = vset.pattern.permute.xlu0 0
  %3129 = vperm.xlu0 %3128, %v3055
  %v3130 = vpop.permute.xlu0 %3129
  %3133 = vset.pattern.permute.xlu0 0
  %3134 = vperm.xlu0 %3133, %v3056
  %v3135 = vpop.permute.xlu0 %3134
  %3138 = vset.pattern.permute.xlu0 0
  %3139 = vperm.xlu0 %3138, %v3057
  %v3140 = vpop.permute.xlu0 %3139
  %3143 = vset.pattern.permute.xlu0 0
  %3144 = vperm.xlu0 %3143, %v3058
  %v3145 = vpop.permute.xlu0 %3144
  %v3147 = vadd.f32 %v3099, %v3110
  %v3148 = vadd.f32 %v3100, %v3115
  %v3149 = vadd.f32 %v3101, %v3120
  %v3150 = vadd.f32 %v3102, %v3125
  %v3151 = vadd.f32 %v3103, %v3130
  %v3152 = vadd.f32 %v3104, %v3135
  %v3153 = vadd.f32 %v3105, %v3140
  %v3154 = vadd.f32 %v3106, %v3145
  %v3155 = vmul.f32 %v208, %v3062
  %v3156 = vmul.f32 %v211, %v3067
  %v3157 = vmul.f32 %v216, %v3072
  %v3158 = vmul.f32 %v219, %v3077
  %v3159 = vmul.f32 %v224, %v3082
  %v3160 = vmul.f32 %v227, %v3087
  %v3161 = vmul.f32 %v232, %v3092
  %v3162 = vmul.f32 %v235, %v3097
  %v3163 = vadd.f32 %v3155, %v3110
  %v3164 = vadd.f32 %v3156, %v3115
  %v3165 = vadd.f32 %v3157, %v3120
  %v3166 = vadd.f32 %v3158, %v3125
  %v3167 = vadd.f32 %v3159, %v3130
  %v3168 = vadd.f32 %v3160, %v3135
  %v3169 = vadd.f32 %v3161, %v3140
  %v3170 = vadd.f32 %v3162, %v3145
  %v3171 = vmul.f32 %v314, %v3062
  %v3172 = vmul.f32 %v317, %v3067
  %v3173 = vmul.f32 %v322, %v3072
  %v3174 = vmul.f32 %v325, %v3077
  %v3175 = vmul.f32 %v330, %v3082
  %v3176 = vmul.f32 %v333, %v3087
  %v3177 = vmul.f32 %v338, %v3092
  %v3178 = vmul.f32 %v341, %v3097
  %v3179 = vadd.f32 %v3171, %v3110
  %v3180 = vadd.f32 %v3172, %v3115
  %v3181 = vadd.f32 %v3173, %v3120
  %v3182 = vadd.f32 %v3174, %v3125
  %v3183 = vadd.f32 %v3175, %v3130
  %v3184 = vadd.f32 %v3176, %v3135
  %v3185 = vadd.f32 %v3177, %v3140
  %v3186 = vadd.f32 %v3178, %v3145
  %v3187 = vmul.f32 %v420, %v3062
  %v3188 = vmul.f32 %v423, %v3067
  %v3189 = vmul.f32 %v428, %v3072
  %v3190 = vmul.f32 %v431, %v3077
  %v3191 = vmul.f32 %v436, %v3082
  %v3192 = vmul.f32 %v439, %v3087
  %v3193 = vmul.f32 %v444, %v3092
  %v3194 = vmul.f32 %v447, %v3097
  %v3195 = vadd.f32 %v3187, %v3110
  %v3196 = vadd.f32 %v3188, %v3115
  %v3197 = vadd.f32 %v3189, %v3120
  %v3198 = vadd.f32 %v3190, %v3125
  %v3199 = vadd.f32 %v3191, %v3130
  %v3200 = vadd.f32 %v3192, %v3135
  %v3201 = vadd.f32 %v3193, %v3140
  %v3202 = vadd.f32 %v3194, %v3145
  %v3203 = vmul.f32 %v526, %v3062
  %v3204 = vmul.f32 %v529, %v3067
  %v3205 = vmul.f32 %v534, %v3072
  %v3206 = vmul.f32 %v537, %v3077
  %v3207 = vmul.f32 %v542, %v3082
  %v3208 = vmul.f32 %v545, %v3087
  %v3209 = vmul.f32 %v550, %v3092
  %v3210 = vmul.f32 %v553, %v3097
  %v3211 = vadd.f32 %v3203, %v3110
  %v3212 = vadd.f32 %v3204, %v3115
  %v3213 = vadd.f32 %v3205, %v3120
  %v3214 = vadd.f32 %v3206, %v3125
  %v3215 = vadd.f32 %v3207, %v3130
  %v3216 = vadd.f32 %v3208, %v3135
  %v3217 = vadd.f32 %v3209, %v3140
  %v3218 = vadd.f32 %v3210, %v3145
  %v3219 = vmul.f32 %v632, %v3062
  %v3220 = vmul.f32 %v635, %v3067
  %v3221 = vmul.f32 %v640, %v3072
  %v3222 = vmul.f32 %v643, %v3077
  %v3223 = vmul.f32 %v648, %v3082
  %v3224 = vmul.f32 %v651, %v3087
  %v3225 = vmul.f32 %v656, %v3092
  %v3226 = vmul.f32 %v659, %v3097
  %v3227 = vadd.f32 %v3219, %v3110
  %v3228 = vadd.f32 %v3220, %v3115
  %v3229 = vadd.f32 %v3221, %v3120
  %v3230 = vadd.f32 %v3222, %v3125
  %v3231 = vadd.f32 %v3223, %v3130
  %v3232 = vadd.f32 %v3224, %v3135
  %v3233 = vadd.f32 %v3225, %v3140
  %v3234 = vadd.f32 %v3226, %v3145
  %v3235 = vmul.f32 %v738, %v3062
  %v3236 = vmul.f32 %v741, %v3067
  %v3237 = vmul.f32 %v746, %v3072
  %v3238 = vmul.f32 %v749, %v3077
  %v3239 = vmul.f32 %v754, %v3082
  %v3240 = vmul.f32 %v757, %v3087
  %v3241 = vmul.f32 %v762, %v3092
  %v3242 = vmul.f32 %v765, %v3097
  %v3243 = vadd.f32 %v3235, %v3110
  %v3244 = vadd.f32 %v3236, %v3115
  %v3245 = vadd.f32 %v3237, %v3120
  %v3246 = vadd.f32 %v3238, %v3125
  %v3247 = vadd.f32 %v3239, %v3130
  %v3248 = vadd.f32 %v3240, %v3135
  %v3249 = vadd.f32 %v3241, %v3140
  %v3250 = vadd.f32 %v3242, %v3145
  %v3251 = vmul.f32 %v844, %v3062
  %v3252 = vmul.f32 %v847, %v3067
  %v3253 = vmul.f32 %v852, %v3072
  %v3254 = vmul.f32 %v855, %v3077
  %v3255 = vmul.f32 %v860, %v3082
  %v3256 = vmul.f32 %v863, %v3087
  %v3257 = vmul.f32 %v868, %v3092
  %v3258 = vmul.f32 %v871, %v3097
  %v3259 = vadd.f32 %v3251, %v3110
  %v3260 = vadd.f32 %v3252, %v3115
  %v3261 = vadd.f32 %v3253, %v3120
  %v3262 = vadd.f32 %v3254, %v3125
  %v3263 = vadd.f32 %v3255, %v3130
  %v3264 = vadd.f32 %v3256, %v3135
  %v3265 = vadd.f32 %v3257, %v3140
  %v3266 = vadd.f32 %v3258, %v3145
  %v3267 = vmul.f32 %v950, %v3062
  %v3268 = vmul.f32 %v953, %v3067
  %v3269 = vmul.f32 %v958, %v3072
  %v3270 = vmul.f32 %v961, %v3077
  %v3271 = vmul.f32 %v966, %v3082
  %v3272 = vmul.f32 %v969, %v3087
  %v3273 = vmul.f32 %v974, %v3092
  %v3274 = vmul.f32 %v977, %v3097
  %v3275 = vadd.f32 %v3267, %v3110
  %v3276 = vadd.f32 %v3268, %v3115
  %v3277 = vadd.f32 %v3269, %v3120
  %v3278 = vadd.f32 %v3270, %v3125
  %v3279 = vadd.f32 %v3271, %v3130
  %v3280 = vadd.f32 %v3272, %v3135
  %v3281 = vadd.f32 %v3273, %v3140
  %v3282 = vadd.f32 %v3274, %v3145
  %v3283 = vmul.f32 %v1056, %v3062
  %v3284 = vmul.f32 %v1059, %v3067
  %v3285 = vmul.f32 %v1064, %v3072
  %v3286 = vmul.f32 %v1067, %v3077
  %v3287 = vmul.f32 %v1072, %v3082
  %v3288 = vmul.f32 %v1075, %v3087
  %v3289 = vmul.f32 %v1080, %v3092
  %v3290 = vmul.f32 %v1083, %v3097
  %v3291 = vadd.f32 %v3283, %v3110
  %v3292 = vadd.f32 %v3284, %v3115
  %v3293 = vadd.f32 %v3285, %v3120
  %v3294 = vadd.f32 %v3286, %v3125
  %v3295 = vadd.f32 %v3287, %v3130
  %v3296 = vadd.f32 %v3288, %v3135
  %v3297 = vadd.f32 %v3289, %v3140
  %v3298 = vadd.f32 %v3290, %v3145
  %v3299 = vmul.f32 %v1162, %v3062
  %v3300 = vmul.f32 %v1165, %v3067
  %v3301 = vmul.f32 %v1170, %v3072
  %v3302 = vmul.f32 %v1173, %v3077
  %v3303 = vmul.f32 %v1178, %v3082
  %v3304 = vmul.f32 %v1181, %v3087
  %v3305 = vmul.f32 %v1186, %v3092
  %v3306 = vmul.f32 %v1189, %v3097
  %v3307 = vadd.f32 %v3299, %v3110
  %v3308 = vadd.f32 %v3300, %v3115
  %v3309 = vadd.f32 %v3301, %v3120
  %v3310 = vadd.f32 %v3302, %v3125
  %v3311 = vadd.f32 %v3303, %v3130
  %v3312 = vadd.f32 %v3304, %v3135
  %v3313 = vadd.f32 %v3305, %v3140
  %v3314 = vadd.f32 %v3306, %v3145
  %v3315 = vmul.f32 %v1268, %v3062
  %v3316 = vmul.f32 %v1271, %v3067
  %v3317 = vmul.f32 %v1276, %v3072
  %v3318 = vmul.f32 %v1279, %v3077
  %v3319 = vmul.f32 %v1284, %v3082
  %v3320 = vmul.f32 %v1287, %v3087
  %v3321 = vmul.f32 %v1292, %v3092
  %v3322 = vmul.f32 %v1295, %v3097
  %v3323 = vadd.f32 %v3315, %v3110
  %v3324 = vadd.f32 %v3316, %v3115
  %v3325 = vadd.f32 %v3317, %v3120
  %v3326 = vadd.f32 %v3318, %v3125
  %v3327 = vadd.f32 %v3319, %v3130
  %v3328 = vadd.f32 %v3320, %v3135
  %v3329 = vadd.f32 %v3321, %v3140
  %v3330 = vadd.f32 %v3322, %v3145
  %v3331 = vmul.f32 %v1374, %v3062
  %v3332 = vmul.f32 %v1377, %v3067
  %v3333 = vmul.f32 %v1382, %v3072
  %v3334 = vmul.f32 %v1385, %v3077
  %v3335 = vmul.f32 %v1390, %v3082
  %v3336 = vmul.f32 %v1393, %v3087
  %v3337 = vmul.f32 %v1398, %v3092
  %v3338 = vmul.f32 %v1401, %v3097
  %v3339 = vadd.f32 %v3331, %v3110
  %v3340 = vadd.f32 %v3332, %v3115
  %v3341 = vadd.f32 %v3333, %v3120
  %v3342 = vadd.f32 %v3334, %v3125
  %v3343 = vadd.f32 %v3335, %v3130
  %v3344 = vadd.f32 %v3336, %v3135
  %v3345 = vadd.f32 %v3337, %v3140
  %v3346 = vadd.f32 %v3338, %v3145
  %v3347 = vmul.f32 %v1480, %v3062
  %v3348 = vmul.f32 %v1483, %v3067
  %v3349 = vmul.f32 %v1488, %v3072
  %v3350 = vmul.f32 %v1491, %v3077
  %v3351 = vmul.f32 %v1496, %v3082
  %v3352 = vmul.f32 %v1499, %v3087
  %v3353 = vmul.f32 %v1504, %v3092
  %v3354 = vmul.f32 %v1507, %v3097
  %v3355 = vadd.f32 %v3347, %v3110
  %v3356 = vadd.f32 %v3348, %v3115
  %v3357 = vadd.f32 %v3349, %v3120
  %v3358 = vadd.f32 %v3350, %v3125
  %v3359 = vadd.f32 %v3351, %v3130
  %v3360 = vadd.f32 %v3352, %v3135
  %v3361 = vadd.f32 %v3353, %v3140
  %v3362 = vadd.f32 %v3354, %v3145
  %v3363 = vmul.f32 %v1586, %v3062
  %v3364 = vmul.f32 %v1589, %v3067
  %v3365 = vmul.f32 %v1594, %v3072
  %v3366 = vmul.f32 %v1597, %v3077
  %v3367 = vmul.f32 %v1602, %v3082
  %v3368 = vmul.f32 %v1605, %v3087
  %v3369 = vmul.f32 %v1610, %v3092
  %v3370 = vmul.f32 %v1613, %v3097
  %v3371 = vadd.f32 %v3363, %v3110
  %v3372 = vadd.f32 %v3364, %v3115
  %v3373 = vadd.f32 %v3365, %v3120
  %v3374 = vadd.f32 %v3366, %v3125
  %v3375 = vadd.f32 %v3367, %v3130
  %v3376 = vadd.f32 %v3368, %v3135
  %v3377 = vadd.f32 %v3369, %v3140
  %v3378 = vadd.f32 %v3370, %v3145
  %v3379 = vmul.f32 %v1692, %v3062
  %v3380 = vmul.f32 %v1695, %v3067
  %v3381 = vmul.f32 %v1700, %v3072
  %v3382 = vmul.f32 %v1703, %v3077
  %v3383 = vmul.f32 %v1708, %v3082
  %v3384 = vmul.f32 %v1711, %v3087
  %v3385 = vmul.f32 %v1716, %v3092
  %v3386 = vmul.f32 %v1719, %v3097
  %v3387 = vadd.f32 %v3379, %v3110
  %v3388 = vadd.f32 %v3380, %v3115
  %v3389 = vadd.f32 %v3381, %v3120
  %v3390 = vadd.f32 %v3382, %v3125
  %v3391 = vadd.f32 %v3383, %v3130
  %v3392 = vadd.f32 %v3384, %v3135
  %v3393 = vadd.f32 %v3385, %v3140
  %v3394 = vadd.f32 %v3386, %v3145
  %v3395 = vmax.f32 %v3147, 0.0
  %v3396 = vmax.f32 %v3148, 0.0
  %v3397 = vmax.f32 %v3149, 0.0
  %v3398 = vmax.f32 %v3150, 0.0
  %v3399 = vmax.f32 %v3151, 0.0
  %v3400 = vmax.f32 %v3152, 0.0
  %v3401 = vmax.f32 %v3153, 0.0
  %v3402 = vmax.f32 %v3154, 0.0
  %v3403 = vmax.f32 %v3163, 0.0
  %v3404 = vmax.f32 %v3164, 0.0
  %v3405 = vmax.f32 %v3165, 0.0
  %v3406 = vmax.f32 %v3166, 0.0
  %v3407 = vmax.f32 %v3167, 0.0
  %v3408 = vmax.f32 %v3168, 0.0
  %v3409 = vmax.f32 %v3169, 0.0
  %v3410 = vmax.f32 %v3170, 0.0
  %v3411 = vmax.f32 %v3179, 0.0
  %v3412 = vmax.f32 %v3180, 0.0
  %v3413 = vmax.f32 %v3181, 0.0
  %v3414 = vmax.f32 %v3182, 0.0
  %v3415 = vmax.f32 %v3183, 0.0
  %v3416 = vmax.f32 %v3184, 0.0
  %v3417 = vmax.f32 %v3185, 0.0
  %v3418 = vmax.f32 %v3186, 0.0
  %v3419 = vmax.f32 %v3195, 0.0
  %v3420 = vmax.f32 %v3196, 0.0
  %v3421 = vmax.f32 %v3197, 0.0
  %v3422 = vmax.f32 %v3198, 0.0
  %v3423 = vmax.f32 %v3199, 0.0
  %v3424 = vmax.f32 %v3200, 0.0
  %v3425 = vmax.f32 %v3201, 0.0
  %v3426 = vmax.f32 %v3202, 0.0
  %v3427 = vmax.f32 %v3211, 0.0
  %v3428 = vmax.f32 %v3212, 0.0
  %v3429 = vmax.f32 %v3213, 0.0
  %v3430 = vmax.f32 %v3214, 0.0
  %v3431 = vmax.f32 %v3215, 0.0
  %v3432 = vmax.f32 %v3216, 0.0
  %v3433 = vmax.f32 %v3217, 0.0
  %v3434 = vmax.f32 %v3218, 0.0
  %v3435 = vmax.f32 %v3227, 0.0
  %v3436 = vmax.f32 %v3228, 0.0
  %v3437 = vmax.f32 %v3229, 0.0
  %v3438 = vmax.f32 %v3230, 0.0
  %v3439 = vmax.f32 %v3231, 0.0
  %v3440 = vmax.f32 %v3232, 0.0
  %v3441 = vmax.f32 %v3233, 0.0
  %v3442 = vmax.f32 %v3234, 0.0
  %v3443 = vmax.f32 %v3243, 0.0
  %v3444 = vmax.f32 %v3244, 0.0
  %v3445 = vmax.f32 %v3245, 0.0
  %v3446 = vmax.f32 %v3246, 0.0
  %v3447 = vmax.f32 %v3247, 0.0
  %v3448 = vmax.f32 %v3248, 0.0
  %v3449 = vmax.f32 %v3249, 0.0
  %v3450 = vmax.f32 %v3250, 0.0
  %v3451 = vmax.f32 %v3259, 0.0
  %v3452 = vmax.f32 %v3260, 0.0
  %v3453 = vmax.f32 %v3261, 0.0
  %v3454 = vmax.f32 %v3262, 0.0
  %v3455 = vmax.f32 %v3263, 0.0
  %v3456 = vmax.f32 %v3264, 0.0
  %v3457 = vmax.f32 %v3265, 0.0
  %v3458 = vmax.f32 %v3266, 0.0
  %v3459 = vmax.f32 %v3275, 0.0
  %v3460 = vmax.f32 %v3276, 0.0
  %v3461 = vmax.f32 %v3277, 0.0
  %v3462 = vmax.f32 %v3278, 0.0
  %v3463 = vmax.f32 %v3279, 0.0
  %v3464 = vmax.f32 %v3280, 0.0
  %v3465 = vmax.f32 %v3281, 0.0
  %v3466 = vmax.f32 %v3282, 0.0
  %v3467 = vmax.f32 %v3291, 0.0
  %v3468 = vmax.f32 %v3292, 0.0
  %v3469 = vmax.f32 %v3293, 0.0
  %v3470 = vmax.f32 %v3294, 0.0
  %v3471 = vmax.f32 %v3295, 0.0
  %v3472 = vmax.f32 %v3296, 0.0
  %v3473 = vmax.f32 %v3297, 0.0
  %v3474 = vmax.f32 %v3298, 0.0
  %v3475 = vmax.f32 %v3307, 0.0
  %v3476 = vmax.f32 %v3308, 0.0
  %v3477 = vmax.f32 %v3309, 0.0
  %v3478 = vmax.f32 %v3310, 0.0
  %v3479 = vmax.f32 %v3311, 0.0
  %v3480 = vmax.f32 %v3312, 0.0
  %v3481 = vmax.f32 %v3313, 0.0
  %v3482 = vmax.f32 %v3314, 0.0
  %v3483 = vmax.f32 %v3323, 0.0
  %v3484 = vmax.f32 %v3324, 0.0
  %v3485 = vmax.f32 %v3325, 0.0
  %v3486 = vmax.f32 %v3326, 0.0
  %v3487 = vmax.f32 %v3327, 0.0
  %v3488 = vmax.f32 %v3328, 0.0
  %v3489 = vmax.f32 %v3329, 0.0
  %v3490 = vmax.f32 %v3330, 0.0
  %v3491 = vmax.f32 %v3339, 0.0
  %v3492 = vmax.f32 %v3340, 0.0
  %v3493 = vmax.f32 %v3341, 0.0
  %v3494 = vmax.f32 %v3342, 0.0
  %v3495 = vmax.f32 %v3343, 0.0
  %v3496 = vmax.f32 %v3344, 0.0
  %v3497 = vmax.f32 %v3345, 0.0
  %v3498 = vmax.f32 %v3346, 0.0
  %v3499 = vmax.f32 %v3355, 0.0
  %v3500 = vmax.f32 %v3356, 0.0
  %v3501 = vmax.f32 %v3357, 0.0
  %v3502 = vmax.f32 %v3358, 0.0
  %v3503 = vmax.f32 %v3359, 0.0
  %v3504 = vmax.f32 %v3360, 0.0
  %v3505 = vmax.f32 %v3361, 0.0
  %v3506 = vmax.f32 %v3362, 0.0
  %v3507 = vmax.f32 %v3371, 0.0
  %v3508 = vmax.f32 %v3372, 0.0
  %v3509 = vmax.f32 %v3373, 0.0
  %v3510 = vmax.f32 %v3374, 0.0
  %v3511 = vmax.f32 %v3375, 0.0
  %v3512 = vmax.f32 %v3376, 0.0
  %v3513 = vmax.f32 %v3377, 0.0
  %v3514 = vmax.f32 %v3378, 0.0
  %v3515 = vmax.f32 %v3387, 0.0
  %v3516 = vmax.f32 %v3388, 0.0
  %v3517 = vmax.f32 %v3389, 0.0
  %v3518 = vmax.f32 %v3390, 0.0
  %v3519 = vmax.f32 %v3391, 0.0
  %v3520 = vmax.f32 %v3392, 0.0
  %v3521 = vmax.f32 %v3393, 0.0
  %v3522 = vmax.f32 %v3394, 0.0
  %v3523 = vpack.c.bf16 %v3396, %v3395
  %v3524 = vpack.c.bf16 %v3398, %v3397
  %v3525 = vpack.c.bf16 %v3400, %v3399
  %v3526 = vpack.c.bf16 %v3402, %v3401
  %v3531 = vunpack.c.l.b16 %v3523
  %v3532 = vunpack.c.h.b16 %v3523
  %v3533 = vunpack.c.l.b16 %v3524
  %v3534 = vunpack.c.h.b16 %v3524
  %v3535 = vunpack.c.l.b16 %v3525
  %v3536 = vunpack.c.h.b16 %v3525
  %v3537 = vunpack.c.l.b16 %v3526
  %v3538 = vunpack.c.h.b16 %v3526
  %v3539 = vpack.c.b16 %v3531, %v3531
  %v3540 = vpack.c.b16 %v3532, %v3532
  %v3541 = vpack.c.b16 %v3533, %v3533
  %v3542 = vpack.c.b16 %v3534, %v3534
  %v3543 = vpack.c.b16 %v3535, %v3535
  %v3544 = vpack.c.b16 %v3536, %v3536
  %v3545 = vpack.c.b16 %v3537, %v3537
  %v3546 = vpack.c.b16 %v3538, %v3538
  %vm3555 = vcmask 11264
  %3556 = vst.msk [vmem:[%s4] sm:$0xf] %vm3555, %v3539
  %3557 = vst.msk [vmem:[%s4 + $0x4] sm:$0xf] %vm3555, %v3540
  %3558 = vst.msk [vmem:[%s4 + $0x8] sm:$0xf] %vm3555, %v3541
  %3559 = vst.msk [vmem:[%s4 + $0xc] sm:$0xf] %vm3555, %v3542
  %3560 = vst.msk [vmem:[%s4 + $0x10] sm:$0xf] %vm3555, %v3543
  %3561 = vst.msk [vmem:[%s4 + $0x14] sm:$0xf] %vm3555, %v3544
  %3562 = vst.msk [vmem:[%s4 + $0x18] sm:$0xf] %vm3555, %v3545
  %3563 = vst.msk [vmem:[%s4 + $0x1c] sm:$0xf] %vm3555, %v3546
  %v3564 = vpack.c.bf16 %v3404, %v3403
  %v3565 = vpack.c.bf16 %v3406, %v3405
  %v3566 = vpack.c.bf16 %v3408, %v3407
  %v3567 = vpack.c.bf16 %v3410, %v3409
  %v3572 = vunpack.c.l.b16 %v3564
  %v3573 = vunpack.c.h.b16 %v3564
  %v3574 = vunpack.c.l.b16 %v3565
  %v3575 = vunpack.c.h.b16 %v3565
  %v3576 = vunpack.c.l.b16 %v3566
  %v3577 = vunpack.c.h.b16 %v3566
  %v3578 = vunpack.c.l.b16 %v3567
  %v3579 = vunpack.c.h.b16 %v3567
  %v3580 = vpack.c.b16 %v3572, %v3572
  %v3581 = vpack.c.b16 %v3573, %v3573
  %v3582 = vpack.c.b16 %v3574, %v3574
  %v3583 = vpack.c.b16 %v3575, %v3575
  %v3584 = vpack.c.b16 %v3576, %v3576
  %v3585 = vpack.c.b16 %v3577, %v3577
  %v3586 = vpack.c.b16 %v3578, %v3578
  %v3587 = vpack.c.b16 %v3579, %v3579
  %s3596 = scalar_lea.vmem %s4, 32
  %3597 = vst.msk [vmem:[%s3596] sm:$0xf] %vm3555, %v3580
  %3598 = vst.msk [vmem:[%s3596 + $0x4] sm:$0xf] %vm3555, %v3581
  %3599 = vst.msk [vmem:[%s3596 + $0x8] sm:$0xf] %vm3555, %v3582
  %3600 = vst.msk [vmem:[%s3596 + $0xc] sm:$0xf] %vm3555, %v3583
  %3601 = vst.msk [vmem:[%s3596 + $0x10] sm:$0xf] %vm3555, %v3584
  %3602 = vst.msk [vmem:[%s3596 + $0x14] sm:$0xf] %vm3555, %v3585
  %3603 = vst.msk [vmem:[%s3596 + $0x18] sm:$0xf] %vm3555, %v3586
  %3604 = vst.msk [vmem:[%s3596 + $0x1c] sm:$0xf] %vm3555, %v3587
  %v3605 = vpack.c.bf16 %v3412, %v3411
  %v3606 = vpack.c.bf16 %v3414, %v3413
  %v3607 = vpack.c.bf16 %v3416, %v3415
  %v3608 = vpack.c.bf16 %v3418, %v3417
  %v3613 = vunpack.c.l.b16 %v3605
  %v3614 = vunpack.c.h.b16 %v3605
  %v3615 = vunpack.c.l.b16 %v3606
  %v3616 = vunpack.c.h.b16 %v3606
  %v3617 = vunpack.c.l.b16 %v3607
  %v3618 = vunpack.c.h.b16 %v3607
  %v3619 = vunpack.c.l.b16 %v3608
  %v3620 = vunpack.c.h.b16 %v3608
  %v3621 = vpack.c.b16 %v3613, %v3613
  %v3622 = vpack.c.b16 %v3614, %v3614
  %v3623 = vpack.c.b16 %v3615, %v3615
  %v3624 = vpack.c.b16 %v3616, %v3616
  %v3625 = vpack.c.b16 %v3617, %v3617
  %v3626 = vpack.c.b16 %v3618, %v3618
  %v3627 = vpack.c.b16 %v3619, %v3619
  %v3628 = vpack.c.b16 %v3620, %v3620
  %s3637 = scalar_lea.vmem %s4, 64
  %3638 = vst.msk [vmem:[%s3637] sm:$0xf] %vm3555, %v3621
  %3639 = vst.msk [vmem:[%s3637 + $0x4] sm:$0xf] %vm3555, %v3622
  %3640 = vst.msk [vmem:[%s3637 + $0x8] sm:$0xf] %vm3555, %v3623
  %3641 = vst.msk [vmem:[%s3637 + $0xc] sm:$0xf] %vm3555, %v3624
  %3642 = vst.msk [vmem:[%s3637 + $0x10] sm:$0xf] %vm3555, %v3625
  %3643 = vst.msk [vmem:[%s3637 + $0x14] sm:$0xf] %vm3555, %v3626
  %3644 = vst.msk [vmem:[%s3637 + $0x18] sm:$0xf] %vm3555, %v3627
  %3645 = vst.msk [vmem:[%s3637 + $0x1c] sm:$0xf] %vm3555, %v3628
  %v3646 = vpack.c.bf16 %v3420, %v3419
  %v3647 = vpack.c.bf16 %v3422, %v3421
  %v3648 = vpack.c.bf16 %v3424, %v3423
  %v3649 = vpack.c.bf16 %v3426, %v3425
  %v3654 = vunpack.c.l.b16 %v3646
  %v3655 = vunpack.c.h.b16 %v3646
  %v3656 = vunpack.c.l.b16 %v3647
  %v3657 = vunpack.c.h.b16 %v3647
  %v3658 = vunpack.c.l.b16 %v3648
  %v3659 = vunpack.c.h.b16 %v3648
  %v3660 = vunpack.c.l.b16 %v3649
  %v3661 = vunpack.c.h.b16 %v3649
  %v3662 = vpack.c.b16 %v3654, %v3654
  %v3663 = vpack.c.b16 %v3655, %v3655
  %v3664 = vpack.c.b16 %v3656, %v3656
  %v3665 = vpack.c.b16 %v3657, %v3657
  %v3666 = vpack.c.b16 %v3658, %v3658
  %v3667 = vpack.c.b16 %v3659, %v3659
  %v3668 = vpack.c.b16 %v3660, %v3660
  %v3669 = vpack.c.b16 %v3661, %v3661
  %s3678 = scalar_lea.vmem %s4, 96
  %3679 = vst.msk [vmem:[%s3678] sm:$0xf] %vm3555, %v3662
  %3680 = vst.msk [vmem:[%s3678 + $0x4] sm:$0xf] %vm3555, %v3663
  %3681 = vst.msk [vmem:[%s3678 + $0x8] sm:$0xf] %vm3555, %v3664
  %3682 = vst.msk [vmem:[%s3678 + $0xc] sm:$0xf] %vm3555, %v3665
  %3683 = vst.msk [vmem:[%s3678 + $0x10] sm:$0xf] %vm3555, %v3666
  %3684 = vst.msk [vmem:[%s3678 + $0x14] sm:$0xf] %vm3555, %v3667
  %3685 = vst.msk [vmem:[%s3678 + $0x18] sm:$0xf] %vm3555, %v3668
  %3686 = vst.msk [vmem:[%s3678 + $0x1c] sm:$0xf] %vm3555, %v3669
  %v3687 = vpack.c.bf16 %v3428, %v3427
  %v3688 = vpack.c.bf16 %v3430, %v3429
  %v3689 = vpack.c.bf16 %v3432, %v3431
  %v3690 = vpack.c.bf16 %v3434, %v3433
  %v3695 = vunpack.c.l.b16 %v3687
  %v3696 = vunpack.c.h.b16 %v3687
  %v3697 = vunpack.c.l.b16 %v3688
  %v3698 = vunpack.c.h.b16 %v3688
  %v3699 = vunpack.c.l.b16 %v3689
  %v3700 = vunpack.c.h.b16 %v3689
  %v3701 = vunpack.c.l.b16 %v3690
  %v3702 = vunpack.c.h.b16 %v3690
  %v3703 = vpack.c.b16 %v3695, %v3695
  %v3704 = vpack.c.b16 %v3696, %v3696
  %v3705 = vpack.c.b16 %v3697, %v3697
  %v3706 = vpack.c.b16 %v3698, %v3698
  %v3707 = vpack.c.b16 %v3699, %v3699
  %v3708 = vpack.c.b16 %v3700, %v3700
  %v3709 = vpack.c.b16 %v3701, %v3701
  %v3710 = vpack.c.b16 %v3702, %v3702
  %s3719 = scalar_lea.vmem %s4, 128
  %3720 = vst.msk [vmem:[%s3719] sm:$0xf] %vm3555, %v3703
  %3721 = vst.msk [vmem:[%s3719 + $0x4] sm:$0xf] %vm3555, %v3704
  %3722 = vst.msk [vmem:[%s3719 + $0x8] sm:$0xf] %vm3555, %v3705
  %3723 = vst.msk [vmem:[%s3719 + $0xc] sm:$0xf] %vm3555, %v3706
  %3724 = vst.msk [vmem:[%s3719 + $0x10] sm:$0xf] %vm3555, %v3707
  %3725 = vst.msk [vmem:[%s3719 + $0x14] sm:$0xf] %vm3555, %v3708
  %3726 = vst.msk [vmem:[%s3719 + $0x18] sm:$0xf] %vm3555, %v3709
  %3727 = vst.msk [vmem:[%s3719 + $0x1c] sm:$0xf] %vm3555, %v3710
  %v3728 = vpack.c.bf16 %v3436, %v3435
  %v3729 = vpack.c.bf16 %v3438, %v3437
  %v3730 = vpack.c.bf16 %v3440, %v3439
  %v3731 = vpack.c.bf16 %v3442, %v3441
  %v3736 = vunpack.c.l.b16 %v3728
  %v3737 = vunpack.c.h.b16 %v3728
  %v3738 = vunpack.c.l.b16 %v3729
  %v3739 = vunpack.c.h.b16 %v3729
  %v3740 = vunpack.c.l.b16 %v3730
  %v3741 = vunpack.c.h.b16 %v3730
  %v3742 = vunpack.c.l.b16 %v3731
  %v3743 = vunpack.c.h.b16 %v3731
  %v3744 = vpack.c.b16 %v3736, %v3736
  %v3745 = vpack.c.b16 %v3737, %v3737
  %v3746 = vpack.c.b16 %v3738, %v3738
  %v3747 = vpack.c.b16 %v3739, %v3739
  %v3748 = vpack.c.b16 %v3740, %v3740
  %v3749 = vpack.c.b16 %v3741, %v3741
  %v3750 = vpack.c.b16 %v3742, %v3742
  %v3751 = vpack.c.b16 %v3743, %v3743
  %s3760 = scalar_lea.vmem %s4, 160
  %3761 = vst.msk [vmem:[%s3760] sm:$0xf] %vm3555, %v3744
  %3762 = vst.msk [vmem:[%s3760 + $0x4] sm:$0xf] %vm3555, %v3745
  %3763 = vst.msk [vmem:[%s3760 + $0x8] sm:$0xf] %vm3555, %v3746
  %3764 = vst.msk [vmem:[%s3760 + $0xc] sm:$0xf] %vm3555, %v3747
  %3765 = vst.msk [vmem:[%s3760 + $0x10] sm:$0xf] %vm3555, %v3748
  %3766 = vst.msk [vmem:[%s3760 + $0x14] sm:$0xf] %vm3555, %v3749
  %3767 = vst.msk [vmem:[%s3760 + $0x18] sm:$0xf] %vm3555, %v3750
  %3768 = vst.msk [vmem:[%s3760 + $0x1c] sm:$0xf] %vm3555, %v3751
  %v3769 = vpack.c.bf16 %v3444, %v3443
  %v3770 = vpack.c.bf16 %v3446, %v3445
  %v3771 = vpack.c.bf16 %v3448, %v3447
  %v3772 = vpack.c.bf16 %v3450, %v3449
  %v3777 = vunpack.c.l.b16 %v3769
  %v3778 = vunpack.c.h.b16 %v3769
  %v3779 = vunpack.c.l.b16 %v3770
  %v3780 = vunpack.c.h.b16 %v3770
  %v3781 = vunpack.c.l.b16 %v3771
  %v3782 = vunpack.c.h.b16 %v3771
  %v3783 = vunpack.c.l.b16 %v3772
  %v3784 = vunpack.c.h.b16 %v3772
  %v3785 = vpack.c.b16 %v3777, %v3777
  %v3786 = vpack.c.b16 %v3778, %v3778
  %v3787 = vpack.c.b16 %v3779, %v3779
  %v3788 = vpack.c.b16 %v3780, %v3780
  %v3789 = vpack.c.b16 %v3781, %v3781
  %v3790 = vpack.c.b16 %v3782, %v3782
  %v3791 = vpack.c.b16 %v3783, %v3783
  %v3792 = vpack.c.b16 %v3784, %v3784
  %s3801 = scalar_lea.vmem %s4, 192
  %3802 = vst.msk [vmem:[%s3801] sm:$0xf] %vm3555, %v3785
  %3803 = vst.msk [vmem:[%s3801 + $0x4] sm:$0xf] %vm3555, %v3786
  %3804 = vst.msk [vmem:[%s3801 + $0x8] sm:$0xf] %vm3555, %v3787
  %3805 = vst.msk [vmem:[%s3801 + $0xc] sm:$0xf] %vm3555, %v3788
  %3806 = vst.msk [vmem:[%s3801 + $0x10] sm:$0xf] %vm3555, %v3789
  %3807 = vst.msk [vmem:[%s3801 + $0x14] sm:$0xf] %vm3555, %v3790
  %3808 = vst.msk [vmem:[%s3801 + $0x18] sm:$0xf] %vm3555, %v3791
  %3809 = vst.msk [vmem:[%s3801 + $0x1c] sm:$0xf] %vm3555, %v3792
  %v3810 = vpack.c.bf16 %v3452, %v3451
  %v3811 = vpack.c.bf16 %v3454, %v3453
  %v3812 = vpack.c.bf16 %v3456, %v3455
  %v3813 = vpack.c.bf16 %v3458, %v3457
  %v3818 = vunpack.c.l.b16 %v3810
  %v3819 = vunpack.c.h.b16 %v3810
  %v3820 = vunpack.c.l.b16 %v3811
  %v3821 = vunpack.c.h.b16 %v3811
  %v3822 = vunpack.c.l.b16 %v3812
  %v3823 = vunpack.c.h.b16 %v3812
  %v3824 = vunpack.c.l.b16 %v3813
  %v3825 = vunpack.c.h.b16 %v3813
  %v3826 = vpack.c.b16 %v3818, %v3818
  %v3827 = vpack.c.b16 %v3819, %v3819
  %v3828 = vpack.c.b16 %v3820, %v3820
  %v3829 = vpack.c.b16 %v3821, %v3821
  %v3830 = vpack.c.b16 %v3822, %v3822
  %v3831 = vpack.c.b16 %v3823, %v3823
  %v3832 = vpack.c.b16 %v3824, %v3824
  %v3833 = vpack.c.b16 %v3825, %v3825
  %s3842 = scalar_lea.vmem %s4, 224
  %3843 = vst.msk [vmem:[%s3842] sm:$0xf] %vm3555, %v3826
  %3844 = vst.msk [vmem:[%s3842 + $0x4] sm:$0xf] %vm3555, %v3827
  %3845 = vst.msk [vmem:[%s3842 + $0x8] sm:$0xf] %vm3555, %v3828
  %3846 = vst.msk [vmem:[%s3842 + $0xc] sm:$0xf] %vm3555, %v3829
  %3847 = vst.msk [vmem:[%s3842 + $0x10] sm:$0xf] %vm3555, %v3830
  %3848 = vst.msk [vmem:[%s3842 + $0x14] sm:$0xf] %vm3555, %v3831
  %3849 = vst.msk [vmem:[%s3842 + $0x18] sm:$0xf] %vm3555, %v3832
  %3850 = vst.msk [vmem:[%s3842 + $0x1c] sm:$0xf] %vm3555, %v3833
  %v3851 = vpack.c.bf16 %v3460, %v3459
  %v3852 = vpack.c.bf16 %v3462, %v3461
  %v3853 = vpack.c.bf16 %v3464, %v3463
  %v3854 = vpack.c.bf16 %v3466, %v3465
  %v3859 = vunpack.c.l.b16 %v3851
  %v3860 = vunpack.c.h.b16 %v3851
  %v3861 = vunpack.c.l.b16 %v3852
  %v3862 = vunpack.c.h.b16 %v3852
  %v3863 = vunpack.c.l.b16 %v3853
  %v3864 = vunpack.c.h.b16 %v3853
  %v3865 = vunpack.c.l.b16 %v3854
  %v3866 = vunpack.c.h.b16 %v3854
  %v3867 = vpack.c.b16 %v3859, %v3859
  %v3868 = vpack.c.b16 %v3860, %v3860
  %v3869 = vpack.c.b16 %v3861, %v3861
  %v3870 = vpack.c.b16 %v3862, %v3862
  %v3871 = vpack.c.b16 %v3863, %v3863
  %v3872 = vpack.c.b16 %v3864, %v3864
  %v3873 = vpack.c.b16 %v3865, %v3865
  %v3874 = vpack.c.b16 %v3866, %v3866
  %s3883 = scalar_lea.vmem %s4, 256
  %3884 = vst.msk [vmem:[%s3883] sm:$0xf] %vm3555, %v3867
  %3885 = vst.msk [vmem:[%s3883 + $0x4] sm:$0xf] %vm3555, %v3868
  %3886 = vst.msk [vmem:[%s3883 + $0x8] sm:$0xf] %vm3555, %v3869
  %3887 = vst.msk [vmem:[%s3883 + $0xc] sm:$0xf] %vm3555, %v3870
  %3888 = vst.msk [vmem:[%s3883 + $0x10] sm:$0xf] %vm3555, %v3871
  %3889 = vst.msk [vmem:[%s3883 + $0x14] sm:$0xf] %vm3555, %v3872
  %3890 = vst.msk [vmem:[%s3883 + $0x18] sm:$0xf] %vm3555, %v3873
  %3891 = vst.msk [vmem:[%s3883 + $0x1c] sm:$0xf] %vm3555, %v3874
  %v3892 = vpack.c.bf16 %v3468, %v3467
  %v3893 = vpack.c.bf16 %v3470, %v3469
  %v3894 = vpack.c.bf16 %v3472, %v3471
  %v3895 = vpack.c.bf16 %v3474, %v3473
  %v3900 = vunpack.c.l.b16 %v3892
  %v3901 = vunpack.c.h.b16 %v3892
  %v3902 = vunpack.c.l.b16 %v3893
  %v3903 = vunpack.c.h.b16 %v3893
  %v3904 = vunpack.c.l.b16 %v3894
  %v3905 = vunpack.c.h.b16 %v3894
  %v3906 = vunpack.c.l.b16 %v3895
  %v3907 = vunpack.c.h.b16 %v3895
  %v3908 = vpack.c.b16 %v3900, %v3900
  %v3909 = vpack.c.b16 %v3901, %v3901
  %v3910 = vpack.c.b16 %v3902, %v3902
  %v3911 = vpack.c.b16 %v3903, %v3903
  %v3912 = vpack.c.b16 %v3904, %v3904
  %v3913 = vpack.c.b16 %v3905, %v3905
  %v3914 = vpack.c.b16 %v3906, %v3906
  %v3915 = vpack.c.b16 %v3907, %v3907
  %s3924 = scalar_lea.vmem %s4, 288
  %3925 = vst.msk [vmem:[%s3924] sm:$0xf] %vm3555, %v3908
  %3926 = vst.msk [vmem:[%s3924 + $0x4] sm:$0xf] %vm3555, %v3909
  %3927 = vst.msk [vmem:[%s3924 + $0x8] sm:$0xf] %vm3555, %v3910
  %3928 = vst.msk [vmem:[%s3924 + $0xc] sm:$0xf] %vm3555, %v3911
  %3929 = vst.msk [vmem:[%s3924 + $0x10] sm:$0xf] %vm3555, %v3912
  %3930 = vst.msk [vmem:[%s3924 + $0x14] sm:$0xf] %vm3555, %v3913
  %3931 = vst.msk [vmem:[%s3924 + $0x18] sm:$0xf] %vm3555, %v3914
  %3932 = vst.msk [vmem:[%s3924 + $0x1c] sm:$0xf] %vm3555, %v3915
  %v3933 = vpack.c.bf16 %v3476, %v3475
  %v3934 = vpack.c.bf16 %v3478, %v3477
  %v3935 = vpack.c.bf16 %v3480, %v3479
  %v3936 = vpack.c.bf16 %v3482, %v3481
  %v3941 = vunpack.c.l.b16 %v3933
  %v3942 = vunpack.c.h.b16 %v3933
  %v3943 = vunpack.c.l.b16 %v3934
  %v3944 = vunpack.c.h.b16 %v3934
  %v3945 = vunpack.c.l.b16 %v3935
  %v3946 = vunpack.c.h.b16 %v3935
  %v3947 = vunpack.c.l.b16 %v3936
  %v3948 = vunpack.c.h.b16 %v3936
  %v3949 = vpack.c.b16 %v3941, %v3941
  %v3950 = vpack.c.b16 %v3942, %v3942
  %v3951 = vpack.c.b16 %v3943, %v3943
  %v3952 = vpack.c.b16 %v3944, %v3944
  %v3953 = vpack.c.b16 %v3945, %v3945
  %v3954 = vpack.c.b16 %v3946, %v3946
  %v3955 = vpack.c.b16 %v3947, %v3947
  %v3956 = vpack.c.b16 %v3948, %v3948
  %s3965 = scalar_lea.vmem %s4, 320
  %3966 = vst.msk [vmem:[%s3965] sm:$0xf] %vm3555, %v3949
  %3967 = vst.msk [vmem:[%s3965 + $0x4] sm:$0xf] %vm3555, %v3950
  %3968 = vst.msk [vmem:[%s3965 + $0x8] sm:$0xf] %vm3555, %v3951
  %3969 = vst.msk [vmem:[%s3965 + $0xc] sm:$0xf] %vm3555, %v3952
  %3970 = vst.msk [vmem:[%s3965 + $0x10] sm:$0xf] %vm3555, %v3953
  %3971 = vst.msk [vmem:[%s3965 + $0x14] sm:$0xf] %vm3555, %v3954
  %3972 = vst.msk [vmem:[%s3965 + $0x18] sm:$0xf] %vm3555, %v3955
  %3973 = vst.msk [vmem:[%s3965 + $0x1c] sm:$0xf] %vm3555, %v3956
  %v3974 = vpack.c.bf16 %v3484, %v3483
  %v3975 = vpack.c.bf16 %v3486, %v3485
  %v3976 = vpack.c.bf16 %v3488, %v3487
  %v3977 = vpack.c.bf16 %v3490, %v3489
  %v3982 = vunpack.c.l.b16 %v3974
  %v3983 = vunpack.c.h.b16 %v3974
  %v3984 = vunpack.c.l.b16 %v3975
  %v3985 = vunpack.c.h.b16 %v3975
  %v3986 = vunpack.c.l.b16 %v3976
  %v3987 = vunpack.c.h.b16 %v3976
  %v3988 = vunpack.c.l.b16 %v3977
  %v3989 = vunpack.c.h.b16 %v3977
  %v3990 = vpack.c.b16 %v3982, %v3982
  %v3991 = vpack.c.b16 %v3983, %v3983
  %v3992 = vpack.c.b16 %v3984, %v3984
  %v3993 = vpack.c.b16 %v3985, %v3985
  %v3994 = vpack.c.b16 %v3986, %v3986
  %v3995 = vpack.c.b16 %v3987, %v3987
  %v3996 = vpack.c.b16 %v3988, %v3988
  %v3997 = vpack.c.b16 %v3989, %v3989
  %s4006 = scalar_lea.vmem %s4, 352
  %4007 = vst.msk [vmem:[%s4006] sm:$0xf] %vm3555, %v3990
  %4008 = vst.msk [vmem:[%s4006 + $0x4] sm:$0xf] %vm3555, %v3991
  %4009 = vst.msk [vmem:[%s4006 + $0x8] sm:$0xf] %vm3555, %v3992
  %4010 = vst.msk [vmem:[%s4006 + $0xc] sm:$0xf] %vm3555, %v3993
  %4011 = vst.msk [vmem:[%s4006 + $0x10] sm:$0xf] %vm3555, %v3994
  %4012 = vst.msk [vmem:[%s4006 + $0x14] sm:$0xf] %vm3555, %v3995
  %4013 = vst.msk [vmem:[%s4006 + $0x18] sm:$0xf] %vm3555, %v3996
  %4014 = vst.msk [vmem:[%s4006 + $0x1c] sm:$0xf] %vm3555, %v3997
  %v4015 = vpack.c.bf16 %v3492, %v3491
  %v4016 = vpack.c.bf16 %v3494, %v3493
  %v4017 = vpack.c.bf16 %v3496, %v3495
  %v4018 = vpack.c.bf16 %v3498, %v3497
  %v4023 = vunpack.c.l.b16 %v4015
  %v4024 = vunpack.c.h.b16 %v4015
  %v4025 = vunpack.c.l.b16 %v4016
  %v4026 = vunpack.c.h.b16 %v4016
  %v4027 = vunpack.c.l.b16 %v4017
  %v4028 = vunpack.c.h.b16 %v4017
  %v4029 = vunpack.c.l.b16 %v4018
  %v4030 = vunpack.c.h.b16 %v4018
  %v4031 = vpack.c.b16 %v4023, %v4023
  %v4032 = vpack.c.b16 %v4024, %v4024
  %v4033 = vpack.c.b16 %v4025, %v4025
  %v4034 = vpack.c.b16 %v4026, %v4026
  %v4035 = vpack.c.b16 %v4027, %v4027
  %v4036 = vpack.c.b16 %v4028, %v4028
  %v4037 = vpack.c.b16 %v4029, %v4029
  %v4038 = vpack.c.b16 %v4030, %v4030
  %s4047 = scalar_lea.vmem %s4, 384
  %4048 = vst.msk [vmem:[%s4047] sm:$0xf] %vm3555, %v4031
  %4049 = vst.msk [vmem:[%s4047 + $0x4] sm:$0xf] %vm3555, %v4032
  %4050 = vst.msk [vmem:[%s4047 + $0x8] sm:$0xf] %vm3555, %v4033
  %4051 = vst.msk [vmem:[%s4047 + $0xc] sm:$0xf] %vm3555, %v4034
  %4052 = vst.msk [vmem:[%s4047 + $0x10] sm:$0xf] %vm3555, %v4035
  %4053 = vst.msk [vmem:[%s4047 + $0x14] sm:$0xf] %vm3555, %v4036
  %4054 = vst.msk [vmem:[%s4047 + $0x18] sm:$0xf] %vm3555, %v4037
  %4055 = vst.msk [vmem:[%s4047 + $0x1c] sm:$0xf] %vm3555, %v4038
  %v4056 = vpack.c.bf16 %v3500, %v3499
  %v4057 = vpack.c.bf16 %v3502, %v3501
  %v4058 = vpack.c.bf16 %v3504, %v3503
  %v4059 = vpack.c.bf16 %v3506, %v3505
  %v4064 = vunpack.c.l.b16 %v4056
  %v4065 = vunpack.c.h.b16 %v4056
  %v4066 = vunpack.c.l.b16 %v4057
  %v4067 = vunpack.c.h.b16 %v4057
  %v4068 = vunpack.c.l.b16 %v4058
  %v4069 = vunpack.c.h.b16 %v4058
  %v4070 = vunpack.c.l.b16 %v4059
  %v4071 = vunpack.c.h.b16 %v4059
  %v4072 = vpack.c.b16 %v4064, %v4064
  %v4073 = vpack.c.b16 %v4065, %v4065
  %v4074 = vpack.c.b16 %v4066, %v4066
  %v4075 = vpack.c.b16 %v4067, %v4067
  %v4076 = vpack.c.b16 %v4068, %v4068
  %v4077 = vpack.c.b16 %v4069, %v4069
  %v4078 = vpack.c.b16 %v4070, %v4070
  %v4079 = vpack.c.b16 %v4071, %v4071
  %s4088 = scalar_lea.vmem %s4, 416
  %4089 = vst.msk [vmem:[%s4088] sm:$0xf] %vm3555, %v4072
  %4090 = vst.msk [vmem:[%s4088 + $0x4] sm:$0xf] %vm3555, %v4073
  %4091 = vst.msk [vmem:[%s4088 + $0x8] sm:$0xf] %vm3555, %v4074
  %4092 = vst.msk [vmem:[%s4088 + $0xc] sm:$0xf] %vm3555, %v4075
  %4093 = vst.msk [vmem:[%s4088 + $0x10] sm:$0xf] %vm3555, %v4076
  %4094 = vst.msk [vmem:[%s4088 + $0x14] sm:$0xf] %vm3555, %v4077
  %4095 = vst.msk [vmem:[%s4088 + $0x18] sm:$0xf] %vm3555, %v4078
  %4096 = vst.msk [vmem:[%s4088 + $0x1c] sm:$0xf] %vm3555, %v4079
  %v4097 = vpack.c.bf16 %v3508, %v3507
  %v4098 = vpack.c.bf16 %v3510, %v3509
  %v4099 = vpack.c.bf16 %v3512, %v3511
  %v4100 = vpack.c.bf16 %v3514, %v3513
  %v4105 = vunpack.c.l.b16 %v4097
  %v4106 = vunpack.c.h.b16 %v4097
  %v4107 = vunpack.c.l.b16 %v4098
  %v4108 = vunpack.c.h.b16 %v4098
  %v4109 = vunpack.c.l.b16 %v4099
  %v4110 = vunpack.c.h.b16 %v4099
  %v4111 = vunpack.c.l.b16 %v4100
  %v4112 = vunpack.c.h.b16 %v4100
  %v4113 = vpack.c.b16 %v4105, %v4105
  %v4114 = vpack.c.b16 %v4106, %v4106
  %v4115 = vpack.c.b16 %v4107, %v4107
  %v4116 = vpack.c.b16 %v4108, %v4108
  %v4117 = vpack.c.b16 %v4109, %v4109
  %v4118 = vpack.c.b16 %v4110, %v4110
  %v4119 = vpack.c.b16 %v4111, %v4111
  %v4120 = vpack.c.b16 %v4112, %v4112
  %s4129 = scalar_lea.vmem %s4, 448
  %4130 = vst.msk [vmem:[%s4129] sm:$0xf] %vm3555, %v4113
  %4131 = vst.msk [vmem:[%s4129 + $0x4] sm:$0xf] %vm3555, %v4114
  %4132 = vst.msk [vmem:[%s4129 + $0x8] sm:$0xf] %vm3555, %v4115
  %4133 = vst.msk [vmem:[%s4129 + $0xc] sm:$0xf] %vm3555, %v4116
  %4134 = vst.msk [vmem:[%s4129 + $0x10] sm:$0xf] %vm3555, %v4117
  %4135 = vst.msk [vmem:[%s4129 + $0x14] sm:$0xf] %vm3555, %v4118
  %4136 = vst.msk [vmem:[%s4129 + $0x18] sm:$0xf] %vm3555, %v4119
  %4137 = vst.msk [vmem:[%s4129 + $0x1c] sm:$0xf] %vm3555, %v4120
  %v4138 = vpack.c.bf16 %v3516, %v3515
  %v4139 = vpack.c.bf16 %v3518, %v3517
  %v4140 = vpack.c.bf16 %v3520, %v3519
  %v4141 = vpack.c.bf16 %v3522, %v3521
  %v4146 = vunpack.c.l.b16 %v4138
  %v4147 = vunpack.c.h.b16 %v4138
  %v4148 = vunpack.c.l.b16 %v4139
  %v4149 = vunpack.c.h.b16 %v4139
  %v4150 = vunpack.c.l.b16 %v4140
  %v4151 = vunpack.c.h.b16 %v4140
  %v4152 = vunpack.c.l.b16 %v4141
  %v4153 = vunpack.c.h.b16 %v4141
  %v4154 = vpack.c.b16 %v4146, %v4146
  %v4155 = vpack.c.b16 %v4147, %v4147
  %v4156 = vpack.c.b16 %v4148, %v4148
  %v4157 = vpack.c.b16 %v4149, %v4149
  %v4158 = vpack.c.b16 %v4150, %v4150
  %v4159 = vpack.c.b16 %v4151, %v4151
  %v4160 = vpack.c.b16 %v4152, %v4152
  %v4161 = vpack.c.b16 %v4153, %v4153
  %s4170 = scalar_lea.vmem %s4, 480
  %4171 = vst.msk [vmem:[%s4170] sm:$0xf] %vm3555, %v4154
  %4172 = vst.msk [vmem:[%s4170 + $0x4] sm:$0xf] %vm3555, %v4155
  %4173 = vst.msk [vmem:[%s4170 + $0x8] sm:$0xf] %vm3555, %v4156
  %4174 = vst.msk [vmem:[%s4170 + $0xc] sm:$0xf] %vm3555, %v4157
  %4175 = vst.msk [vmem:[%s4170 + $0x10] sm:$0xf] %vm3555, %v4158
  %4176 = vst.msk [vmem:[%s4170 + $0x14] sm:$0xf] %vm3555, %v4159
  %4177 = vst.msk [vmem:[%s4170 + $0x18] sm:$0xf] %vm3555, %v4160
  %4178 = vst.msk [vmem:[%s4170 + $0x1c] sm:$0xf] %vm3555, %v4161
  // Predicated region
  $region18: #{generator_forward.5} parent=0 // pred_check
    _
  $region19: #{generator_forward.5} parent=0 // pred_check_branch
    %4180 = sbr.rel (0) target = $region21
  $region20: #{generator_forward.5} parent=0 // pred_region
    _
  $region21: #{generator_forward.5} parent=0 // pred_fallthru
    _
  // Predicated region
  $region22: #{generator_forward.5} parent=0 // pred_check
    _
  $region23: #{generator_forward.5} parent=0 // pred_check_branch
    %4182 = sbr.rel (0) target = $region25
  $region24: #{generator_forward.5} parent=0 // pred_region
    _
  $region25: #{generator_forward.5} parent=0 // pred_fallthru
    _

// kernel: generator_forward.8
$region0: #{generator_forward.8}
  #allocation0 [shape = 'u32[]', space=smem, size = 0x4, offset = 0x4, fixed_abs, tag = 'smem constant byte address 0x4 - core index']
  #allocation1 [shape = 'u32[144,128]{1,0:T(1,128)}', space=vmem, size = 0x12000, scoped, tag = 'internal scratch']
  %s0 = inlined_call_operand.vmem [shape: bf16[4,64,512], index: 0, kind: input, shape index: {}]
  %s1 = inlined_call_operand.vmem [shape: bf16[4,8,64], index: 1, kind: input, shape index: {}]
  %s2 = inlined_call_operand.vmem [shape: f32[8,1], index: 2, kind: input, shape index: {}]
  %s3 = inlined_call_operand.vmem [shape: f32[8,1], index: 3, kind: input, shape index: {}]
  %s4 = inlined_call_operand.vmem [shape: bf16[4,8,512], index: 4, kind: output, shape index: {}]
  %s5 = sld [smem:[#allocation0]]
  $region26: #{generator_forward.8} parent=0
    _
  %s7 = ssub.s32 1, %s5
  %s8 = scalar_select 0, %s7, %s5
  // Predicated region
  $region2: #{generator_forward.8} parent=0 // pred_check
    _
  $region3: #{generator_forward.8} parent=0 // pred_check_branch
    %10 = sbr.rel (0) target = $region5
  $region4: #{generator_forward.8} parent=0 // pred_region
    _
  $region5: #{generator_forward.8} parent=0 // pred_fallthru
    _
  // Predicated region
  $region6: #{generator_forward.8} parent=0 // pred_check
    _
  $region7: #{generator_forward.8} parent=0 // pred_check_branch
    %12 = sbr.rel (0) target = $region9
  $region8: #{generator_forward.8} parent=0 // pred_region
    _
  $region9: #{generator_forward.8} parent=0 // pred_fallthru
    _
  // Predicated region
  $region10: #{generator_forward.8} parent=0 // pred_check
    _
  $region11: #{generator_forward.8} parent=0 // pred_check_branch
    %14 = sbr.rel (0) target = $region13
  $region12: #{generator_forward.8} parent=0 // pred_region
    _
  $region13: #{generator_forward.8} parent=0 // pred_fallthru
    _
  // Predicated region
  $region14: #{generator_forward.8} parent=0 // pred_check
    _
  $region15: #{generator_forward.8} parent=0 // pred_check_branch
    %16 = sbr.rel (0) target = $region17
  $region16: #{generator_forward.8} parent=0 // pred_region
    _
  $region17: #{generator_forward.8} parent=0 // pred_fallthru
    _
  %v18 = vld [vmem:[%s0] sm:$0xff]
  %v19 = vld [vmem:[%s0 + $0x8] sm:$0xff]
  %v20 = vld [vmem:[%s0 + $0x10] sm:$0xff]
  %v21 = vld [vmem:[%s0 + $0x18] sm:$0xff]
  %v22 = vld [vmem:[%s0 + $0x20] sm:$0xff]
  %v23 = vld [vmem:[%s0 + $0x28] sm:$0xff]
  %v24 = vld [vmem:[%s0 + $0x30] sm:$0xff]
  %v25 = vld [vmem:[%s0 + $0x38] sm:$0xff]
  %v26 = vld [vmem:[%s0 + $0x40] sm:$0xff]
  %v27 = vld [vmem:[%s0 + $0x48] sm:$0xff]
  %v28 = vld [vmem:[%s0 + $0x50] sm:$0xff]
  %v29 = vld [vmem:[%s0 + $0x58] sm:$0xff]
  %v30 = vld [vmem:[%s0 + $0x60] sm:$0xff]
  %v31 = vld [vmem:[%s0 + $0x68] sm:$0xff]
  %v32 = vld [vmem:[%s0 + $0x70] sm:$0xff]
  %v33 = vld [vmem:[%s0 + $0x78] sm:$0xff]
  %v34 = vld [vmem:[%s1] sm:$0xf]
  %v51 = vunpack.c.l.b16 %v18
  %v52 = vunpack.c.h.b16 %v18
  %v53 = vunpack.c.l.b16 %v19
  %v54 = vunpack.c.h.b16 %v19
  %v55 = vunpack.c.l.b16 %v20
  %v56 = vunpack.c.h.b16 %v20
  %v57 = vunpack.c.l.b16 %v21
  %v58 = vunpack.c.h.b16 %v21
  %v59 = vunpack.c.l.b16 %v22
  %v60 = vunpack.c.h.b16 %v22
  %v61 = vunpack.c.l.b16 %v23
  %v62 = vunpack.c.h.b16 %v23
  %v63 = vunpack.c.l.b16 %v24
  %v64 = vunpack.c.h.b16 %v24
  %v65 = vunpack.c.l.b16 %v25
  %v66 = vunpack.c.h.b16 %v25
  %v67 = vunpack.c.l.b16 %v26
  %v68 = vunpack.c.h.b16 %v26
  %v69 = vunpack.c.l.b16 %v27
  %v70 = vunpack.c.h.b16 %v27
  %v71 = vunpack.c.l.b16 %v28
  %v72 = vunpack.c.h.b16 %v28
  %v73 = vunpack.c.l.b16 %v29
  %v74 = vunpack.c.h.b16 %v29
  %v75 = vunpack.c.l.b16 %v30
  %v76 = vunpack.c.h.b16 %v30
  %v77 = vunpack.c.l.b16 %v31
  %v78 = vunpack.c.h.b16 %v31
  %v79 = vunpack.c.l.b16 %v32
  %v80 = vunpack.c.h.b16 %v32
  %v81 = vunpack.c.l.b16 %v33
  %v82 = vunpack.c.h.b16 %v33
  %v83 = vpack.c.b16 %v55, %v51
  %v84 = vpack.c.b16 %v56, %v52
  %v85 = vpack.c.b16 %v57, %v53
  %v86 = vpack.c.b16 %v58, %v54
  %v87 = vpack.c.b16 %v63, %v59
  %v88 = vpack.c.b16 %v64, %v60
  %v89 = vpack.c.b16 %v65, %v61
  %v90 = vpack.c.b16 %v66, %v62
  %v91 = vpack.c.b16 %v71, %v67
  %v92 = vpack.c.b16 %v72, %v68
  %v93 = vpack.c.b16 %v73, %v69
  %v94 = vpack.c.b16 %v74, %v70
  %v95 = vpack.c.b16 %v79, %v75
  %v96 = vpack.c.b16 %v80, %v76
  %v97 = vpack.c.b16 %v81, %v77
  %v98 = vpack.c.b16 %v82, %v78
  %vm115 = vcmask 523264
  %v117 = vsel %vm115, %v34, 0
  %119 = vmatprep.subr.bf16.mxu0 0
  %120 = vmatpush1.bf16.msra.mxu0 0
  %121 = vmatprep.subr.bf16.mxu0 0
  %122 = vmatpush1.bf16.msra.mxu0 0
  %123 = vmatprep.subr.bf16.mxu0 0
  %124 = vmatpush1.bf16.msra.mxu0 0
  %125 = vmatprep.subr.bf16.mxu0 0
  %126 = vmatpush1.bf16.msra.mxu0 0
  %127 = vmatprep.subr.bf16.mxu0 %v96
  %128 = vmatpush1.bf16.msra.mxu0 %v95
  %129 = vmatprep.subr.bf16.mxu0 %v92
  %130 = vmatpush1.bf16.msra.mxu0 %v91
  %131 = vmatprep.subr.bf16.mxu0 %v88
  %132 = vmatpush1.bf16.msra.mxu0 %v87
  %133 = vmatprep.subr.bf16.mxu0 %v84
  %134 = vmatpush1.bf16.msra.mxu0 %v83
  %135 = vmatprep.subr.bf16.mxu0 0
  %136 = vmatpush2.bf16.msra.mxu0 0
  %137 = vmatprep.subr.bf16.mxu0 0
  %138 = vmatpush2.bf16.msra.mxu0 0
  %139 = vmatprep.subr.bf16.mxu0 0
  %140 = vmatpush2.bf16.msra.mxu0 0
  %141 = vmatprep.subr.bf16.mxu0 0
  %142 = vmatpush2.bf16.msra.mxu0 0
  %143 = vmatprep.subr.bf16.mxu0 0
  %144 = vmatpush2.bf16.msra.mxu0 0
  %145 = vmatprep.subr.bf16.mxu0 0
  %146 = vmatpush2.bf16.msra.mxu0 0
  %147 = vmatprep.subr.bf16.mxu0 0
  %148 = vmatpush2.bf16.msra.mxu0 0
  %149 = vmatprep.subr.bf16.mxu0 0
  %150 = vmatpush2.bf16.msra.mxu0 0
  %151 = vmatprep.mubr.bf16.mxu0 0
  %152 = vmatmul.mubr.bf16.gmra.mxu0 %v117
  %v153 = vpop.f32.mrf.mxu0
  %v154 = vadd.f32 0.0, %v153
  %v155 = vpop.f32.mrf.mxu0
  %v156 = vadd.f32 0.0, %v155
  %v157 = vpop.f32.mrf.mxu0
  %v158 = vpop.f32.mrf.mxu0
  %159 = vdwg.mxu0
  %160 = vmatprep.subr.bf16.mxu0 0
  %161 = vmatpush1.bf16.msra.mxu0 0
  %162 = vmatprep.subr.bf16.mxu0 0
  %163 = vmatpush1.bf16.msra.mxu0 0
  %164 = vmatprep.subr.bf16.mxu0 0
  %165 = vmatpush1.bf16.msra.mxu0 0
  %166 = vmatprep.subr.bf16.mxu0 0
  %167 = vmatpush1.bf16.msra.mxu0 0
  %168 = vmatprep.subr.bf16.mxu0 %v98
  %169 = vmatpush1.bf16.msra.mxu0 %v97
  %170 = vmatprep.subr.bf16.mxu0 %v94
  %171 = vmatpush1.bf16.msra.mxu0 %v93
  %172 = vmatprep.subr.bf16.mxu0 %v90
  %173 = vmatpush1.bf16.msra.mxu0 %v89
  %174 = vmatprep.subr.bf16.mxu0 %v86
  %175 = vmatpush1.bf16.msra.mxu0 %v85
  %176 = vmatprep.subr.bf16.mxu0 0
  %177 = vmatpush2.bf16.msra.mxu0 0
  %178 = vmatprep.subr.bf16.mxu0 0
  %179 = vmatpush2.bf16.msra.mxu0 0
  %180 = vmatprep.subr.bf16.mxu0 0
  %181 = vmatpush2.bf16.msra.mxu0 0
  %182 = vmatprep.subr.bf16.mxu0 0
  %183 = vmatpush2.bf16.msra.mxu0 0
  %184 = vmatprep.subr.bf16.mxu0 0
  %185 = vmatpush2.bf16.msra.mxu0 0
  %186 = vmatprep.subr.bf16.mxu0 0
  %187 = vmatpush2.bf16.msra.mxu0 0
  %188 = vmatprep.subr.bf16.mxu0 0
  %189 = vmatpush2.bf16.msra.mxu0 0
  %190 = vmatprep.subr.bf16.mxu0 0
  %191 = vmatpush2.bf16.msra.mxu0 0
  %192 = vmatprep.mubr.bf16.mxu0 0
  %193 = vmatmul.mubr.bf16.gmra.mxu0 %v117
  %v194 = vpop.f32.mrf.mxu0
  %v195 = vadd.f32 0.0, %v194
  %v196 = vpop.f32.mrf.mxu0
  %v197 = vadd.f32 0.0, %v196
  %v198 = vpop.f32.mrf.mxu0
  %v199 = vpop.f32.mrf.mxu0
  %200 = vdwg.mxu0
  %s201 = scalar_lea.vmem %s0, 128
  %v202 = vld [vmem:[%s201] sm:$0xff]
  %v203 = vld [vmem:[%s201 + $0x8] sm:$0xff]
  %v204 = vld [vmem:[%s201 + $0x10] sm:$0xff]
  %v205 = vld [vmem:[%s201 + $0x18] sm:$0xff]
  %v206 = vld [vmem:[%s201 + $0x20] sm:$0xff]
  %v207 = vld [vmem:[%s201 + $0x28] sm:$0xff]
  %v208 = vld [vmem:[%s201 + $0x30] sm:$0xff]
  %v209 = vld [vmem:[%s201 + $0x38] sm:$0xff]
  %v210 = vld [vmem:[%s201 + $0x40] sm:$0xff]
  %v211 = vld [vmem:[%s201 + $0x48] sm:$0xff]
  %v212 = vld [vmem:[%s201 + $0x50] sm:$0xff]
  %v213 = vld [vmem:[%s201 + $0x58] sm:$0xff]
  %v214 = vld [vmem:[%s201 + $0x60] sm:$0xff]
  %v215 = vld [vmem:[%s201 + $0x68] sm:$0xff]
  %v216 = vld [vmem:[%s201 + $0x70] sm:$0xff]
  %v217 = vld [vmem:[%s201 + $0x78] sm:$0xff]
  %s218 = scalar_lea.vmem %s1, 4
  %v219 = vld [vmem:[%s218] sm:$0xf]
  %v236 = vunpack.c.l.b16 %v202
  %v237 = vunpack.c.h.b16 %v202
  %v238 = vunpack.c.l.b16 %v203
  %v239 = vunpack.c.h.b16 %v203
  %v240 = vunpack.c.l.b16 %v204
  %v241 = vunpack.c.h.b16 %v204
  %v242 = vunpack.c.l.b16 %v205
  %v243 = vunpack.c.h.b16 %v205
  %v244 = vunpack.c.l.b16 %v206
  %v245 = vunpack.c.h.b16 %v206
  %v246 = vunpack.c.l.b16 %v207
  %v247 = vunpack.c.h.b16 %v207
  %v248 = vunpack.c.l.b16 %v208
  %v249 = vunpack.c.h.b16 %v208
  %v250 = vunpack.c.l.b16 %v209
  %v251 = vunpack.c.h.b16 %v209
  %v252 = vunpack.c.l.b16 %v210
  %v253 = vunpack.c.h.b16 %v210
  %v254 = vunpack.c.l.b16 %v211
  %v255 = vunpack.c.h.b16 %v211
  %v256 = vunpack.c.l.b16 %v212
  %v257 = vunpack.c.h.b16 %v212
  %v258 = vunpack.c.l.b16 %v213
  %v259 = vunpack.c.h.b16 %v213
  %v260 = vunpack.c.l.b16 %v214
  %v261 = vunpack.c.h.b16 %v214
  %v262 = vunpack.c.l.b16 %v215
  %v263 = vunpack.c.h.b16 %v215
  %v264 = vunpack.c.l.b16 %v216
  %v265 = vunpack.c.h.b16 %v216
  %v266 = vunpack.c.l.b16 %v217
  %v267 = vunpack.c.h.b16 %v217
  %v268 = vpack.c.b16 %v240, %v236
  %v269 = vpack.c.b16 %v241, %v237
  %v270 = vpack.c.b16 %v242, %v238
  %v271 = vpack.c.b16 %v243, %v239
  %v272 = vpack.c.b16 %v248, %v244
  %v273 = vpack.c.b16 %v249, %v245
  %v274 = vpack.c.b16 %v250, %v246
  %v275 = vpack.c.b16 %v251, %v247
  %v276 = vpack.c.b16 %v256, %v252
  %v277 = vpack.c.b16 %v257, %v253
  %v278 = vpack.c.b16 %v258, %v254
  %v279 = vpack.c.b16 %v259, %v255
  %v280 = vpack.c.b16 %v264, %v260
  %v281 = vpack.c.b16 %v265, %v261
  %v282 = vpack.c.b16 %v266, %v262
  %v283 = vpack.c.b16 %v267, %v263
  %v301 = vsel %vm115, %v219, 0
  %303 = vmatprep.subr.bf16.mxu0 0
  %304 = vmatpush1.bf16.msra.mxu0 0
  %305 = vmatprep.subr.bf16.mxu0 0
  %306 = vmatpush1.bf16.msra.mxu0 0
  %307 = vmatprep.subr.bf16.mxu0 0
  %308 = vmatpush1.bf16.msra.mxu0 0
  %309 = vmatprep.subr.bf16.mxu0 0
  %310 = vmatpush1.bf16.msra.mxu0 0
  %311 = vmatprep.subr.bf16.mxu0 %v281
  %312 = vmatpush1.bf16.msra.mxu0 %v280
  %313 = vmatprep.subr.bf16.mxu0 %v277
  %314 = vmatpush1.bf16.msra.mxu0 %v276
  %315 = vmatprep.subr.bf16.mxu0 %v273
  %316 = vmatpush1.bf16.msra.mxu0 %v272
  %317 = vmatprep.subr.bf16.mxu0 %v269
  %318 = vmatpush1.bf16.msra.mxu0 %v268
  %319 = vmatprep.subr.bf16.mxu0 0
  %320 = vmatpush2.bf16.msra.mxu0 0
  %321 = vmatprep.subr.bf16.mxu0 0
  %322 = vmatpush2.bf16.msra.mxu0 0
  %323 = vmatprep.subr.bf16.mxu0 0
  %324 = vmatpush2.bf16.msra.mxu0 0
  %325 = vmatprep.subr.bf16.mxu0 0
  %326 = vmatpush2.bf16.msra.mxu0 0
  %327 = vmatprep.subr.bf16.mxu0 0
  %328 = vmatpush2.bf16.msra.mxu0 0
  %329 = vmatprep.subr.bf16.mxu0 0
  %330 = vmatpush2.bf16.msra.mxu0 0
  %331 = vmatprep.subr.bf16.mxu0 0
  %332 = vmatpush2.bf16.msra.mxu0 0
  %333 = vmatprep.subr.bf16.mxu0 0
  %334 = vmatpush2.bf16.msra.mxu0 0
  %335 = vmatprep.mubr.bf16.mxu0 0
  %336 = vmatmul.mubr.bf16.gmra.mxu0 %v301
  %v337 = vpop.f32.mrf.mxu0
  %v338 = vadd.f32 0.0, %v337
  %v339 = vpop.f32.mrf.mxu0
  %v340 = vadd.f32 0.0, %v339
  %v341 = vpop.f32.mrf.mxu0
  %v342 = vpop.f32.mrf.mxu0
  %343 = vdwg.mxu0
  %344 = vmatprep.subr.bf16.mxu0 0
  %345 = vmatpush1.bf16.msra.mxu0 0
  %346 = vmatprep.subr.bf16.mxu0 0
  %347 = vmatpush1.bf16.msra.mxu0 0
  %348 = vmatprep.subr.bf16.mxu0 0
  %349 = vmatpush1.bf16.msra.mxu0 0
  %350 = vmatprep.subr.bf16.mxu0 0
  %351 = vmatpush1.bf16.msra.mxu0 0
  %352 = vmatprep.subr.bf16.mxu0 %v283
  %353 = vmatpush1.bf16.msra.mxu0 %v282
  %354 = vmatprep.subr.bf16.mxu0 %v279
  %355 = vmatpush1.bf16.msra.mxu0 %v278
  %356 = vmatprep.subr.bf16.mxu0 %v275
  %357 = vmatpush1.bf16.msra.mxu0 %v274
  %358 = vmatprep.subr.bf16.mxu0 %v271
  %359 = vmatpush1.bf16.msra.mxu0 %v270
  %360 = vmatprep.subr.bf16.mxu0 0
  %361 = vmatpush2.bf16.msra.mxu0 0
  %362 = vmatprep.subr.bf16.mxu0 0
  %363 = vmatpush2.bf16.msra.mxu0 0
  %364 = vmatprep.subr.bf16.mxu0 0
  %365 = vmatpush2.bf16.msra.mxu0 0
  %366 = vmatprep.subr.bf16.mxu0 0
  %367 = vmatpush2.bf16.msra.mxu0 0
  %368 = vmatprep.subr.bf16.mxu0 0
  %369 = vmatpush2.bf16.msra.mxu0 0
  %370 = vmatprep.subr.bf16.mxu0 0
  %371 = vmatpush2.bf16.msra.mxu0 0
  %372 = vmatprep.subr.bf16.mxu0 0
  %373 = vmatpush2.bf16.msra.mxu0 0
  %374 = vmatprep.subr.bf16.mxu0 0
  %375 = vmatpush2.bf16.msra.mxu0 0
  %376 = vmatprep.mubr.bf16.mxu0 0
  %377 = vmatmul.mubr.bf16.gmra.mxu0 %v301
  %v378 = vpop.f32.mrf.mxu0
  %v379 = vadd.f32 0.0, %v378
  %v380 = vpop.f32.mrf.mxu0
  %v381 = vadd.f32 0.0, %v380
  %v382 = vpop.f32.mrf.mxu0
  %v383 = vpop.f32.mrf.mxu0
  %384 = vdwg.mxu0
  %s385 = scalar_lea.vmem %s0, 256
  %v386 = vld [vmem:[%s385] sm:$0xff]
  %v387 = vld [vmem:[%s385 + $0x8] sm:$0xff]
  %v388 = vld [vmem:[%s385 + $0x10] sm:$0xff]
  %v389 = vld [vmem:[%s385 + $0x18] sm:$0xff]
  %v390 = vld [vmem:[%s385 + $0x20] sm:$0xff]
  %v391 = vld [vmem:[%s385 + $0x28] sm:$0xff]
  %v392 = vld [vmem:[%s385 + $0x30] sm:$0xff]
  %v393 = vld [vmem:[%s385 + $0x38] sm:$0xff]
  %v394 = vld [vmem:[%s385 + $0x40] sm:$0xff]
  %v395 = vld [vmem:[%s385 + $0x48] sm:$0xff]
  %v396 = vld [vmem:[%s385 + $0x50] sm:$0xff]
  %v397 = vld [vmem:[%s385 + $0x58] sm:$0xff]
  %v398 = vld [vmem:[%s385 + $0x60] sm:$0xff]
  %v399 = vld [vmem:[%s385 + $0x68] sm:$0xff]
  %v400 = vld [vmem:[%s385 + $0x70] sm:$0xff]
  %v401 = vld [vmem:[%s385 + $0x78] sm:$0xff]
  %s402 = scalar_lea.vmem %s1, 8
  %v403 = vld [vmem:[%s402] sm:$0xf]
  %v420 = vunpack.c.l.b16 %v386
  %v421 = vunpack.c.h.b16 %v386
  %v422 = vunpack.c.l.b16 %v387
  %v423 = vunpack.c.h.b16 %v387
  %v424 = vunpack.c.l.b16 %v388
  %v425 = vunpack.c.h.b16 %v388
  %v426 = vunpack.c.l.b16 %v389
  %v427 = vunpack.c.h.b16 %v389
  %v428 = vunpack.c.l.b16 %v390
  %v429 = vunpack.c.h.b16 %v390
  %v430 = vunpack.c.l.b16 %v391
  %v431 = vunpack.c.h.b16 %v391
  %v432 = vunpack.c.l.b16 %v392
  %v433 = vunpack.c.h.b16 %v392
  %v434 = vunpack.c.l.b16 %v393
  %v435 = vunpack.c.h.b16 %v393
  %v436 = vunpack.c.l.b16 %v394
  %v437 = vunpack.c.h.b16 %v394
  %v438 = vunpack.c.l.b16 %v395
  %v439 = vunpack.c.h.b16 %v395
  %v440 = vunpack.c.l.b16 %v396
  %v441 = vunpack.c.h.b16 %v396
  %v442 = vunpack.c.l.b16 %v397
  %v443 = vunpack.c.h.b16 %v397
  %v444 = vunpack.c.l.b16 %v398
  %v445 = vunpack.c.h.b16 %v398
  %v446 = vunpack.c.l.b16 %v399
  %v447 = vunpack.c.h.b16 %v399
  %v448 = vunpack.c.l.b16 %v400
  %v449 = vunpack.c.h.b16 %v400
  %v450 = vunpack.c.l.b16 %v401
  %v451 = vunpack.c.h.b16 %v401
  %v452 = vpack.c.b16 %v424, %v420
  %v453 = vpack.c.b16 %v425, %v421
  %v454 = vpack.c.b16 %v426, %v422
  %v455 = vpack.c.b16 %v427, %v423
  %v456 = vpack.c.b16 %v432, %v428
  %v457 = vpack.c.b16 %v433, %v429
  %v458 = vpack.c.b16 %v434, %v430
  %v459 = vpack.c.b16 %v435, %v431
  %v460 = vpack.c.b16 %v440, %v436
  %v461 = vpack.c.b16 %v441, %v437
  %v462 = vpack.c.b16 %v442, %v438
  %v463 = vpack.c.b16 %v443, %v439
  %v464 = vpack.c.b16 %v448, %v444
  %v465 = vpack.c.b16 %v449, %v445
  %v466 = vpack.c.b16 %v450, %v446
  %v467 = vpack.c.b16 %v451, %v447
  %v485 = vsel %vm115, %v403, 0
  %487 = vmatprep.subr.bf16.mxu0 0
  %488 = vmatpush1.bf16.msra.mxu0 0
  %489 = vmatprep.subr.bf16.mxu0 0
  %490 = vmatpush1.bf16.msra.mxu0 0
  %491 = vmatprep.subr.bf16.mxu0 0
  %492 = vmatpush1.bf16.msra.mxu0 0
  %493 = vmatprep.subr.bf16.mxu0 0
  %494 = vmatpush1.bf16.msra.mxu0 0
  %495 = vmatprep.subr.bf16.mxu0 %v465
  %496 = vmatpush1.bf16.msra.mxu0 %v464
  %497 = vmatprep.subr.bf16.mxu0 %v461
  %498 = vmatpush1.bf16.msra.mxu0 %v460
  %499 = vmatprep.subr.bf16.mxu0 %v457
  %500 = vmatpush1.bf16.msra.mxu0 %v456
  %501 = vmatprep.subr.bf16.mxu0 %v453
  %502 = vmatpush1.bf16.msra.mxu0 %v452
  %503 = vmatprep.subr.bf16.mxu0 0
  %504 = vmatpush2.bf16.msra.mxu0 0
  %505 = vmatprep.subr.bf16.mxu0 0
  %506 = vmatpush2.bf16.msra.mxu0 0
  %507 = vmatprep.subr.bf16.mxu0 0
  %508 = vmatpush2.bf16.msra.mxu0 0
  %509 = vmatprep.subr.bf16.mxu0 0
  %510 = vmatpush2.bf16.msra.mxu0 0
  %511 = vmatprep.subr.bf16.mxu0 0
  %512 = vmatpush2.bf16.msra.mxu0 0
  %513 = vmatprep.subr.bf16.mxu0 0
  %514 = vmatpush2.bf16.msra.mxu0 0
  %515 = vmatprep.subr.bf16.mxu0 0
  %516 = vmatpush2.bf16.msra.mxu0 0
  %517 = vmatprep.subr.bf16.mxu0 0
  %518 = vmatpush2.bf16.msra.mxu0 0
  %519 = vmatprep.mubr.bf16.mxu0 0
  %520 = vmatmul.mubr.bf16.gmra.mxu0 %v485
  %v521 = vpop.f32.mrf.mxu0
  %v522 = vadd.f32 0.0, %v521
  %v523 = vpop.f32.mrf.mxu0
  %v524 = vadd.f32 0.0, %v523
  %v525 = vpop.f32.mrf.mxu0
  %v526 = vpop.f32.mrf.mxu0
  %527 = vdwg.mxu0
  %528 = vmatprep.subr.bf16.mxu0 0
  %529 = vmatpush1.bf16.msra.mxu0 0
  %530 = vmatprep.subr.bf16.mxu0 0
  %531 = vmatpush1.bf16.msra.mxu0 0
  %532 = vmatprep.subr.bf16.mxu0 0
  %533 = vmatpush1.bf16.msra.mxu0 0
  %534 = vmatprep.subr.bf16.mxu0 0
  %535 = vmatpush1.bf16.msra.mxu0 0
  %536 = vmatprep.subr.bf16.mxu0 %v467
  %537 = vmatpush1.bf16.msra.mxu0 %v466
  %538 = vmatprep.subr.bf16.mxu0 %v463
  %539 = vmatpush1.bf16.msra.mxu0 %v462
  %540 = vmatprep.subr.bf16.mxu0 %v459
  %541 = vmatpush1.bf16.msra.mxu0 %v458
  %542 = vmatprep.subr.bf16.mxu0 %v455
  %543 = vmatpush1.bf16.msra.mxu0 %v454
  %544 = vmatprep.subr.bf16.mxu0 0
  %545 = vmatpush2.bf16.msra.mxu0 0
  %546 = vmatprep.subr.bf16.mxu0 0
  %547 = vmatpush2.bf16.msra.mxu0 0
  %548 = vmatprep.subr.bf16.mxu0 0
  %549 = vmatpush2.bf16.msra.mxu0 0
  %550 = vmatprep.subr.bf16.mxu0 0
  %551 = vmatpush2.bf16.msra.mxu0 0
  %552 = vmatprep.subr.bf16.mxu0 0
  %553 = vmatpush2.bf16.msra.mxu0 0
  %554 = vmatprep.subr.bf16.mxu0 0
  %555 = vmatpush2.bf16.msra.mxu0 0
  %556 = vmatprep.subr.bf16.mxu0 0
  %557 = vmatpush2.bf16.msra.mxu0 0
  %558 = vmatprep.subr.bf16.mxu0 0
  %559 = vmatpush2.bf16.msra.mxu0 0
  %560 = vmatprep.mubr.bf16.mxu0 0
  %561 = vmatmul.mubr.bf16.gmra.mxu0 %v485
  %v562 = vpop.f32.mrf.mxu0
  %v563 = vadd.f32 0.0, %v562
  %v564 = vpop.f32.mrf.mxu0
  %v565 = vadd.f32 0.0, %v564
  %v566 = vpop.f32.mrf.mxu0
  %v567 = vpop.f32.mrf.mxu0
  %568 = vdwg.mxu0
  %s569 = scalar_lea.vmem %s0, 384
  %v570 = vld [vmem:[%s569] sm:$0xff]
  %v571 = vld [vmem:[%s569 + $0x8] sm:$0xff]
  %v572 = vld [vmem:[%s569 + $0x10] sm:$0xff]
  %v573 = vld [vmem:[%s569 + $0x18] sm:$0xff]
  %v574 = vld [vmem:[%s569 + $0x20] sm:$0xff]
  %v575 = vld [vmem:[%s569 + $0x28] sm:$0xff]
  %v576 = vld [vmem:[%s569 + $0x30] sm:$0xff]
  %v577 = vld [vmem:[%s569 + $0x38] sm:$0xff]
  %v578 = vld [vmem:[%s569 + $0x40] sm:$0xff]
  %v579 = vld [vmem:[%s569 + $0x48] sm:$0xff]
  %v580 = vld [vmem:[%s569 + $0x50] sm:$0xff]
  %v581 = vld [vmem:[%s569 + $0x58] sm:$0xff]
  %v582 = vld [vmem:[%s569 + $0x60] sm:$0xff]
  %v583 = vld [vmem:[%s569 + $0x68] sm:$0xff]
  %v584 = vld [vmem:[%s569 + $0x70] sm:$0xff]
  %v585 = vld [vmem:[%s569 + $0x78] sm:$0xff]
  %s586 = scalar_lea.vmem %s1, 12
  %v587 = vld [vmem:[%s586] sm:$0xf]
  %v604 = vunpack.c.l.b16 %v570
  %v605 = vunpack.c.h.b16 %v570
  %v606 = vunpack.c.l.b16 %v571
  %v607 = vunpack.c.h.b16 %v571
  %v608 = vunpack.c.l.b16 %v572
  %v609 = vunpack.c.h.b16 %v572
  %v610 = vunpack.c.l.b16 %v573
  %v611 = vunpack.c.h.b16 %v573
  %v612 = vunpack.c.l.b16 %v574
  %v613 = vunpack.c.h.b16 %v574
  %v614 = vunpack.c.l.b16 %v575
  %v615 = vunpack.c.h.b16 %v575
  %v616 = vunpack.c.l.b16 %v576
  %v617 = vunpack.c.h.b16 %v576
  %v618 = vunpack.c.l.b16 %v577
  %v619 = vunpack.c.h.b16 %v577
  %v620 = vunpack.c.l.b16 %v578
  %v621 = vunpack.c.h.b16 %v578
  %v622 = vunpack.c.l.b16 %v579
  %v623 = vunpack.c.h.b16 %v579
  %v624 = vunpack.c.l.b16 %v580
  %v625 = vunpack.c.h.b16 %v580
  %v626 = vunpack.c.l.b16 %v581
  %v627 = vunpack.c.h.b16 %v581
  %v628 = vunpack.c.l.b16 %v582
  %v629 = vunpack.c.h.b16 %v582
  %v630 = vunpack.c.l.b16 %v583
  %v631 = vunpack.c.h.b16 %v583
  %v632 = vunpack.c.l.b16 %v584
  %v633 = vunpack.c.h.b16 %v584
  %v634 = vunpack.c.l.b16 %v585
  %v635 = vunpack.c.h.b16 %v585
  %v636 = vpack.c.b16 %v608, %v604
  %v637 = vpack.c.b16 %v609, %v605
  %v638 = vpack.c.b16 %v610, %v606
  %v639 = vpack.c.b16 %v611, %v607
  %v640 = vpack.c.b16 %v616, %v612
  %v641 = vpack.c.b16 %v617, %v613
  %v642 = vpack.c.b16 %v618, %v614
  %v643 = vpack.c.b16 %v619, %v615
  %v644 = vpack.c.b16 %v624, %v620
  %v645 = vpack.c.b16 %v625, %v621
  %v646 = vpack.c.b16 %v626, %v622
  %v647 = vpack.c.b16 %v627, %v623
  %v648 = vpack.c.b16 %v632, %v628
  %v649 = vpack.c.b16 %v633, %v629
  %v650 = vpack.c.b16 %v634, %v630
  %v651 = vpack.c.b16 %v635, %v631
  %v669 = vsel %vm115, %v587, 0
  %671 = vmatprep.subr.bf16.mxu0 0
  %672 = vmatpush1.bf16.msra.mxu0 0
  %673 = vmatprep.subr.bf16.mxu0 0
  %674 = vmatpush1.bf16.msra.mxu0 0
  %675 = vmatprep.subr.bf16.mxu0 0
  %676 = vmatpush1.bf16.msra.mxu0 0
  %677 = vmatprep.subr.bf16.mxu0 0
  %678 = vmatpush1.bf16.msra.mxu0 0
  %679 = vmatprep.subr.bf16.mxu0 %v649
  %680 = vmatpush1.bf16.msra.mxu0 %v648
  %681 = vmatprep.subr.bf16.mxu0 %v645
  %682 = vmatpush1.bf16.msra.mxu0 %v644
  %683 = vmatprep.subr.bf16.mxu0 %v641
  %684 = vmatpush1.bf16.msra.mxu0 %v640
  %685 = vmatprep.subr.bf16.mxu0 %v637
  %686 = vmatpush1.bf16.msra.mxu0 %v636
  %687 = vmatprep.subr.bf16.mxu0 0
  %688 = vmatpush2.bf16.msra.mxu0 0
  %689 = vmatprep.subr.bf16.mxu0 0
  %690 = vmatpush2.bf16.msra.mxu0 0
  %691 = vmatprep.subr.bf16.mxu0 0
  %692 = vmatpush2.bf16.msra.mxu0 0
  %693 = vmatprep.subr.bf16.mxu0 0
  %694 = vmatpush2.bf16.msra.mxu0 0
  %695 = vmatprep.subr.bf16.mxu0 0
  %696 = vmatpush2.bf16.msra.mxu0 0
  %697 = vmatprep.subr.bf16.mxu0 0
  %698 = vmatpush2.bf16.msra.mxu0 0
  %699 = vmatprep.subr.bf16.mxu0 0
  %700 = vmatpush2.bf16.msra.mxu0 0
  %701 = vmatprep.subr.bf16.mxu0 0
  %702 = vmatpush2.bf16.msra.mxu0 0
  %703 = vmatprep.mubr.bf16.mxu0 0
  %704 = vmatmul.mubr.bf16.gmra.mxu0 %v669
  %v705 = vpop.f32.mrf.mxu0
  %v706 = vadd.f32 0.0, %v705
  %v707 = vpop.f32.mrf.mxu0
  %v708 = vadd.f32 0.0, %v707
  %v709 = vpop.f32.mrf.mxu0
  %v710 = vpop.f32.mrf.mxu0
  %711 = vdwg.mxu0
  %712 = vmatprep.subr.bf16.mxu0 0
  %713 = vmatpush1.bf16.msra.mxu0 0
  %714 = vmatprep.subr.bf16.mxu0 0
  %715 = vmatpush1.bf16.msra.mxu0 0
  %716 = vmatprep.subr.bf16.mxu0 0
  %717 = vmatpush1.bf16.msra.mxu0 0
  %718 = vmatprep.subr.bf16.mxu0 0
  %719 = vmatpush1.bf16.msra.mxu0 0
  %720 = vmatprep.subr.bf16.mxu0 %v651
  %721 = vmatpush1.bf16.msra.mxu0 %v650
  %722 = vmatprep.subr.bf16.mxu0 %v647
  %723 = vmatpush1.bf16.msra.mxu0 %v646
  %724 = vmatprep.subr.bf16.mxu0 %v643
  %725 = vmatpush1.bf16.msra.mxu0 %v642
  %726 = vmatprep.subr.bf16.mxu0 %v639
  %727 = vmatpush1.bf16.msra.mxu0 %v638
  %728 = vmatprep.subr.bf16.mxu0 0
  %729 = vmatpush2.bf16.msra.mxu0 0
  %730 = vmatprep.subr.bf16.mxu0 0
  %731 = vmatpush2.bf16.msra.mxu0 0
  %732 = vmatprep.subr.bf16.mxu0 0
  %733 = vmatpush2.bf16.msra.mxu0 0
  %734 = vmatprep.subr.bf16.mxu0 0
  %735 = vmatpush2.bf16.msra.mxu0 0
  %736 = vmatprep.subr.bf16.mxu0 0
  %737 = vmatpush2.bf16.msra.mxu0 0
  %738 = vmatprep.subr.bf16.mxu0 0
  %739 = vmatpush2.bf16.msra.mxu0 0
  %740 = vmatprep.subr.bf16.mxu0 0
  %741 = vmatpush2.bf16.msra.mxu0 0
  %742 = vmatprep.subr.bf16.mxu0 0
  %743 = vmatpush2.bf16.msra.mxu0 0
  %744 = vmatprep.mubr.bf16.mxu0 0
  %745 = vmatmul.mubr.bf16.gmra.mxu0 %v669
  %v746 = vpop.f32.mrf.mxu0
  %v747 = vadd.f32 0.0, %v746
  %v748 = vpop.f32.mrf.mxu0
  %v749 = vadd.f32 0.0, %v748
  %v750 = vpop.f32.mrf.mxu0
  %v751 = vpop.f32.mrf.mxu0
  %752 = vdwg.mxu0
  %v753 = vadd.f32 %v154, %v156
  %v754 = vadd.f32 %v753, %v195
  %v755 = vadd.f32 %v754, %v197
  %756 = vadd.xlane.f32.xlu0 %v755
  %v757 = vpop.xlane.xlu0 %756
  %v758 = vadd.f32 %v338, %v340
  %v759 = vadd.f32 %v758, %v379
  %v760 = vadd.f32 %v759, %v381
  %761 = vadd.xlane.f32.xlu0 %v760
  %v762 = vpop.xlane.xlu0 %761
  %v763 = vadd.f32 %v757, %v762
  %v764 = vadd.f32 %v522, %v524
  %v765 = vadd.f32 %v764, %v563
  %v766 = vadd.f32 %v765, %v565
  %767 = vadd.xlane.f32.xlu0 %v766
  %v768 = vpop.xlane.xlu0 %767
  %v769 = vadd.f32 %v763, %v768
  %v770 = vadd.f32 %v706, %v708
  %v771 = vadd.f32 %v770, %v747
  %v772 = vadd.f32 %v771, %v749
  %773 = vadd.xlane.f32.xlu0 %v772
  %v774 = vpop.xlane.xlu0 %773
  %v775 = vadd.f32 %v769, %v774
  %v776 = vmul.f32 %v775, 0.00048828125
  %v777 = vsub.f32 %v154, %v776
  %v778 = vsub.f32 %v156, %v776
  %v779 = vsub.f32 %v195, %v776
  %v780 = vsub.f32 %v197, %v776
  %v781 = vmul.f32 %v777, %v777
  %v782 = vmul.f32 %v778, %v778
  %v783 = vmul.f32 %v779, %v779
  %v784 = vmul.f32 %v780, %v780
  %v785 = vadd.f32 %v781, %v782
  %v786 = vadd.f32 %v785, %v783
  %v787 = vadd.f32 %v786, %v784
  %788 = vadd.xlane.f32.xlu0 %v787
  %v789 = vpop.xlane.xlu0 %788
  %v790 = vsub.f32 %v338, %v776
  %v791 = vsub.f32 %v340, %v776
  %v792 = vsub.f32 %v379, %v776
  %v793 = vsub.f32 %v381, %v776
  %v794 = vmul.f32 %v790, %v790
  %v795 = vmul.f32 %v791, %v791
  %v796 = vmul.f32 %v792, %v792
  %v797 = vmul.f32 %v793, %v793
  %v798 = vadd.f32 %v794, %v795
  %v799 = vadd.f32 %v798, %v796
  %v800 = vadd.f32 %v799, %v797
  %801 = vadd.xlane.f32.xlu0 %v800
  %v802 = vpop.xlane.xlu0 %801
  %v803 = vadd.f32 %v789, %v802
  %v804 = vsub.f32 %v522, %v776
  %v805 = vsub.f32 %v524, %v776
  %v806 = vsub.f32 %v563, %v776
  %v807 = vsub.f32 %v565, %v776
  %v808 = vmul.f32 %v804, %v804
  %v809 = vmul.f32 %v805, %v805
  %v810 = vmul.f32 %v806, %v806
  %v811 = vmul.f32 %v807, %v807
  %v812 = vadd.f32 %v808, %v809
  %v813 = vadd.f32 %v812, %v810
  %v814 = vadd.f32 %v813, %v811
  %815 = vadd.xlane.f32.xlu0 %v814
  %v816 = vpop.xlane.xlu0 %815
  %v817 = vadd.f32 %v803, %v816
  %v818 = vsub.f32 %v706, %v776
  %v819 = vsub.f32 %v708, %v776
  %v820 = vsub.f32 %v747, %v776
  %v821 = vsub.f32 %v749, %v776
  %v822 = vmul.f32 %v818, %v818
  %v823 = vmul.f32 %v819, %v819
  %v824 = vmul.f32 %v820, %v820
  %v825 = vmul.f32 %v821, %v821
  %v826 = vadd.f32 %v822, %v823
  %v827 = vadd.f32 %v826, %v824
  %v828 = vadd.f32 %v827, %v825
  %829 = vadd.xlane.f32.xlu0 %v828
  %v830 = vpop.xlane.xlu0 %829
  %v831 = vadd.f32 %v817, %v830
  %v832 = vmul.f32 %v831, 0.00048828125
  %v833 = vld [vmem:[%s2] sm:$0xff]
  %v834 = vadd.f32 %v832, 1e-05
  %v835 = vrsqrt.pop %v834
  %v836 = vmul.f32 %v833, %v835
  %v837 = vld [vmem:[%s3] sm:$0xff]
  %v838 = vmul.f32 %v776, %v836
  %v839 = vsub.f32 %v837, %v838
  %841 = vset.pattern.permute.xlu0 0
  %842 = vperm.xlu0 %841, %v836
  %v843 = vpop.permute.xlu0 %842
  %v845 = vmul.f32 %v154, %v843
  %v846 = vmul.f32 %v156, %v843
  %v847 = vmul.f32 %v195, %v843
  %v848 = vmul.f32 %v197, %v843
  %850 = vset.pattern.permute.xlu0 0
  %851 = vperm.xlu0 %850, %v839
  %v852 = vpop.permute.xlu0 %851
  %v854 = vadd.f32 %v845, %v852
  %v855 = vadd.f32 %v846, %v852
  %v856 = vadd.f32 %v847, %v852
  %v857 = vadd.f32 %v848, %v852
  %v858 = vmul.f32 %v338, %v843
  %v859 = vmul.f32 %v340, %v843
  %v860 = vmul.f32 %v379, %v843
  %v861 = vmul.f32 %v381, %v843
  %v862 = vadd.f32 %v858, %v852
  %v863 = vadd.f32 %v859, %v852
  %v864 = vadd.f32 %v860, %v852
  %v865 = vadd.f32 %v861, %v852
  %v866 = vmul.f32 %v522, %v843
  %v867 = vmul.f32 %v524, %v843
  %v868 = vmul.f32 %v563, %v843
  %v869 = vmul.f32 %v565, %v843
  %v870 = vadd.f32 %v866, %v852
  %v871 = vadd.f32 %v867, %v852
  %v872 = vadd.f32 %v868, %v852
  %v873 = vadd.f32 %v869, %v852
  %v874 = vmul.f32 %v706, %v843
  %v875 = vmul.f32 %v708, %v843
  %v876 = vmul.f32 %v747, %v843
  %v877 = vmul.f32 %v749, %v843
  %v878 = vadd.f32 %v874, %v852
  %v879 = vadd.f32 %v875, %v852
  %v880 = vadd.f32 %v876, %v852
  %v881 = vadd.f32 %v877, %v852
  %v882 = vmax.f32 %v854, 0.0
  %v883 = vmax.f32 %v855, 0.0
  %v884 = vmax.f32 %v856, 0.0
  %v885 = vmax.f32 %v857, 0.0
  %v886 = vmax.f32 %v862, 0.0
  %v887 = vmax.f32 %v863, 0.0
  %v888 = vmax.f32 %v864, 0.0
  %v889 = vmax.f32 %v865, 0.0
  %v890 = vmax.f32 %v870, 0.0
  %v891 = vmax.f32 %v871, 0.0
  %v892 = vmax.f32 %v872, 0.0
  %v893 = vmax.f32 %v873, 0.0
  %v894 = vmax.f32 %v878, 0.0
  %v895 = vmax.f32 %v879, 0.0
  %v896 = vmax.f32 %v880, 0.0
  %v897 = vmax.f32 %v881, 0.0
  %v898 = vpack.c.bf16 %v882, %v882
  %v899 = vpack.c.bf16 %v883, %v883
  %v900 = vpack.c.bf16 %v884, %v884
  %v901 = vpack.c.bf16 %v885, %v885
  %v906 = vunpack.c.l.b16 %v898
  %v907 = vunpack.c.l.b16 %v899
  %v908 = vunpack.c.l.b16 %v900
  %v909 = vunpack.c.l.b16 %v901
  %v910 = vpack.c.b16 %v907, %v906
  %v911 = vpack.c.b16 %v909, %v908
  %914 = vst [vmem:[%s4] sm:$0xff] %v910
  %915 = vst [vmem:[%s4 + $0x8] sm:$0xff] %v911
  %v916 = vpack.c.bf16 %v886, %v886
  %v917 = vpack.c.bf16 %v887, %v887
  %v918 = vpack.c.bf16 %v888, %v888
  %v919 = vpack.c.bf16 %v889, %v889
  %v924 = vunpack.c.l.b16 %v916
  %v925 = vunpack.c.l.b16 %v917
  %v926 = vunpack.c.l.b16 %v918
  %v927 = vunpack.c.l.b16 %v919
  %v928 = vpack.c.b16 %v925, %v924
  %v929 = vpack.c.b16 %v927, %v926
  %s932 = scalar_lea.vmem %s4, 16
  %933 = vst [vmem:[%s932] sm:$0xff] %v928
  %934 = vst [vmem:[%s932 + $0x8] sm:$0xff] %v929
  %v935 = vpack.c.bf16 %v890, %v890
  %v936 = vpack.c.bf16 %v891, %v891
  %v937 = vpack.c.bf16 %v892, %v892
  %v938 = vpack.c.bf16 %v893, %v893
  %v943 = vunpack.c.l.b16 %v935
  %v944 = vunpack.c.l.b16 %v936
  %v945 = vunpack.c.l.b16 %v937
  %v946 = vunpack.c.l.b16 %v938
  %v947 = vpack.c.b16 %v944, %v943
  %v948 = vpack.c.b16 %v946, %v945
  %s951 = scalar_lea.vmem %s4, 32
  %952 = vst [vmem:[%s951] sm:$0xff] %v947
  %953 = vst [vmem:[%s951 + $0x8] sm:$0xff] %v948
  %v954 = vpack.c.bf16 %v894, %v894
  %v955 = vpack.c.bf16 %v895, %v895
  %v956 = vpack.c.bf16 %v896, %v896
  %v957 = vpack.c.bf16 %v897, %v897
  %v962 = vunpack.c.l.b16 %v954
  %v963 = vunpack.c.l.b16 %v955
  %v964 = vunpack.c.l.b16 %v956
  %v965 = vunpack.c.l.b16 %v957
  %v966 = vpack.c.b16 %v963, %v962
  %v967 = vpack.c.b16 %v965, %v964
  %s970 = scalar_lea.vmem %s4, 48
  %971 = vst [vmem:[%s970] sm:$0xff] %v966
  %972 = vst [vmem:[%s970 + $0x8] sm:$0xff] %v967
  // Predicated region
  $region18: #{generator_forward.8} parent=0 // pred_check
    _
  $region19: #{generator_forward.8} parent=0 // pred_check_branch
    %974 = sbr.rel (0) target = $region21
  $region20: #{generator_forward.8} parent=0 // pred_region
    _
  $region21: #{generator_forward.8} parent=0 // pred_fallthru
    _
  // Predicated region
  $region22: #{generator_forward.8} parent=0 // pred_check
    _
  $region23: #{generator_forward.8} parent=0 // pred_check_branch
    %976 = sbr.rel (0) target = $region25
  $region24: #{generator_forward.8} parent=0 // pred_region
    _
  $region25: #{generator_forward.8} parent=0 // pred_fallthru
    _

// kernel: generator_forward.9
$region0: #{generator_forward.9}
  #allocation0 [shape = 'u32[]', space=smem, size = 0x4, offset = 0x4, fixed_abs, tag = 'smem constant byte address 0x4 - core index']
  #allocation1 [shape = 'u32[144,128]{1,0:T(1,128)}', space=vmem, size = 0x12000, scoped, tag = 'internal scratch']
  %s0 = inlined_call_operand.vmem [shape: bf16[4,32,2048], index: 0, kind: input, shape index: {}]
  %s1 = inlined_call_operand.vmem [shape: bf16[4,3,32], index: 1, kind: input, shape index: {}]
  %s2 = inlined_call_operand.vmem [shape: f32[3,1], index: 2, kind: input, shape index: {}]
  %s3 = inlined_call_operand.vmem [shape: f32[3,1], index: 3, kind: input, shape index: {}]
  %s4 = inlined_call_operand.vmem [shape: f32[4,3,2048], index: 4, kind: output, shape index: {}]
  %s5 = sld [smem:[#allocation0]]
  $region26: #{generator_forward.9} parent=0
    _
  %s7 = ssub.s32 1, %s5
  %s8 = scalar_select 0, %s7, %s5
  // Predicated region
  $region2: #{generator_forward.9} parent=0 // pred_check
    _
  $region3: #{generator_forward.9} parent=0 // pred_check_branch
    %10 = sbr.rel (0) target = $region5
  $region4: #{generator_forward.9} parent=0 // pred_region
    _
  $region5: #{generator_forward.9} parent=0 // pred_fallthru
    _
  // Predicated region
  $region6: #{generator_forward.9} parent=0 // pred_check
    _
  $region7: #{generator_forward.9} parent=0 // pred_check_branch
    %12 = sbr.rel (0) target = $region9
  $region8: #{generator_forward.9} parent=0 // pred_region
    _
  $region9: #{generator_forward.9} parent=0 // pred_fallthru
    _
  // Predicated region
  $region10: #{generator_forward.9} parent=0 // pred_check
    _
  $region11: #{generator_forward.9} parent=0 // pred_check_branch
    %14 = sbr.rel (0) target = $region13
  $region12: #{generator_forward.9} parent=0 // pred_region
    _
  $region13: #{generator_forward.9} parent=0 // pred_fallthru
    _
  // Predicated region
  $region14: #{generator_forward.9} parent=0 // pred_check
    _
  $region15: #{generator_forward.9} parent=0 // pred_check_branch
    %16 = sbr.rel (0) target = $region17
  $region16: #{generator_forward.9} parent=0 // pred_region
    _
  $region17: #{generator_forward.9} parent=0 // pred_fallthru
    _
  %v18 = vld [vmem:[%s0] sm:$0xff]
  %v19 = vld [vmem:[%s0 + $0x8] sm:$0xff]
  %v20 = vld [vmem:[%s0 + $0x10] sm:$0xff]
  %v21 = vld [vmem:[%s0 + $0x18] sm:$0xff]
  %v22 = vld [vmem:[%s0 + $0x20] sm:$0xff]
  %v23 = vld [vmem:[%s0 + $0x28] sm:$0xff]
  %v24 = vld [vmem:[%s0 + $0x30] sm:$0xff]
  %v25 = vld [vmem:[%s0 + $0x38] sm:$0xff]
  %v26 = vld [vmem:[%s0 + $0x40] sm:$0xff]
  %v27 = vld [vmem:[%s0 + $0x48] sm:$0xff]
  %v28 = vld [vmem:[%s0 + $0x50] sm:$0xff]
  %v29 = vld [vmem:[%s0 + $0x58] sm:$0xff]
  %v30 = vld [vmem:[%s0 + $0x60] sm:$0xff]
  %v31 = vld [vmem:[%s0 + $0x68] sm:$0xff]
  %v32 = vld [vmem:[%s0 + $0x70] sm:$0xff]
  %v33 = vld [vmem:[%s0 + $0x78] sm:$0xff]
  %v34 = vld [vmem:[%s0 + $0x80] sm:$0xff]
  %v35 = vld [vmem:[%s0 + $0x88] sm:$0xff]
  %v36 = vld [vmem:[%s0 + $0x90] sm:$0xff]
  %v37 = vld [vmem:[%s0 + $0x98] sm:$0xff]
  %v38 = vld [vmem:[%s0 + $0xa0] sm:$0xff]
  %v39 = vld [vmem:[%s0 + $0xa8] sm:$0xff]
  %v40 = vld [vmem:[%s0 + $0xb0] sm:$0xff]
  %v41 = vld [vmem:[%s0 + $0xb8] sm:$0xff]
  %v42 = vld [vmem:[%s0 + $0xc0] sm:$0xff]
  %v43 = vld [vmem:[%s0 + $0xc8] sm:$0xff]
  %v44 = vld [vmem:[%s0 + $0xd0] sm:$0xff]
  %v45 = vld [vmem:[%s0 + $0xd8] sm:$0xff]
  %v46 = vld [vmem:[%s0 + $0xe0] sm:$0xff]
  %v47 = vld [vmem:[%s0 + $0xe8] sm:$0xff]
  %v48 = vld [vmem:[%s0 + $0xf0] sm:$0xff]
  %v49 = vld [vmem:[%s0 + $0xf8] sm:$0xff]
  %v50 = vld [vmem:[%s1] sm:$0x3]
  %v83 = vunpack.c.l.b16 %v18
  %v84 = vunpack.c.h.b16 %v18
  %v85 = vunpack.c.l.b16 %v19
  %v86 = vunpack.c.h.b16 %v19
  %v87 = vunpack.c.l.b16 %v20
  %v88 = vunpack.c.h.b16 %v20
  %v89 = vunpack.c.l.b16 %v21
  %v90 = vunpack.c.h.b16 %v21
  %v91 = vunpack.c.l.b16 %v22
  %v92 = vunpack.c.h.b16 %v22
  %v93 = vunpack.c.l.b16 %v23
  %v94 = vunpack.c.h.b16 %v23
  %v95 = vunpack.c.l.b16 %v24
  %v96 = vunpack.c.h.b16 %v24
  %v97 = vunpack.c.l.b16 %v25
  %v98 = vunpack.c.h.b16 %v25
  %v99 = vunpack.c.l.b16 %v26
  %v100 = vunpack.c.h.b16 %v26
  %v101 = vunpack.c.l.b16 %v27
  %v102 = vunpack.c.h.b16 %v27
  %v103 = vunpack.c.l.b16 %v28
  %v104 = vunpack.c.h.b16 %v28
  %v105 = vunpack.c.l.b16 %v29
  %v106 = vunpack.c.h.b16 %v29
  %v107 = vunpack.c.l.b16 %v30
  %v108 = vunpack.c.h.b16 %v30
  %v109 = vunpack.c.l.b16 %v31
  %v110 = vunpack.c.h.b16 %v31
  %v111 = vunpack.c.l.b16 %v32
  %v112 = vunpack.c.h.b16 %v32
  %v113 = vunpack.c.l.b16 %v33
  %v114 = vunpack.c.h.b16 %v33
  %v115 = vunpack.c.l.b16 %v34
  %v116 = vunpack.c.h.b16 %v34
  %v117 = vunpack.c.l.b16 %v35
  %v118 = vunpack.c.h.b16 %v35
  %v119 = vunpack.c.l.b16 %v36
  %v120 = vunpack.c.h.b16 %v36
  %v121 = vunpack.c.l.b16 %v37
  %v122 = vunpack.c.h.b16 %v37
  %v123 = vunpack.c.l.b16 %v38
  %v124 = vunpack.c.h.b16 %v38
  %v125 = vunpack.c.l.b16 %v39
  %v126 = vunpack.c.h.b16 %v39
  %v127 = vunpack.c.l.b16 %v40
  %v128 = vunpack.c.h.b16 %v40
  %v129 = vunpack.c.l.b16 %v41
  %v130 = vunpack.c.h.b16 %v41
  %v131 = vunpack.c.l.b16 %v42
  %v132 = vunpack.c.h.b16 %v42
  %v133 = vunpack.c.l.b16 %v43
  %v134 = vunpack.c.h.b16 %v43
  %v135 = vunpack.c.l.b16 %v44
  %v136 = vunpack.c.h.b16 %v44
  %v137 = vunpack.c.l.b16 %v45
  %v138 = vunpack.c.h.b16 %v45
  %v139 = vunpack.c.l.b16 %v46
  %v140 = vunpack.c.h.b16 %v46
  %v141 = vunpack.c.l.b16 %v47
  %v142 = vunpack.c.h.b16 %v47
  %v143 = vunpack.c.l.b16 %v48
  %v144 = vunpack.c.h.b16 %v48
  %v145 = vunpack.c.l.b16 %v49
  %v146 = vunpack.c.h.b16 %v49
  %v147 = vpack.c.b16 %v99, %v83
  %v148 = vpack.c.b16 %v100, %v84
  %v149 = vpack.c.b16 %v101, %v85
  %v150 = vpack.c.b16 %v102, %v86
  %v151 = vpack.c.b16 %v103, %v87
  %v152 = vpack.c.b16 %v104, %v88
  %v153 = vpack.c.b16 %v105, %v89
  %v154 = vpack.c.b16 %v106, %v90
  %v155 = vpack.c.b16 %v107, %v91
  %v156 = vpack.c.b16 %v108, %v92
  %v157 = vpack.c.b16 %v109, %v93
  %v158 = vpack.c.b16 %v110, %v94
  %v159 = vpack.c.b16 %v111, %v95
  %v160 = vpack.c.b16 %v112, %v96
  %v161 = vpack.c.b16 %v113, %v97
  %v162 = vpack.c.b16 %v114, %v98
  %v163 = vpack.c.b16 %v131, %v115
  %v164 = vpack.c.b16 %v132, %v116
  %v165 = vpack.c.b16 %v133, %v117
  %v166 = vpack.c.b16 %v134, %v118
  %v167 = vpack.c.b16 %v135, %v119
  %v168 = vpack.c.b16 %v136, %v120
  %v169 = vpack.c.b16 %v137, %v121
  %v170 = vpack.c.b16 %v138, %v122
  %v171 = vpack.c.b16 %v139, %v123
  %v172 = vpack.c.b16 %v140, %v124
  %v173 = vpack.c.b16 %v141, %v125
  %v174 = vpack.c.b16 %v142, %v126
  %v175 = vpack.c.b16 %v143, %v127
  %v176 = vpack.c.b16 %v144, %v128
  %v177 = vpack.c.b16 %v145, %v129
  %v178 = vpack.c.b16 %v146, %v130
  %vm211 = vcmask 261120
  %v213 = vsel %vm211, %v50, 0
  %215 = vmatprep.subr.bf16.mxu0 0
  %216 = vmatpush1.bf16.msra.mxu0 0
  %217 = vmatprep.subr.bf16.mxu0 0
  %218 = vmatpush1.bf16.msra.mxu0 0
  %219 = vmatprep.subr.bf16.mxu0 0
  %220 = vmatpush1.bf16.msra.mxu0 0
  %221 = vmatprep.subr.bf16.mxu0 0
  %222 = vmatpush1.bf16.msra.mxu0 0
  %223 = vmatprep.subr.bf16.mxu0 0
  %224 = vmatpush1.bf16.msra.mxu0 0
  %225 = vmatprep.subr.bf16.mxu0 0
  %226 = vmatpush1.bf16.msra.mxu0 0
  %227 = vmatprep.subr.bf16.mxu0 %v164
  %228 = vmatpush1.bf16.msra.mxu0 %v163
  %229 = vmatprep.subr.bf16.mxu0 %v148
  %230 = vmatpush1.bf16.msra.mxu0 %v147
  %231 = vmatprep.subr.bf16.mxu0 0
  %232 = vmatpush2.bf16.msra.mxu0 0
  %233 = vmatprep.subr.bf16.mxu0 0
  %234 = vmatpush2.bf16.msra.mxu0 0
  %235 = vmatprep.subr.bf16.mxu0 0
  %236 = vmatpush2.bf16.msra.mxu0 0
  %237 = vmatprep.subr.bf16.mxu0 0
  %238 = vmatpush2.bf16.msra.mxu0 0
  %239 = vmatprep.subr.bf16.mxu0 0
  %240 = vmatpush2.bf16.msra.mxu0 0
  %241 = vmatprep.subr.bf16.mxu0 0
  %242 = vmatpush2.bf16.msra.mxu0 0
  %243 = vmatprep.subr.bf16.mxu0 0
  %244 = vmatpush2.bf16.msra.mxu0 0
  %245 = vmatprep.subr.bf16.mxu0 0
  %246 = vmatpush2.bf16.msra.mxu0 0
  %247 = vmatprep.mubr.bf16.mxu0 0
  %248 = vmatmul.mubr.bf16.gmra.mxu0 %v213
  %v249 = vpop.f32.mrf.mxu0
  %v250 = vadd.f32 0.0, %v249
  %v251 = vpop.f32.mrf.mxu0
  %v252 = vadd.f32 0.0, %v251
  %v253 = vpop.f32.mrf.mxu0
  %v254 = vpop.f32.mrf.mxu0
  %255 = vdwg.mxu0
  %256 = vmatprep.subr.bf16.mxu0 0
  %257 = vmatpush1.bf16.msra.mxu0 0
  %258 = vmatprep.subr.bf16.mxu0 0
  %259 = vmatpush1.bf16.msra.mxu0 0
  %260 = vmatprep.subr.bf16.mxu0 0
  %261 = vmatpush1.bf16.msra.mxu0 0
  %262 = vmatprep.subr.bf16.mxu0 0
  %263 = vmatpush1.bf16.msra.mxu0 0
  %264 = vmatprep.subr.bf16.mxu0 0
  %265 = vmatpush1.bf16.msra.mxu0 0
  %266 = vmatprep.subr.bf16.mxu0 0
  %267 = vmatpush1.bf16.msra.mxu0 0
  %268 = vmatprep.subr.bf16.mxu0 %v166
  %269 = vmatpush1.bf16.msra.mxu0 %v165
  %270 = vmatprep.subr.bf16.mxu0 %v150
  %271 = vmatpush1.bf16.msra.mxu0 %v149
  %272 = vmatprep.subr.bf16.mxu0 0
  %273 = vmatpush2.bf16.msra.mxu0 0
  %274 = vmatprep.subr.bf16.mxu0 0
  %275 = vmatpush2.bf16.msra.mxu0 0
  %276 = vmatprep.subr.bf16.mxu0 0
  %277 = vmatpush2.bf16.msra.mxu0 0
  %278 = vmatprep.subr.bf16.mxu0 0
  %279 = vmatpush2.bf16.msra.mxu0 0
  %280 = vmatprep.subr.bf16.mxu0 0
  %281 = vmatpush2.bf16.msra.mxu0 0
  %282 = vmatprep.subr.bf16.mxu0 0
  %283 = vmatpush2.bf16.msra.mxu0 0
  %284 = vmatprep.subr.bf16.mxu0 0
  %285 = vmatpush2.bf16.msra.mxu0 0
  %286 = vmatprep.subr.bf16.mxu0 0
  %287 = vmatpush2.bf16.msra.mxu0 0
  %288 = vmatprep.mubr.bf16.mxu0 0
  %289 = vmatmul.mubr.bf16.gmra.mxu0 %v213
  %v290 = vpop.f32.mrf.mxu0
  %v291 = vadd.f32 0.0, %v290
  %v292 = vpop.f32.mrf.mxu0
  %v293 = vadd.f32 0.0, %v292
  %v294 = vpop.f32.mrf.mxu0
  %v295 = vpop.f32.mrf.mxu0
  %296 = vdwg.mxu0
  %297 = vmatprep.subr.bf16.mxu0 0
  %298 = vmatpush1.bf16.msra.mxu0 0
  %299 = vmatprep.subr.bf16.mxu0 0
  %300 = vmatpush1.bf16.msra.mxu0 0
  %301 = vmatprep.subr.bf16.mxu0 0
  %302 = vmatpush1.bf16.msra.mxu0 0
  %303 = vmatprep.subr.bf16.mxu0 0
  %304 = vmatpush1.bf16.msra.mxu0 0
  %305 = vmatprep.subr.bf16.mxu0 0
  %306 = vmatpush1.bf16.msra.mxu0 0
  %307 = vmatprep.subr.bf16.mxu0 0
  %308 = vmatpush1.bf16.msra.mxu0 0
  %309 = vmatprep.subr.bf16.mxu0 %v168
  %310 = vmatpush1.bf16.msra.mxu0 %v167
  %311 = vmatprep.subr.bf16.mxu0 %v152
  %312 = vmatpush1.bf16.msra.mxu0 %v151
  %313 = vmatprep.subr.bf16.mxu0 0
  %314 = vmatpush2.bf16.msra.mxu0 0
  %315 = vmatprep.subr.bf16.mxu0 0
  %316 = vmatpush2.bf16.msra.mxu0 0
  %317 = vmatprep.subr.bf16.mxu0 0
  %318 = vmatpush2.bf16.msra.mxu0 0
  %319 = vmatprep.subr.bf16.mxu0 0
  %320 = vmatpush2.bf16.msra.mxu0 0
  %321 = vmatprep.subr.bf16.mxu0 0
  %322 = vmatpush2.bf16.msra.mxu0 0
  %323 = vmatprep.subr.bf16.mxu0 0
  %324 = vmatpush2.bf16.msra.mxu0 0
  %325 = vmatprep.subr.bf16.mxu0 0
  %326 = vmatpush2.bf16.msra.mxu0 0
  %327 = vmatprep.subr.bf16.mxu0 0
  %328 = vmatpush2.bf16.msra.mxu0 0
  %329 = vmatprep.mubr.bf16.mxu0 0
  %330 = vmatmul.mubr.bf16.gmra.mxu0 %v213
  %v331 = vpop.f32.mrf.mxu0
  %v332 = vadd.f32 0.0, %v331
  %v333 = vpop.f32.mrf.mxu0
  %v334 = vadd.f32 0.0, %v333
  %v335 = vpop.f32.mrf.mxu0
  %v336 = vpop.f32.mrf.mxu0
  %337 = vdwg.mxu0
  %338 = vmatprep.subr.bf16.mxu0 0
  %339 = vmatpush1.bf16.msra.mxu0 0
  %340 = vmatprep.subr.bf16.mxu0 0
  %341 = vmatpush1.bf16.msra.mxu0 0
  %342 = vmatprep.subr.bf16.mxu0 0
  %343 = vmatpush1.bf16.msra.mxu0 0
  %344 = vmatprep.subr.bf16.mxu0 0
  %345 = vmatpush1.bf16.msra.mxu0 0
  %346 = vmatprep.subr.bf16.mxu0 0
  %347 = vmatpush1.bf16.msra.mxu0 0
  %348 = vmatprep.subr.bf16.mxu0 0
  %349 = vmatpush1.bf16.msra.mxu0 0
  %350 = vmatprep.subr.bf16.mxu0 %v170
  %351 = vmatpush1.bf16.msra.mxu0 %v169
  %352 = vmatprep.subr.bf16.mxu0 %v154
  %353 = vmatpush1.bf16.msra.mxu0 %v153
  %354 = vmatprep.subr.bf16.mxu0 0
  %355 = vmatpush2.bf16.msra.mxu0 0
  %356 = vmatprep.subr.bf16.mxu0 0
  %357 = vmatpush2.bf16.msra.mxu0 0
  %358 = vmatprep.subr.bf16.mxu0 0
  %359 = vmatpush2.bf16.msra.mxu0 0
  %360 = vmatprep.subr.bf16.mxu0 0
  %361 = vmatpush2.bf16.msra.mxu0 0
  %362 = vmatprep.subr.bf16.mxu0 0
  %363 = vmatpush2.bf16.msra.mxu0 0
  %364 = vmatprep.subr.bf16.mxu0 0
  %365 = vmatpush2.bf16.msra.mxu0 0
  %366 = vmatprep.subr.bf16.mxu0 0
  %367 = vmatpush2.bf16.msra.mxu0 0
  %368 = vmatprep.subr.bf16.mxu0 0
  %369 = vmatpush2.bf16.msra.mxu0 0
  %370 = vmatprep.mubr.bf16.mxu0 0
  %371 = vmatmul.mubr.bf16.gmra.mxu0 %v213
  %v372 = vpop.f32.mrf.mxu0
  %v373 = vadd.f32 0.0, %v372
  %v374 = vpop.f32.mrf.mxu0
  %v375 = vadd.f32 0.0, %v374
  %v376 = vpop.f32.mrf.mxu0
  %v377 = vpop.f32.mrf.mxu0
  %378 = vdwg.mxu0
  %379 = vmatprep.subr.bf16.mxu0 0
  %380 = vmatpush1.bf16.msra.mxu0 0
  %381 = vmatprep.subr.bf16.mxu0 0
  %382 = vmatpush1.bf16.msra.mxu0 0
  %383 = vmatprep.subr.bf16.mxu0 0
  %384 = vmatpush1.bf16.msra.mxu0 0
  %385 = vmatprep.subr.bf16.mxu0 0
  %386 = vmatpush1.bf16.msra.mxu0 0
  %387 = vmatprep.subr.bf16.mxu0 0
  %388 = vmatpush1.bf16.msra.mxu0 0
  %389 = vmatprep.subr.bf16.mxu0 0
  %390 = vmatpush1.bf16.msra.mxu0 0
  %391 = vmatprep.subr.bf16.mxu0 %v172
  %392 = vmatpush1.bf16.msra.mxu0 %v171
  %393 = vmatprep.subr.bf16.mxu0 %v156
  %394 = vmatpush1.bf16.msra.mxu0 %v155
  %395 = vmatprep.subr.bf16.mxu0 0
  %396 = vmatpush2.bf16.msra.mxu0 0
  %397 = vmatprep.subr.bf16.mxu0 0
  %398 = vmatpush2.bf16.msra.mxu0 0
  %399 = vmatprep.subr.bf16.mxu0 0
  %400 = vmatpush2.bf16.msra.mxu0 0
  %401 = vmatprep.subr.bf16.mxu0 0
  %402 = vmatpush2.bf16.msra.mxu0 0
  %403 = vmatprep.subr.bf16.mxu0 0
  %404 = vmatpush2.bf16.msra.mxu0 0
  %405 = vmatprep.subr.bf16.mxu0 0
  %406 = vmatpush2.bf16.msra.mxu0 0
  %407 = vmatprep.subr.bf16.mxu0 0
  %408 = vmatpush2.bf16.msra.mxu0 0
  %409 = vmatprep.subr.bf16.mxu0 0
  %410 = vmatpush2.bf16.msra.mxu0 0
  %411 = vmatprep.mubr.bf16.mxu0 0
  %412 = vmatmul.mubr.bf16.gmra.mxu0 %v213
  %v413 = vpop.f32.mrf.mxu0
  %v414 = vadd.f32 0.0, %v413
  %v415 = vpop.f32.mrf.mxu0
  %v416 = vadd.f32 0.0, %v415
  %v417 = vpop.f32.mrf.mxu0
  %v418 = vpop.f32.mrf.mxu0
  %419 = vdwg.mxu0
  %420 = vmatprep.subr.bf16.mxu0 0
  %421 = vmatpush1.bf16.msra.mxu0 0
  %422 = vmatprep.subr.bf16.mxu0 0
  %423 = vmatpush1.bf16.msra.mxu0 0
  %424 = vmatprep.subr.bf16.mxu0 0
  %425 = vmatpush1.bf16.msra.mxu0 0
  %426 = vmatprep.subr.bf16.mxu0 0
  %427 = vmatpush1.bf16.msra.mxu0 0
  %428 = vmatprep.subr.bf16.mxu0 0
  %429 = vmatpush1.bf16.msra.mxu0 0
  %430 = vmatprep.subr.bf16.mxu0 0
  %431 = vmatpush1.bf16.msra.mxu0 0
  %432 = vmatprep.subr.bf16.mxu0 %v174
  %433 = vmatpush1.bf16.msra.mxu0 %v173
  %434 = vmatprep.subr.bf16.mxu0 %v158
  %435 = vmatpush1.bf16.msra.mxu0 %v157
  %436 = vmatprep.subr.bf16.mxu0 0
  %437 = vmatpush2.bf16.msra.mxu0 0
  %438 = vmatprep.subr.bf16.mxu0 0
  %439 = vmatpush2.bf16.msra.mxu0 0
  %440 = vmatprep.subr.bf16.mxu0 0
  %441 = vmatpush2.bf16.msra.mxu0 0
  %442 = vmatprep.subr.bf16.mxu0 0
  %443 = vmatpush2.bf16.msra.mxu0 0
  %444 = vmatprep.subr.bf16.mxu0 0
  %445 = vmatpush2.bf16.msra.mxu0 0
  %446 = vmatprep.subr.bf16.mxu0 0
  %447 = vmatpush2.bf16.msra.mxu0 0
  %448 = vmatprep.subr.bf16.mxu0 0
  %449 = vmatpush2.bf16.msra.mxu0 0
  %450 = vmatprep.subr.bf16.mxu0 0
  %451 = vmatpush2.bf16.msra.mxu0 0
  %452 = vmatprep.mubr.bf16.mxu0 0
  %453 = vmatmul.mubr.bf16.gmra.mxu0 %v213
  %v454 = vpop.f32.mrf.mxu0
  %v455 = vadd.f32 0.0, %v454
  %v456 = vpop.f32.mrf.mxu0
  %v457 = vadd.f32 0.0, %v456
  %v458 = vpop.f32.mrf.mxu0
  %v459 = vpop.f32.mrf.mxu0
  %460 = vdwg.mxu0
  %461 = vmatprep.subr.bf16.mxu0 0
  %462 = vmatpush1.bf16.msra.mxu0 0
  %463 = vmatprep.subr.bf16.mxu0 0
  %464 = vmatpush1.bf16.msra.mxu0 0
  %465 = vmatprep.subr.bf16.mxu0 0
  %466 = vmatpush1.bf16.msra.mxu0 0
  %467 = vmatprep.subr.bf16.mxu0 0
  %468 = vmatpush1.bf16.msra.mxu0 0
  %469 = vmatprep.subr.bf16.mxu0 0
  %470 = vmatpush1.bf16.msra.mxu0 0
  %471 = vmatprep.subr.bf16.mxu0 0
  %472 = vmatpush1.bf16.msra.mxu0 0
  %473 = vmatprep.subr.bf16.mxu0 %v176
  %474 = vmatpush1.bf16.msra.mxu0 %v175
  %475 = vmatprep.subr.bf16.mxu0 %v160
  %476 = vmatpush1.bf16.msra.mxu0 %v159
  %477 = vmatprep.subr.bf16.mxu0 0
  %478 = vmatpush2.bf16.msra.mxu0 0
  %479 = vmatprep.subr.bf16.mxu0 0
  %480 = vmatpush2.bf16.msra.mxu0 0
  %481 = vmatprep.subr.bf16.mxu0 0
  %482 = vmatpush2.bf16.msra.mxu0 0
  %483 = vmatprep.subr.bf16.mxu0 0
  %484 = vmatpush2.bf16.msra.mxu0 0
  %485 = vmatprep.subr.bf16.mxu0 0
  %486 = vmatpush2.bf16.msra.mxu0 0
  %487 = vmatprep.subr.bf16.mxu0 0
  %488 = vmatpush2.bf16.msra.mxu0 0
  %489 = vmatprep.subr.bf16.mxu0 0
  %490 = vmatpush2.bf16.msra.mxu0 0
  %491 = vmatprep.subr.bf16.mxu0 0
  %492 = vmatpush2.bf16.msra.mxu0 0
  %493 = vmatprep.mubr.bf16.mxu0 0
  %494 = vmatmul.mubr.bf16.gmra.mxu0 %v213
  %v495 = vpop.f32.mrf.mxu0
  %v496 = vadd.f32 0.0, %v495
  %v497 = vpop.f32.mrf.mxu0
  %v498 = vadd.f32 0.0, %v497
  %v499 = vpop.f32.mrf.mxu0
  %v500 = vpop.f32.mrf.mxu0
  %501 = vdwg.mxu0
  %502 = vmatprep.subr.bf16.mxu0 0
  %503 = vmatpush1.bf16.msra.mxu0 0
  %504 = vmatprep.subr.bf16.mxu0 0
  %505 = vmatpush1.bf16.msra.mxu0 0
  %506 = vmatprep.subr.bf16.mxu0 0
  %507 = vmatpush1.bf16.msra.mxu0 0
  %508 = vmatprep.subr.bf16.mxu0 0
  %509 = vmatpush1.bf16.msra.mxu0 0
  %510 = vmatprep.subr.bf16.mxu0 0
  %511 = vmatpush1.bf16.msra.mxu0 0
  %512 = vmatprep.subr.bf16.mxu0 0
  %513 = vmatpush1.bf16.msra.mxu0 0
  %514 = vmatprep.subr.bf16.mxu0 %v178
  %515 = vmatpush1.bf16.msra.mxu0 %v177
  %516 = vmatprep.subr.bf16.mxu0 %v162
  %517 = vmatpush1.bf16.msra.mxu0 %v161
  %518 = vmatprep.subr.bf16.mxu0 0
  %519 = vmatpush2.bf16.msra.mxu0 0
  %520 = vmatprep.subr.bf16.mxu0 0
  %521 = vmatpush2.bf16.msra.mxu0 0
  %522 = vmatprep.subr.bf16.mxu0 0
  %523 = vmatpush2.bf16.msra.mxu0 0
  %524 = vmatprep.subr.bf16.mxu0 0
  %525 = vmatpush2.bf16.msra.mxu0 0
  %526 = vmatprep.subr.bf16.mxu0 0
  %527 = vmatpush2.bf16.msra.mxu0 0
  %528 = vmatprep.subr.bf16.mxu0 0
  %529 = vmatpush2.bf16.msra.mxu0 0
  %530 = vmatprep.subr.bf16.mxu0 0
  %531 = vmatpush2.bf16.msra.mxu0 0
  %532 = vmatprep.subr.bf16.mxu0 0
  %533 = vmatpush2.bf16.msra.mxu0 0
  %534 = vmatprep.mubr.bf16.mxu0 0
  %535 = vmatmul.mubr.bf16.gmra.mxu0 %v213
  %v536 = vpop.f32.mrf.mxu0
  %v537 = vadd.f32 0.0, %v536
  %v538 = vpop.f32.mrf.mxu0
  %v539 = vadd.f32 0.0, %v538
  %v540 = vpop.f32.mrf.mxu0
  %v541 = vpop.f32.mrf.mxu0
  %542 = vdwg.mxu0
  %s543 = scalar_lea.vmem %s0, 256
  %v544 = vld [vmem:[%s543] sm:$0xff]
  %v545 = vld [vmem:[%s543 + $0x8] sm:$0xff]
  %v546 = vld [vmem:[%s543 + $0x10] sm:$0xff]
  %v547 = vld [vmem:[%s543 + $0x18] sm:$0xff]
  %v548 = vld [vmem:[%s543 + $0x20] sm:$0xff]
  %v549 = vld [vmem:[%s543 + $0x28] sm:$0xff]
  %v550 = vld [vmem:[%s543 + $0x30] sm:$0xff]
  %v551 = vld [vmem:[%s543 + $0x38] sm:$0xff]
  %v552 = vld [vmem:[%s543 + $0x40] sm:$0xff]
  %v553 = vld [vmem:[%s543 + $0x48] sm:$0xff]
  %v554 = vld [vmem:[%s543 + $0x50] sm:$0xff]
  %v555 = vld [vmem:[%s543 + $0x58] sm:$0xff]
  %v556 = vld [vmem:[%s543 + $0x60] sm:$0xff]
  %v557 = vld [vmem:[%s543 + $0x68] sm:$0xff]
  %v558 = vld [vmem:[%s543 + $0x70] sm:$0xff]
  %v559 = vld [vmem:[%s543 + $0x78] sm:$0xff]
  %v560 = vld [vmem:[%s543 + $0x80] sm:$0xff]
  %v561 = vld [vmem:[%s543 + $0x88] sm:$0xff]
  %v562 = vld [vmem:[%s543 + $0x90] sm:$0xff]
  %v563 = vld [vmem:[%s543 + $0x98] sm:$0xff]
  %v564 = vld [vmem:[%s543 + $0xa0] sm:$0xff]
  %v565 = vld [vmem:[%s543 + $0xa8] sm:$0xff]
  %v566 = vld [vmem:[%s543 + $0xb0] sm:$0xff]
  %v567 = vld [vmem:[%s543 + $0xb8] sm:$0xff]
  %v568 = vld [vmem:[%s543 + $0xc0] sm:$0xff]
  %v569 = vld [vmem:[%s543 + $0xc8] sm:$0xff]
  %v570 = vld [vmem:[%s543 + $0xd0] sm:$0xff]
  %v571 = vld [vmem:[%s543 + $0xd8] sm:$0xff]
  %v572 = vld [vmem:[%s543 + $0xe0] sm:$0xff]
  %v573 = vld [vmem:[%s543 + $0xe8] sm:$0xff]
  %v574 = vld [vmem:[%s543 + $0xf0] sm:$0xff]
  %v575 = vld [vmem:[%s543 + $0xf8] sm:$0xff]
  %s576 = scalar_lea.vmem %s1, 2
  %v577 = vld [vmem:[%s576] sm:$0x3]
  %v610 = vunpack.c.l.b16 %v544
  %v611 = vunpack.c.h.b16 %v544
  %v612 = vunpack.c.l.b16 %v545
  %v613 = vunpack.c.h.b16 %v545
  %v614 = vunpack.c.l.b16 %v546
  %v615 = vunpack.c.h.b16 %v546
  %v616 = vunpack.c.l.b16 %v547
  %v617 = vunpack.c.h.b16 %v547
  %v618 = vunpack.c.l.b16 %v548
  %v619 = vunpack.c.h.b16 %v548
  %v620 = vunpack.c.l.b16 %v549
  %v621 = vunpack.c.h.b16 %v549
  %v622 = vunpack.c.l.b16 %v550
  %v623 = vunpack.c.h.b16 %v550
  %v624 = vunpack.c.l.b16 %v551
  %v625 = vunpack.c.h.b16 %v551
  %v626 = vunpack.c.l.b16 %v552
  %v627 = vunpack.c.h.b16 %v552
  %v628 = vunpack.c.l.b16 %v553
  %v629 = vunpack.c.h.b16 %v553
  %v630 = vunpack.c.l.b16 %v554
  %v631 = vunpack.c.h.b16 %v554
  %v632 = vunpack.c.l.b16 %v555
  %v633 = vunpack.c.h.b16 %v555
  %v634 = vunpack.c.l.b16 %v556
  %v635 = vunpack.c.h.b16 %v556
  %v636 = vunpack.c.l.b16 %v557
  %v637 = vunpack.c.h.b16 %v557
  %v638 = vunpack.c.l.b16 %v558
  %v639 = vunpack.c.h.b16 %v558
  %v640 = vunpack.c.l.b16 %v559
  %v641 = vunpack.c.h.b16 %v559
  %v642 = vunpack.c.l.b16 %v560
  %v643 = vunpack.c.h.b16 %v560
  %v644 = vunpack.c.l.b16 %v561
  %v645 = vunpack.c.h.b16 %v561
  %v646 = vunpack.c.l.b16 %v562
  %v647 = vunpack.c.h.b16 %v562
  %v648 = vunpack.c.l.b16 %v563
  %v649 = vunpack.c.h.b16 %v563
  %v650 = vunpack.c.l.b16 %v564
  %v651 = vunpack.c.h.b16 %v564
  %v652 = vunpack.c.l.b16 %v565
  %v653 = vunpack.c.h.b16 %v565
  %v654 = vunpack.c.l.b16 %v566
  %v655 = vunpack.c.h.b16 %v566
  %v656 = vunpack.c.l.b16 %v567
  %v657 = vunpack.c.h.b16 %v567
  %v658 = vunpack.c.l.b16 %v568
  %v659 = vunpack.c.h.b16 %v568
  %v660 = vunpack.c.l.b16 %v569
  %v661 = vunpack.c.h.b16 %v569
  %v662 = vunpack.c.l.b16 %v570
  %v663 = vunpack.c.h.b16 %v570
  %v664 = vunpack.c.l.b16 %v571
  %v665 = vunpack.c.h.b16 %v571
  %v666 = vunpack.c.l.b16 %v572
  %v667 = vunpack.c.h.b16 %v572
  %v668 = vunpack.c.l.b16 %v573
  %v669 = vunpack.c.h.b16 %v573
  %v670 = vunpack.c.l.b16 %v574
  %v671 = vunpack.c.h.b16 %v574
  %v672 = vunpack.c.l.b16 %v575
  %v673 = vunpack.c.h.b16 %v575
  %v674 = vpack.c.b16 %v626, %v610
  %v675 = vpack.c.b16 %v627, %v611
  %v676 = vpack.c.b16 %v628, %v612
  %v677 = vpack.c.b16 %v629, %v613
  %v678 = vpack.c.b16 %v630, %v614
  %v679 = vpack.c.b16 %v631, %v615
  %v680 = vpack.c.b16 %v632, %v616
  %v681 = vpack.c.b16 %v633, %v617
  %v682 = vpack.c.b16 %v634, %v618
  %v683 = vpack.c.b16 %v635, %v619
  %v684 = vpack.c.b16 %v636, %v620
  %v685 = vpack.c.b16 %v637, %v621
  %v686 = vpack.c.b16 %v638, %v622
  %v687 = vpack.c.b16 %v639, %v623
  %v688 = vpack.c.b16 %v640, %v624
  %v689 = vpack.c.b16 %v641, %v625
  %v690 = vpack.c.b16 %v658, %v642
  %v691 = vpack.c.b16 %v659, %v643
  %v692 = vpack.c.b16 %v660, %v644
  %v693 = vpack.c.b16 %v661, %v645
  %v694 = vpack.c.b16 %v662, %v646
  %v695 = vpack.c.b16 %v663, %v647
  %v696 = vpack.c.b16 %v664, %v648
  %v697 = vpack.c.b16 %v665, %v649
  %v698 = vpack.c.b16 %v666, %v650
  %v699 = vpack.c.b16 %v667, %v651
  %v700 = vpack.c.b16 %v668, %v652
  %v701 = vpack.c.b16 %v669, %v653
  %v702 = vpack.c.b16 %v670, %v654
  %v703 = vpack.c.b16 %v671, %v655
  %v704 = vpack.c.b16 %v672, %v656
  %v705 = vpack.c.b16 %v673, %v657
  %v739 = vsel %vm211, %v577, 0
  %741 = vmatprep.subr.bf16.mxu0 0
  %742 = vmatpush1.bf16.msra.mxu0 0
  %743 = vmatprep.subr.bf16.mxu0 0
  %744 = vmatpush1.bf16.msra.mxu0 0
  %745 = vmatprep.subr.bf16.mxu0 0
  %746 = vmatpush1.bf16.msra.mxu0 0
  %747 = vmatprep.subr.bf16.mxu0 0
  %748 = vmatpush1.bf16.msra.mxu0 0
  %749 = vmatprep.subr.bf16.mxu0 0
  %750 = vmatpush1.bf16.msra.mxu0 0
  %751 = vmatprep.subr.bf16.mxu0 0
  %752 = vmatpush1.bf16.msra.mxu0 0
  %753 = vmatprep.subr.bf16.mxu0 %v691
  %754 = vmatpush1.bf16.msra.mxu0 %v690
  %755 = vmatprep.subr.bf16.mxu0 %v675
  %756 = vmatpush1.bf16.msra.mxu0 %v674
  %757 = vmatprep.subr.bf16.mxu0 0
  %758 = vmatpush2.bf16.msra.mxu0 0
  %759 = vmatprep.subr.bf16.mxu0 0
  %760 = vmatpush2.bf16.msra.mxu0 0
  %761 = vmatprep.subr.bf16.mxu0 0
  %762 = vmatpush2.bf16.msra.mxu0 0
  %763 = vmatprep.subr.bf16.mxu0 0
  %764 = vmatpush2.bf16.msra.mxu0 0
  %765 = vmatprep.subr.bf16.mxu0 0
  %766 = vmatpush2.bf16.msra.mxu0 0
  %767 = vmatprep.subr.bf16.mxu0 0
  %768 = vmatpush2.bf16.msra.mxu0 0
  %769 = vmatprep.subr.bf16.mxu0 0
  %770 = vmatpush2.bf16.msra.mxu0 0
  %771 = vmatprep.subr.bf16.mxu0 0
  %772 = vmatpush2.bf16.msra.mxu0 0
  %773 = vmatprep.mubr.bf16.mxu0 0
  %774 = vmatmul.mubr.bf16.gmra.mxu0 %v739
  %v775 = vpop.f32.mrf.mxu0
  %v776 = vadd.f32 0.0, %v775
  %v777 = vpop.f32.mrf.mxu0
  %v778 = vadd.f32 0.0, %v777
  %v779 = vpop.f32.mrf.mxu0
  %v780 = vpop.f32.mrf.mxu0
  %781 = vdwg.mxu0
  %782 = vmatprep.subr.bf16.mxu0 0
  %783 = vmatpush1.bf16.msra.mxu0 0
  %784 = vmatprep.subr.bf16.mxu0 0
  %785 = vmatpush1.bf16.msra.mxu0 0
  %786 = vmatprep.subr.bf16.mxu0 0
  %787 = vmatpush1.bf16.msra.mxu0 0
  %788 = vmatprep.subr.bf16.mxu0 0
  %789 = vmatpush1.bf16.msra.mxu0 0
  %790 = vmatprep.subr.bf16.mxu0 0
  %791 = vmatpush1.bf16.msra.mxu0 0
  %792 = vmatprep.subr.bf16.mxu0 0
  %793 = vmatpush1.bf16.msra.mxu0 0
  %794 = vmatprep.subr.bf16.mxu0 %v693
  %795 = vmatpush1.bf16.msra.mxu0 %v692
  %796 = vmatprep.subr.bf16.mxu0 %v677
  %797 = vmatpush1.bf16.msra.mxu0 %v676
  %798 = vmatprep.subr.bf16.mxu0 0
  %799 = vmatpush2.bf16.msra.mxu0 0
  %800 = vmatprep.subr.bf16.mxu0 0
  %801 = vmatpush2.bf16.msra.mxu0 0
  %802 = vmatprep.subr.bf16.mxu0 0
  %803 = vmatpush2.bf16.msra.mxu0 0
  %804 = vmatprep.subr.bf16.mxu0 0
  %805 = vmatpush2.bf16.msra.mxu0 0
  %806 = vmatprep.subr.bf16.mxu0 0
  %807 = vmatpush2.bf16.msra.mxu0 0
  %808 = vmatprep.subr.bf16.mxu0 0
  %809 = vmatpush2.bf16.msra.mxu0 0
  %810 = vmatprep.subr.bf16.mxu0 0
  %811 = vmatpush2.bf16.msra.mxu0 0
  %812 = vmatprep.subr.bf16.mxu0 0
  %813 = vmatpush2.bf16.msra.mxu0 0
  %814 = vmatprep.mubr.bf16.mxu0 0
  %815 = vmatmul.mubr.bf16.gmra.mxu0 %v739
  %v816 = vpop.f32.mrf.mxu0
  %v817 = vadd.f32 0.0, %v816
  %v818 = vpop.f32.mrf.mxu0
  %v819 = vadd.f32 0.0, %v818
  %v820 = vpop.f32.mrf.mxu0
  %v821 = vpop.f32.mrf.mxu0
  %822 = vdwg.mxu0
  %823 = vmatprep.subr.bf16.mxu0 0
  %824 = vmatpush1.bf16.msra.mxu0 0
  %825 = vmatprep.subr.bf16.mxu0 0
  %826 = vmatpush1.bf16.msra.mxu0 0
  %827 = vmatprep.subr.bf16.mxu0 0
  %828 = vmatpush1.bf16.msra.mxu0 0
  %829 = vmatprep.subr.bf16.mxu0 0
  %830 = vmatpush1.bf16.msra.mxu0 0
  %831 = vmatprep.subr.bf16.mxu0 0
  %832 = vmatpush1.bf16.msra.mxu0 0
  %833 = vmatprep.subr.bf16.mxu0 0
  %834 = vmatpush1.bf16.msra.mxu0 0
  %835 = vmatprep.subr.bf16.mxu0 %v695
  %836 = vmatpush1.bf16.msra.mxu0 %v694
  %837 = vmatprep.subr.bf16.mxu0 %v679
  %838 = vmatpush1.bf16.msra.mxu0 %v678
  %839 = vmatprep.subr.bf16.mxu0 0
  %840 = vmatpush2.bf16.msra.mxu0 0
  %841 = vmatprep.subr.bf16.mxu0 0
  %842 = vmatpush2.bf16.msra.mxu0 0
  %843 = vmatprep.subr.bf16.mxu0 0
  %844 = vmatpush2.bf16.msra.mxu0 0
  %845 = vmatprep.subr.bf16.mxu0 0
  %846 = vmatpush2.bf16.msra.mxu0 0
  %847 = vmatprep.subr.bf16.mxu0 0
  %848 = vmatpush2.bf16.msra.mxu0 0
  %849 = vmatprep.subr.bf16.mxu0 0
  %850 = vmatpush2.bf16.msra.mxu0 0
  %851 = vmatprep.subr.bf16.mxu0 0
  %852 = vmatpush2.bf16.msra.mxu0 0
  %853 = vmatprep.subr.bf16.mxu0 0
  %854 = vmatpush2.bf16.msra.mxu0 0
  %855 = vmatprep.mubr.bf16.mxu0 0
  %856 = vmatmul.mubr.bf16.gmra.mxu0 %v739
  %v857 = vpop.f32.mrf.mxu0
  %v858 = vadd.f32 0.0, %v857
  %v859 = vpop.f32.mrf.mxu0
  %v860 = vadd.f32 0.0, %v859
  %v861 = vpop.f32.mrf.mxu0
  %v862 = vpop.f32.mrf.mxu0
  %863 = vdwg.mxu0
  %864 = vmatprep.subr.bf16.mxu0 0
  %865 = vmatpush1.bf16.msra.mxu0 0
  %866 = vmatprep.subr.bf16.mxu0 0
  %867 = vmatpush1.bf16.msra.mxu0 0
  %868 = vmatprep.subr.bf16.mxu0 0
  %869 = vmatpush1.bf16.msra.mxu0 0
  %870 = vmatprep.subr.bf16.mxu0 0
  %871 = vmatpush1.bf16.msra.mxu0 0
  %872 = vmatprep.subr.bf16.mxu0 0
  %873 = vmatpush1.bf16.msra.mxu0 0
  %874 = vmatprep.subr.bf16.mxu0 0
  %875 = vmatpush1.bf16.msra.mxu0 0
  %876 = vmatprep.subr.bf16.mxu0 %v697
  %877 = vmatpush1.bf16.msra.mxu0 %v696
  %878 = vmatprep.subr.bf16.mxu0 %v681
  %879 = vmatpush1.bf16.msra.mxu0 %v680
  %880 = vmatprep.subr.bf16.mxu0 0
  %881 = vmatpush2.bf16.msra.mxu0 0
  %882 = vmatprep.subr.bf16.mxu0 0
  %883 = vmatpush2.bf16.msra.mxu0 0
  %884 = vmatprep.subr.bf16.mxu0 0
  %885 = vmatpush2.bf16.msra.mxu0 0
  %886 = vmatprep.subr.bf16.mxu0 0
  %887 = vmatpush2.bf16.msra.mxu0 0
  %888 = vmatprep.subr.bf16.mxu0 0
  %889 = vmatpush2.bf16.msra.mxu0 0
  %890 = vmatprep.subr.bf16.mxu0 0
  %891 = vmatpush2.bf16.msra.mxu0 0
  %892 = vmatprep.subr.bf16.mxu0 0
  %893 = vmatpush2.bf16.msra.mxu0 0
  %894 = vmatprep.subr.bf16.mxu0 0
  %895 = vmatpush2.bf16.msra.mxu0 0
  %896 = vmatprep.mubr.bf16.mxu0 0
  %897 = vmatmul.mubr.bf16.gmra.mxu0 %v739
  %v898 = vpop.f32.mrf.mxu0
  %v899 = vadd.f32 0.0, %v898
  %v900 = vpop.f32.mrf.mxu0
  %v901 = vadd.f32 0.0, %v900
  %v902 = vpop.f32.mrf.mxu0
  %v903 = vpop.f32.mrf.mxu0
  %904 = vdwg.mxu0
  %905 = vmatprep.subr.bf16.mxu0 0
  %906 = vmatpush1.bf16.msra.mxu0 0
  %907 = vmatprep.subr.bf16.mxu0 0
  %908 = vmatpush1.bf16.msra.mxu0 0
  %909 = vmatprep.subr.bf16.mxu0 0
  %910 = vmatpush1.bf16.msra.mxu0 0
  %911 = vmatprep.subr.bf16.mxu0 0
  %912 = vmatpush1.bf16.msra.mxu0 0
  %913 = vmatprep.subr.bf16.mxu0 0
  %914 = vmatpush1.bf16.msra.mxu0 0
  %915 = vmatprep.subr.bf16.mxu0 0
  %916 = vmatpush1.bf16.msra.mxu0 0
  %917 = vmatprep.subr.bf16.mxu0 %v699
  %918 = vmatpush1.bf16.msra.mxu0 %v698
  %919 = vmatprep.subr.bf16.mxu0 %v683
  %920 = vmatpush1.bf16.msra.mxu0 %v682
  %921 = vmatprep.subr.bf16.mxu0 0
  %922 = vmatpush2.bf16.msra.mxu0 0
  %923 = vmatprep.subr.bf16.mxu0 0
  %924 = vmatpush2.bf16.msra.mxu0 0
  %925 = vmatprep.subr.bf16.mxu0 0
  %926 = vmatpush2.bf16.msra.mxu0 0
  %927 = vmatprep.subr.bf16.mxu0 0
  %928 = vmatpush2.bf16.msra.mxu0 0
  %929 = vmatprep.subr.bf16.mxu0 0
  %930 = vmatpush2.bf16.msra.mxu0 0
  %931 = vmatprep.subr.bf16.mxu0 0
  %932 = vmatpush2.bf16.msra.mxu0 0
  %933 = vmatprep.subr.bf16.mxu0 0
  %934 = vmatpush2.bf16.msra.mxu0 0
  %935 = vmatprep.subr.bf16.mxu0 0
  %936 = vmatpush2.bf16.msra.mxu0 0
  %937 = vmatprep.mubr.bf16.mxu0 0
  %938 = vmatmul.mubr.bf16.gmra.mxu0 %v739
  %v939 = vpop.f32.mrf.mxu0
  %v940 = vadd.f32 0.0, %v939
  %v941 = vpop.f32.mrf.mxu0
  %v942 = vadd.f32 0.0, %v941
  %v943 = vpop.f32.mrf.mxu0
  %v944 = vpop.f32.mrf.mxu0
  %945 = vdwg.mxu0
  %946 = vmatprep.subr.bf16.mxu0 0
  %947 = vmatpush1.bf16.msra.mxu0 0
  %948 = vmatprep.subr.bf16.mxu0 0
  %949 = vmatpush1.bf16.msra.mxu0 0
  %950 = vmatprep.subr.bf16.mxu0 0
  %951 = vmatpush1.bf16.msra.mxu0 0
  %952 = vmatprep.subr.bf16.mxu0 0
  %953 = vmatpush1.bf16.msra.mxu0 0
  %954 = vmatprep.subr.bf16.mxu0 0
  %955 = vmatpush1.bf16.msra.mxu0 0
  %956 = vmatprep.subr.bf16.mxu0 0
  %957 = vmatpush1.bf16.msra.mxu0 0
  %958 = vmatprep.subr.bf16.mxu0 %v701
  %959 = vmatpush1.bf16.msra.mxu0 %v700
  %960 = vmatprep.subr.bf16.mxu0 %v685
  %961 = vmatpush1.bf16.msra.mxu0 %v684
  %962 = vmatprep.subr.bf16.mxu0 0
  %963 = vmatpush2.bf16.msra.mxu0 0
  %964 = vmatprep.subr.bf16.mxu0 0
  %965 = vmatpush2.bf16.msra.mxu0 0
  %966 = vmatprep.subr.bf16.mxu0 0
  %967 = vmatpush2.bf16.msra.mxu0 0
  %968 = vmatprep.subr.bf16.mxu0 0
  %969 = vmatpush2.bf16.msra.mxu0 0
  %970 = vmatprep.subr.bf16.mxu0 0
  %971 = vmatpush2.bf16.msra.mxu0 0
  %972 = vmatprep.subr.bf16.mxu0 0
  %973 = vmatpush2.bf16.msra.mxu0 0
  %974 = vmatprep.subr.bf16.mxu0 0
  %975 = vmatpush2.bf16.msra.mxu0 0
  %976 = vmatprep.subr.bf16.mxu0 0
  %977 = vmatpush2.bf16.msra.mxu0 0
  %978 = vmatprep.mubr.bf16.mxu0 0
  %979 = vmatmul.mubr.bf16.gmra.mxu0 %v739
  %v980 = vpop.f32.mrf.mxu0
  %v981 = vadd.f32 0.0, %v980
  %v982 = vpop.f32.mrf.mxu0
  %v983 = vadd.f32 0.0, %v982
  %v984 = vpop.f32.mrf.mxu0
  %v985 = vpop.f32.mrf.mxu0
  %986 = vdwg.mxu0
  %987 = vmatprep.subr.bf16.mxu0 0
  %988 = vmatpush1.bf16.msra.mxu0 0
  %989 = vmatprep.subr.bf16.mxu0 0
  %990 = vmatpush1.bf16.msra.mxu0 0
  %991 = vmatprep.subr.bf16.mxu0 0
  %992 = vmatpush1.bf16.msra.mxu0 0
  %993 = vmatprep.subr.bf16.mxu0 0
  %994 = vmatpush1.bf16.msra.mxu0 0
  %995 = vmatprep.subr.bf16.mxu0 0
  %996 = vmatpush1.bf16.msra.mxu0 0
  %997 = vmatprep.subr.bf16.mxu0 0
  %998 = vmatpush1.bf16.msra.mxu0 0
  %999 = vmatprep.subr.bf16.mxu0 %v703
  %1000 = vmatpush1.bf16.msra.mxu0 %v702
  %1001 = vmatprep.subr.bf16.mxu0 %v687
  %1002 = vmatpush1.bf16.msra.mxu0 %v686
  %1003 = vmatprep.subr.bf16.mxu0 0
  %1004 = vmatpush2.bf16.msra.mxu0 0
  %1005 = vmatprep.subr.bf16.mxu0 0
  %1006 = vmatpush2.bf16.msra.mxu0 0
  %1007 = vmatprep.subr.bf16.mxu0 0
  %1008 = vmatpush2.bf16.msra.mxu0 0
  %1009 = vmatprep.subr.bf16.mxu0 0
  %1010 = vmatpush2.bf16.msra.mxu0 0
  %1011 = vmatprep.subr.bf16.mxu0 0
  %1012 = vmatpush2.bf16.msra.mxu0 0
  %1013 = vmatprep.subr.bf16.mxu0 0
  %1014 = vmatpush2.bf16.msra.mxu0 0
  %1015 = vmatprep.subr.bf16.mxu0 0
  %1016 = vmatpush2.bf16.msra.mxu0 0
  %1017 = vmatprep.subr.bf16.mxu0 0
  %1018 = vmatpush2.bf16.msra.mxu0 0
  %1019 = vmatprep.mubr.bf16.mxu0 0
  %1020 = vmatmul.mubr.bf16.gmra.mxu0 %v739
  %v1021 = vpop.f32.mrf.mxu0
  %v1022 = vadd.f32 0.0, %v1021
  %v1023 = vpop.f32.mrf.mxu0
  %v1024 = vadd.f32 0.0, %v1023
  %v1025 = vpop.f32.mrf.mxu0
  %v1026 = vpop.f32.mrf.mxu0
  %1027 = vdwg.mxu0
  %1028 = vmatprep.subr.bf16.mxu0 0
  %1029 = vmatpush1.bf16.msra.mxu0 0
  %1030 = vmatprep.subr.bf16.mxu0 0
  %1031 = vmatpush1.bf16.msra.mxu0 0
  %1032 = vmatprep.subr.bf16.mxu0 0
  %1033 = vmatpush1.bf16.msra.mxu0 0
  %1034 = vmatprep.subr.bf16.mxu0 0
  %1035 = vmatpush1.bf16.msra.mxu0 0
  %1036 = vmatprep.subr.bf16.mxu0 0
  %1037 = vmatpush1.bf16.msra.mxu0 0
  %1038 = vmatprep.subr.bf16.mxu0 0
  %1039 = vmatpush1.bf16.msra.mxu0 0
  %1040 = vmatprep.subr.bf16.mxu0 %v705
  %1041 = vmatpush1.bf16.msra.mxu0 %v704
  %1042 = vmatprep.subr.bf16.mxu0 %v689
  %1043 = vmatpush1.bf16.msra.mxu0 %v688
  %1044 = vmatprep.subr.bf16.mxu0 0
  %1045 = vmatpush2.bf16.msra.mxu0 0
  %1046 = vmatprep.subr.bf16.mxu0 0
  %1047 = vmatpush2.bf16.msra.mxu0 0
  %1048 = vmatprep.subr.bf16.mxu0 0
  %1049 = vmatpush2.bf16.msra.mxu0 0
  %1050 = vmatprep.subr.bf16.mxu0 0
  %1051 = vmatpush2.bf16.msra.mxu0 0
  %1052 = vmatprep.subr.bf16.mxu0 0
  %1053 = vmatpush2.bf16.msra.mxu0 0
  %1054 = vmatprep.subr.bf16.mxu0 0
  %1055 = vmatpush2.bf16.msra.mxu0 0
  %1056 = vmatprep.subr.bf16.mxu0 0
  %1057 = vmatpush2.bf16.msra.mxu0 0
  %1058 = vmatprep.subr.bf16.mxu0 0
  %1059 = vmatpush2.bf16.msra.mxu0 0
  %1060 = vmatprep.mubr.bf16.mxu0 0
  %1061 = vmatmul.mubr.bf16.gmra.mxu0 %v739
  %v1062 = vpop.f32.mrf.mxu0
  %v1063 = vadd.f32 0.0, %v1062
  %v1064 = vpop.f32.mrf.mxu0
  %v1065 = vadd.f32 0.0, %v1064
  %v1066 = vpop.f32.mrf.mxu0
  %v1067 = vpop.f32.mrf.mxu0
  %1068 = vdwg.mxu0
  %s1069 = scalar_lea.vmem %s0, 512
  %v1070 = vld [vmem:[%s1069] sm:$0xff]
  %v1071 = vld [vmem:[%s1069 + $0x8] sm:$0xff]
  %v1072 = vld [vmem:[%s1069 + $0x10] sm:$0xff]
  %v1073 = vld [vmem:[%s1069 + $0x18] sm:$0xff]
  %v1074 = vld [vmem:[%s1069 + $0x20] sm:$0xff]
  %v1075 = vld [vmem:[%s1069 + $0x28] sm:$0xff]
  %v1076 = vld [vmem:[%s1069 + $0x30] sm:$0xff]
  %v1077 = vld [vmem:[%s1069 + $0x38] sm:$0xff]
  %v1078 = vld [vmem:[%s1069 + $0x40] sm:$0xff]
  %v1079 = vld [vmem:[%s1069 + $0x48] sm:$0xff]
  %v1080 = vld [vmem:[%s1069 + $0x50] sm:$0xff]
  %v1081 = vld [vmem:[%s1069 + $0x58] sm:$0xff]
  %v1082 = vld [vmem:[%s1069 + $0x60] sm:$0xff]
  %v1083 = vld [vmem:[%s1069 + $0x68] sm:$0xff]
  %v1084 = vld [vmem:[%s1069 + $0x70] sm:$0xff]
  %v1085 = vld [vmem:[%s1069 + $0x78] sm:$0xff]
  %v1086 = vld [vmem:[%s1069 + $0x80] sm:$0xff]
  %v1087 = vld [vmem:[%s1069 + $0x88] sm:$0xff]
  %v1088 = vld [vmem:[%s1069 + $0x90] sm:$0xff]
  %v1089 = vld [vmem:[%s1069 + $0x98] sm:$0xff]
  %v1090 = vld [vmem:[%s1069 + $0xa0] sm:$0xff]
  %v1091 = vld [vmem:[%s1069 + $0xa8] sm:$0xff]
  %v1092 = vld [vmem:[%s1069 + $0xb0] sm:$0xff]
  %v1093 = vld [vmem:[%s1069 + $0xb8] sm:$0xff]
  %v1094 = vld [vmem:[%s1069 + $0xc0] sm:$0xff]
  %v1095 = vld [vmem:[%s1069 + $0xc8] sm:$0xff]
  %v1096 = vld [vmem:[%s1069 + $0xd0] sm:$0xff]
  %v1097 = vld [vmem:[%s1069 + $0xd8] sm:$0xff]
  %v1098 = vld [vmem:[%s1069 + $0xe0] sm:$0xff]
  %v1099 = vld [vmem:[%s1069 + $0xe8] sm:$0xff]
  %v1100 = vld [vmem:[%s1069 + $0xf0] sm:$0xff]
  %v1101 = vld [vmem:[%s1069 + $0xf8] sm:$0xff]
  %s1102 = scalar_lea.vmem %s1, 4
  %v1103 = vld [vmem:[%s1102] sm:$0x3]
  %v1136 = vunpack.c.l.b16 %v1070
  %v1137 = vunpack.c.h.b16 %v1070
  %v1138 = vunpack.c.l.b16 %v1071
  %v1139 = vunpack.c.h.b16 %v1071
  %v1140 = vunpack.c.l.b16 %v1072
  %v1141 = vunpack.c.h.b16 %v1072
  %v1142 = vunpack.c.l.b16 %v1073
  %v1143 = vunpack.c.h.b16 %v1073
  %v1144 = vunpack.c.l.b16 %v1074
  %v1145 = vunpack.c.h.b16 %v1074
  %v1146 = vunpack.c.l.b16 %v1075
  %v1147 = vunpack.c.h.b16 %v1075
  %v1148 = vunpack.c.l.b16 %v1076
  %v1149 = vunpack.c.h.b16 %v1076
  %v1150 = vunpack.c.l.b16 %v1077
  %v1151 = vunpack.c.h.b16 %v1077
  %v1152 = vunpack.c.l.b16 %v1078
  %v1153 = vunpack.c.h.b16 %v1078
  %v1154 = vunpack.c.l.b16 %v1079
  %v1155 = vunpack.c.h.b16 %v1079
  %v1156 = vunpack.c.l.b16 %v1080
  %v1157 = vunpack.c.h.b16 %v1080
  %v1158 = vunpack.c.l.b16 %v1081
  %v1159 = vunpack.c.h.b16 %v1081
  %v1160 = vunpack.c.l.b16 %v1082
  %v1161 = vunpack.c.h.b16 %v1082
  %v1162 = vunpack.c.l.b16 %v1083
  %v1163 = vunpack.c.h.b16 %v1083
  %v1164 = vunpack.c.l.b16 %v1084
  %v1165 = vunpack.c.h.b16 %v1084
  %v1166 = vunpack.c.l.b16 %v1085
  %v1167 = vunpack.c.h.b16 %v1085
  %v1168 = vunpack.c.l.b16 %v1086
  %v1169 = vunpack.c.h.b16 %v1086
  %v1170 = vunpack.c.l.b16 %v1087
  %v1171 = vunpack.c.h.b16 %v1087
  %v1172 = vunpack.c.l.b16 %v1088
  %v1173 = vunpack.c.h.b16 %v1088
  %v1174 = vunpack.c.l.b16 %v1089
  %v1175 = vunpack.c.h.b16 %v1089
  %v1176 = vunpack.c.l.b16 %v1090
  %v1177 = vunpack.c.h.b16 %v1090
  %v1178 = vunpack.c.l.b16 %v1091
  %v1179 = vunpack.c.h.b16 %v1091
  %v1180 = vunpack.c.l.b16 %v1092
  %v1181 = vunpack.c.h.b16 %v1092
  %v1182 = vunpack.c.l.b16 %v1093
  %v1183 = vunpack.c.h.b16 %v1093
  %v1184 = vunpack.c.l.b16 %v1094
  %v1185 = vunpack.c.h.b16 %v1094
  %v1186 = vunpack.c.l.b16 %v1095
  %v1187 = vunpack.c.h.b16 %v1095
  %v1188 = vunpack.c.l.b16 %v1096
  %v1189 = vunpack.c.h.b16 %v1096
  %v1190 = vunpack.c.l.b16 %v1097
  %v1191 = vunpack.c.h.b16 %v1097
  %v1192 = vunpack.c.l.b16 %v1098
  %v1193 = vunpack.c.h.b16 %v1098
  %v1194 = vunpack.c.l.b16 %v1099
  %v1195 = vunpack.c.h.b16 %v1099
  %v1196 = vunpack.c.l.b16 %v1100
  %v1197 = vunpack.c.h.b16 %v1100
  %v1198 = vunpack.c.l.b16 %v1101
  %v1199 = vunpack.c.h.b16 %v1101
  %v1200 = vpack.c.b16 %v1152, %v1136
  %v1201 = vpack.c.b16 %v1153, %v1137
  %v1202 = vpack.c.b16 %v1154, %v1138
  %v1203 = vpack.c.b16 %v1155, %v1139
  %v1204 = vpack.c.b16 %v1156, %v1140
  %v1205 = vpack.c.b16 %v1157, %v1141
  %v1206 = vpack.c.b16 %v1158, %v1142
  %v1207 = vpack.c.b16 %v1159, %v1143
  %v1208 = vpack.c.b16 %v1160, %v1144
  %v1209 = vpack.c.b16 %v1161, %v1145
  %v1210 = vpack.c.b16 %v1162, %v1146
  %v1211 = vpack.c.b16 %v1163, %v1147
  %v1212 = vpack.c.b16 %v1164, %v1148
  %v1213 = vpack.c.b16 %v1165, %v1149
  %v1214 = vpack.c.b16 %v1166, %v1150
  %v1215 = vpack.c.b16 %v1167, %v1151
  %v1216 = vpack.c.b16 %v1184, %v1168
  %v1217 = vpack.c.b16 %v1185, %v1169
  %v1218 = vpack.c.b16 %v1186, %v1170
  %v1219 = vpack.c.b16 %v1187, %v1171
  %v1220 = vpack.c.b16 %v1188, %v1172
  %v1221 = vpack.c.b16 %v1189, %v1173
  %v1222 = vpack.c.b16 %v1190, %v1174
  %v1223 = vpack.c.b16 %v1191, %v1175
  %v1224 = vpack.c.b16 %v1192, %v1176
  %v1225 = vpack.c.b16 %v1193, %v1177
  %v1226 = vpack.c.b16 %v1194, %v1178
  %v1227 = vpack.c.b16 %v1195, %v1179
  %v1228 = vpack.c.b16 %v1196, %v1180
  %v1229 = vpack.c.b16 %v1197, %v1181
  %v1230 = vpack.c.b16 %v1198, %v1182
  %v1231 = vpack.c.b16 %v1199, %v1183
  %v1265 = vsel %vm211, %v1103, 0
  %1267 = vmatprep.subr.bf16.mxu0 0
  %1268 = vmatpush1.bf16.msra.mxu0 0
  %1269 = vmatprep.subr.bf16.mxu0 0
  %1270 = vmatpush1.bf16.msra.mxu0 0
  %1271 = vmatprep.subr.bf16.mxu0 0
  %1272 = vmatpush1.bf16.msra.mxu0 0
  %1273 = vmatprep.subr.bf16.mxu0 0
  %1274 = vmatpush1.bf16.msra.mxu0 0
  %1275 = vmatprep.subr.bf16.mxu0 0
  %1276 = vmatpush1.bf16.msra.mxu0 0
  %1277 = vmatprep.subr.bf16.mxu0 0
  %1278 = vmatpush1.bf16.msra.mxu0 0
  %1279 = vmatprep.subr.bf16.mxu0 %v1217
  %1280 = vmatpush1.bf16.msra.mxu0 %v1216
  %1281 = vmatprep.subr.bf16.mxu0 %v1201
  %1282 = vmatpush1.bf16.msra.mxu0 %v1200
  %1283 = vmatprep.subr.bf16.mxu0 0
  %1284 = vmatpush2.bf16.msra.mxu0 0
  %1285 = vmatprep.subr.bf16.mxu0 0
  %1286 = vmatpush2.bf16.msra.mxu0 0
  %1287 = vmatprep.subr.bf16.mxu0 0
  %1288 = vmatpush2.bf16.msra.mxu0 0
  %1289 = vmatprep.subr.bf16.mxu0 0
  %1290 = vmatpush2.bf16.msra.mxu0 0
  %1291 = vmatprep.subr.bf16.mxu0 0
  %1292 = vmatpush2.bf16.msra.mxu0 0
  %1293 = vmatprep.subr.bf16.mxu0 0
  %1294 = vmatpush2.bf16.msra.mxu0 0
  %1295 = vmatprep.subr.bf16.mxu0 0
  %1296 = vmatpush2.bf16.msra.mxu0 0
  %1297 = vmatprep.subr.bf16.mxu0 0
  %1298 = vmatpush2.bf16.msra.mxu0 0
  %1299 = vmatprep.mubr.bf16.mxu0 0
  %1300 = vmatmul.mubr.bf16.gmra.mxu0 %v1265
  %v1301 = vpop.f32.mrf.mxu0
  %v1302 = vadd.f32 0.0, %v1301
  %v1303 = vpop.f32.mrf.mxu0
  %v1304 = vadd.f32 0.0, %v1303
  %v1305 = vpop.f32.mrf.mxu0
  %v1306 = vpop.f32.mrf.mxu0
  %1307 = vdwg.mxu0
  %1308 = vmatprep.subr.bf16.mxu0 0
  %1309 = vmatpush1.bf16.msra.mxu0 0
  %1310 = vmatprep.subr.bf16.mxu0 0
  %1311 = vmatpush1.bf16.msra.mxu0 0
  %1312 = vmatprep.subr.bf16.mxu0 0
  %1313 = vmatpush1.bf16.msra.mxu0 0
  %1314 = vmatprep.subr.bf16.mxu0 0
  %1315 = vmatpush1.bf16.msra.mxu0 0
  %1316 = vmatprep.subr.bf16.mxu0 0
  %1317 = vmatpush1.bf16.msra.mxu0 0
  %1318 = vmatprep.subr.bf16.mxu0 0
  %1319 = vmatpush1.bf16.msra.mxu0 0
  %1320 = vmatprep.subr.bf16.mxu0 %v1219
  %1321 = vmatpush1.bf16.msra.mxu0 %v1218
  %1322 = vmatprep.subr.bf16.mxu0 %v1203
  %1323 = vmatpush1.bf16.msra.mxu0 %v1202
  %1324 = vmatprep.subr.bf16.mxu0 0
  %1325 = vmatpush2.bf16.msra.mxu0 0
  %1326 = vmatprep.subr.bf16.mxu0 0
  %1327 = vmatpush2.bf16.msra.mxu0 0
  %1328 = vmatprep.subr.bf16.mxu0 0
  %1329 = vmatpush2.bf16.msra.mxu0 0
  %1330 = vmatprep.subr.bf16.mxu0 0
  %1331 = vmatpush2.bf16.msra.mxu0 0
  %1332 = vmatprep.subr.bf16.mxu0 0
  %1333 = vmatpush2.bf16.msra.mxu0 0
  %1334 = vmatprep.subr.bf16.mxu0 0
  %1335 = vmatpush2.bf16.msra.mxu0 0
  %1336 = vmatprep.subr.bf16.mxu0 0
  %1337 = vmatpush2.bf16.msra.mxu0 0
  %1338 = vmatprep.subr.bf16.mxu0 0
  %1339 = vmatpush2.bf16.msra.mxu0 0
  %1340 = vmatprep.mubr.bf16.mxu0 0
  %1341 = vmatmul.mubr.bf16.gmra.mxu0 %v1265
  %v1342 = vpop.f32.mrf.mxu0
  %v1343 = vadd.f32 0.0, %v1342
  %v1344 = vpop.f32.mrf.mxu0
  %v1345 = vadd.f32 0.0, %v1344
  %v1346 = vpop.f32.mrf.mxu0
  %v1347 = vpop.f32.mrf.mxu0
  %1348 = vdwg.mxu0
  %1349 = vmatprep.subr.bf16.mxu0 0
  %1350 = vmatpush1.bf16.msra.mxu0 0
  %1351 = vmatprep.subr.bf16.mxu0 0
  %1352 = vmatpush1.bf16.msra.mxu0 0
  %1353 = vmatprep.subr.bf16.mxu0 0
  %1354 = vmatpush1.bf16.msra.mxu0 0
  %1355 = vmatprep.subr.bf16.mxu0 0
  %1356 = vmatpush1.bf16.msra.mxu0 0
  %1357 = vmatprep.subr.bf16.mxu0 0
  %1358 = vmatpush1.bf16.msra.mxu0 0
  %1359 = vmatprep.subr.bf16.mxu0 0
  %1360 = vmatpush1.bf16.msra.mxu0 0
  %1361 = vmatprep.subr.bf16.mxu0 %v1221
  %1362 = vmatpush1.bf16.msra.mxu0 %v1220
  %1363 = vmatprep.subr.bf16.mxu0 %v1205
  %1364 = vmatpush1.bf16.msra.mxu0 %v1204
  %1365 = vmatprep.subr.bf16.mxu0 0
  %1366 = vmatpush2.bf16.msra.mxu0 0
  %1367 = vmatprep.subr.bf16.mxu0 0
  %1368 = vmatpush2.bf16.msra.mxu0 0
  %1369 = vmatprep.subr.bf16.mxu0 0
  %1370 = vmatpush2.bf16.msra.mxu0 0
  %1371 = vmatprep.subr.bf16.mxu0 0
  %1372 = vmatpush2.bf16.msra.mxu0 0
  %1373 = vmatprep.subr.bf16.mxu0 0
  %1374 = vmatpush2.bf16.msra.mxu0 0
  %1375 = vmatprep.subr.bf16.mxu0 0
  %1376 = vmatpush2.bf16.msra.mxu0 0
  %1377 = vmatprep.subr.bf16.mxu0 0
  %1378 = vmatpush2.bf16.msra.mxu0 0
  %1379 = vmatprep.subr.bf16.mxu0 0
  %1380 = vmatpush2.bf16.msra.mxu0 0
  %1381 = vmatprep.mubr.bf16.mxu0 0
  %1382 = vmatmul.mubr.bf16.gmra.mxu0 %v1265
  %v1383 = vpop.f32.mrf.mxu0
  %v1384 = vadd.f32 0.0, %v1383
  %v1385 = vpop.f32.mrf.mxu0
  %v1386 = vadd.f32 0.0, %v1385
  %v1387 = vpop.f32.mrf.mxu0
  %v1388 = vpop.f32.mrf.mxu0
  %1389 = vdwg.mxu0
  %1390 = vmatprep.subr.bf16.mxu0 0
  %1391 = vmatpush1.bf16.msra.mxu0 0
  %1392 = vmatprep.subr.bf16.mxu0 0
  %1393 = vmatpush1.bf16.msra.mxu0 0
  %1394 = vmatprep.subr.bf16.mxu0 0
  %1395 = vmatpush1.bf16.msra.mxu0 0
  %1396 = vmatprep.subr.bf16.mxu0 0
  %1397 = vmatpush1.bf16.msra.mxu0 0
  %1398 = vmatprep.subr.bf16.mxu0 0
  %1399 = vmatpush1.bf16.msra.mxu0 0
  %1400 = vmatprep.subr.bf16.mxu0 0
  %1401 = vmatpush1.bf16.msra.mxu0 0
  %1402 = vmatprep.subr.bf16.mxu0 %v1223
  %1403 = vmatpush1.bf16.msra.mxu0 %v1222
  %1404 = vmatprep.subr.bf16.mxu0 %v1207
  %1405 = vmatpush1.bf16.msra.mxu0 %v1206
  %1406 = vmatprep.subr.bf16.mxu0 0
  %1407 = vmatpush2.bf16.msra.mxu0 0
  %1408 = vmatprep.subr.bf16.mxu0 0
  %1409 = vmatpush2.bf16.msra.mxu0 0
  %1410 = vmatprep.subr.bf16.mxu0 0
  %1411 = vmatpush2.bf16.msra.mxu0 0
  %1412 = vmatprep.subr.bf16.mxu0 0
  %1413 = vmatpush2.bf16.msra.mxu0 0
  %1414 = vmatprep.subr.bf16.mxu0 0
  %1415 = vmatpush2.bf16.msra.mxu0 0
  %1416 = vmatprep.subr.bf16.mxu0 0
  %1417 = vmatpush2.bf16.msra.mxu0 0
  %1418 = vmatprep.subr.bf16.mxu0 0
  %1419 = vmatpush2.bf16.msra.mxu0 0
  %1420 = vmatprep.subr.bf16.mxu0 0
  %1421 = vmatpush2.bf16.msra.mxu0 0
  %1422 = vmatprep.mubr.bf16.mxu0 0
  %1423 = vmatmul.mubr.bf16.gmra.mxu0 %v1265
  %v1424 = vpop.f32.mrf.mxu0
  %v1425 = vadd.f32 0.0, %v1424
  %v1426 = vpop.f32.mrf.mxu0
  %v1427 = vadd.f32 0.0, %v1426
  %v1428 = vpop.f32.mrf.mxu0
  %v1429 = vpop.f32.mrf.mxu0
  %1430 = vdwg.mxu0
  %1431 = vmatprep.subr.bf16.mxu0 0
  %1432 = vmatpush1.bf16.msra.mxu0 0
  %1433 = vmatprep.subr.bf16.mxu0 0
  %1434 = vmatpush1.bf16.msra.mxu0 0
  %1435 = vmatprep.subr.bf16.mxu0 0
  %1436 = vmatpush1.bf16.msra.mxu0 0
  %1437 = vmatprep.subr.bf16.mxu0 0
  %1438 = vmatpush1.bf16.msra.mxu0 0
  %1439 = vmatprep.subr.bf16.mxu0 0
  %1440 = vmatpush1.bf16.msra.mxu0 0
  %1441 = vmatprep.subr.bf16.mxu0 0
  %1442 = vmatpush1.bf16.msra.mxu0 0
  %1443 = vmatprep.subr.bf16.mxu0 %v1225
  %1444 = vmatpush1.bf16.msra.mxu0 %v1224
  %1445 = vmatprep.subr.bf16.mxu0 %v1209
  %1446 = vmatpush1.bf16.msra.mxu0 %v1208
  %1447 = vmatprep.subr.bf16.mxu0 0
  %1448 = vmatpush2.bf16.msra.mxu0 0
  %1449 = vmatprep.subr.bf16.mxu0 0
  %1450 = vmatpush2.bf16.msra.mxu0 0
  %1451 = vmatprep.subr.bf16.mxu0 0
  %1452 = vmatpush2.bf16.msra.mxu0 0
  %1453 = vmatprep.subr.bf16.mxu0 0
  %1454 = vmatpush2.bf16.msra.mxu0 0
  %1455 = vmatprep.subr.bf16.mxu0 0
  %1456 = vmatpush2.bf16.msra.mxu0 0
  %1457 = vmatprep.subr.bf16.mxu0 0
  %1458 = vmatpush2.bf16.msra.mxu0 0
  %1459 = vmatprep.subr.bf16.mxu0 0
  %1460 = vmatpush2.bf16.msra.mxu0 0
  %1461 = vmatprep.subr.bf16.mxu0 0
  %1462 = vmatpush2.bf16.msra.mxu0 0
  %1463 = vmatprep.mubr.bf16.mxu0 0
  %1464 = vmatmul.mubr.bf16.gmra.mxu0 %v1265
  %v1465 = vpop.f32.mrf.mxu0
  %v1466 = vadd.f32 0.0, %v1465
  %v1467 = vpop.f32.mrf.mxu0
  %v1468 = vadd.f32 0.0, %v1467
  %v1469 = vpop.f32.mrf.mxu0
  %v1470 = vpop.f32.mrf.mxu0
  %1471 = vdwg.mxu0
  %1472 = vmatprep.subr.bf16.mxu0 0
  %1473 = vmatpush1.bf16.msra.mxu0 0
  %1474 = vmatprep.subr.bf16.mxu0 0
  %1475 = vmatpush1.bf16.msra.mxu0 0
  %1476 = vmatprep.subr.bf16.mxu0 0
  %1477 = vmatpush1.bf16.msra.mxu0 0
  %1478 = vmatprep.subr.bf16.mxu0 0
  %1479 = vmatpush1.bf16.msra.mxu0 0
  %1480 = vmatprep.subr.bf16.mxu0 0
  %1481 = vmatpush1.bf16.msra.mxu0 0
  %1482 = vmatprep.subr.bf16.mxu0 0
  %1483 = vmatpush1.bf16.msra.mxu0 0
  %1484 = vmatprep.subr.bf16.mxu0 %v1227
  %1485 = vmatpush1.bf16.msra.mxu0 %v1226
  %1486 = vmatprep.subr.bf16.mxu0 %v1211
  %1487 = vmatpush1.bf16.msra.mxu0 %v1210
  %1488 = vmatprep.subr.bf16.mxu0 0
  %1489 = vmatpush2.bf16.msra.mxu0 0
  %1490 = vmatprep.subr.bf16.mxu0 0
  %1491 = vmatpush2.bf16.msra.mxu0 0
  %1492 = vmatprep.subr.bf16.mxu0 0
  %1493 = vmatpush2.bf16.msra.mxu0 0
  %1494 = vmatprep.subr.bf16.mxu0 0
  %1495 = vmatpush2.bf16.msra.mxu0 0
  %1496 = vmatprep.subr.bf16.mxu0 0
  %1497 = vmatpush2.bf16.msra.mxu0 0
  %1498 = vmatprep.subr.bf16.mxu0 0
  %1499 = vmatpush2.bf16.msra.mxu0 0
  %1500 = vmatprep.subr.bf16.mxu0 0
  %1501 = vmatpush2.bf16.msra.mxu0 0
  %1502 = vmatprep.subr.bf16.mxu0 0
  %1503 = vmatpush2.bf16.msra.mxu0 0
  %1504 = vmatprep.mubr.bf16.mxu0 0
  %1505 = vmatmul.mubr.bf16.gmra.mxu0 %v1265
  %v1506 = vpop.f32.mrf.mxu0
  %v1507 = vadd.f32 0.0, %v1506
  %v1508 = vpop.f32.mrf.mxu0
  %v1509 = vadd.f32 0.0, %v1508
  %v1510 = vpop.f32.mrf.mxu0
  %v1511 = vpop.f32.mrf.mxu0
  %1512 = vdwg.mxu0
  %1513 = vmatprep.subr.bf16.mxu0 0
  %1514 = vmatpush1.bf16.msra.mxu0 0
  %1515 = vmatprep.subr.bf16.mxu0 0
  %1516 = vmatpush1.bf16.msra.mxu0 0
  %1517 = vmatprep.subr.bf16.mxu0 0
  %1518 = vmatpush1.bf16.msra.mxu0 0
  %1519 = vmatprep.subr.bf16.mxu0 0
  %1520 = vmatpush1.bf16.msra.mxu0 0
  %1521 = vmatprep.subr.bf16.mxu0 0
  %1522 = vmatpush1.bf16.msra.mxu0 0
  %1523 = vmatprep.subr.bf16.mxu0 0
  %1524 = vmatpush1.bf16.msra.mxu0 0
  %1525 = vmatprep.subr.bf16.mxu0 %v1229
  %1526 = vmatpush1.bf16.msra.mxu0 %v1228
  %1527 = vmatprep.subr.bf16.mxu0 %v1213
  %1528 = vmatpush1.bf16.msra.mxu0 %v1212
  %1529 = vmatprep.subr.bf16.mxu0 0
  %1530 = vmatpush2.bf16.msra.mxu0 0
  %1531 = vmatprep.subr.bf16.mxu0 0
  %1532 = vmatpush2.bf16.msra.mxu0 0
  %1533 = vmatprep.subr.bf16.mxu0 0
  %1534 = vmatpush2.bf16.msra.mxu0 0
  %1535 = vmatprep.subr.bf16.mxu0 0
  %1536 = vmatpush2.bf16.msra.mxu0 0
  %1537 = vmatprep.subr.bf16.mxu0 0
  %1538 = vmatpush2.bf16.msra.mxu0 0
  %1539 = vmatprep.subr.bf16.mxu0 0
  %1540 = vmatpush2.bf16.msra.mxu0 0
  %1541 = vmatprep.subr.bf16.mxu0 0
  %1542 = vmatpush2.bf16.msra.mxu0 0
  %1543 = vmatprep.subr.bf16.mxu0 0
  %1544 = vmatpush2.bf16.msra.mxu0 0
  %1545 = vmatprep.mubr.bf16.mxu0 0
  %1546 = vmatmul.mubr.bf16.gmra.mxu0 %v1265
  %v1547 = vpop.f32.mrf.mxu0
  %v1548 = vadd.f32 0.0, %v1547
  %v1549 = vpop.f32.mrf.mxu0
  %v1550 = vadd.f32 0.0, %v1549
  %v1551 = vpop.f32.mrf.mxu0
  %v1552 = vpop.f32.mrf.mxu0
  %1553 = vdwg.mxu0
  %1554 = vmatprep.subr.bf16.mxu0 0
  %1555 = vmatpush1.bf16.msra.mxu0 0
  %1556 = vmatprep.subr.bf16.mxu0 0
  %1557 = vmatpush1.bf16.msra.mxu0 0
  %1558 = vmatprep.subr.bf16.mxu0 0
  %1559 = vmatpush1.bf16.msra.mxu0 0
  %1560 = vmatprep.subr.bf16.mxu0 0
  %1561 = vmatpush1.bf16.msra.mxu0 0
  %1562 = vmatprep.subr.bf16.mxu0 0
  %1563 = vmatpush1.bf16.msra.mxu0 0
  %1564 = vmatprep.subr.bf16.mxu0 0
  %1565 = vmatpush1.bf16.msra.mxu0 0
  %1566 = vmatprep.subr.bf16.mxu0 %v1231
  %1567 = vmatpush1.bf16.msra.mxu0 %v1230
  %1568 = vmatprep.subr.bf16.mxu0 %v1215
  %1569 = vmatpush1.bf16.msra.mxu0 %v1214
  %1570 = vmatprep.subr.bf16.mxu0 0
  %1571 = vmatpush2.bf16.msra.mxu0 0
  %1572 = vmatprep.subr.bf16.mxu0 0
  %1573 = vmatpush2.bf16.msra.mxu0 0
  %1574 = vmatprep.subr.bf16.mxu0 0
  %1575 = vmatpush2.bf16.msra.mxu0 0
  %1576 = vmatprep.subr.bf16.mxu0 0
  %1577 = vmatpush2.bf16.msra.mxu0 0
  %1578 = vmatprep.subr.bf16.mxu0 0
  %1579 = vmatpush2.bf16.msra.mxu0 0
  %1580 = vmatprep.subr.bf16.mxu0 0
  %1581 = vmatpush2.bf16.msra.mxu0 0
  %1582 = vmatprep.subr.bf16.mxu0 0
  %1583 = vmatpush2.bf16.msra.mxu0 0
  %1584 = vmatprep.subr.bf16.mxu0 0
  %1585 = vmatpush2.bf16.msra.mxu0 0
  %1586 = vmatprep.mubr.bf16.mxu0 0
  %1587 = vmatmul.mubr.bf16.gmra.mxu0 %v1265
  %v1588 = vpop.f32.mrf.mxu0
  %v1589 = vadd.f32 0.0, %v1588
  %v1590 = vpop.f32.mrf.mxu0
  %v1591 = vadd.f32 0.0, %v1590
  %v1592 = vpop.f32.mrf.mxu0
  %v1593 = vpop.f32.mrf.mxu0
  %1594 = vdwg.mxu0
  %s1595 = scalar_lea.vmem %s0, 768
  %v1596 = vld [vmem:[%s1595] sm:$0xff]
  %v1597 = vld [vmem:[%s1595 + $0x8] sm:$0xff]
  %v1598 = vld [vmem:[%s1595 + $0x10] sm:$0xff]
  %v1599 = vld [vmem:[%s1595 + $0x18] sm:$0xff]
  %v1600 = vld [vmem:[%s1595 + $0x20] sm:$0xff]
  %v1601 = vld [vmem:[%s1595 + $0x28] sm:$0xff]
  %v1602 = vld [vmem:[%s1595 + $0x30] sm:$0xff]
  %v1603 = vld [vmem:[%s1595 + $0x38] sm:$0xff]
  %v1604 = vld [vmem:[%s1595 + $0x40] sm:$0xff]
  %v1605 = vld [vmem:[%s1595 + $0x48] sm:$0xff]
  %v1606 = vld [vmem:[%s1595 + $0x50] sm:$0xff]
  %v1607 = vld [vmem:[%s1595 + $0x58] sm:$0xff]
  %v1608 = vld [vmem:[%s1595 + $0x60] sm:$0xff]
  %v1609 = vld [vmem:[%s1595 + $0x68] sm:$0xff]
  %v1610 = vld [vmem:[%s1595 + $0x70] sm:$0xff]
  %v1611 = vld [vmem:[%s1595 + $0x78] sm:$0xff]
  %v1612 = vld [vmem:[%s1595 + $0x80] sm:$0xff]
  %v1613 = vld [vmem:[%s1595 + $0x88] sm:$0xff]
  %v1614 = vld [vmem:[%s1595 + $0x90] sm:$0xff]
  %v1615 = vld [vmem:[%s1595 + $0x98] sm:$0xff]
  %v1616 = vld [vmem:[%s1595 + $0xa0] sm:$0xff]
  %v1617 = vld [vmem:[%s1595 + $0xa8] sm:$0xff]
  %v1618 = vld [vmem:[%s1595 + $0xb0] sm:$0xff]
  %v1619 = vld [vmem:[%s1595 + $0xb8] sm:$0xff]
  %v1620 = vld [vmem:[%s1595 + $0xc0] sm:$0xff]
  %v1621 = vld [vmem:[%s1595 + $0xc8] sm:$0xff]
  %v1622 = vld [vmem:[%s1595 + $0xd0] sm:$0xff]
  %v1623 = vld [vmem:[%s1595 + $0xd8] sm:$0xff]
  %v1624 = vld [vmem:[%s1595 + $0xe0] sm:$0xff]
  %v1625 = vld [vmem:[%s1595 + $0xe8] sm:$0xff]
  %v1626 = vld [vmem:[%s1595 + $0xf0] sm:$0xff]
  %v1627 = vld [vmem:[%s1595 + $0xf8] sm:$0xff]
  %s1628 = scalar_lea.vmem %s1, 6
  %v1629 = vld [vmem:[%s1628] sm:$0x3]
  %v1662 = vunpack.c.l.b16 %v1596
  %v1663 = vunpack.c.h.b16 %v1596
  %v1664 = vunpack.c.l.b16 %v1597
  %v1665 = vunpack.c.h.b16 %v1597
  %v1666 = vunpack.c.l.b16 %v1598
  %v1667 = vunpack.c.h.b16 %v1598
  %v1668 = vunpack.c.l.b16 %v1599
  %v1669 = vunpack.c.h.b16 %v1599
  %v1670 = vunpack.c.l.b16 %v1600
  %v1671 = vunpack.c.h.b16 %v1600
  %v1672 = vunpack.c.l.b16 %v1601
  %v1673 = vunpack.c.h.b16 %v1601
  %v1674 = vunpack.c.l.b16 %v1602
  %v1675 = vunpack.c.h.b16 %v1602
  %v1676 = vunpack.c.l.b16 %v1603
  %v1677 = vunpack.c.h.b16 %v1603
  %v1678 = vunpack.c.l.b16 %v1604
  %v1679 = vunpack.c.h.b16 %v1604
  %v1680 = vunpack.c.l.b16 %v1605
  %v1681 = vunpack.c.h.b16 %v1605
  %v1682 = vunpack.c.l.b16 %v1606
  %v1683 = vunpack.c.h.b16 %v1606
  %v1684 = vunpack.c.l.b16 %v1607
  %v1685 = vunpack.c.h.b16 %v1607
  %v1686 = vunpack.c.l.b16 %v1608
  %v1687 = vunpack.c.h.b16 %v1608
  %v1688 = vunpack.c.l.b16 %v1609
  %v1689 = vunpack.c.h.b16 %v1609
  %v1690 = vunpack.c.l.b16 %v1610
  %v1691 = vunpack.c.h.b16 %v1610
  %v1692 = vunpack.c.l.b16 %v1611
  %v1693 = vunpack.c.h.b16 %v1611
  %v1694 = vunpack.c.l.b16 %v1612
  %v1695 = vunpack.c.h.b16 %v1612
  %v1696 = vunpack.c.l.b16 %v1613
  %v1697 = vunpack.c.h.b16 %v1613
  %v1698 = vunpack.c.l.b16 %v1614
  %v1699 = vunpack.c.h.b16 %v1614
  %v1700 = vunpack.c.l.b16 %v1615
  %v1701 = vunpack.c.h.b16 %v1615
  %v1702 = vunpack.c.l.b16 %v1616
  %v1703 = vunpack.c.h.b16 %v1616
  %v1704 = vunpack.c.l.b16 %v1617
  %v1705 = vunpack.c.h.b16 %v1617
  %v1706 = vunpack.c.l.b16 %v1618
  %v1707 = vunpack.c.h.b16 %v1618
  %v1708 = vunpack.c.l.b16 %v1619
  %v1709 = vunpack.c.h.b16 %v1619
  %v1710 = vunpack.c.l.b16 %v1620
  %v1711 = vunpack.c.h.b16 %v1620
  %v1712 = vunpack.c.l.b16 %v1621
  %v1713 = vunpack.c.h.b16 %v1621
  %v1714 = vunpack.c.l.b16 %v1622
  %v1715 = vunpack.c.h.b16 %v1622
  %v1716 = vunpack.c.l.b16 %v1623
  %v1717 = vunpack.c.h.b16 %v1623
  %v1718 = vunpack.c.l.b16 %v1624
  %v1719 = vunpack.c.h.b16 %v1624
  %v1720 = vunpack.c.l.b16 %v1625
  %v1721 = vunpack.c.h.b16 %v1625
  %v1722 = vunpack.c.l.b16 %v1626
  %v1723 = vunpack.c.h.b16 %v1626
  %v1724 = vunpack.c.l.b16 %v1627
  %v1725 = vunpack.c.h.b16 %v1627
  %v1726 = vpack.c.b16 %v1678, %v1662
  %v1727 = vpack.c.b16 %v1679, %v1663
  %v1728 = vpack.c.b16 %v1680, %v1664
  %v1729 = vpack.c.b16 %v1681, %v1665
  %v1730 = vpack.c.b16 %v1682, %v1666
  %v1731 = vpack.c.b16 %v1683, %v1667
  %v1732 = vpack.c.b16 %v1684, %v1668
  %v1733 = vpack.c.b16 %v1685, %v1669
  %v1734 = vpack.c.b16 %v1686, %v1670
  %v1735 = vpack.c.b16 %v1687, %v1671
  %v1736 = vpack.c.b16 %v1688, %v1672
  %v1737 = vpack.c.b16 %v1689, %v1673
  %v1738 = vpack.c.b16 %v1690, %v1674
  %v1739 = vpack.c.b16 %v1691, %v1675
  %v1740 = vpack.c.b16 %v1692, %v1676
  %v1741 = vpack.c.b16 %v1693, %v1677
  %v1742 = vpack.c.b16 %v1710, %v1694
  %v1743 = vpack.c.b16 %v1711, %v1695
  %v1744 = vpack.c.b16 %v1712, %v1696
  %v1745 = vpack.c.b16 %v1713, %v1697
  %v1746 = vpack.c.b16 %v1714, %v1698
  %v1747 = vpack.c.b16 %v1715, %v1699
  %v1748 = vpack.c.b16 %v1716, %v1700
  %v1749 = vpack.c.b16 %v1717, %v1701
  %v1750 = vpack.c.b16 %v1718, %v1702
  %v1751 = vpack.c.b16 %v1719, %v1703
  %v1752 = vpack.c.b16 %v1720, %v1704
  %v1753 = vpack.c.b16 %v1721, %v1705
  %v1754 = vpack.c.b16 %v1722, %v1706
  %v1755 = vpack.c.b16 %v1723, %v1707
  %v1756 = vpack.c.b16 %v1724, %v1708
  %v1757 = vpack.c.b16 %v1725, %v1709
  %v1791 = vsel %vm211, %v1629, 0
  %1793 = vmatprep.subr.bf16.mxu0 0
  %1794 = vmatpush1.bf16.msra.mxu0 0
  %1795 = vmatprep.subr.bf16.mxu0 0
  %1796 = vmatpush1.bf16.msra.mxu0 0
  %1797 = vmatprep.subr.bf16.mxu0 0
  %1798 = vmatpush1.bf16.msra.mxu0 0
  %1799 = vmatprep.subr.bf16.mxu0 0
  %1800 = vmatpush1.bf16.msra.mxu0 0
  %1801 = vmatprep.subr.bf16.mxu0 0
  %1802 = vmatpush1.bf16.msra.mxu0 0
  %1803 = vmatprep.subr.bf16.mxu0 0
  %1804 = vmatpush1.bf16.msra.mxu0 0
  %1805 = vmatprep.subr.bf16.mxu0 %v1743
  %1806 = vmatpush1.bf16.msra.mxu0 %v1742
  %1807 = vmatprep.subr.bf16.mxu0 %v1727
  %1808 = vmatpush1.bf16.msra.mxu0 %v1726
  %1809 = vmatprep.subr.bf16.mxu0 0
  %1810 = vmatpush2.bf16.msra.mxu0 0
  %1811 = vmatprep.subr.bf16.mxu0 0
  %1812 = vmatpush2.bf16.msra.mxu0 0
  %1813 = vmatprep.subr.bf16.mxu0 0
  %1814 = vmatpush2.bf16.msra.mxu0 0
  %1815 = vmatprep.subr.bf16.mxu0 0
  %1816 = vmatpush2.bf16.msra.mxu0 0
  %1817 = vmatprep.subr.bf16.mxu0 0
  %1818 = vmatpush2.bf16.msra.mxu0 0
  %1819 = vmatprep.subr.bf16.mxu0 0
  %1820 = vmatpush2.bf16.msra.mxu0 0
  %1821 = vmatprep.subr.bf16.mxu0 0
  %1822 = vmatpush2.bf16.msra.mxu0 0
  %1823 = vmatprep.subr.bf16.mxu0 0
  %1824 = vmatpush2.bf16.msra.mxu0 0
  %1825 = vmatprep.mubr.bf16.mxu0 0
  %1826 = vmatmul.mubr.bf16.gmra.mxu0 %v1791
  %v1827 = vpop.f32.mrf.mxu0
  %v1828 = vadd.f32 0.0, %v1827
  %v1829 = vpop.f32.mrf.mxu0
  %v1830 = vadd.f32 0.0, %v1829
  %v1831 = vpop.f32.mrf.mxu0
  %v1832 = vpop.f32.mrf.mxu0
  %1833 = vdwg.mxu0
  %1834 = vmatprep.subr.bf16.mxu0 0
  %1835 = vmatpush1.bf16.msra.mxu0 0
  %1836 = vmatprep.subr.bf16.mxu0 0
  %1837 = vmatpush1.bf16.msra.mxu0 0
  %1838 = vmatprep.subr.bf16.mxu0 0
  %1839 = vmatpush1.bf16.msra.mxu0 0
  %1840 = vmatprep.subr.bf16.mxu0 0
  %1841 = vmatpush1.bf16.msra.mxu0 0
  %1842 = vmatprep.subr.bf16.mxu0 0
  %1843 = vmatpush1.bf16.msra.mxu0 0
  %1844 = vmatprep.subr.bf16.mxu0 0
  %1845 = vmatpush1.bf16.msra.mxu0 0
  %1846 = vmatprep.subr.bf16.mxu0 %v1745
  %1847 = vmatpush1.bf16.msra.mxu0 %v1744
  %1848 = vmatprep.subr.bf16.mxu0 %v1729
  %1849 = vmatpush1.bf16.msra.mxu0 %v1728
  %1850 = vmatprep.subr.bf16.mxu0 0
  %1851 = vmatpush2.bf16.msra.mxu0 0
  %1852 = vmatprep.subr.bf16.mxu0 0
  %1853 = vmatpush2.bf16.msra.mxu0 0
  %1854 = vmatprep.subr.bf16.mxu0 0
  %1855 = vmatpush2.bf16.msra.mxu0 0
  %1856 = vmatprep.subr.bf16.mxu0 0
  %1857 = vmatpush2.bf16.msra.mxu0 0
  %1858 = vmatprep.subr.bf16.mxu0 0
  %1859 = vmatpush2.bf16.msra.mxu0 0
  %1860 = vmatprep.subr.bf16.mxu0 0
  %1861 = vmatpush2.bf16.msra.mxu0 0
  %1862 = vmatprep.subr.bf16.mxu0 0
  %1863 = vmatpush2.bf16.msra.mxu0 0
  %1864 = vmatprep.subr.bf16.mxu0 0
  %1865 = vmatpush2.bf16.msra.mxu0 0
  %1866 = vmatprep.mubr.bf16.mxu0 0
  %1867 = vmatmul.mubr.bf16.gmra.mxu0 %v1791
  %v1868 = vpop.f32.mrf.mxu0
  %v1869 = vadd.f32 0.0, %v1868
  %v1870 = vpop.f32.mrf.mxu0
  %v1871 = vadd.f32 0.0, %v1870
  %v1872 = vpop.f32.mrf.mxu0
  %v1873 = vpop.f32.mrf.mxu0
  %1874 = vdwg.mxu0
  %1875 = vmatprep.subr.bf16.mxu0 0
  %1876 = vmatpush1.bf16.msra.mxu0 0
  %1877 = vmatprep.subr.bf16.mxu0 0
  %1878 = vmatpush1.bf16.msra.mxu0 0
  %1879 = vmatprep.subr.bf16.mxu0 0
  %1880 = vmatpush1.bf16.msra.mxu0 0
  %1881 = vmatprep.subr.bf16.mxu0 0
  %1882 = vmatpush1.bf16.msra.mxu0 0
  %1883 = vmatprep.subr.bf16.mxu0 0
  %1884 = vmatpush1.bf16.msra.mxu0 0
  %1885 = vmatprep.subr.bf16.mxu0 0
  %1886 = vmatpush1.bf16.msra.mxu0 0
  %1887 = vmatprep.subr.bf16.mxu0 %v1747
  %1888 = vmatpush1.bf16.msra.mxu0 %v1746
  %1889 = vmatprep.subr.bf16.mxu0 %v1731
  %1890 = vmatpush1.bf16.msra.mxu0 %v1730
  %1891 = vmatprep.subr.bf16.mxu0 0
  %1892 = vmatpush2.bf16.msra.mxu0 0
  %1893 = vmatprep.subr.bf16.mxu0 0
  %1894 = vmatpush2.bf16.msra.mxu0 0
  %1895 = vmatprep.subr.bf16.mxu0 0
  %1896 = vmatpush2.bf16.msra.mxu0 0
  %1897 = vmatprep.subr.bf16.mxu0 0
  %1898 = vmatpush2.bf16.msra.mxu0 0
  %1899 = vmatprep.subr.bf16.mxu0 0
  %1900 = vmatpush2.bf16.msra.mxu0 0
  %1901 = vmatprep.subr.bf16.mxu0 0
  %1902 = vmatpush2.bf16.msra.mxu0 0
  %1903 = vmatprep.subr.bf16.mxu0 0
  %1904 = vmatpush2.bf16.msra.mxu0 0
  %1905 = vmatprep.subr.bf16.mxu0 0
  %1906 = vmatpush2.bf16.msra.mxu0 0
  %1907 = vmatprep.mubr.bf16.mxu0 0
  %1908 = vmatmul.mubr.bf16.gmra.mxu0 %v1791
  %v1909 = vpop.f32.mrf.mxu0
  %v1910 = vadd.f32 0.0, %v1909
  %v1911 = vpop.f32.mrf.mxu0
  %v1912 = vadd.f32 0.0, %v1911
  %v1913 = vpop.f32.mrf.mxu0
  %v1914 = vpop.f32.mrf.mxu0
  %1915 = vdwg.mxu0
  %1916 = vmatprep.subr.bf16.mxu0 0
  %1917 = vmatpush1.bf16.msra.mxu0 0
  %1918 = vmatprep.subr.bf16.mxu0 0
  %1919 = vmatpush1.bf16.msra.mxu0 0
  %1920 = vmatprep.subr.bf16.mxu0 0
  %1921 = vmatpush1.bf16.msra.mxu0 0
  %1922 = vmatprep.subr.bf16.mxu0 0
  %1923 = vmatpush1.bf16.msra.mxu0 0
  %1924 = vmatprep.subr.bf16.mxu0 0
  %1925 = vmatpush1.bf16.msra.mxu0 0
  %1926 = vmatprep.subr.bf16.mxu0 0
  %1927 = vmatpush1.bf16.msra.mxu0 0
  %1928 = vmatprep.subr.bf16.mxu0 %v1749
  %1929 = vmatpush1.bf16.msra.mxu0 %v1748
  %1930 = vmatprep.subr.bf16.mxu0 %v1733
  %1931 = vmatpush1.bf16.msra.mxu0 %v1732
  %1932 = vmatprep.subr.bf16.mxu0 0
  %1933 = vmatpush2.bf16.msra.mxu0 0
  %1934 = vmatprep.subr.bf16.mxu0 0
  %1935 = vmatpush2.bf16.msra.mxu0 0
  %1936 = vmatprep.subr.bf16.mxu0 0
  %1937 = vmatpush2.bf16.msra.mxu0 0
  %1938 = vmatprep.subr.bf16.mxu0 0
  %1939 = vmatpush2.bf16.msra.mxu0 0
  %1940 = vmatprep.subr.bf16.mxu0 0
  %1941 = vmatpush2.bf16.msra.mxu0 0
  %1942 = vmatprep.subr.bf16.mxu0 0
  %1943 = vmatpush2.bf16.msra.mxu0 0
  %1944 = vmatprep.subr.bf16.mxu0 0
  %1945 = vmatpush2.bf16.msra.mxu0 0
  %1946 = vmatprep.subr.bf16.mxu0 0
  %1947 = vmatpush2.bf16.msra.mxu0 0
  %1948 = vmatprep.mubr.bf16.mxu0 0
  %1949 = vmatmul.mubr.bf16.gmra.mxu0 %v1791
  %v1950 = vpop.f32.mrf.mxu0
  %v1951 = vadd.f32 0.0, %v1950
  %v1952 = vpop.f32.mrf.mxu0
  %v1953 = vadd.f32 0.0, %v1952
  %v1954 = vpop.f32.mrf.mxu0
  %v1955 = vpop.f32.mrf.mxu0
  %1956 = vdwg.mxu0
  %1957 = vmatprep.subr.bf16.mxu0 0
  %1958 = vmatpush1.bf16.msra.mxu0 0
  %1959 = vmatprep.subr.bf16.mxu0 0
  %1960 = vmatpush1.bf16.msra.mxu0 0
  %1961 = vmatprep.subr.bf16.mxu0 0
  %1962 = vmatpush1.bf16.msra.mxu0 0
  %1963 = vmatprep.subr.bf16.mxu0 0
  %1964 = vmatpush1.bf16.msra.mxu0 0
  %1965 = vmatprep.subr.bf16.mxu0 0
  %1966 = vmatpush1.bf16.msra.mxu0 0
  %1967 = vmatprep.subr.bf16.mxu0 0
  %1968 = vmatpush1.bf16.msra.mxu0 0
  %1969 = vmatprep.subr.bf16.mxu0 %v1751
  %1970 = vmatpush1.bf16.msra.mxu0 %v1750
  %1971 = vmatprep.subr.bf16.mxu0 %v1735
  %1972 = vmatpush1.bf16.msra.mxu0 %v1734
  %1973 = vmatprep.subr.bf16.mxu0 0
  %1974 = vmatpush2.bf16.msra.mxu0 0
  %1975 = vmatprep.subr.bf16.mxu0 0
  %1976 = vmatpush2.bf16.msra.mxu0 0
  %1977 = vmatprep.subr.bf16.mxu0 0
  %1978 = vmatpush2.bf16.msra.mxu0 0
  %1979 = vmatprep.subr.bf16.mxu0 0
  %1980 = vmatpush2.bf16.msra.mxu0 0
  %1981 = vmatprep.subr.bf16.mxu0 0
  %1982 = vmatpush2.bf16.msra.mxu0 0
  %1983 = vmatprep.subr.bf16.mxu0 0
  %1984 = vmatpush2.bf16.msra.mxu0 0
  %1985 = vmatprep.subr.bf16.mxu0 0
  %1986 = vmatpush2.bf16.msra.mxu0 0
  %1987 = vmatprep.subr.bf16.mxu0 0
  %1988 = vmatpush2.bf16.msra.mxu0 0
  %1989 = vmatprep.mubr.bf16.mxu0 0
  %1990 = vmatmul.mubr.bf16.gmra.mxu0 %v1791
  %v1991 = vpop.f32.mrf.mxu0
  %v1992 = vadd.f32 0.0, %v1991
  %v1993 = vpop.f32.mrf.mxu0
  %v1994 = vadd.f32 0.0, %v1993
  %v1995 = vpop.f32.mrf.mxu0
  %v1996 = vpop.f32.mrf.mxu0
  %1997 = vdwg.mxu0
  %1998 = vmatprep.subr.bf16.mxu0 0
  %1999 = vmatpush1.bf16.msra.mxu0 0
  %2000 = vmatprep.subr.bf16.mxu0 0
  %2001 = vmatpush1.bf16.msra.mxu0 0
  %2002 = vmatprep.subr.bf16.mxu0 0
  %2003 = vmatpush1.bf16.msra.mxu0 0
  %2004 = vmatprep.subr.bf16.mxu0 0
  %2005 = vmatpush1.bf16.msra.mxu0 0
  %2006 = vmatprep.subr.bf16.mxu0 0
  %2007 = vmatpush1.bf16.msra.mxu0 0
  %2008 = vmatprep.subr.bf16.mxu0 0
  %2009 = vmatpush1.bf16.msra.mxu0 0
  %2010 = vmatprep.subr.bf16.mxu0 %v1753
  %2011 = vmatpush1.bf16.msra.mxu0 %v1752
  %2012 = vmatprep.subr.bf16.mxu0 %v1737
  %2013 = vmatpush1.bf16.msra.mxu0 %v1736
  %2014 = vmatprep.subr.bf16.mxu0 0
  %2015 = vmatpush2.bf16.msra.mxu0 0
  %2016 = vmatprep.subr.bf16.mxu0 0
  %2017 = vmatpush2.bf16.msra.mxu0 0
  %2018 = vmatprep.subr.bf16.mxu0 0
  %2019 = vmatpush2.bf16.msra.mxu0 0
  %2020 = vmatprep.subr.bf16.mxu0 0
  %2021 = vmatpush2.bf16.msra.mxu0 0
  %2022 = vmatprep.subr.bf16.mxu0 0
  %2023 = vmatpush2.bf16.msra.mxu0 0
  %2024 = vmatprep.subr.bf16.mxu0 0
  %2025 = vmatpush2.bf16.msra.mxu0 0
  %2026 = vmatprep.subr.bf16.mxu0 0
  %2027 = vmatpush2.bf16.msra.mxu0 0
  %2028 = vmatprep.subr.bf16.mxu0 0
  %2029 = vmatpush2.bf16.msra.mxu0 0
  %2030 = vmatprep.mubr.bf16.mxu0 0
  %2031 = vmatmul.mubr.bf16.gmra.mxu0 %v1791
  %v2032 = vpop.f32.mrf.mxu0
  %v2033 = vadd.f32 0.0, %v2032
  %v2034 = vpop.f32.mrf.mxu0
  %v2035 = vadd.f32 0.0, %v2034
  %v2036 = vpop.f32.mrf.mxu0
  %v2037 = vpop.f32.mrf.mxu0
  %2038 = vdwg.mxu0
  %2039 = vmatprep.subr.bf16.mxu0 0
  %2040 = vmatpush1.bf16.msra.mxu0 0
  %2041 = vmatprep.subr.bf16.mxu0 0
  %2042 = vmatpush1.bf16.msra.mxu0 0
  %2043 = vmatprep.subr.bf16.mxu0 0
  %2044 = vmatpush1.bf16.msra.mxu0 0
  %2045 = vmatprep.subr.bf16.mxu0 0
  %2046 = vmatpush1.bf16.msra.mxu0 0
  %2047 = vmatprep.subr.bf16.mxu0 0
  %2048 = vmatpush1.bf16.msra.mxu0 0
  %2049 = vmatprep.subr.bf16.mxu0 0
  %2050 = vmatpush1.bf16.msra.mxu0 0
  %2051 = vmatprep.subr.bf16.mxu0 %v1755
  %2052 = vmatpush1.bf16.msra.mxu0 %v1754
  %2053 = vmatprep.subr.bf16.mxu0 %v1739
  %2054 = vmatpush1.bf16.msra.mxu0 %v1738
  %2055 = vmatprep.subr.bf16.mxu0 0
  %2056 = vmatpush2.bf16.msra.mxu0 0
  %2057 = vmatprep.subr.bf16.mxu0 0
  %2058 = vmatpush2.bf16.msra.mxu0 0
  %2059 = vmatprep.subr.bf16.mxu0 0
  %2060 = vmatpush2.bf16.msra.mxu0 0
  %2061 = vmatprep.subr.bf16.mxu0 0
  %2062 = vmatpush2.bf16.msra.mxu0 0
  %2063 = vmatprep.subr.bf16.mxu0 0
  %2064 = vmatpush2.bf16.msra.mxu0 0
  %2065 = vmatprep.subr.bf16.mxu0 0
  %2066 = vmatpush2.bf16.msra.mxu0 0
  %2067 = vmatprep.subr.bf16.mxu0 0
  %2068 = vmatpush2.bf16.msra.mxu0 0
  %2069 = vmatprep.subr.bf16.mxu0 0
  %2070 = vmatpush2.bf16.msra.mxu0 0
  %2071 = vmatprep.mubr.bf16.mxu0 0
  %2072 = vmatmul.mubr.bf16.gmra.mxu0 %v1791
  %v2073 = vpop.f32.mrf.mxu0
  %v2074 = vadd.f32 0.0, %v2073
  %v2075 = vpop.f32.mrf.mxu0
  %v2076 = vadd.f32 0.0, %v2075
  %v2077 = vpop.f32.mrf.mxu0
  %v2078 = vpop.f32.mrf.mxu0
  %2079 = vdwg.mxu0
  %2080 = vmatprep.subr.bf16.mxu0 0
  %2081 = vmatpush1.bf16.msra.mxu0 0
  %2082 = vmatprep.subr.bf16.mxu0 0
  %2083 = vmatpush1.bf16.msra.mxu0 0
  %2084 = vmatprep.subr.bf16.mxu0 0
  %2085 = vmatpush1.bf16.msra.mxu0 0
  %2086 = vmatprep.subr.bf16.mxu0 0
  %2087 = vmatpush1.bf16.msra.mxu0 0
  %2088 = vmatprep.subr.bf16.mxu0 0
  %2089 = vmatpush1.bf16.msra.mxu0 0
  %2090 = vmatprep.subr.bf16.mxu0 0
  %2091 = vmatpush1.bf16.msra.mxu0 0
  %2092 = vmatprep.subr.bf16.mxu0 %v1757
  %2093 = vmatpush1.bf16.msra.mxu0 %v1756
  %2094 = vmatprep.subr.bf16.mxu0 %v1741
  %2095 = vmatpush1.bf16.msra.mxu0 %v1740
  %2096 = vmatprep.subr.bf16.mxu0 0
  %2097 = vmatpush2.bf16.msra.mxu0 0
  %2098 = vmatprep.subr.bf16.mxu0 0
  %2099 = vmatpush2.bf16.msra.mxu0 0
  %2100 = vmatprep.subr.bf16.mxu0 0
  %2101 = vmatpush2.bf16.msra.mxu0 0
  %2102 = vmatprep.subr.bf16.mxu0 0
  %2103 = vmatpush2.bf16.msra.mxu0 0
  %2104 = vmatprep.subr.bf16.mxu0 0
  %2105 = vmatpush2.bf16.msra.mxu0 0
  %2106 = vmatprep.subr.bf16.mxu0 0
  %2107 = vmatpush2.bf16.msra.mxu0 0
  %2108 = vmatprep.subr.bf16.mxu0 0
  %2109 = vmatpush2.bf16.msra.mxu0 0
  %2110 = vmatprep.subr.bf16.mxu0 0
  %2111 = vmatpush2.bf16.msra.mxu0 0
  %2112 = vmatprep.mubr.bf16.mxu0 0
  %2113 = vmatmul.mubr.bf16.gmra.mxu0 %v1791
  %v2114 = vpop.f32.mrf.mxu0
  %v2115 = vadd.f32 0.0, %v2114
  %v2116 = vpop.f32.mrf.mxu0
  %v2117 = vadd.f32 0.0, %v2116
  %v2118 = vpop.f32.mrf.mxu0
  %v2119 = vpop.f32.mrf.mxu0
  %2120 = vdwg.mxu0
  %v2121 = vtanh.pop %v250
  %v2122 = vtanh.pop %v252
  %v2123 = vtanh.pop %v291
  %v2124 = vtanh.pop %v293
  %v2125 = vtanh.pop %v332
  %v2126 = vtanh.pop %v334
  %v2127 = vtanh.pop %v373
  %v2128 = vtanh.pop %v375
  %v2129 = vtanh.pop %v414
  %v2130 = vtanh.pop %v416
  %v2131 = vtanh.pop %v455
  %v2132 = vtanh.pop %v457
  %v2133 = vtanh.pop %v496
  %v2134 = vtanh.pop %v498
  %v2135 = vtanh.pop %v537
  %v2136 = vtanh.pop %v539
  %v2137 = vtanh.pop %v776
  %v2138 = vtanh.pop %v778
  %v2139 = vtanh.pop %v817
  %v2140 = vtanh.pop %v819
  %v2141 = vtanh.pop %v858
  %v2142 = vtanh.pop %v860
  %v2143 = vtanh.pop %v899
  %v2144 = vtanh.pop %v901
  %v2145 = vtanh.pop %v940
  %v2146 = vtanh.pop %v942
  %v2147 = vtanh.pop %v981
  %v2148 = vtanh.pop %v983
  %v2149 = vtanh.pop %v1022
  %v2150 = vtanh.pop %v1024
  %v2151 = vtanh.pop %v1063
  %v2152 = vtanh.pop %v1065
  %v2153 = vtanh.pop %v1302
  %v2154 = vtanh.pop %v1304
  %v2155 = vtanh.pop %v1343
  %v2156 = vtanh.pop %v1345
  %v2157 = vtanh.pop %v1384
  %v2158 = vtanh.pop %v1386
  %v2159 = vtanh.pop %v1425
  %v2160 = vtanh.pop %v1427
  %v2161 = vtanh.pop %v1466
  %v2162 = vtanh.pop %v1468
  %v2163 = vtanh.pop %v1507
  %v2164 = vtanh.pop %v1509
  %v2165 = vtanh.pop %v1548
  %v2166 = vtanh.pop %v1550
  %v2167 = vtanh.pop %v1589
  %v2168 = vtanh.pop %v1591
  %v2169 = vtanh.pop %v1828
  %v2170 = vtanh.pop %v1830
  %v2171 = vtanh.pop %v1869
  %v2172 = vtanh.pop %v1871
  %v2173 = vtanh.pop %v1910
  %v2174 = vtanh.pop %v1912
  %v2175 = vtanh.pop %v1951
  %v2176 = vtanh.pop %v1953
  %v2177 = vtanh.pop %v1992
  %v2178 = vtanh.pop %v1994
  %v2179 = vtanh.pop %v2033
  %v2180 = vtanh.pop %v2035
  %v2181 = vtanh.pop %v2074
  %v2182 = vtanh.pop %v2076
  %v2183 = vtanh.pop %v2115
  %v2184 = vtanh.pop %v2117
  %v2201 = vcombine.low %v2121, %v2122
  %v2202 = vcombine.low %v2123, %v2124
  %v2203 = vcombine.low %v2125, %v2126
  %v2204 = vcombine.low %v2127, %v2128
  %v2205 = vcombine.low %v2129, %v2130
  %v2206 = vcombine.low %v2131, %v2132
  %v2207 = vcombine.low %v2133, %v2134
  %v2208 = vcombine.low %v2135, %v2136
  %2217 = vst [vmem:[%s4] sm:$0x77] %v2201
  %2218 = vst [vmem:[%s4 + $0x8] sm:$0x77] %v2202
  %2219 = vst [vmem:[%s4 + $0x10] sm:$0x77] %v2203
  %2220 = vst [vmem:[%s4 + $0x18] sm:$0x77] %v2204
  %2221 = vst [vmem:[%s4 + $0x20] sm:$0x77] %v2205
  %2222 = vst [vmem:[%s4 + $0x28] sm:$0x77] %v2206
  %2223 = vst [vmem:[%s4 + $0x30] sm:$0x77] %v2207
  %2224 = vst [vmem:[%s4 + $0x38] sm:$0x77] %v2208
  %v2241 = vcombine.low %v2137, %v2138
  %v2242 = vcombine.low %v2139, %v2140
  %v2243 = vcombine.low %v2141, %v2142
  %v2244 = vcombine.low %v2143, %v2144
  %v2245 = vcombine.low %v2145, %v2146
  %v2246 = vcombine.low %v2147, %v2148
  %v2247 = vcombine.low %v2149, %v2150
  %v2248 = vcombine.low %v2151, %v2152
  %s2257 = scalar_lea.vmem %s4, 64
  %2258 = vst [vmem:[%s2257] sm:$0x77] %v2241
  %2259 = vst [vmem:[%s2257 + $0x8] sm:$0x77] %v2242
  %2260 = vst [vmem:[%s2257 + $0x10] sm:$0x77] %v2243
  %2261 = vst [vmem:[%s2257 + $0x18] sm:$0x77] %v2244
  %2262 = vst [vmem:[%s2257 + $0x20] sm:$0x77] %v2245
  %2263 = vst [vmem:[%s2257 + $0x28] sm:$0x77] %v2246
  %2264 = vst [vmem:[%s2257 + $0x30] sm:$0x77] %v2247
  %2265 = vst [vmem:[%s2257 + $0x38] sm:$0x77] %v2248
  %v2282 = vcombine.low %v2153, %v2154
  %v2283 = vcombine.low %v2155, %v2156
  %v2284 = vcombine.low %v2157, %v2158
  %v2285 = vcombine.low %v2159, %v2160
  %v2286 = vcombine.low %v2161, %v2162
  %v2287 = vcombine.low %v2163, %v2164
  %v2288 = vcombine.low %v2165, %v2166
  %v2289 = vcombine.low %v2167, %v2168
  %s2298 = scalar_lea.vmem %s4, 128
  %2299 = vst [vmem:[%s2298] sm:$0x77] %v2282
  %2300 = vst [vmem:[%s2298 + $0x8] sm:$0x77] %v2283
  %2301 = vst [vmem:[%s2298 + $0x10] sm:$0x77] %v2284
  %2302 = vst [vmem:[%s2298 + $0x18] sm:$0x77] %v2285
  %2303 = vst [vmem:[%s2298 + $0x20] sm:$0x77] %v2286
  %2304 = vst [vmem:[%s2298 + $0x28] sm:$0x77] %v2287
  %2305 = vst [vmem:[%s2298 + $0x30] sm:$0x77] %v2288
  %2306 = vst [vmem:[%s2298 + $0x38] sm:$0x77] %v2289
  %v2323 = vcombine.low %v2169, %v2170
  %v2324 = vcombine.low %v2171, %v2172
  %v2325 = vcombine.low %v2173, %v2174
  %v2326 = vcombine.low %v2175, %v2176
  %v2327 = vcombine.low %v2177, %v2178
  %v2328 = vcombine.low %v2179, %v2180
  %v2329 = vcombine.low %v2181, %v2182
  %v2330 = vcombine.low %v2183, %v2184
  %s2339 = scalar_lea.vmem %s4, 192
  %2340 = vst [vmem:[%s2339] sm:$0x77] %v2323
  %2341 = vst [vmem:[%s2339 + $0x8] sm:$0x77] %v2324
  %2342 = vst [vmem:[%s2339 + $0x10] sm:$0x77] %v2325
  %2343 = vst [vmem:[%s2339 + $0x18] sm:$0x77] %v2326
  %2344 = vst [vmem:[%s2339 + $0x20] sm:$0x77] %v2327
  %2345 = vst [vmem:[%s2339 + $0x28] sm:$0x77] %v2328
  %2346 = vst [vmem:[%s2339 + $0x30] sm:$0x77] %v2329
  %2347 = vst [vmem:[%s2339 + $0x38] sm:$0x77] %v2330
  // Predicated region
  $region18: #{generator_forward.9} parent=0 // pred_check
    _
  $region19: #{generator_forward.9} parent=0 // pred_check_branch
    %2349 = sbr.rel (0) target = $region21
  $region20: #{generator_forward.9} parent=0 // pred_region
    _
  $region21: #{generator_forward.9} parent=0 // pred_fallthru
    _
  // Predicated region
  $region22: #{generator_forward.9} parent=0 // pred_check
    _
  $region23: #{generator_forward.9} parent=0 // pred_check_branch
    %2351 = sbr.rel (0) target = $region25
  $region24: #{generator_forward.9} parent=0 // pred_region
    _
  $region25: #{generator_forward.9} parent=0 // pred_fallthru
    _

</llo_original>
